<compile_context>
chip_gen: v5e
topology: v5e:2x2
jax: 0.10.0
libtpu: 0.0.40
codegen_flags: <defaults>
</compile_context>

<pallas_src>
import functools

import jax
import jax.numpy as jnp
from jax.experimental import pallas as pl
from jax.experimental.pallas import tpu as pltpu


# ----------------------------- model hyper-params -----------------------------
DENSE_HIDDEN_UNITS = (200, 200)            # md_nn_model default
ALARM_UNITS = (112, 100, 300, 200, 77, 1)  # TorchAlarm layer widths
SELU_ALPHA = 1.6732632423543772
SELU_SCALE = 1.0507009873554805


def _rup(n, m=128):
    return ((n + m - 1) // m) * m


H1U, H2U = DENSE_HIDDEN_UNITS
H1P, H2P = _rup(H1U), _rup(H2U)            # 256, 256
OUT_P = 128                                # packed output slab width
A1P, A2P, A3P, A4P, A5P = (_rup(u) for u in ALARM_UNITS[:5])   # 128,128,384,256,128

# -------- packed weight slab layout (everything except x, W1, W2) -------------
_WSLAB_LAYOUT = (
    ("w3",   H2P, OUT_P),
    ("a1wt", H1P, A1P),
    ("a1wb", H2P, A1P),
    ("a2w",  A1P, A2P),
    ("a3w",  A2P, A3P),
    ("a4w",  A3P, A4P),
    ("a5w",  A4P, A5P),
    ("a6w",  A5P, OUT_P),
)
WSLAB_COLS = max(c for _, _, c in _WSLAB_LAYOUT)           # 384
WSLAB_INDEX = {}
_row = 0
for _name, _rows, _cols in _WSLAB_LAYOUT:
    WSLAB_INDEX[_name] = (_row, _rows, _cols)
    _row += _rows
WSLAB_ROWS = _row                                          # 1792 (multiple of 8)

# -------- packed bias slab layout (all 9 biases, f32, lane axis) ---------------
_BSLAB_LAYOUT = (
    ("b1", H1P), ("b2", H2P), ("b3", OUT_P),
    ("a1b", A1P), ("a2b", A2P), ("a3b", A3P),
    ("a4b", A4P), ("a5b", A5P), ("a6b", OUT_P),
)
BSLAB_INDEX = {}
_col = 0
for _name, _width in _BSLAB_LAYOUT:
    BSLAB_INDEX[_name] = (_col, _width)
    _col += _width
BSLAB_COLS = _col                                          # 1792 (multiple of 128)


def _selu(x):
    # f32 math (v5e has no bf16 VPU/EUP); exp goes to the EUP.
    return SELU_SCALE * jnp.where(x > 0.0, x, SELU_ALPHA * (jnp.exp(x) - 1.0))


# --------------------------------- kernel ------------------------------------
def amd_dla_kernel(x_ref, w1_ref, w2_ref, wslab_ref, bslab_ref, out_ref, acc_ref,
                   *, alarm_dtype):
    f32 = jnp.float32
    bf16 = jnp.bfloat16
    k = pl.program_id(1)

    @pl.when(k == 0)
    def _init():
        acc_ref[...] = jnp.zeros_like(acc_ref)

    # K-tiled first matmul: accumulate h1 pre-activation in f32 scratch.
    acc_ref[...] += jnp.dot(x_ref[...], w1_ref[...], preferred_element_type=f32)

    @pl.when(k == pl.num_programs(1) - 1)
    def _finish():
        def wgt(name):
            off, rows, cols = WSLAB_INDEX[name]        # static, 8/128-aligned
            return wslab_ref[off:off + rows, 0:cols]

        def bias(name):
            off, width = BSLAB_INDEX[name]             # static, 128-aligned
            return bslab_ref[:, off:off + width]

        # md_nn_model hidden layers (SELU, f32 math; bf16 MXU operands).
        h1 = _selu(acc_ref[...] + bias("b1"))
        h1b = h1.astype(bf16)
        h2 = _selu(jnp.dot(h1b, w2_ref[...], preferred_element_type=f32) + bias("b2"))
        h2b = h2.astype(bf16)

        # logits padded to 128 lanes; pad lanes are exactly 0.
        logits = jnp.dot(h2b, wgt("w3"), preferred_element_type=f32) + bias("b3")

        # Alarm chain: ReLU + bias in bf16 on v6e/v7x, f32 on v5e.
        def relu_layer(pre_f32, bname):
            dt = alarm_dtype
            return jnp.maximum(pre_f32.astype(dt) + bias(bname).astype(dt), 0.0).astype(bf16)

        # First alarm layer as split matmuls (no lane-axis concat of [h1|h2]).
        a = relu_layer(
            jnp.dot(h1b, wgt("a1wt"), preferred_element_type=f32)
            + jnp.dot(h2b, wgt("a1wb"), preferred_element_type=f32),
            "a1b")
        a = relu_layer(jnp.dot(a, wgt("a2w"), preferred_element_type=f32), "a2b")
        a = relu_layer(jnp.dot(a, wgt("a3w"), preferred_element_type=f32), "a3b")
        a = relu_layer(jnp.dot(a, wgt("a4w"), preferred_element_type=f32), "a4b")
        a = relu_layer(jnp.dot(a, wgt("a5w"), preferred_element_type=f32), "a5b")

        # Final alarm layer: real output column embedded at lane n_classes,
        # all other lanes 0 -> packed slab = logits_pad + xprob_pad.
        xprob = jnp.dot(a, wgt("a6w"), preferred_element_type=f32) + bias("a6b")

        out_ref[...] = (logits + xprob).astype(out_ref.dtype)


# --------------------------- host-side param packing ---------------------------
def prepare_params(params, n_classes, *, in_p):
    """Pad/cast/pack weights ONCE (not per call): bf16 weights, f32 biases,
    every width rounded up to a multiple of 128, first alarm layer split across
    the [h1 | h2] boundary, final alarm column embedded at lane n_classes, all
    small weights packed into one slab and all biases into one slab."""
    assert n_classes + 1 <= OUT_P
    f32 = jnp.float32

    def pad2(w, rows, cols):
        return jnp.zeros((rows, cols), f32).at[:w.shape[0], :w.shape[1]].set(w)

    w1 = pad2(params["w1"], in_p, H1P).astype(jnp.bfloat16)
    w2 = pad2(params["w2"], H1P, H2P).astype(jnp.bfloat16)

    # Final alarm layer (width 1): embed at lane n_classes of the output slab.
    a6w = jnp.zeros((ALARM_UNITS[4], OUT_P), f32).at[:, n_classes].set(params["a6w"][:, 0])
    a6b = jnp.zeros((1, OUT_P), f32).at[0, n_classes].set(params["a6b"][0, 0])

    raw_w = {
        "w3": params["w3"],
        "a1wt": params["a1w"][:H1U],     # rows multiplying h1
        "a1wb": params["a1w"][H1U:],     # rows multiplying h2
        "a2w": params["a2w"],
        "a3w": params["a3w"],
        "a4w": params["a4w"],
        "a5w": params["a5w"],
        "a6w": a6w,
    }
    wslab = jnp.zeros((WSLAB_ROWS, WSLAB_COLS), f32)
    for name, (off, _rows, _cols) in WSLAB_INDEX.items():
        w = raw_w[name]
        wslab = wslab.at[off:off + w.shape[0], :w.shape[1]].set(w)
    wslab = wslab.astype(jnp.bfloat16)

    raw_b = {
        "b1": params["b1"], "b2": params["b2"], "b3": params["b3"],
        "a1b": params["a1b"], "a2b": params["a2b"], "a3b": params["a3b"],
        "a4b": params["a4b"], "a5b": params["a5b"], "a6b": a6b,
    }
    bslab = jnp.zeros((1, BSLAB_COLS), f32)
    for name, (off, _width) in BSLAB_INDEX.items():
        b = raw_b[name]
        bslab = bslab.at[:, off:off + b.shape[1]].set(b)

    return {"w1": w1, "w2": w2, "wslab": wslab, "bslab": bslab}


def prepare_input(x, *, in_p, batch_tile):
    """Pad/cast x ONCE (data-pipeline side), not inside the per-call forward."""
    b, in_size = x.shape
    b_pad = _rup(b, batch_tile)
    xp = jnp.zeros((b_pad, in_p), jnp.bfloat16)
    return xp.at[:b, :in_size].set(x.astype(jnp.bfloat16))


# ------------------------- generation-aware configuration ----------------------
def tpu_config(batch, in_size, *, k_tile=512, batch_tile=None):
    try:
        kind = jax.devices()[0].device_kind.lower()
    except Exception:
        kind = ""
    is_v7 = ("v7" in kind) or ("7x" in kind)
    has_bf16_vpu = any(t in kind for t in ("v6", "v7", "7x"))
    n_tc = 2 if is_v7 else 1

    tk = min(k_tile, _rup(in_size, 128))
    in_p = _rup(in_size, tk)

    if batch_tile is None:
        b128 = _rup(batch, 128)
        if n_tc >= 2:
            # Guarantee >=2 batch tiles when possible so the "parallel" axis
            # actually shards across v7x's 2 TensorCores.
            batch_tile = min(256, max(128, ((b128 // 2) // 128) * 128))
        else:
            # Single TC (v5e/v6e): bigger tiles amortize per-step overhead.
            batch_tile = 256

    # v5e/v6e: 128 MiB physical VMEM; v7x (or unknown): stay conservative.
    vmem_limit_bytes = (96 if (kind and not is_v7) else 48) * 1024 * 1024
    alarm_dtype = jnp.bfloat16 if has_bf16_vpu else jnp.float32
    return dict(k_tile=tk, in_p=in_p, batch_tile=batch_tile,
                vmem_limit_bytes=vmem_limit_bytes, alarm_dtype=alarm_dtype)


# ------------------------------- host wrapper ---------------------------------
def amd_dla_forward(x_padded, prep, *, batch, n_classes, batch_tile, k_tile,
                    alarm_dtype=jnp.float32, vmem_limit_bytes=48 * 1024 * 1024,
                    single_buffer_weights=True):
    """Fused forward pass. x_padded: (B_pad, IN_P) bf16 from prepare_input()."""
    b_pad, in_p = x_padded.shape
    assert x_padded.dtype == jnp.bfloat16
    assert b_pad % batch_tile == 0 and in_p % k_tile == 0
    nb = b_pad // batch_tile
    nk = in_p // k_tile

    def _const(i, k):
        return (0, 0)

    def resident(arr):
        # Constant block index -> DMA'd once; single-buffer to save VMEM.
        if single_buffer_weights:
            return pl.BlockSpec(arr.shape, _const, pipeline_mode=pl.Buffered(1))
        return pl.BlockSpec(arr.shape, _const)

    in_specs = [
        pl.BlockSpec((batch_tile, k_tile), lambda i, k: (i, k)),   # x (K-tiled)
        pl.BlockSpec((k_tile, H1P), lambda i, k: (k, 0)),          # W1 (K-tiled, double-buffered)
        resident(prep["w2"]),
        resident(prep["wslab"]),
        resident(prep["bslab"]),
    ]
    out_specs = pl.BlockSpec((batch_tile, OUT_P), lambda i, k: (i, 0))

    slab = pl.pallas_call(
        functools.partial(amd_dla_kernel, alarm_dtype=alarm_dtype),
        out_shape=jax.ShapeDtypeStruct((b_pad, OUT_P), jnp.float32),
        grid_spec=pltpu.PrefetchScalarGridSpec(
            num_scalar_prefetch=0,
            grid=(nb, nk),                                   # reduction axis last
            in_specs=in_specs,
            out_specs=out_specs,
            scratch_shapes=[pltpu.VMEM((batch_tile, H1P), jnp.float32)],  # h1 pre-act acc
        ),
        compiler_params=pltpu.CompilerParams(
            dimension_semantics=("parallel", "arbitrary"),
            vmem_limit_bytes=vmem_limit_bytes,
        ),
    )(x_padded, prep["w1"], prep["w2"], prep["wslab"], prep["bslab"])

    logits = slab[:batch, :n_classes]
    x_prob = slab[:batch, n_classes]          # x_prob = alarm(...).reshape(-1)
    return logits, x_prob


# --------------------------- deterministic init --------------------------------
def init_params(key, input_size, n_classes):
    dims_md = [
        (input_size, DENSE_HIDDEN_UNITS[0]),
        (DENSE_HIDDEN_UNITS[0], DENSE_HIDDEN_UNITS[1]),
        (DENSE_HIDDEN_UNITS[1], n_classes),
    ]
    dims_alarm = []
    prev = sum(DENSE_HIDDEN_UNITS)
    for u in ALARM_UNITS:
        dims_alarm.append((prev, u))
        prev = u

    params = {}
    keys = jax.random.split(key, len(dims_md) + len(dims_alarm))
    for name, (fi, fo), k in zip(("1", "2", "3"), dims_md, keys[: len(dims_md)]):
        kw, kb = jax.random.split(k)
        scale = 1.0 / jnp.sqrt(fi)
        params[f"w{name}"] = jax.random.uniform(kw, (fi, fo), jnp.float32, -scale, scale)
        params[f"b{name}"] = jax.random.uniform(kb, (1, fo), jnp.float32, -scale, scale)
    for idx, ((fi, fo), k) in enumerate(zip(dims_alarm, keys[len(dims_md):]), start=1):
        kw, kb = jax.random.split(k)
        scale = 1.0 / jnp.sqrt(fi)
        params[f"a{idx}w"] = jax.random.uniform(kw, (fi, fo), jnp.float32, -scale, scale)
        params[f"a{idx}b"] = jax.random.uniform(kb, (1, fo), jnp.float32, -scale, scale)
    return params


# ------------------------------ pure-JAX reference ------------------------------
def reference_forward(x, params):
    h1 = _selu(x @ params["w1"] + params["b1"])
    h2 = _selu(h1 @ params["w2"] + params["b2"])
    logits = h2 @ params["w3"] + params["b3"]
    h = jnp.concatenate([h1, h2], axis=-1)
    for i in range(1, 6):
        h = jnp.maximum(h @ params[f"a{i}w"] + params[f"a{i}b"], 0.0)
    xprob = h @ params["a6w"] + params["a6b"]
    return logits, xprob.reshape(-1)


# ------------------------------------ main --------------------------------------
if __name__ == "__main__":
    key = jax.random.PRNGKey(0)
    k_params, k_x = jax.random.split(key)

    batch = 8
    input_size = 64      # small synthetic feature size
    n_classes = 2

    params = init_params(k_params, input_size, n_classes)
    x = jax.random.uniform(k_x, (batch, input_size), jnp.float32)

    cfg = tpu_config(batch, input_size)
    # One-time packing / padding (data-pipeline side, NOT per forward call).
    prep = prepare_params(params, n_classes, in_p=cfg["in_p"])
    x_p = prepare_input(x, in_p=cfg["in_p"], batch_tile=cfg["batch_tile"])

    fwd_kwargs = dict(batch=batch, n_classes=n_classes,
                      batch_tile=cfg["batch_tile"], k_tile=cfg["k_tile"],
                      alarm_dtype=cfg["alarm_dtype"],
                      vmem_limit_bytes=cfg["vmem_limit_bytes"])
    try:
        logits, x_prob = amd_dla_forward(x_p, prep, single_buffer_weights=True, **fwd_kwargs)
        jax.block_until_ready((logits, x_prob))
    except Exception:
        # Fallback if this JAX build rejects pl.Buffered(1) single-buffering of
        # the constant-index weight operands.
        logits, x_prob = amd_dla_forward(x_p, prep, single_buffer_weights=False, **fwd_kwargs)
        jax.block_until_ready((logits, x_prob))

    ref_logits, ref_xprob = reference_forward(x, params)
    assert logits.shape == (batch, n_classes)
    assert x_prob.shape == (batch,)
    # bf16 weights/activations on the MXU path -> compare to the f32 reference
    # with a correspondingly loose tolerance.
    assert jnp.allclose(logits, ref_logits, atol=5e-2, rtol=5e-2)
    assert jnp.allclose(x_prob, ref_xprob, atol=5e-2, rtol=5e-2)

    print("KERNEL_OK")
</pallas_src>

<mosaic_0001>
module attributes {stable_mosaic.version = 11 : i64} {
  func.func @amd_dla_kernel(%arg0: i32, %arg1: i32, %arg2: memref<256x128xbf16, #tpu.memory_space<vmem>>, %arg3: memref<128x256xbf16, #tpu.memory_space<vmem>>, %arg4: memref<256x256xbf16, #tpu.memory_space<vmem>>, %arg5: memref<1792x384xbf16, #tpu.memory_space<vmem>>, %arg6: memref<1x1792xf32, #tpu.memory_space<vmem>>, %arg7: memref<256x128xf32, #tpu.memory_space<vmem>>, %arg8: memref<256x256xf32, #tpu.memory_space<vmem>>) attributes {dimension_semantics = [#tpu.dimension_semantics<parallel>, #tpu.dimension_semantics<arbitrary>], iteration_bounds = array<i64: 1, 1>, scalar_prefetch = 0 : i64, scratch_operands = 1 : i64, tpu.core_type = #tpu.core_type<tc>, window_params = [{transform_indices = @transform_0, window_bounds = array<i64: 256, 128>}, {transform_indices = @transform_1, window_bounds = array<i64: 128, 256>}, {pipeline_mode = #tpu.pipeline_mode<synchronous>, transform_indices = @transform_2, window_bounds = array<i64: 256, 256>}, {pipeline_mode = #tpu.pipeline_mode<synchronous>, transform_indices = @transform_3, window_bounds = array<i64: 1792, 384>}, {pipeline_mode = #tpu.pipeline_mode<synchronous>, transform_indices = @transform_4, window_bounds = array<i64: 1, 1792>}, {transform_indices = @transform_5, window_bounds = array<i64: 256, 128>}]} {
    %c0_i32 = arith.constant 0 : i32
    %0 = arith.cmpi eq, %arg1, %c0_i32 : i32
    %1 = arith.extui %0 : i1 to i32
    %c0_i32_0 = arith.constant 0 : i32
    %2 = arith.cmpi ne, %1, %c0_i32_0 : i32
    scf.if %2 {
      %cst_10 = arith.constant 0.000000e+00 : f32
      %12 = vector.broadcast %cst_10 : f32 to vector<256x256xf32>
      %c0_11 = arith.constant 0 : index
      %c0_12 = arith.constant 0 : index
      %13 = vector.load %arg8[%c0_11, %c0_12] : memref<256x256xf32, #tpu.memory_space<vmem>>, vector<256x256xf32>
      tpu.vector_store %arg8[%c0_11, %c0_12], %12 {strides = array<i32>} : memref<256x256xf32, #tpu.memory_space<vmem>>, vector<256x256xf32>,
    } else {
    }
    %c0 = arith.constant 0 : index
    %c0_1 = arith.constant 0 : index
    %3 = vector.load %arg8[%c0, %c0_1] : memref<256x256xf32, #tpu.memory_space<vmem>>, vector<256x256xf32>
    %c0_2 = arith.constant 0 : index
    %c0_3 = arith.constant 0 : index
    %4 = vector.load %arg2[%c0_2, %c0_3] : memref<256x128xbf16, #tpu.memory_space<vmem>>, vector<256x128xbf16>
    %c0_4 = arith.constant 0 : index
    %c0_5 = arith.constant 0 : index
    %5 = vector.load %arg3[%c0_4, %c0_5] : memref<128x256xbf16, #tpu.memory_space<vmem>>, vector<128x256xbf16>
    %cst = arith.constant dense<0.000000e+00> : vector<256x256xf32>
    %6 = tpu.matmul %4, %5, %cst {dimension_numbers = #tpu.dot_dimension_numbers<[1], [0], [0], [1], [0, 0, 1, 1], [], []>} : vector<256x128xbf16>, vector<128x256xbf16>, vector<256x256xf32> -> vector<256x256xf32>
    %7 = arith.addf %3, %6 : vector<256x256xf32>
    %c0_6 = arith.constant 0 : index
    %c0_7 = arith.constant 0 : index
    %8 = vector.load %arg8[%c0_6, %c0_7] : memref<256x256xf32, #tpu.memory_space<vmem>>, vector<256x256xf32>
    tpu.vector_store %arg8[%c0_6, %c0_7], %7 {strides = array<i32>} : memref<256x256xf32, #tpu.memory_space<vmem>>, vector<256x256xf32>,
    %c0_i32_8 = arith.constant 0 : i32
    %9 = arith.cmpi eq, %arg1, %c0_i32_8 : i32
    %10 = arith.extui %9 : i1 to i32
    %c0_i32_9 = arith.constant 0 : i32
    %11 = arith.cmpi ne, %10, %c0_i32_9 : i32
    scf.if %11 {
      %c0_10 = arith.constant 0 : index
      %c0_11 = arith.constant 0 : index
      %12 = vector.load %arg8[%c0_10, %c0_11] : memref<256x256xf32, #tpu.memory_space<vmem>>, vector<256x256xf32>
      %c0_12 = arith.constant 0 : index
      %c0_13 = arith.constant 0 : index
      %13 = vector.load %arg6[%c0_12, %c0_13] : memref<1x1792xf32, #tpu.memory_space<vmem>>, vector<1x256xf32>
      %14 = vector.broadcast %13 : vector<1x256xf32> to vector<256x256xf32>
      %15 = arith.addf %12, %14 : vector<256x256xf32>
      %cst_14 = arith.constant 0.000000e+00 : f32
      %16 = vector.broadcast %cst_14 : f32 to vector<256x256xf32>
      %17 = arith.cmpf ogt, %15, %16 : vector<256x256xf32>
      %18 = math.exp %15 : vector<256x256xf32>
      %cst_15 = arith.constant 1.000000e+00 : f32
      %19 = vector.broadcast %cst_15 : f32 to vector<256x256xf32>
      %20 = arith.subf %18, %19 : vector<256x256xf32>
      %cst_16 = arith.constant 1.67326319 : f32
      %21 = vector.broadcast %cst_16 : f32 to vector<256x256xf32>
      %22 = arith.mulf %21, %20 : vector<256x256xf32>
      %23 = arith.select %17, %15, %22 : vector<256x256xi1>, vector<256x256xf32>
      %cst_17 = arith.constant 1.05070102 : f32
      %24 = vector.broadcast %cst_17 : f32 to vector<256x256xf32>
      %25 = arith.mulf %24, %23 : vector<256x256xf32>
      %26 = arith.truncf %25 : vector<256x256xf32> to vector<256x256xbf16>
      %c0_18 = arith.constant 0 : index
      %c0_19 = arith.constant 0 : index
      %27 = vector.load %arg4[%c0_18, %c0_19] : memref<256x256xbf16, #tpu.memory_space<vmem>>, vector<256x256xbf16>
      %cst_20 = arith.constant dense<0.000000e+00> : vector<256x256xf32>
      %28 = tpu.matmul %26, %27, %cst_20 {dimension_numbers = #tpu.dot_dimension_numbers<[1], [0], [0], [1], [0, 0, 1, 1], [], []>} : vector<256x256xbf16>, vector<256x256xbf16>, vector<256x256xf32> -> vector<256x256xf32>
      %c0_21 = arith.constant 0 : index
      %c256 = arith.constant 256 : index
      %29 = vector.load %arg6[%c0_21, %c256] : memref<1x1792xf32, #tpu.memory_space<vmem>>, vector<1x256xf32>
      %30 = vector.broadcast %29 : vector<1x256xf32> to vector<256x256xf32>
      %31 = arith.addf %28, %30 : vector<256x256xf32>
      %cst_22 = arith.constant 0.000000e+00 : f32
      %32 = vector.broadcast %cst_22 : f32 to vector<256x256xf32>
      %33 = arith.cmpf ogt, %31, %32 : vector<256x256xf32>
      %34 = math.exp %31 : vector<256x256xf32>
      %cst_23 = arith.constant 1.000000e+00 : f32
      %35 = vector.broadcast %cst_23 : f32 to vector<256x256xf32>
      %36 = arith.subf %34, %35 : vector<256x256xf32>
      %cst_24 = arith.constant 1.67326319 : f32
      %37 = vector.broadcast %cst_24 : f32 to vector<256x256xf32>
      %38 = arith.mulf %37, %36 : vector<256x256xf32>
      %39 = arith.select %33, %31, %38 : vector<256x256xi1>, vector<256x256xf32>
      %cst_25 = arith.constant 1.05070102 : f32
      %40 = vector.broadcast %cst_25 : f32 to vector<256x256xf32>
      %41 = arith.mulf %40, %39 : vector<256x256xf32>
      %42 = arith.truncf %41 : vector<256x256xf32> to vector<256x256xbf16>
      %c0_26 = arith.constant 0 : index
      %c0_27 = arith.constant 0 : index
      %43 = vector.load %arg5[%c0_26, %c0_27] : memref<1792x384xbf16, #tpu.memory_space<vmem>>, vector<256x128xbf16>
      %cst_28 = arith.constant dense<0.000000e+00> : vector<256x128xf32>
      %44 = tpu.matmul %42, %43, %cst_28 {dimension_numbers = #tpu.dot_dimension_numbers<[1], [0], [0], [1], [0, 0, 1, 1], [], []>} : vector<256x256xbf16>, vector<256x128xbf16>, vector<256x128xf32> -> vector<256x128xf32>
      %c0_29 = arith.constant 0 : index
      %c512 = arith.constant 512 : index
      %45 = vector.load %arg6[%c0_29, %c512] : memref<1x1792xf32, #tpu.memory_space<vmem>>, vector<1x128xf32>
      %46 = vector.broadcast %45 : vector<1x128xf32> to vector<256x128xf32>
      %47 = arith.addf %44, %46 : vector<256x128xf32>
      %c256_30 = arith.constant 256 : index
      %c0_31 = arith.constant 0 : index
      %48 = vector.load %arg5[%c256_30, %c0_31] : memref<1792x384xbf16, #tpu.memory_space<vmem>>, vector<256x128xbf16>
      %cst_32 = arith.constant dense<0.000000e+00> : vector<256x128xf32>
      %49 = tpu.matmul %26, %48, %cst_32 {dimension_numbers = #tpu.dot_dimension_numbers<[1], [0], [0], [1], [0, 0, 1, 1], [], []>} : vector<256x256xbf16>, vector<256x128xbf16>, vector<256x128xf32> -> vector<256x128xf32>
      %c512_33 = arith.constant 512 : index
      %c0_34 = arith.constant 0 : index
      %50 = vector.load %arg5[%c512_33, %c0_34] : memref<1792x384xbf16, #tpu.memory_space<vmem>>, vector<256x128xbf16>
      %cst_35 = arith.constant dense<0.000000e+00> : vector<256x128xf32>
      %51 = tpu.matmul %42, %50, %cst_35 {dimension_numbers = #tpu.dot_dimension_numbers<[1], [0], [0], [1], [0, 0, 1, 1], [], []>} : vector<256x256xbf16>, vector<256x128xbf16>, vector<256x128xf32> -> vector<256x128xf32>
      %52 = arith.addf %49, %51 : vector<256x128xf32>
      %c0_36 = arith.constant 0 : index
      %c640 = arith.constant 640 : index
      %53 = vector.load %arg6[%c0_36, %c640] : memref<1x1792xf32, #tpu.memory_space<vmem>>, vector<1x128xf32>
      %54 = vector.broadcast %53 : vector<1x128xf32> to vector<256x128xf32>
      %55 = arith.addf %52, %54 : vector<256x128xf32>
      %cst_37 = arith.constant 0.000000e+00 : f32
      %56 = vector.broadcast %cst_37 : f32 to vector<256x128xf32>
      %57 = arith.maximumf %55, %56 : vector<256x128xf32>
      %58 = arith.truncf %57 : vector<256x128xf32> to vector<256x128xbf16>
      %c768 = arith.constant 768 : index
      %c0_38 = arith.constant 0 : index
      %59 = vector.load %arg5[%c768, %c0_38] : memref<1792x384xbf16, #tpu.memory_space<vmem>>, vector<128x128xbf16>
      %cst_39 = arith.constant dense<0.000000e+00> : vector<256x128xf32>
      %60 = tpu.matmul %58, %59, %cst_39 {dimension_numbers = #tpu.dot_dimension_numbers<[1], [0], [0], [1], [0, 0, 1, 1], [], []>} : vector<256x128xbf16>, vector<128x128xbf16>, vector<256x128xf32> -> vector<256x128xf32>
      %c0_40 = arith.constant 0 : index
      %c768_41 = arith.constant 768 : index
      %61 = vector.load %arg6[%c0_40, %c768_41] : memref<1x1792xf32, #tpu.memory_space<vmem>>, vector<1x128xf32>
      %62 = vector.broadcast %61 : vector<1x128xf32> to vector<256x128xf32>
      %63 = arith.addf %60, %62 : vector<256x128xf32>
      %cst_42 = arith.constant 0.000000e+00 : f32
      %64 = vector.broadcast %cst_42 : f32 to vector<256x128xf32>
      %65 = arith.maximumf %63, %64 : vector<256x128xf32>
      %66 = arith.truncf %65 : vector<256x128xf32> to vector<256x128xbf16>
      %c896 = arith.constant 896 : index
      %c0_43 = arith.constant 0 : index
      %67 = vector.load %arg5[%c896, %c0_43] : memref<1792x384xbf16, #tpu.memory_space<vmem>>, vector<128x384xbf16>
      %cst_44 = arith.constant dense<0.000000e+00> : vector<256x384xf32>
      %68 = tpu.matmul %66, %67, %cst_44 {dimension_numbers = #tpu.dot_dimension_numbers<[1], [0], [0], [1], [0, 0, 1, 1], [], []>} : vector<256x128xbf16>, vector<128x384xbf16>, vector<256x384xf32> -> vector<256x384xf32>
      %c0_45 = arith.constant 0 : index
      %c896_46 = arith.constant 896 : index
      %69 = vector.load %arg6[%c0_45, %c896_46] : memref<1x1792xf32, #tpu.memory_space<vmem>>, vector<1x384xf32>
      %70 = vector.broadcast %69 : vector<1x384xf32> to vector<256x384xf32>
      %71 = arith.addf %68, %70 : vector<256x384xf32>
      %cst_47 = arith.constant 0.000000e+00 : f32
      %72 = vector.broadcast %cst_47 : f32 to vector<256x384xf32>
      %73 = arith.maximumf %71, %72 : vector<256x384xf32>
      %74 = arith.truncf %73 : vector<256x384xf32> to vector<256x384xbf16>
      %c1024 = arith.constant 1024 : index
      %c0_48 = arith.constant 0 : index
      %75 = vector.load %arg5[%c1024, %c0_48] : memref<1792x384xbf16, #tpu.memory_space<vmem>>, vector<384x256xbf16>
      %cst_49 = arith.constant dense<0.000000e+00> : vector<256x256xf32>
      %76 = tpu.matmul %74, %75, %cst_49 {dimension_numbers = #tpu.dot_dimension_numbers<[1], [0], [0], [1], [0, 0, 1, 1], [], []>} : vector<256x384xbf16>, vector<384x256xbf16>, vector<256x256xf32> -> vector<256x256xf32>
      %c0_50 = arith.constant 0 : index
      %c1280 = arith.constant 1280 : index
      %77 = vector.load %arg6[%c0_50, %c1280] : memref<1x1792xf32, #tpu.memory_space<vmem>>, vector<1x256xf32>
      %78 = vector.broadcast %77 : vector<1x256xf32> to vector<256x256xf32>
      %79 = arith.addf %76, %78 : vector<256x256xf32>
      %cst_51 = arith.constant 0.000000e+00 : f32
      %80 = vector.broadcast %cst_51 : f32 to vector<256x256xf32>
      %81 = arith.maximumf %79, %80 : vector<256x256xf32>
      %82 = arith.truncf %81 : vector<256x256xf32> to vector<256x256xbf16>
      %c1408 = arith.constant 1408 : index
      %c0_52 = arith.constant 0 : index
      %83 = vector.load %arg5[%c1408, %c0_52] : memref<1792x384xbf16, #tpu.memory_space<vmem>>, vector<256x128xbf16>
      %cst_53 = arith.constant dense<0.000000e+00> : vector<256x128xf32>
      %84 = tpu.matmul %82, %83, %cst_53 {dimension_numbers = #tpu.dot_dimension_numbers<[1], [0], [0], [1], [0, 0, 1, 1], [], []>} : vector<256x256xbf16>, vector<256x128xbf16>, vector<256x128xf32> -> vector<256x128xf32>
      %c0_54 = arith.constant 0 : index
      %c1536 = arith.constant 1536 : index
      %85 = vector.load %arg6[%c0_54, %c1536] : memref<1x1792xf32, #tpu.memory_space<vmem>>, vector<1x128xf32>
      %86 = vector.broadcast %85 : vector<1x128xf32> to vector<256x128xf32>
      %87 = arith.addf %84, %86 : vector<256x128xf32>
      %cst_55 = arith.constant 0.000000e+00 : f32
      %88 = vector.broadcast %cst_55 : f32 to vector<256x128xf32>
      %89 = arith.maximumf %87, %88 : vector<256x128xf32>
      %90 = arith.truncf %89 : vector<256x128xf32> to vector<256x128xbf16>
      %c1664 = arith.constant 1664 : index
      %c0_56 = arith.constant 0 : index
      %91 = vector.load %arg5[%c1664, %c0_56] : memref<1792x384xbf16, #tpu.memory_space<vmem>>, vector<128x128xbf16>
      %cst_57 = arith.constant dense<0.000000e+00> : vector<256x128xf32>
      %92 = tpu.matmul %90, %91, %cst_57 {dimension_numbers = #tpu.dot_dimension_numbers<[1], [0], [0], [1], [0, 0, 1, 1], [], []>} : vector<256x128xbf16>, vector<128x128xbf16>, vector<256x128xf32> -> vector<256x128xf32>
      %c0_58 = arith.constant 0 : index
      %c1664_59 = arith.constant 1664 : index
      %93 = vector.load %arg6[%c0_58, %c1664_59] : memref<1x1792xf32, #tpu.memory_space<vmem>>, vector<1x128xf32>
      %94 = vector.broadcast %93 : vector<1x128xf32> to vector<256x128xf32>
      %95 = arith.addf %92, %94 : vector<256x128xf32>
      %96 = arith.addf %47, %95 : vector<256x128xf32>
      %c0_60 = arith.constant 0 : index
      %c0_61 = arith.constant 0 : index
      %97 = vector.load %arg7[%c0_60, %c0_61] : memref<256x128xf32, #tpu.memory_space<vmem>>, vector<256x128xf32>
      tpu.vector_store %arg7[%c0_60, %c0_61], %96 {strides = array<i32>} : memref<256x128xf32, #tpu.memory_space<vmem>>, vector<256x128xf32>,
    } else {
    }
    return
  }
  func.func @transform_0(%arg0: i32, %arg1: i32) -> (i32, i32) {
    %c0_i32 = arith.constant 0 : i32
    return %arg0, %arg1 : i32, i32
  }
  func.func @transform_1(%arg0: i32, %arg1: i32) -> (i32, i32) {
    %c0_i32 = arith.constant 0 : i32
    %c0_i32_0 = arith.constant 0 : i32
    return %arg1, %c0_i32 : i32, i32
  }
  func.func @transform_2(%arg0: i32, %arg1: i32) -> (i32, i32) {
    %c0_i32 = arith.constant 0 : i32
    %c0_i32_0 = arith.constant 0 : i32
    %c0_i32_1 = arith.constant 0 : i32
    return %c0_i32, %c0_i32_0 : i32, i32
  }
  func.func @transform_3(%arg0: i32, %arg1: i32) -> (i32, i32) {
    %c0_i32 = arith.constant 0 : i32
    %c0_i32_0 = arith.constant 0 : i32
    %c0_i32_1 = arith.constant 0 : i32
    return %c0_i32, %c0_i32_0 : i32, i32
  }
  func.func @transform_4(%arg0: i32, %arg1: i32) -> (i32, i32) {
    %c0_i32 = arith.constant 0 : i32
    %c0_i32_0 = arith.constant 0 : i32
    %c0_i32_1 = arith.constant 0 : i32
    return %c0_i32, %c0_i32_0 : i32, i32
  }
  func.func @transform_5(%arg0: i32, %arg1: i32) -> (i32, i32) {
    %c0_i32 = arith.constant 0 : i32
    %c0_i32_0 = arith.constant 0 : i32
    return %arg0, %c0_i32 : i32, i32
  }
}

module attributes {stable_mosaic.version = 11 : i64} {
  func.func @amd_dla_kernel(%arg0: i32, %arg1: i32, %arg2: memref<256x128xbf16, #tpu.memory_space<vmem>>, %arg3: memref<128x256xbf16, #tpu.memory_space<vmem>>, %arg4: memref<256x256xbf16, #tpu.memory_space<vmem>>, %arg5: memref<1792x384xbf16, #tpu.memory_space<vmem>>, %arg6: memref<1x1792xf32, #tpu.memory_space<vmem>>, %arg7: memref<256x128xf32, #tpu.memory_space<vmem>>, %arg8: memref<256x256xf32, #tpu.memory_space<vmem>>) attributes {dimension_semantics = [#tpu.dimension_semantics<parallel>, #tpu.dimension_semantics<arbitrary>], iteration_bounds = array<i64: 1, 1>, scalar_prefetch = 0 : i64, scratch_operands = 1 : i64, tpu.core_type = #tpu.core_type<tc>, window_params = [{transform_indices = @transform_0, window_bounds = array<i64: 256, 128>}, {transform_indices = @transform_1, window_bounds = array<i64: 128, 256>}, {pipeline_mode = #tpu.pipeline_mode<synchronous>, transform_indices = @transform_2, window_bounds = array<i64: 256, 256>}, {pipeline_mode = #tpu.pipeline_mode<synchronous>, transform_indices = @transform_3, window_bounds = array<i64: 1792, 384>}, {pipeline_mode = #tpu.pipeline_mode<synchronous>, transform_indices = @transform_4, window_bounds = array<i64: 1, 1792>}, {transform_indices = @transform_5, window_bounds = array<i64: 256, 128>}]} {
    %c0_i32 = arith.constant 0 : i32
    %0 = arith.cmpi eq, %arg1, %c0_i32 : i32
    %1 = arith.extui %0 : i1 to i32
    %c0_i32_0 = arith.constant 0 : i32
    %2 = arith.cmpi ne, %1, %c0_i32_0 : i32
    scf.if %2 {
      %cst_10 = arith.constant 0.000000e+00 : f32
      %12 = vector.broadcast %cst_10 : f32 to vector<256x256xf32>
      %c0_11 = arith.constant 0 : index
      %c0_12 = arith.constant 0 : index
      %13 = vector.load %arg8[%c0_11, %c0_12] : memref<256x256xf32, #tpu.memory_space<vmem>>, vector<256x256xf32>
      tpu.vector_store %arg8[%c0_11, %c0_12], %12 {strides = array<i32>} : memref<256x256xf32, #tpu.memory_space<vmem>>, vector<256x256xf32>,
    } else {
    }
    %c0 = arith.constant 0 : index
    %c0_1 = arith.constant 0 : index
    %3 = vector.load %arg8[%c0, %c0_1] : memref<256x256xf32, #tpu.memory_space<vmem>>, vector<256x256xf32>
    %c0_2 = arith.constant 0 : index
    %c0_3 = arith.constant 0 : index
    %4 = vector.load %arg2[%c0_2, %c0_3] : memref<256x128xbf16, #tpu.memory_space<vmem>>, vector<256x128xbf16>
    %c0_4 = arith.constant 0 : index
    %c0_5 = arith.constant 0 : index
    %5 = vector.load %arg3[%c0_4, %c0_5] : memref<128x256xbf16, #tpu.memory_space<vmem>>, vector<128x256xbf16>
    %cst = arith.constant dense<0.000000e+00> : vector<256x256xf32>
    %6 = tpu.matmul %4, %5, %cst {dimension_numbers = #tpu.dot_dimension_numbers<[1], [0], [0], [1], [0, 0, 1, 1], [], []>} : vector<256x128xbf16>, vector<128x256xbf16>, vector<256x256xf32> -> vector<256x256xf32>
    %7 = arith.addf %3, %6 : vector<256x256xf32>
    %c0_6 = arith.constant 0 : index
    %c0_7 = arith.constant 0 : index
    %8 = vector.load %arg8[%c0_6, %c0_7] : memref<256x256xf32, #tpu.memory_space<vmem>>, vector<256x256xf32>
    tpu.vector_store %arg8[%c0_6, %c0_7], %7 {strides = array<i32>} : memref<256x256xf32, #tpu.memory_space<vmem>>, vector<256x256xf32>,
    %c0_i32_8 = arith.constant 0 : i32
    %9 = arith.cmpi eq, %arg1, %c0_i32_8 : i32
    %10 = arith.extui %9 : i1 to i32
    %c0_i32_9 = arith.constant 0 : i32
    %11 = arith.cmpi ne, %10, %c0_i32_9 : i32
    scf.if %11 {
      %c0_10 = arith.constant 0 : index
      %c0_11 = arith.constant 0 : index
      %12 = vector.load %arg8[%c0_10, %c0_11] : memref<256x256xf32, #tpu.memory_space<vmem>>, vector<256x256xf32>
      %c0_12 = arith.constant 0 : index
      %c0_13 = arith.constant 0 : index
      %13 = vector.load %arg6[%c0_12, %c0_13] : memref<1x1792xf32, #tpu.memory_space<vmem>>, vector<1x256xf32>
      %14 = vector.broadcast %13 : vector<1x256xf32> to vector<256x256xf32>
      %15 = arith.addf %12, %14 : vector<256x256xf32>
      %cst_14 = arith.constant 0.000000e+00 : f32
      %16 = vector.broadcast %cst_14 : f32 to vector<256x256xf32>
      %17 = arith.cmpf ogt, %15, %16 : vector<256x256xf32>
      %18 = math.exp %15 : vector<256x256xf32>
      %cst_15 = arith.constant 1.000000e+00 : f32
      %19 = vector.broadcast %cst_15 : f32 to vector<256x256xf32>
      %20 = arith.subf %18, %19 : vector<256x256xf32>
      %cst_16 = arith.constant 1.67326319 : f32
      %21 = vector.broadcast %cst_16 : f32 to vector<256x256xf32>
      %22 = arith.mulf %21, %20 : vector<256x256xf32>
      %23 = arith.select %17, %15, %22 : vector<256x256xi1>, vector<256x256xf32>
      %cst_17 = arith.constant 1.05070102 : f32
      %24 = vector.broadcast %cst_17 : f32 to vector<256x256xf32>
      %25 = arith.mulf %24, %23 : vector<256x256xf32>
      %26 = arith.truncf %25 : vector<256x256xf32> to vector<256x256xbf16>
      %c0_18 = arith.constant 0 : index
      %c0_19 = arith.constant 0 : index
      %27 = vector.load %arg4[%c0_18, %c0_19] : memref<256x256xbf16, #tpu.memory_space<vmem>>, vector<256x256xbf16>
      %cst_20 = arith.constant dense<0.000000e+00> : vector<256x256xf32>
      %28 = tpu.matmul %26, %27, %cst_20 {dimension_numbers = #tpu.dot_dimension_numbers<[1], [0], [0], [1], [0, 0, 1, 1], [], []>} : vector<256x256xbf16>, vector<256x256xbf16>, vector<256x256xf32> -> vector<256x256xf32>
      %c0_21 = arith.constant 0 : index
      %c256 = arith.constant 256 : index
      %29 = vector.load %arg6[%c0_21, %c256] : memref<1x1792xf32, #tpu.memory_space<vmem>>, vector<1x256xf32>
      %30 = vector.broadcast %29 : vector<1x256xf32> to vector<256x256xf32>
      %31 = arith.addf %28, %30 : vector<256x256xf32>
      %cst_22 = arith.constant 0.000000e+00 : f32
      %32 = vector.broadcast %cst_22 : f32 to vector<256x256xf32>
      %33 = arith.cmpf ogt, %31, %32 : vector<256x256xf32>
      %34 = math.exp %31 : vector<256x256xf32>
      %cst_23 = arith.constant 1.000000e+00 : f32
      %35 = vector.broadcast %cst_23 : f32 to vector<256x256xf32>
      %36 = arith.subf %34, %35 : vector<256x256xf32>
      %cst_24 = arith.constant 1.67326319 : f32
      %37 = vector.broadcast %cst_24 : f32 to vector<256x256xf32>
      %38 = arith.mulf %37, %36 : vector<256x256xf32>
      %39 = arith.select %33, %31, %38 : vector<256x256xi1>, vector<256x256xf32>
      %cst_25 = arith.constant 1.05070102 : f32
      %40 = vector.broadcast %cst_25 : f32 to vector<256x256xf32>
      %41 = arith.mulf %40, %39 : vector<256x256xf32>
      %42 = arith.truncf %41 : vector<256x256xf32> to vector<256x256xbf16>
      %c0_26 = arith.constant 0 : index
      %c0_27 = arith.constant 0 : index
      %43 = vector.load %arg5[%c0_26, %c0_27] : memref<1792x384xbf16, #tpu.memory_space<vmem>>, vector<256x128xbf16>
      %cst_28 = arith.constant dense<0.000000e+00> : vector<256x128xf32>
      %44 = tpu.matmul %42, %43, %cst_28 {dimension_numbers = #tpu.dot_dimension_numbers<[1], [0], [0], [1], [0, 0, 1, 1], [], []>} : vector<256x256xbf16>, vector<256x128xbf16>, vector<256x128xf32> -> vector<256x128xf32>
      %c0_29 = arith.constant 0 : index
      %c512 = arith.constant 512 : index
      %45 = vector.load %arg6[%c0_29, %c512] : memref<1x1792xf32, #tpu.memory_space<vmem>>, vector<1x128xf32>
      %46 = vector.broadcast %45 : vector<1x128xf32> to vector<256x128xf32>
      %47 = arith.addf %44, %46 : vector<256x128xf32>
      %c256_30 = arith.constant 256 : index
      %c0_31 = arith.constant 0 : index
      %48 = vector.load %arg5[%c256_30, %c0_31] : memref<1792x384xbf16, #tpu.memory_space<vmem>>, vector<256x128xbf16>
      %cst_32 = arith.constant dense<0.000000e+00> : vector<256x128xf32>
      %49 = tpu.matmul %26, %48, %cst_32 {dimension_numbers = #tpu.dot_dimension_numbers<[1], [0], [0], [1], [0, 0, 1, 1], [], []>} : vector<256x256xbf16>, vector<256x128xbf16>, vector<256x128xf32> -> vector<256x128xf32>
      %c512_33 = arith.constant 512 : index
      %c0_34 = arith.constant 0 : index
      %50 = vector.load %arg5[%c512_33, %c0_34] : memref<1792x384xbf16, #tpu.memory_space<vmem>>, vector<256x128xbf16>
      %cst_35 = arith.constant dense<0.000000e+00> : vector<256x128xf32>
      %51 = tpu.matmul %42, %50, %cst_35 {dimension_numbers = #tpu.dot_dimension_numbers<[1], [0], [0], [1], [0, 0, 1, 1], [], []>} : vector<256x256xbf16>, vector<256x128xbf16>, vector<256x128xf32> -> vector<256x128xf32>
      %52 = arith.addf %49, %51 : vector<256x128xf32>
      %c0_36 = arith.constant 0 : index
      %c640 = arith.constant 640 : index
      %53 = vector.load %arg6[%c0_36, %c640] : memref<1x1792xf32, #tpu.memory_space<vmem>>, vector<1x128xf32>
      %54 = vector.broadcast %53 : vector<1x128xf32> to vector<256x128xf32>
      %55 = arith.addf %52, %54 : vector<256x128xf32>
      %cst_37 = arith.constant 0.000000e+00 : f32
      %56 = vector.broadcast %cst_37 : f32 to vector<256x128xf32>
      %57 = arith.maximumf %55, %56 : vector<256x128xf32>
      %58 = arith.truncf %57 : vector<256x128xf32> to vector<256x128xbf16>
      %c768 = arith.constant 768 : index
      %c0_38 = arith.constant 0 : index
      %59 = vector.load %arg5[%c768, %c0_38] : memref<1792x384xbf16, #tpu.memory_space<vmem>>, vector<128x128xbf16>
      %cst_39 = arith.constant dense<0.000000e+00> : vector<256x128xf32>
      %60 = tpu.matmul %58, %59, %cst_39 {dimension_numbers = #tpu.dot_dimension_numbers<[1], [0], [0], [1], [0, 0, 1, 1], [], []>} : vector<256x128xbf16>, vector<128x128xbf16>, vector<256x128xf32> -> vector<256x128xf32>
      %c0_40 = arith.constant 0 : index
      %c768_41 = arith.constant 768 : index
      %61 = vector.load %arg6[%c0_40, %c768_41] : memref<1x1792xf32, #tpu.memory_space<vmem>>, vector<1x128xf32>
      %62 = vector.broadcast %61 : vector<1x128xf32> to vector<256x128xf32>
      %63 = arith.addf %60, %62 : vector<256x128xf32>
      %cst_42 = arith.constant 0.000000e+00 : f32
      %64 = vector.broadcast %cst_42 : f32 to vector<256x128xf32>
      %65 = arith.maximumf %63, %64 : vector<256x128xf32>
      %66 = arith.truncf %65 : vector<256x128xf32> to vector<256x128xbf16>
      %c896 = arith.constant 896 : index
      %c0_43 = arith.constant 0 : index
      %67 = vector.load %arg5[%c896, %c0_43] : memref<1792x384xbf16, #tpu.memory_space<vmem>>, vector<128x384xbf16>
      %cst_44 = arith.constant dense<0.000000e+00> : vector<256x384xf32>
      %68 = tpu.matmul %66, %67, %cst_44 {dimension_numbers = #tpu.dot_dimension_numbers<[1], [0], [0], [1], [0, 0, 1, 1], [], []>} : vector<256x128xbf16>, vector<128x384xbf16>, vector<256x384xf32> -> vector<256x384xf32>
      %c0_45 = arith.constant 0 : index
      %c896_46 = arith.constant 896 : index
      %69 = vector.load %arg6[%c0_45, %c896_46] : memref<1x1792xf32, #tpu.memory_space<vmem>>, vector<1x384xf32>
      %70 = vector.broadcast %69 : vector<1x384xf32> to vector<256x384xf32>
      %71 = arith.addf %68, %70 : vector<256x384xf32>
      %cst_47 = arith.constant 0.000000e+00 : f32
      %72 = vector.broadcast %cst_47 : f32 to vector<256x384xf32>
      %73 = arith.maximumf %71, %72 : vector<256x384xf32>
      %74 = arith.truncf %73 : vector<256x384xf32> to vector<256x384xbf16>
      %c1024 = arith.constant 1024 : index
      %c0_48 = arith.constant 0 : index
      %75 = vector.load %arg5[%c1024, %c0_48] : memref<1792x384xbf16, #tpu.memory_space<vmem>>, vector<384x256xbf16>
      %cst_49 = arith.constant dense<0.000000e+00> : vector<256x256xf32>
      %76 = tpu.matmul %74, %75, %cst_49 {dimension_numbers = #tpu.dot_dimension_numbers<[1], [0], [0], [1], [0, 0, 1, 1], [], []>} : vector<256x384xbf16>, vector<384x256xbf16>, vector<256x256xf32> -> vector<256x256xf32>
      %c0_50 = arith.constant 0 : index
      %c1280 = arith.constant 1280 : index
      %77 = vector.load %arg6[%c0_50, %c1280] : memref<1x1792xf32, #tpu.memory_space<vmem>>, vector<1x256xf32>
      %78 = vector.broadcast %77 : vector<1x256xf32> to vector<256x256xf32>
      %79 = arith.addf %76, %78 : vector<256x256xf32>
      %cst_51 = arith.constant 0.000000e+00 : f32
      %80 = vector.broadcast %cst_51 : f32 to vector<256x256xf32>
      %81 = arith.maximumf %79, %80 : vector<256x256xf32>
      %82 = arith.truncf %81 : vector<256x256xf32> to vector<256x256xbf16>
      %c1408 = arith.constant 1408 : index
      %c0_52 = arith.constant 0 : index
      %83 = vector.load %arg5[%c1408, %c0_52] : memref<1792x384xbf16, #tpu.memory_space<vmem>>, vector<256x128xbf16>
      %cst_53 = arith.constant dense<0.000000e+00> : vector<256x128xf32>
      %84 = tpu.matmul %82, %83, %cst_53 {dimension_numbers = #tpu.dot_dimension_numbers<[1], [0], [0], [1], [0, 0, 1, 1], [], []>} : vector<256x256xbf16>, vector<256x128xbf16>, vector<256x128xf32> -> vector<256x128xf32>
      %c0_54 = arith.constant 0 : index
      %c1536 = arith.constant 1536 : index
      %85 = vector.load %arg6[%c0_54, %c1536] : memref<1x1792xf32, #tpu.memory_space<vmem>>, vector<1x128xf32>
      %86 = vector.broadcast %85 : vector<1x128xf32> to vector<256x128xf32>
      %87 = arith.addf %84, %86 : vector<256x128xf32>
      %cst_55 = arith.constant 0.000000e+00 : f32
      %88 = vector.broadcast %cst_55 : f32 to vector<256x128xf32>
      %89 = arith.maximumf %87, %88 : vector<256x128xf32>
      %90 = arith.truncf %89 : vector<256x128xf32> to vector<256x128xbf16>
      %c1664 = arith.constant 1664 : index
      %c0_56 = arith.constant 0 : index
      %91 = vector.load %arg5[%c1664, %c0_56] : memref<1792x384xbf16, #tpu.memory_space<vmem>>, vector<128x128xbf16>
      %cst_57 = arith.constant dense<0.000000e+00> : vector<256x128xf32>
      %92 = tpu.matmul %90, %91, %cst_57 {dimension_numbers = #tpu.dot_dimension_numbers<[1], [0], [0], [1], [0, 0, 1, 1], [], []>} : vector<256x128xbf16>, vector<128x128xbf16>, vector<256x128xf32> -> vector<256x128xf32>
      %c0_58 = arith.constant 0 : index
      %c1664_59 = arith.constant 1664 : index
      %93 = vector.load %arg6[%c0_58, %c1664_59] : memref<1x1792xf32, #tpu.memory_space<vmem>>, vector<1x128xf32>
      %94 = vector.broadcast %93 : vector<1x128xf32> to vector<256x128xf32>
      %95 = arith.addf %92, %94 : vector<256x128xf32>
      %96 = arith.addf %47, %95 : vector<256x128xf32>
      %c0_60 = arith.constant 0 : index
      %c0_61 = arith.constant 0 : index
      %97 = vector.load %arg7[%c0_60, %c0_61] : memref<256x128xf32, #tpu.memory_space<vmem>>, vector<256x128xf32>
      tpu.vector_store %arg7[%c0_60, %c0_61], %96 {strides = array<i32>} : memref<256x128xf32, #tpu.memory_space<vmem>>, vector<256x128xf32>,
    } else {
    }
    return
  }
  func.func @transform_0(%arg0: i32, %arg1: i32) -> (i32, i32) {
    %c0_i32 = arith.constant 0 : i32
    return %arg0, %arg1 : i32, i32
  }
  func.func @transform_1(%arg0: i32, %arg1: i32) -> (i32, i32) {
    %c0_i32 = arith.constant 0 : i32
    %c0_i32_0 = arith.constant 0 : i32
    return %arg1, %c0_i32 : i32, i32
  }
  func.func @transform_2(%arg0: i32, %arg1: i32) -> (i32, i32) {
    %c0_i32 = arith.constant 0 : i32
    %c0_i32_0 = arith.constant 0 : i32
    %c0_i32_1 = arith.constant 0 : i32
    return %c0_i32, %c0_i32_0 : i32, i32
  }
  func.func @transform_3(%arg0: i32, %arg1: i32) -> (i32, i32) {
    %c0_i32 = arith.constant 0 : i32
    %c0_i32_0 = arith.constant 0 : i32
    %c0_i32_1 = arith.constant 0 : i32
    return %c0_i32, %c0_i32_0 : i32, i32
  }
  func.func @transform_4(%arg0: i32, %arg1: i32) -> (i32, i32) {
    %c0_i32 = arith.constant 0 : i32
    %c0_i32_0 = arith.constant 0 : i32
    %c0_i32_1 = arith.constant 0 : i32
    return %c0_i32, %c0_i32_0 : i32, i32
  }
  func.func @transform_5(%arg0: i32, %arg1: i32) -> (i32, i32) {
    %c0_i32 = arith.constant 0 : i32
    %c0_i32_0 = arith.constant 0 : i32
    return %arg0, %c0_i32 : i32, i32
  }
}

</mosaic_0001>

<llo_original>
// kernel: tpu_custom_call.1
$region0: #{tpu_custom_call.1}
  #allocation0 [shape = 'u32[]', space=smem, size = 0x4, offset = 0x4, fixed_abs, tag = 'smem constant byte address 0x4 - core index']
  #allocation1 [shape = 'u32[72,128]{1,0:T(1,128)}', space=vmem, size = 0x9000, scoped, tag = 'internal scratch']
  #allocation2 [shape = 'f32[256,256]{1,0:T(8,128)}', space=vmem, size = 0x40000, scoped, tag = 'scratch operand']
  %s0 = inlined_call_operand.hbm [shape: bf16[256,128], index: 0, kind: input, shape index: {}]
  %s1 = inlined_call_operand.hbm [shape: bf16[128,256], index: 1, kind: input, shape index: {}]
  %s2 = inlined_call_operand.hbm [shape: bf16[256,256], index: 2, kind: input, shape index: {}]
  %s3 = inlined_call_operand.hbm [shape: bf16[1792,384], index: 3, kind: input, shape index: {}]
  %s4 = inlined_call_operand.hbm [shape: f32[1,1792], index: 4, kind: input, shape index: {}]
  %s5 = inlined_call_operand.hbm [shape: f32[256,128], index: 5, kind: output, shape index: {}]
  %s6 = sld [smem:[#allocation0]]
  $region58: #{tpu_custom_call.1} parent=0
    _
  %s8 = ssub.s32 1, %s6
  %s9 = scalar_select 0, %s8, %s6
  $region1: #{tpu_custom_call.1} parent=0
    #allocation3 [shape = 'u8[65536]{0}', space=vmem, size = 0x10000, scoped, tag = 'input window, operand 0, single buffered']
    #allocation4 [shape = 's32[1]{0}', space=sflag, size = 0x4, scoped, tag = 'scoped memory for tpu_custom_call.1']
    #allocation5 [shape = 's32[1]{0}', space=sflag, size = 0x4, scoped, tag = 'scoped memory for tpu_custom_call.1']
    #allocation6 [shape = 'u8[65536]{0}', space=vmem, size = 0x10000, scoped, tag = 'input window, operand 1, single buffered']
    #allocation7 [shape = 's32[1]{0}', space=sflag, size = 0x4, scoped, tag = 'scoped memory for tpu_custom_call.1']
    #allocation8 [shape = 'u8[131072]{0}', space=vmem, size = 0x20000, scoped, tag = 'input window, operand 2, single buffered']
    #allocation9 [shape = 'u8[1376256]{0}', space=vmem, size = 0x150000, scoped, tag = 'input window, operand 3, single buffered']
    #allocation10 [shape = 's32[1]{0}', space=sflag, size = 0x4, scoped, tag = 'scoped memory for tpu_custom_call.1']
    #allocation11 [shape = 'u8[7168]{0}', space=vmem, size = 0x1c00, scoped, tag = 'input window, operand 4, single buffered']
    #allocation12 [shape = 'u8[131072]{0}', space=vmem, size = 0x20000, scoped, tag = 'output window, operand 0, single buffered']
    %10 = vsyncpa [#allocation4], 0
    %11 = vsyncpa [#allocation7], 0
    %12 = vsyncpa [#allocation10], 0
    %13 = vsyncpa [#allocation5], 0
    // Predicated region
    $region2: #{tpu_custom_call.1} parent=1 // pred_check
      _
    $region3: #{tpu_custom_call.1} parent=1 // pred_check_branch
      %15 = sbr.rel (0) target = $region5
    $region4: #{tpu_custom_call.1} parent=1 // pred_region
      %17 = vsyncadd [#allocation4], 0
      %s18 = sshll.u32 %s0, 4
      %s19 = int_to_ptr.hbm [resolvable:$true] %s18
      %s20 = sshll.u32 [#allocation3], 4
      %s21 = int_to_ptr.vmem [resolvable:$true] %s20
      %26 = dma.hbm_to_vmem [thread:$0]  %s19, 2048, %s21, [#allocation4], 64, 64, 4
    $region5: #{tpu_custom_call.1} parent=1 // pred_fallthru
      _
    // Predicated region
    $region6: #{tpu_custom_call.1} parent=1 // pred_check
      _
    $region7: #{tpu_custom_call.1} parent=1 // pred_check_branch
      %28 = sbr.rel (0) target = $region9
    $region8: #{tpu_custom_call.1} parent=1 // pred_region
      %30 = vsyncadd [#allocation7], 0
      %s31 = sshll.u32 %s1, 4
      %s32 = int_to_ptr.hbm [resolvable:$true] %s31
      %s33 = sshll.u32 [#allocation6], 4
      %s34 = int_to_ptr.vmem [resolvable:$true] %s33
      %39 = dma.hbm_to_vmem [thread:$0]  %s32, 2048, %s34, [#allocation7], 128, 128, 8
    $region9: #{tpu_custom_call.1} parent=1 // pred_fallthru
      _
    // Predicated region
    $region10: #{tpu_custom_call.1} parent=1 // pred_check
      _
    $region11: #{tpu_custom_call.1} parent=1 // pred_check_branch
      %41 = sbr.rel (0) target = $region13
    $region12: #{tpu_custom_call.1} parent=1 // pred_region
      %43 = vsyncadd [#allocation7], 0
      %s44 = sshll.u32 %s2, 4
      %s45 = int_to_ptr.hbm [resolvable:$true] %s44
      %s46 = sshll.u32 [#allocation8], 4
      %s47 = int_to_ptr.vmem [resolvable:$true] %s46
      %52 = dma.hbm_to_vmem [thread:$0]  %s45, 4096, %s47, [#allocation7], 128, 128, 8
    $region13: #{tpu_custom_call.1} parent=1 // pred_fallthru
      _
    // Predicated region
    $region14: #{tpu_custom_call.1} parent=1 // pred_check
      _
    $region15: #{tpu_custom_call.1} parent=1 // pred_check_branch
      %54 = sbr.rel (0) target = $region17
    $region16: #{tpu_custom_call.1} parent=1 // pred_region
      %56 = vsyncadd [#allocation10], 0
      %s57 = sshll.u32 %s3, 4
      %s58 = int_to_ptr.hbm [resolvable:$true] %s57
      %s59 = sshll.u32 [#allocation9], 4
      %s60 = int_to_ptr.vmem [resolvable:$true] %s59
      %65 = dma.hbm_to_vmem [thread:$0]  %s58, 43008, %s60, [#allocation10], 192, 192, 12
    $region17: #{tpu_custom_call.1} parent=1 // pred_fallthru
      _
    // Predicated region
    $region18: #{tpu_custom_call.1} parent=1 // pred_check
      _
    $region19: #{tpu_custom_call.1} parent=1 // pred_check_branch
      %67 = sbr.rel (0) target = $region21
    $region20: #{tpu_custom_call.1} parent=1 // pred_region
      %69 = vsyncadd [#allocation10], 0
      %s71 = sshll.u32 %s4, 4
      %s72 = int_to_ptr.hbm [resolvable:$true] %s71
      %s73 = sshll.u32 [#allocation11], 4
      %s74 = int_to_ptr.vmem [resolvable:$true] %s73
      %76 = dma.hbm_to_vmem [thread:$0]  %s72, 224, %s74, [#allocation10]
    $region21: #{tpu_custom_call.1} parent=1 // pred_fallthru
      _
    // Predicated region
    $region22: #{tpu_custom_call.1} parent=1 // pred_check
      _
    $region23: #{tpu_custom_call.1} parent=1 // pred_check_branch
      %78 = sbr.rel (0) target = $region25
    $region24: #{tpu_custom_call.1} parent=1 // pred_region
      %80 = dma.done [#allocation4], 2048
    $region25: #{tpu_custom_call.1} parent=1 // pred_fallthru
      _
    // Predicated region
    $region26: #{tpu_custom_call.1} parent=1 // pred_check
      _
    $region27: #{tpu_custom_call.1} parent=1 // pred_check_branch
      %82 = sbr.rel (0) target = $region29
    $region28: #{tpu_custom_call.1} parent=1 // pred_region
      %84 = dma.done [#allocation7], 2048
    $region29: #{tpu_custom_call.1} parent=1 // pred_fallthru
      _
    // Predicated region
    $region30: #{tpu_custom_call.1} parent=1 // pred_check
      _
    $region31: #{tpu_custom_call.1} parent=1 // pred_check_branch
      %86 = sbr.rel (0) target = $region33
    $region32: #{tpu_custom_call.1} parent=1 // pred_region
      %88 = dma.done [#allocation7], 4096
    $region33: #{tpu_custom_call.1} parent=1 // pred_fallthru
      _
    // Predicated region
    $region34: #{tpu_custom_call.1} parent=1 // pred_check
      _
    $region35: #{tpu_custom_call.1} parent=1 // pred_check_branch
      %90 = sbr.rel (0) target = $region37
    $region36: #{tpu_custom_call.1} parent=1 // pred_region
      %92 = dma.done [#allocation10], 43008
    $region37: #{tpu_custom_call.1} parent=1 // pred_fallthru
      _
    // Predicated region
    $region38: #{tpu_custom_call.1} parent=1 // pred_check
      _
    $region39: #{tpu_custom_call.1} parent=1 // pred_check_branch
      %94 = sbr.rel (0) target = $region41
    $region40: #{tpu_custom_call.1} parent=1 // pred_region
      %96 = dma.done [#allocation10], 224
    $region41: #{tpu_custom_call.1} parent=1 // pred_fallthru
      _
    %p97 = scmp.eq.s32.totalorder 0, 0
    // Predicated region
    $region42: #{tpu_custom_call.1} parent=1 // pred_check
      %p98 = pneg %p97
    $region43: #{tpu_custom_call.1} parent=1 // pred_check_branch
      %100 = sbr.rel (%p98) target = $region45
    $region44: #{tpu_custom_call.1} parent=1 // pred_region
      %101 = vst [vmem:[#allocation2] sm:$0xff] 0.0
      %102 = vst [vmem:[#allocation2 + $0x8] sm:$0xff] 0.0
      %103 = vst [vmem:[#allocation2 + $0x10] sm:$0xff] 0.0
      %104 = vst [vmem:[#allocation2 + $0x18] sm:$0xff] 0.0
      %105 = vst [vmem:[#allocation2 + $0x20] sm:$0xff] 0.0
      %106 = vst [vmem:[#allocation2 + $0x28] sm:$0xff] 0.0
      %107 = vst [vmem:[#allocation2 + $0x30] sm:$0xff] 0.0
      %108 = vst [vmem:[#allocation2 + $0x38] sm:$0xff] 0.0
      %109 = vst [vmem:[#allocation2 + $0x40] sm:$0xff] 0.0
      %110 = vst [vmem:[#allocation2 + $0x48] sm:$0xff] 0.0
      %111 = vst [vmem:[#allocation2 + $0x50] sm:$0xff] 0.0
      %112 = vst [vmem:[#allocation2 + $0x58] sm:$0xff] 0.0
      %113 = vst [vmem:[#allocation2 + $0x60] sm:$0xff] 0.0
      %114 = vst [vmem:[#allocation2 + $0x68] sm:$0xff] 0.0
      %115 = vst [vmem:[#allocation2 + $0x70] sm:$0xff] 0.0
      %116 = vst [vmem:[#allocation2 + $0x78] sm:$0xff] 0.0
      %117 = vst [vmem:[#allocation2 + $0x80] sm:$0xff] 0.0
      %118 = vst [vmem:[#allocation2 + $0x88] sm:$0xff] 0.0
      %119 = vst [vmem:[#allocation2 + $0x90] sm:$0xff] 0.0
      %120 = vst [vmem:[#allocation2 + $0x98] sm:$0xff] 0.0
      %121 = vst [vmem:[#allocation2 + $0xa0] sm:$0xff] 0.0
      %122 = vst [vmem:[#allocation2 + $0xa8] sm:$0xff] 0.0
      %123 = vst [vmem:[#allocation2 + $0xb0] sm:$0xff] 0.0
      %124 = vst [vmem:[#allocation2 + $0xb8] sm:$0xff] 0.0
      %125 = vst [vmem:[#allocation2 + $0xc0] sm:$0xff] 0.0
      %126 = vst [vmem:[#allocation2 + $0xc8] sm:$0xff] 0.0
      %127 = vst [vmem:[#allocation2 + $0xd0] sm:$0xff] 0.0
      %128 = vst [vmem:[#allocation2 + $0xd8] sm:$0xff] 0.0
      %129 = vst [vmem:[#allocation2 + $0xe0] sm:$0xff] 0.0
      %130 = vst [vmem:[#allocation2 + $0xe8] sm:$0xff] 0.0
      %131 = vst [vmem:[#allocation2 + $0xf0] sm:$0xff] 0.0
      %132 = vst [vmem:[#allocation2 + $0xf8] sm:$0xff] 0.0
      %133 = vst [vmem:[#allocation2 + $0x100] sm:$0xff] 0.0
      %134 = vst [vmem:[#allocation2 + $0x108] sm:$0xff] 0.0
      %135 = vst [vmem:[#allocation2 + $0x110] sm:$0xff] 0.0
      %136 = vst [vmem:[#allocation2 + $0x118] sm:$0xff] 0.0
      %137 = vst [vmem:[#allocation2 + $0x120] sm:$0xff] 0.0
      %138 = vst [vmem:[#allocation2 + $0x128] sm:$0xff] 0.0
      %139 = vst [vmem:[#allocation2 + $0x130] sm:$0xff] 0.0
      %140 = vst [vmem:[#allocation2 + $0x138] sm:$0xff] 0.0
      %141 = vst [vmem:[#allocation2 + $0x140] sm:$0xff] 0.0
      %142 = vst [vmem:[#allocation2 + $0x148] sm:$0xff] 0.0
      %143 = vst [vmem:[#allocation2 + $0x150] sm:$0xff] 0.0
      %144 = vst [vmem:[#allocation2 + $0x158] sm:$0xff] 0.0
      %145 = vst [vmem:[#allocation2 + $0x160] sm:$0xff] 0.0
      %146 = vst [vmem:[#allocation2 + $0x168] sm:$0xff] 0.0
      %147 = vst [vmem:[#allocation2 + $0x170] sm:$0xff] 0.0
      %148 = vst [vmem:[#allocation2 + $0x178] sm:$0xff] 0.0
      %149 = vst [vmem:[#allocation2 + $0x180] sm:$0xff] 0.0
      %150 = vst [vmem:[#allocation2 + $0x188] sm:$0xff] 0.0
      %151 = vst [vmem:[#allocation2 + $0x190] sm:$0xff] 0.0
      %152 = vst [vmem:[#allocation2 + $0x198] sm:$0xff] 0.0
      %153 = vst [vmem:[#allocation2 + $0x1a0] sm:$0xff] 0.0
      %154 = vst [vmem:[#allocation2 + $0x1a8] sm:$0xff] 0.0
      %155 = vst [vmem:[#allocation2 + $0x1b0] sm:$0xff] 0.0
      %156 = vst [vmem:[#allocation2 + $0x1b8] sm:$0xff] 0.0
      %157 = vst [vmem:[#allocation2 + $0x1c0] sm:$0xff] 0.0
      %158 = vst [vmem:[#allocation2 + $0x1c8] sm:$0xff] 0.0
      %159 = vst [vmem:[#allocation2 + $0x1d0] sm:$0xff] 0.0
      %160 = vst [vmem:[#allocation2 + $0x1d8] sm:$0xff] 0.0
      %161 = vst [vmem:[#allocation2 + $0x1e0] sm:$0xff] 0.0
      %162 = vst [vmem:[#allocation2 + $0x1e8] sm:$0xff] 0.0
      %163 = vst [vmem:[#allocation2 + $0x1f0] sm:$0xff] 0.0
      %164 = vst [vmem:[#allocation2 + $0x1f8] sm:$0xff] 0.0
    $region45: #{tpu_custom_call.1} parent=1 // pred_fallthru
      _
    %v165 = vld [vmem:[#allocation2] sm:$0xff]
    %v166 = vld [vmem:[#allocation2 + $0x8] sm:$0xff]
    %v167 = vld [vmem:[#allocation2 + $0x10] sm:$0xff]
    %v168 = vld [vmem:[#allocation2 + $0x18] sm:$0xff]
    %v169 = vld [vmem:[#allocation2 + $0x20] sm:$0xff]
    %v170 = vld [vmem:[#allocation2 + $0x28] sm:$0xff]
    %v171 = vld [vmem:[#allocation2 + $0x30] sm:$0xff]
    %v172 = vld [vmem:[#allocation2 + $0x38] sm:$0xff]
    %v173 = vld [vmem:[#allocation2 + $0x40] sm:$0xff]
    %v174 = vld [vmem:[#allocation2 + $0x48] sm:$0xff]
    %v175 = vld [vmem:[#allocation2 + $0x50] sm:$0xff]
    %v176 = vld [vmem:[#allocation2 + $0x58] sm:$0xff]
    %v177 = vld [vmem:[#allocation2 + $0x60] sm:$0xff]
    %v178 = vld [vmem:[#allocation2 + $0x68] sm:$0xff]
    %v179 = vld [vmem:[#allocation2 + $0x70] sm:$0xff]
    %v180 = vld [vmem:[#allocation2 + $0x78] sm:$0xff]
    %v181 = vld [vmem:[#allocation2 + $0x80] sm:$0xff]
    %v182 = vld [vmem:[#allocation2 + $0x88] sm:$0xff]
    %v183 = vld [vmem:[#allocation2 + $0x90] sm:$0xff]
    %v184 = vld [vmem:[#allocation2 + $0x98] sm:$0xff]
    %v185 = vld [vmem:[#allocation2 + $0xa0] sm:$0xff]
    %v186 = vld [vmem:[#allocation2 + $0xa8] sm:$0xff]
    %v187 = vld [vmem:[#allocation2 + $0xb0] sm:$0xff]
    %v188 = vld [vmem:[#allocation2 + $0xb8] sm:$0xff]
    %v189 = vld [vmem:[#allocation2 + $0xc0] sm:$0xff]
    %v190 = vld [vmem:[#allocation2 + $0xc8] sm:$0xff]
    %v191 = vld [vmem:[#allocation2 + $0xd0] sm:$0xff]
    %v192 = vld [vmem:[#allocation2 + $0xd8] sm:$0xff]
    %v193 = vld [vmem:[#allocation2 + $0xe0] sm:$0xff]
    %v194 = vld [vmem:[#allocation2 + $0xe8] sm:$0xff]
    %v195 = vld [vmem:[#allocation2 + $0xf0] sm:$0xff]
    %v196 = vld [vmem:[#allocation2 + $0xf8] sm:$0xff]
    %v197 = vld [vmem:[#allocation2 + $0x100] sm:$0xff]
    %v198 = vld [vmem:[#allocation2 + $0x108] sm:$0xff]
    %v199 = vld [vmem:[#allocation2 + $0x110] sm:$0xff]
    %v200 = vld [vmem:[#allocation2 + $0x118] sm:$0xff]
    %v201 = vld [vmem:[#allocation2 + $0x120] sm:$0xff]
    %v202 = vld [vmem:[#allocation2 + $0x128] sm:$0xff]
    %v203 = vld [vmem:[#allocation2 + $0x130] sm:$0xff]
    %v204 = vld [vmem:[#allocation2 + $0x138] sm:$0xff]
    %v205 = vld [vmem:[#allocation2 + $0x140] sm:$0xff]
    %v206 = vld [vmem:[#allocation2 + $0x148] sm:$0xff]
    %v207 = vld [vmem:[#allocation2 + $0x150] sm:$0xff]
    %v208 = vld [vmem:[#allocation2 + $0x158] sm:$0xff]
    %v209 = vld [vmem:[#allocation2 + $0x160] sm:$0xff]
    %v210 = vld [vmem:[#allocation2 + $0x168] sm:$0xff]
    %v211 = vld [vmem:[#allocation2 + $0x170] sm:$0xff]
    %v212 = vld [vmem:[#allocation2 + $0x178] sm:$0xff]
    %v213 = vld [vmem:[#allocation2 + $0x180] sm:$0xff]
    %v214 = vld [vmem:[#allocation2 + $0x188] sm:$0xff]
    %v215 = vld [vmem:[#allocation2 + $0x190] sm:$0xff]
    %v216 = vld [vmem:[#allocation2 + $0x198] sm:$0xff]
    %v217 = vld [vmem:[#allocation2 + $0x1a0] sm:$0xff]
    %v218 = vld [vmem:[#allocation2 + $0x1a8] sm:$0xff]
    %v219 = vld [vmem:[#allocation2 + $0x1b0] sm:$0xff]
    %v220 = vld [vmem:[#allocation2 + $0x1b8] sm:$0xff]
    %v221 = vld [vmem:[#allocation2 + $0x1c0] sm:$0xff]
    %v222 = vld [vmem:[#allocation2 + $0x1c8] sm:$0xff]
    %v223 = vld [vmem:[#allocation2 + $0x1d0] sm:$0xff]
    %v224 = vld [vmem:[#allocation2 + $0x1d8] sm:$0xff]
    %v225 = vld [vmem:[#allocation2 + $0x1e0] sm:$0xff]
    %v226 = vld [vmem:[#allocation2 + $0x1e8] sm:$0xff]
    %v227 = vld [vmem:[#allocation2 + $0x1f0] sm:$0xff]
    %v228 = vld [vmem:[#allocation2 + $0x1f8] sm:$0xff]
    %v229 = vld [vmem:[#allocation3] sm:$0xf]
    %v230 = vld [vmem:[#allocation3 + $0x4] sm:$0xf]
    %v231 = vld [vmem:[#allocation3 + $0x8] sm:$0xf]
    %v232 = vld [vmem:[#allocation3 + $0xc] sm:$0xf]
    %v233 = vld [vmem:[#allocation3 + $0x10] sm:$0xf]
    %v234 = vld [vmem:[#allocation3 + $0x14] sm:$0xf]
    %v235 = vld [vmem:[#allocation3 + $0x18] sm:$0xf]
    %v236 = vld [vmem:[#allocation3 + $0x1c] sm:$0xf]
    %v237 = vld [vmem:[#allocation3 + $0x20] sm:$0xf]
    %v238 = vld [vmem:[#allocation3 + $0x24] sm:$0xf]
    %v239 = vld [vmem:[#allocation3 + $0x28] sm:$0xf]
    %v240 = vld [vmem:[#allocation3 + $0x2c] sm:$0xf]
    %v241 = vld [vmem:[#allocation3 + $0x30] sm:$0xf]
    %v242 = vld [vmem:[#allocation3 + $0x34] sm:$0xf]
    %v243 = vld [vmem:[#allocation3 + $0x38] sm:$0xf]
    %v244 = vld [vmem:[#allocation3 + $0x3c] sm:$0xf]
    %v245 = vld [vmem:[#allocation3 + $0x40] sm:$0xf]
    %v246 = vld [vmem:[#allocation3 + $0x44] sm:$0xf]
    %v247 = vld [vmem:[#allocation3 + $0x48] sm:$0xf]
    %v248 = vld [vmem:[#allocation3 + $0x4c] sm:$0xf]
    %v249 = vld [vmem:[#allocation3 + $0x50] sm:$0xf]
    %v250 = vld [vmem:[#allocation3 + $0x54] sm:$0xf]
    %v251 = vld [vmem:[#allocation3 + $0x58] sm:$0xf]
    %v252 = vld [vmem:[#allocation3 + $0x5c] sm:$0xf]
    %v253 = vld [vmem:[#allocation3 + $0x60] sm:$0xf]
    %v254 = vld [vmem:[#allocation3 + $0x64] sm:$0xf]
    %v255 = vld [vmem:[#allocation3 + $0x68] sm:$0xf]
    %v256 = vld [vmem:[#allocation3 + $0x6c] sm:$0xf]
    %v257 = vld [vmem:[#allocation3 + $0x70] sm:$0xf]
    %v258 = vld [vmem:[#allocation3 + $0x74] sm:$0xf]
    %v259 = vld [vmem:[#allocation3 + $0x78] sm:$0xf]
    %v260 = vld [vmem:[#allocation3 + $0x7c] sm:$0xf]
    %v261 = vld [vmem:[#allocation6] sm:$0xff]
    %v262 = vld [vmem:[#allocation6 + $0x8] sm:$0xff]
    %v263 = vld [vmem:[#allocation6 + $0x10] sm:$0xff]
    %v264 = vld [vmem:[#allocation6 + $0x18] sm:$0xff]
    %v265 = vld [vmem:[#allocation6 + $0x20] sm:$0xff]
    %v266 = vld [vmem:[#allocation6 + $0x28] sm:$0xff]
    %v267 = vld [vmem:[#allocation6 + $0x30] sm:$0xff]
    %v268 = vld [vmem:[#allocation6 + $0x38] sm:$0xff]
    %v269 = vld [vmem:[#allocation6 + $0x40] sm:$0xff]
    %v270 = vld [vmem:[#allocation6 + $0x48] sm:$0xff]
    %v271 = vld [vmem:[#allocation6 + $0x50] sm:$0xff]
    %v272 = vld [vmem:[#allocation6 + $0x58] sm:$0xff]
    %v273 = vld [vmem:[#allocation6 + $0x60] sm:$0xff]
    %v274 = vld [vmem:[#allocation6 + $0x68] sm:$0xff]
    %v275 = vld [vmem:[#allocation6 + $0x70] sm:$0xff]
    %v276 = vld [vmem:[#allocation6 + $0x78] sm:$0xff]
    %v309 = vunpack.c.l.b16 %v229
    %v310 = vunpack.c.l.b16 %v230
    %v311 = vunpack.c.l.b16 %v231
    %v312 = vunpack.c.l.b16 %v232
    %v313 = vunpack.c.l.b16 %v233
    %v314 = vunpack.c.l.b16 %v234
    %v315 = vunpack.c.l.b16 %v235
    %v316 = vunpack.c.l.b16 %v236
    %v317 = vunpack.c.l.b16 %v237
    %v318 = vunpack.c.l.b16 %v238
    %v319 = vunpack.c.l.b16 %v239
    %v320 = vunpack.c.l.b16 %v240
    %v321 = vunpack.c.l.b16 %v241
    %v322 = vunpack.c.l.b16 %v242
    %v323 = vunpack.c.l.b16 %v243
    %v324 = vunpack.c.l.b16 %v244
    %v325 = vunpack.c.l.b16 %v245
    %v326 = vunpack.c.l.b16 %v246
    %v327 = vunpack.c.l.b16 %v247
    %v328 = vunpack.c.l.b16 %v248
    %v329 = vunpack.c.l.b16 %v249
    %v330 = vunpack.c.l.b16 %v250
    %v331 = vunpack.c.l.b16 %v251
    %v332 = vunpack.c.l.b16 %v252
    %v333 = vunpack.c.l.b16 %v253
    %v334 = vunpack.c.l.b16 %v254
    %v335 = vunpack.c.l.b16 %v255
    %v336 = vunpack.c.l.b16 %v256
    %v337 = vunpack.c.l.b16 %v257
    %v338 = vunpack.c.l.b16 %v258
    %v339 = vunpack.c.l.b16 %v259
    %v340 = vunpack.c.l.b16 %v260
    %v341 = vpack.c.b16 %v310, %v309
    %v342 = vpack.c.b16 %v312, %v311
    %v343 = vpack.c.b16 %v314, %v313
    %v344 = vpack.c.b16 %v316, %v315
    %v345 = vpack.c.b16 %v318, %v317
    %v346 = vpack.c.b16 %v320, %v319
    %v347 = vpack.c.b16 %v322, %v321
    %v348 = vpack.c.b16 %v324, %v323
    %v349 = vpack.c.b16 %v326, %v325
    %v350 = vpack.c.b16 %v328, %v327
    %v351 = vpack.c.b16 %v330, %v329
    %v352 = vpack.c.b16 %v332, %v331
    %v353 = vpack.c.b16 %v334, %v333
    %v354 = vpack.c.b16 %v336, %v335
    %v355 = vpack.c.b16 %v338, %v337
    %v356 = vpack.c.b16 %v340, %v339
    %v389 = vunpack.c.l.b16 %v261
    %v390 = vunpack.c.h.b16 %v261
    %v391 = vunpack.c.l.b16 %v262
    %v392 = vunpack.c.h.b16 %v262
    %v393 = vunpack.c.l.b16 %v263
    %v394 = vunpack.c.h.b16 %v263
    %v395 = vunpack.c.l.b16 %v264
    %v396 = vunpack.c.h.b16 %v264
    %v397 = vunpack.c.l.b16 %v265
    %v398 = vunpack.c.h.b16 %v265
    %v399 = vunpack.c.l.b16 %v266
    %v400 = vunpack.c.h.b16 %v266
    %v401 = vunpack.c.l.b16 %v267
    %v402 = vunpack.c.h.b16 %v267
    %v403 = vunpack.c.l.b16 %v268
    %v404 = vunpack.c.h.b16 %v268
    %v405 = vunpack.c.l.b16 %v269
    %v406 = vunpack.c.h.b16 %v269
    %v407 = vunpack.c.l.b16 %v270
    %v408 = vunpack.c.h.b16 %v270
    %v409 = vunpack.c.l.b16 %v271
    %v410 = vunpack.c.h.b16 %v271
    %v411 = vunpack.c.l.b16 %v272
    %v412 = vunpack.c.h.b16 %v272
    %v413 = vunpack.c.l.b16 %v273
    %v414 = vunpack.c.h.b16 %v273
    %v415 = vunpack.c.l.b16 %v274
    %v416 = vunpack.c.h.b16 %v274
    %v417 = vunpack.c.l.b16 %v275
    %v418 = vunpack.c.h.b16 %v275
    %v419 = vunpack.c.l.b16 %v276
    %v420 = vunpack.c.h.b16 %v276
    %v421 = vpack.c.b16 %v391, %v389
    %v422 = vpack.c.b16 %v392, %v390
    %v423 = vpack.c.b16 %v395, %v393
    %v424 = vpack.c.b16 %v396, %v394
    %v425 = vpack.c.b16 %v399, %v397
    %v426 = vpack.c.b16 %v400, %v398
    %v427 = vpack.c.b16 %v403, %v401
    %v428 = vpack.c.b16 %v404, %v402
    %v429 = vpack.c.b16 %v407, %v405
    %v430 = vpack.c.b16 %v408, %v406
    %v431 = vpack.c.b16 %v411, %v409
    %v432 = vpack.c.b16 %v412, %v410
    %v433 = vpack.c.b16 %v415, %v413
    %v434 = vpack.c.b16 %v416, %v414
    %v435 = vpack.c.b16 %v419, %v417
    %v436 = vpack.c.b16 %v420, %v418
    %453 = vmatpush.bf16.msra.mxu0 %v435
    %454 = vmatpush.bf16.msra.mxu0 %v433
    %455 = vmatpush.bf16.msra.mxu0 %v431
    %456 = vmatpush.bf16.msra.mxu0 %v429
    %457 = vmatpush.bf16.msra.mxu0 %v427
    %458 = vmatpush.bf16.msra.mxu0 %v425
    %459 = vmatpush.bf16.msra.mxu0 %v423
    %460 = vmatpush.bf16.msra.mxu0 %v421
    %461 = vmatmul.bf16.gmra.mxu0 %v341
    %v462 = vpop.f32.mrf.mxu0
    %v463 = vadd.f32 0.0, %v462
    %v464 = vpop.f32.mrf.mxu0
    %v465 = vadd.f32 0.0, %v464
    %466 = vmatmul.bf16.gmra.mxu0 %v342
    %v467 = vpop.f32.mrf.mxu0
    %v468 = vadd.f32 0.0, %v467
    %v469 = vpop.f32.mrf.mxu0
    %v470 = vadd.f32 0.0, %v469
    %471 = vmatmul.bf16.gmra.mxu0 %v343
    %v472 = vpop.f32.mrf.mxu0
    %v473 = vadd.f32 0.0, %v472
    %v474 = vpop.f32.mrf.mxu0
    %v475 = vadd.f32 0.0, %v474
    %476 = vmatmul.bf16.gmra.mxu0 %v344
    %v477 = vpop.f32.mrf.mxu0
    %v478 = vadd.f32 0.0, %v477
    %v479 = vpop.f32.mrf.mxu0
    %v480 = vadd.f32 0.0, %v479
    %481 = vmatmul.bf16.gmra.mxu0 %v345
    %v482 = vpop.f32.mrf.mxu0
    %v483 = vadd.f32 0.0, %v482
    %v484 = vpop.f32.mrf.mxu0
    %v485 = vadd.f32 0.0, %v484
    %486 = vmatmul.bf16.gmra.mxu0 %v346
    %v487 = vpop.f32.mrf.mxu0
    %v488 = vadd.f32 0.0, %v487
    %v489 = vpop.f32.mrf.mxu0
    %v490 = vadd.f32 0.0, %v489
    %491 = vmatmul.bf16.gmra.mxu0 %v347
    %v492 = vpop.f32.mrf.mxu0
    %v493 = vadd.f32 0.0, %v492
    %v494 = vpop.f32.mrf.mxu0
    %v495 = vadd.f32 0.0, %v494
    %496 = vmatmul.bf16.gmra.mxu0 %v348
    %v497 = vpop.f32.mrf.mxu0
    %v498 = vadd.f32 0.0, %v497
    %v499 = vpop.f32.mrf.mxu0
    %v500 = vadd.f32 0.0, %v499
    %501 = vmatmul.bf16.gmra.mxu0 %v349
    %v502 = vpop.f32.mrf.mxu0
    %v503 = vadd.f32 0.0, %v502
    %v504 = vpop.f32.mrf.mxu0
    %v505 = vadd.f32 0.0, %v504
    %506 = vmatmul.bf16.gmra.mxu0 %v350
    %v507 = vpop.f32.mrf.mxu0
    %v508 = vadd.f32 0.0, %v507
    %v509 = vpop.f32.mrf.mxu0
    %v510 = vadd.f32 0.0, %v509
    %511 = vmatmul.bf16.gmra.mxu0 %v351
    %v512 = vpop.f32.mrf.mxu0
    %v513 = vadd.f32 0.0, %v512
    %v514 = vpop.f32.mrf.mxu0
    %v515 = vadd.f32 0.0, %v514
    %516 = vmatmul.bf16.gmra.mxu0 %v352
    %v517 = vpop.f32.mrf.mxu0
    %v518 = vadd.f32 0.0, %v517
    %v519 = vpop.f32.mrf.mxu0
    %v520 = vadd.f32 0.0, %v519
    %521 = vmatmul.bf16.gmra.mxu0 %v353
    %v522 = vpop.f32.mrf.mxu0
    %v523 = vadd.f32 0.0, %v522
    %v524 = vpop.f32.mrf.mxu0
    %v525 = vadd.f32 0.0, %v524
    %526 = vmatmul.bf16.gmra.mxu0 %v354
    %v527 = vpop.f32.mrf.mxu0
    %v528 = vadd.f32 0.0, %v527
    %v529 = vpop.f32.mrf.mxu0
    %v530 = vadd.f32 0.0, %v529
    %531 = vmatmul.bf16.gmra.mxu0 %v355
    %v532 = vpop.f32.mrf.mxu0
    %v533 = vadd.f32 0.0, %v532
    %v534 = vpop.f32.mrf.mxu0
    %v535 = vadd.f32 0.0, %v534
    %536 = vmatmul.bf16.gmra.mxu0 %v356
    %v537 = vpop.f32.mrf.mxu0
    %v538 = vadd.f32 0.0, %v537
    %v539 = vpop.f32.mrf.mxu0
    %v540 = vadd.f32 0.0, %v539
    %541 = vdwg.mxu0
    %542 = vmatpush.bf16.msra.mxu0 %v436
    %543 = vmatpush.bf16.msra.mxu0 %v434
    %544 = vmatpush.bf16.msra.mxu0 %v432
    %545 = vmatpush.bf16.msra.mxu0 %v430
    %546 = vmatpush.bf16.msra.mxu0 %v428
    %547 = vmatpush.bf16.msra.mxu0 %v426
    %548 = vmatpush.bf16.msra.mxu0 %v424
    %549 = vmatpush.bf16.msra.mxu0 %v422
    %550 = vmatmul.bf16.gmra.mxu0 %v341
    %v551 = vpop.f32.mrf.mxu0
    %v552 = vadd.f32 0.0, %v551
    %v553 = vpop.f32.mrf.mxu0
    %v554 = vadd.f32 0.0, %v553
    %555 = vmatmul.bf16.gmra.mxu0 %v342
    %v556 = vpop.f32.mrf.mxu0
    %v557 = vadd.f32 0.0, %v556
    %v558 = vpop.f32.mrf.mxu0
    %v559 = vadd.f32 0.0, %v558
    %560 = vmatmul.bf16.gmra.mxu0 %v343
    %v561 = vpop.f32.mrf.mxu0
    %v562 = vadd.f32 0.0, %v561
    %v563 = vpop.f32.mrf.mxu0
    %v564 = vadd.f32 0.0, %v563
    %565 = vmatmul.bf16.gmra.mxu0 %v344
    %v566 = vpop.f32.mrf.mxu0
    %v567 = vadd.f32 0.0, %v566
    %v568 = vpop.f32.mrf.mxu0
    %v569 = vadd.f32 0.0, %v568
    %570 = vmatmul.bf16.gmra.mxu0 %v345
    %v571 = vpop.f32.mrf.mxu0
    %v572 = vadd.f32 0.0, %v571
    %v573 = vpop.f32.mrf.mxu0
    %v574 = vadd.f32 0.0, %v573
    %575 = vmatmul.bf16.gmra.mxu0 %v346
    %v576 = vpop.f32.mrf.mxu0
    %v577 = vadd.f32 0.0, %v576
    %v578 = vpop.f32.mrf.mxu0
    %v579 = vadd.f32 0.0, %v578
    %580 = vmatmul.bf16.gmra.mxu0 %v347
    %v581 = vpop.f32.mrf.mxu0
    %v582 = vadd.f32 0.0, %v581
    %v583 = vpop.f32.mrf.mxu0
    %v584 = vadd.f32 0.0, %v583
    %585 = vmatmul.bf16.gmra.mxu0 %v348
    %v586 = vpop.f32.mrf.mxu0
    %v587 = vadd.f32 0.0, %v586
    %v588 = vpop.f32.mrf.mxu0
    %v589 = vadd.f32 0.0, %v588
    %590 = vmatmul.bf16.gmra.mxu0 %v349
    %v591 = vpop.f32.mrf.mxu0
    %v592 = vadd.f32 0.0, %v591
    %v593 = vpop.f32.mrf.mxu0
    %v594 = vadd.f32 0.0, %v593
    %595 = vmatmul.bf16.gmra.mxu0 %v350
    %v596 = vpop.f32.mrf.mxu0
    %v597 = vadd.f32 0.0, %v596
    %v598 = vpop.f32.mrf.mxu0
    %v599 = vadd.f32 0.0, %v598
    %600 = vmatmul.bf16.gmra.mxu0 %v351
    %v601 = vpop.f32.mrf.mxu0
    %v602 = vadd.f32 0.0, %v601
    %v603 = vpop.f32.mrf.mxu0
    %v604 = vadd.f32 0.0, %v603
    %605 = vmatmul.bf16.gmra.mxu0 %v352
    %v606 = vpop.f32.mrf.mxu0
    %v607 = vadd.f32 0.0, %v606
    %v608 = vpop.f32.mrf.mxu0
    %v609 = vadd.f32 0.0, %v608
    %610 = vmatmul.bf16.gmra.mxu0 %v353
    %v611 = vpop.f32.mrf.mxu0
    %v612 = vadd.f32 0.0, %v611
    %v613 = vpop.f32.mrf.mxu0
    %v614 = vadd.f32 0.0, %v613
    %615 = vmatmul.bf16.gmra.mxu0 %v354
    %v616 = vpop.f32.mrf.mxu0
    %v617 = vadd.f32 0.0, %v616
    %v618 = vpop.f32.mrf.mxu0
    %v619 = vadd.f32 0.0, %v618
    %620 = vmatmul.bf16.gmra.mxu0 %v355
    %v621 = vpop.f32.mrf.mxu0
    %v622 = vadd.f32 0.0, %v621
    %v623 = vpop.f32.mrf.mxu0
    %v624 = vadd.f32 0.0, %v623
    %625 = vmatmul.bf16.gmra.mxu0 %v356
    %v626 = vpop.f32.mrf.mxu0
    %v627 = vadd.f32 0.0, %v626
    %v628 = vpop.f32.mrf.mxu0
    %v629 = vadd.f32 0.0, %v628
    %630 = vdwg.mxu0
    %v631 = vadd.f32 %v165, %v463
    %v632 = vadd.f32 %v166, %v552
    %v633 = vadd.f32 %v167, %v465
    %v634 = vadd.f32 %v168, %v554
    %v635 = vadd.f32 %v169, %v468
    %v636 = vadd.f32 %v170, %v557
    %v637 = vadd.f32 %v171, %v470
    %v638 = vadd.f32 %v172, %v559
    %v639 = vadd.f32 %v173, %v473
    %v640 = vadd.f32 %v174, %v562
    %v641 = vadd.f32 %v175, %v475
    %v642 = vadd.f32 %v176, %v564
    %v643 = vadd.f32 %v177, %v478
    %v644 = vadd.f32 %v178, %v567
    %v645 = vadd.f32 %v179, %v480
    %v646 = vadd.f32 %v180, %v569
    %v647 = vadd.f32 %v181, %v483
    %v648 = vadd.f32 %v182, %v572
    %v649 = vadd.f32 %v183, %v485
    %v650 = vadd.f32 %v184, %v574
    %v651 = vadd.f32 %v185, %v488
    %v652 = vadd.f32 %v186, %v577
    %v653 = vadd.f32 %v187, %v490
    %v654 = vadd.f32 %v188, %v579
    %v655 = vadd.f32 %v189, %v493
    %v656 = vadd.f32 %v190, %v582
    %v657 = vadd.f32 %v191, %v495
    %v658 = vadd.f32 %v192, %v584
    %v659 = vadd.f32 %v193, %v498
    %v660 = vadd.f32 %v194, %v587
    %v661 = vadd.f32 %v195, %v500
    %v662 = vadd.f32 %v196, %v589
    %v663 = vadd.f32 %v197, %v503
    %v664 = vadd.f32 %v198, %v592
    %v665 = vadd.f32 %v199, %v505
    %v666 = vadd.f32 %v200, %v594
    %v667 = vadd.f32 %v201, %v508
    %v668 = vadd.f32 %v202, %v597
    %v669 = vadd.f32 %v203, %v510
    %v670 = vadd.f32 %v204, %v599
    %v671 = vadd.f32 %v205, %v513
    %v672 = vadd.f32 %v206, %v602
    %v673 = vadd.f32 %v207, %v515
    %v674 = vadd.f32 %v208, %v604
    %v675 = vadd.f32 %v209, %v518
    %v676 = vadd.f32 %v210, %v607
    %v677 = vadd.f32 %v211, %v520
    %v678 = vadd.f32 %v212, %v609
    %v679 = vadd.f32 %v213, %v523
    %v680 = vadd.f32 %v214, %v612
    %v681 = vadd.f32 %v215, %v525
    %v682 = vadd.f32 %v216, %v614
    %v683 = vadd.f32 %v217, %v528
    %v684 = vadd.f32 %v218, %v617
    %v685 = vadd.f32 %v219, %v530
    %v686 = vadd.f32 %v220, %v619
    %v687 = vadd.f32 %v221, %v533
    %v688 = vadd.f32 %v222, %v622
    %v689 = vadd.f32 %v223, %v535
    %v690 = vadd.f32 %v224, %v624
    %v691 = vadd.f32 %v225, %v538
    %v692 = vadd.f32 %v226, %v627
    %v693 = vadd.f32 %v227, %v540
    %v694 = vadd.f32 %v228, %v629
    %695 = vst [vmem:[#allocation2] sm:$0xff] %v631
    %696 = vst [vmem:[#allocation2 + $0x8] sm:$0xff] %v632
    %697 = vst [vmem:[#allocation2 + $0x10] sm:$0xff] %v633
    %698 = vst [vmem:[#allocation2 + $0x18] sm:$0xff] %v634
    %699 = vst [vmem:[#allocation2 + $0x20] sm:$0xff] %v635
    %700 = vst [vmem:[#allocation2 + $0x28] sm:$0xff] %v636
    %701 = vst [vmem:[#allocation2 + $0x30] sm:$0xff] %v637
    %702 = vst [vmem:[#allocation2 + $0x38] sm:$0xff] %v638
    %703 = vst [vmem:[#allocation2 + $0x40] sm:$0xff] %v639
    %704 = vst [vmem:[#allocation2 + $0x48] sm:$0xff] %v640
    %705 = vst [vmem:[#allocation2 + $0x50] sm:$0xff] %v641
    %706 = vst [vmem:[#allocation2 + $0x58] sm:$0xff] %v642
    %707 = vst [vmem:[#allocation2 + $0x60] sm:$0xff] %v643
    %708 = vst [vmem:[#allocation2 + $0x68] sm:$0xff] %v644
    %709 = vst [vmem:[#allocation2 + $0x70] sm:$0xff] %v645
    %710 = vst [vmem:[#allocation2 + $0x78] sm:$0xff] %v646
    %711 = vst [vmem:[#allocation2 + $0x80] sm:$0xff] %v647
    %712 = vst [vmem:[#allocation2 + $0x88] sm:$0xff] %v648
    %713 = vst [vmem:[#allocation2 + $0x90] sm:$0xff] %v649
    %714 = vst [vmem:[#allocation2 + $0x98] sm:$0xff] %v650
    %715 = vst [vmem:[#allocation2 + $0xa0] sm:$0xff] %v651
    %716 = vst [vmem:[#allocation2 + $0xa8] sm:$0xff] %v652
    %717 = vst [vmem:[#allocation2 + $0xb0] sm:$0xff] %v653
    %718 = vst [vmem:[#allocation2 + $0xb8] sm:$0xff] %v654
    %719 = vst [vmem:[#allocation2 + $0xc0] sm:$0xff] %v655
    %720 = vst [vmem:[#allocation2 + $0xc8] sm:$0xff] %v656
    %721 = vst [vmem:[#allocation2 + $0xd0] sm:$0xff] %v657
    %722 = vst [vmem:[#allocation2 + $0xd8] sm:$0xff] %v658
    %723 = vst [vmem:[#allocation2 + $0xe0] sm:$0xff] %v659
    %724 = vst [vmem:[#allocation2 + $0xe8] sm:$0xff] %v660
    %725 = vst [vmem:[#allocation2 + $0xf0] sm:$0xff] %v661
    %726 = vst [vmem:[#allocation2 + $0xf8] sm:$0xff] %v662
    %727 = vst [vmem:[#allocation2 + $0x100] sm:$0xff] %v663
    %728 = vst [vmem:[#allocation2 + $0x108] sm:$0xff] %v664
    %729 = vst [vmem:[#allocation2 + $0x110] sm:$0xff] %v665
    %730 = vst [vmem:[#allocation2 + $0x118] sm:$0xff] %v666
    %731 = vst [vmem:[#allocation2 + $0x120] sm:$0xff] %v667
    %732 = vst [vmem:[#allocation2 + $0x128] sm:$0xff] %v668
    %733 = vst [vmem:[#allocation2 + $0x130] sm:$0xff] %v669
    %734 = vst [vmem:[#allocation2 + $0x138] sm:$0xff] %v670
    %735 = vst [vmem:[#allocation2 + $0x140] sm:$0xff] %v671
    %736 = vst [vmem:[#allocation2 + $0x148] sm:$0xff] %v672
    %737 = vst [vmem:[#allocation2 + $0x150] sm:$0xff] %v673
    %738 = vst [vmem:[#allocation2 + $0x158] sm:$0xff] %v674
    %739 = vst [vmem:[#allocation2 + $0x160] sm:$0xff] %v675
    %740 = vst [vmem:[#allocation2 + $0x168] sm:$0xff] %v676
    %741 = vst [vmem:[#allocation2 + $0x170] sm:$0xff] %v677
    %742 = vst [vmem:[#allocation2 + $0x178] sm:$0xff] %v678
    %743 = vst [vmem:[#allocation2 + $0x180] sm:$0xff] %v679
    %744 = vst [vmem:[#allocation2 + $0x188] sm:$0xff] %v680
    %745 = vst [vmem:[#allocation2 + $0x190] sm:$0xff] %v681
    %746 = vst [vmem:[#allocation2 + $0x198] sm:$0xff] %v682
    %747 = vst [vmem:[#allocation2 + $0x1a0] sm:$0xff] %v683
    %748 = vst [vmem:[#allocation2 + $0x1a8] sm:$0xff] %v684
    %749 = vst [vmem:[#allocation2 + $0x1b0] sm:$0xff] %v685
    %750 = vst [vmem:[#allocation2 + $0x1b8] sm:$0xff] %v686
    %751 = vst [vmem:[#allocation2 + $0x1c0] sm:$0xff] %v687
    %752 = vst [vmem:[#allocation2 + $0x1c8] sm:$0xff] %v688
    %753 = vst [vmem:[#allocation2 + $0x1d0] sm:$0xff] %v689
    %754 = vst [vmem:[#allocation2 + $0x1d8] sm:$0xff] %v690
    %755 = vst [vmem:[#allocation2 + $0x1e0] sm:$0xff] %v691
    %756 = vst [vmem:[#allocation2 + $0x1e8] sm:$0xff] %v692
    %757 = vst [vmem:[#allocation2 + $0x1f0] sm:$0xff] %v693
    %758 = vst [vmem:[#allocation2 + $0x1f8] sm:$0xff] %v694
    // Predicated region
    $region46: #{tpu_custom_call.1} parent=1 // pred_check
      %p759 = pneg %p97
    $region47: #{tpu_custom_call.1} parent=1 // pred_check_branch
      %761 = sbr.rel (%p759) target = $region49
    $region48: #{tpu_custom_call.1} parent=1 // pred_region
      %v762 = vld [vmem:[#allocation2] sm:$0xff]
      %v763 = vld [vmem:[#allocation2 + $0x8] sm:$0xff]
      %v764 = vld [vmem:[#allocation2 + $0x10] sm:$0xff]
      %v765 = vld [vmem:[#allocation2 + $0x18] sm:$0xff]
      %v766 = vld [vmem:[#allocation2 + $0x20] sm:$0xff]
      %v767 = vld [vmem:[#allocation2 + $0x28] sm:$0xff]
      %v768 = vld [vmem:[#allocation2 + $0x30] sm:$0xff]
      %v769 = vld [vmem:[#allocation2 + $0x38] sm:$0xff]
      %v770 = vld [vmem:[#allocation2 + $0x40] sm:$0xff]
      %v771 = vld [vmem:[#allocation2 + $0x48] sm:$0xff]
      %v772 = vld [vmem:[#allocation2 + $0x50] sm:$0xff]
      %v773 = vld [vmem:[#allocation2 + $0x58] sm:$0xff]
      %v774 = vld [vmem:[#allocation2 + $0x60] sm:$0xff]
      %v775 = vld [vmem:[#allocation2 + $0x68] sm:$0xff]
      %v776 = vld [vmem:[#allocation2 + $0x70] sm:$0xff]
      %v777 = vld [vmem:[#allocation2 + $0x78] sm:$0xff]
      %v778 = vld [vmem:[#allocation2 + $0x80] sm:$0xff]
      %v779 = vld [vmem:[#allocation2 + $0x88] sm:$0xff]
      %v780 = vld [vmem:[#allocation2 + $0x90] sm:$0xff]
      %v781 = vld [vmem:[#allocation2 + $0x98] sm:$0xff]
      %v782 = vld [vmem:[#allocation2 + $0xa0] sm:$0xff]
      %v783 = vld [vmem:[#allocation2 + $0xa8] sm:$0xff]
      %v784 = vld [vmem:[#allocation2 + $0xb0] sm:$0xff]
      %v785 = vld [vmem:[#allocation2 + $0xb8] sm:$0xff]
      %v786 = vld [vmem:[#allocation2 + $0xc0] sm:$0xff]
      %v787 = vld [vmem:[#allocation2 + $0xc8] sm:$0xff]
      %v788 = vld [vmem:[#allocation2 + $0xd0] sm:$0xff]
      %v789 = vld [vmem:[#allocation2 + $0xd8] sm:$0xff]
      %v790 = vld [vmem:[#allocation2 + $0xe0] sm:$0xff]
      %v791 = vld [vmem:[#allocation2 + $0xe8] sm:$0xff]
      %v792 = vld [vmem:[#allocation2 + $0xf0] sm:$0xff]
      %v793 = vld [vmem:[#allocation2 + $0xf8] sm:$0xff]
      %v794 = vld [vmem:[#allocation2 + $0x100] sm:$0xff]
      %v795 = vld [vmem:[#allocation2 + $0x108] sm:$0xff]
      %v796 = vld [vmem:[#allocation2 + $0x110] sm:$0xff]
      %v797 = vld [vmem:[#allocation2 + $0x118] sm:$0xff]
      %v798 = vld [vmem:[#allocation2 + $0x120] sm:$0xff]
      %v799 = vld [vmem:[#allocation2 + $0x128] sm:$0xff]
      %v800 = vld [vmem:[#allocation2 + $0x130] sm:$0xff]
      %v801 = vld [vmem:[#allocation2 + $0x138] sm:$0xff]
      %v802 = vld [vmem:[#allocation2 + $0x140] sm:$0xff]
      %v803 = vld [vmem:[#allocation2 + $0x148] sm:$0xff]
      %v804 = vld [vmem:[#allocation2 + $0x150] sm:$0xff]
      %v805 = vld [vmem:[#allocation2 + $0x158] sm:$0xff]
      %v806 = vld [vmem:[#allocation2 + $0x160] sm:$0xff]
      %v807 = vld [vmem:[#allocation2 + $0x168] sm:$0xff]
      %v808 = vld [vmem:[#allocation2 + $0x170] sm:$0xff]
      %v809 = vld [vmem:[#allocation2 + $0x178] sm:$0xff]
      %v810 = vld [vmem:[#allocation2 + $0x180] sm:$0xff]
      %v811 = vld [vmem:[#allocation2 + $0x188] sm:$0xff]
      %v812 = vld [vmem:[#allocation2 + $0x190] sm:$0xff]
      %v813 = vld [vmem:[#allocation2 + $0x198] sm:$0xff]
      %v814 = vld [vmem:[#allocation2 + $0x1a0] sm:$0xff]
      %v815 = vld [vmem:[#allocation2 + $0x1a8] sm:$0xff]
      %v816 = vld [vmem:[#allocation2 + $0x1b0] sm:$0xff]
      %v817 = vld [vmem:[#allocation2 + $0x1b8] sm:$0xff]
      %v818 = vld [vmem:[#allocation2 + $0x1c0] sm:$0xff]
      %v819 = vld [vmem:[#allocation2 + $0x1c8] sm:$0xff]
      %v820 = vld [vmem:[#allocation2 + $0x1d0] sm:$0xff]
      %v821 = vld [vmem:[#allocation2 + $0x1d8] sm:$0xff]
      %v822 = vld [vmem:[#allocation2 + $0x1e0] sm:$0xff]
      %v823 = vld [vmem:[#allocation2 + $0x1e8] sm:$0xff]
      %v824 = vld [vmem:[#allocation2 + $0x1f0] sm:$0xff]
      %v825 = vld [vmem:[#allocation2 + $0x1f8] sm:$0xff]
      %v826 = vld [vmem:[#allocation11] sm:$0x3]
      %v828 = vperm.slane %v826, 0
      %v829 = vperm.slane %v826, 1
      %v832 = vadd.f32 %v762, %v828
      %v833 = vadd.f32 %v763, %v829
      %v834 = vadd.f32 %v764, %v828
      %v835 = vadd.f32 %v765, %v829
      %v836 = vadd.f32 %v766, %v828
      %v837 = vadd.f32 %v767, %v829
      %v838 = vadd.f32 %v768, %v828
      %v839 = vadd.f32 %v769, %v829
      %v840 = vadd.f32 %v770, %v828
      %v841 = vadd.f32 %v771, %v829
      %v842 = vadd.f32 %v772, %v828
      %v843 = vadd.f32 %v773, %v829
      %v844 = vadd.f32 %v774, %v828
      %v845 = vadd.f32 %v775, %v829
      %v846 = vadd.f32 %v776, %v828
      %v847 = vadd.f32 %v777, %v829
      %v848 = vadd.f32 %v778, %v828
      %v849 = vadd.f32 %v779, %v829
      %v850 = vadd.f32 %v780, %v828
      %v851 = vadd.f32 %v781, %v829
      %v852 = vadd.f32 %v782, %v828
      %v853 = vadd.f32 %v783, %v829
      %v854 = vadd.f32 %v784, %v828
      %v855 = vadd.f32 %v785, %v829
      %v856 = vadd.f32 %v786, %v828
      %v857 = vadd.f32 %v787, %v829
      %v858 = vadd.f32 %v788, %v828
      %v859 = vadd.f32 %v789, %v829
      %v860 = vadd.f32 %v790, %v828
      %v861 = vadd.f32 %v791, %v829
      %v862 = vadd.f32 %v792, %v828
      %v863 = vadd.f32 %v793, %v829
      %v864 = vadd.f32 %v794, %v828
      %v865 = vadd.f32 %v795, %v829
      %v866 = vadd.f32 %v796, %v828
      %v867 = vadd.f32 %v797, %v829
      %v868 = vadd.f32 %v798, %v828
      %v869 = vadd.f32 %v799, %v829
      %v870 = vadd.f32 %v800, %v828
      %v871 = vadd.f32 %v801, %v829
      %v872 = vadd.f32 %v802, %v828
      %v873 = vadd.f32 %v803, %v829
      %v874 = vadd.f32 %v804, %v828
      %v875 = vadd.f32 %v805, %v829
      %v876 = vadd.f32 %v806, %v828
      %v877 = vadd.f32 %v807, %v829
      %v878 = vadd.f32 %v808, %v828
      %v879 = vadd.f32 %v809, %v829
      %v880 = vadd.f32 %v810, %v828
      %v881 = vadd.f32 %v811, %v829
      %v882 = vadd.f32 %v812, %v828
      %v883 = vadd.f32 %v813, %v829
      %v884 = vadd.f32 %v814, %v828
      %v885 = vadd.f32 %v815, %v829
      %v886 = vadd.f32 %v816, %v828
      %v887 = vadd.f32 %v817, %v829
      %v888 = vadd.f32 %v818, %v828
      %v889 = vadd.f32 %v819, %v829
      %v890 = vadd.f32 %v820, %v828
      %v891 = vadd.f32 %v821, %v829
      %v892 = vadd.f32 %v822, %v828
      %v893 = vadd.f32 %v823, %v829
      %v894 = vadd.f32 %v824, %v828
      %v895 = vadd.f32 %v825, %v829
      %vm896 = vcmp.gt.f32.partialorder %v832, 0.0
      %vm897 = vcmp.gt.f32.partialorder %v833, 0.0
      %vm898 = vcmp.gt.f32.partialorder %v834, 0.0
      %vm899 = vcmp.gt.f32.partialorder %v835, 0.0
      %vm900 = vcmp.gt.f32.partialorder %v836, 0.0
      %vm901 = vcmp.gt.f32.partialorder %v837, 0.0
      %vm902 = vcmp.gt.f32.partialorder %v838, 0.0
      %vm903 = vcmp.gt.f32.partialorder %v839, 0.0
      %vm904 = vcmp.gt.f32.partialorder %v840, 0.0
      %vm905 = vcmp.gt.f32.partialorder %v841, 0.0
      %vm906 = vcmp.gt.f32.partialorder %v842, 0.0
      %vm907 = vcmp.gt.f32.partialorder %v843, 0.0
      %vm908 = vcmp.gt.f32.partialorder %v844, 0.0
      %vm909 = vcmp.gt.f32.partialorder %v845, 0.0
      %vm910 = vcmp.gt.f32.partialorder %v846, 0.0
      %vm911 = vcmp.gt.f32.partialorder %v847, 0.0
      %vm912 = vcmp.gt.f32.partialorder %v848, 0.0
      %vm913 = vcmp.gt.f32.partialorder %v849, 0.0
      %vm914 = vcmp.gt.f32.partialorder %v850, 0.0
      %vm915 = vcmp.gt.f32.partialorder %v851, 0.0
      %vm916 = vcmp.gt.f32.partialorder %v852, 0.0
      %vm917 = vcmp.gt.f32.partialorder %v853, 0.0
      %vm918 = vcmp.gt.f32.partialorder %v854, 0.0
      %vm919 = vcmp.gt.f32.partialorder %v855, 0.0
      %vm920 = vcmp.gt.f32.partialorder %v856, 0.0
      %vm921 = vcmp.gt.f32.partialorder %v857, 0.0
      %vm922 = vcmp.gt.f32.partialorder %v858, 0.0
      %vm923 = vcmp.gt.f32.partialorder %v859, 0.0
      %vm924 = vcmp.gt.f32.partialorder %v860, 0.0
      %vm925 = vcmp.gt.f32.partialorder %v861, 0.0
      %vm926 = vcmp.gt.f32.partialorder %v862, 0.0
      %vm927 = vcmp.gt.f32.partialorder %v863, 0.0
      %vm928 = vcmp.gt.f32.partialorder %v864, 0.0
      %vm929 = vcmp.gt.f32.partialorder %v865, 0.0
      %vm930 = vcmp.gt.f32.partialorder %v866, 0.0
      %vm931 = vcmp.gt.f32.partialorder %v867, 0.0
      %vm932 = vcmp.gt.f32.partialorder %v868, 0.0
      %vm933 = vcmp.gt.f32.partialorder %v869, 0.0
      %vm934 = vcmp.gt.f32.partialorder %v870, 0.0
      %vm935 = vcmp.gt.f32.partialorder %v871, 0.0
      %vm936 = vcmp.gt.f32.partialorder %v872, 0.0
      %vm937 = vcmp.gt.f32.partialorder %v873, 0.0
      %vm938 = vcmp.gt.f32.partialorder %v874, 0.0
      %vm939 = vcmp.gt.f32.partialorder %v875, 0.0
      %vm940 = vcmp.gt.f32.partialorder %v876, 0.0
      %vm941 = vcmp.gt.f32.partialorder %v877, 0.0
      %vm942 = vcmp.gt.f32.partialorder %v878, 0.0
      %vm943 = vcmp.gt.f32.partialorder %v879, 0.0
      %vm944 = vcmp.gt.f32.partialorder %v880, 0.0
      %vm945 = vcmp.gt.f32.partialorder %v881, 0.0
      %vm946 = vcmp.gt.f32.partialorder %v882, 0.0
      %vm947 = vcmp.gt.f32.partialorder %v883, 0.0
      %vm948 = vcmp.gt.f32.partialorder %v884, 0.0
      %vm949 = vcmp.gt.f32.partialorder %v885, 0.0
      %vm950 = vcmp.gt.f32.partialorder %v886, 0.0
      %vm951 = vcmp.gt.f32.partialorder %v887, 0.0
      %vm952 = vcmp.gt.f32.partialorder %v888, 0.0
      %vm953 = vcmp.gt.f32.partialorder %v889, 0.0
      %vm954 = vcmp.gt.f32.partialorder %v890, 0.0
      %vm955 = vcmp.gt.f32.partialorder %v891, 0.0
      %vm956 = vcmp.gt.f32.partialorder %v892, 0.0
      %vm957 = vcmp.gt.f32.partialorder %v893, 0.0
      %vm958 = vcmp.gt.f32.partialorder %v894, 0.0
      %vm959 = vcmp.gt.f32.partialorder %v895, 0.0
      %v960 = vmul.f32 %v832, 1.442695
      %v961 = vpow.pop %v960
      %v962 = vmul.f32 %v833, 1.442695
      %v963 = vpow.pop %v962
      %v964 = vmul.f32 %v834, 1.442695
      %v965 = vpow.pop %v964
      %v966 = vmul.f32 %v835, 1.442695
      %v967 = vpow.pop %v966
      %v968 = vmul.f32 %v836, 1.442695
      %v969 = vpow.pop %v968
      %v970 = vmul.f32 %v837, 1.442695
      %v971 = vpow.pop %v970
      %v972 = vmul.f32 %v838, 1.442695
      %v973 = vpow.pop %v972
      %v974 = vmul.f32 %v839, 1.442695
      %v975 = vpow.pop %v974
      %v976 = vmul.f32 %v840, 1.442695
      %v977 = vpow.pop %v976
      %v978 = vmul.f32 %v841, 1.442695
      %v979 = vpow.pop %v978
      %v980 = vmul.f32 %v842, 1.442695
      %v981 = vpow.pop %v980
      %v982 = vmul.f32 %v843, 1.442695
      %v983 = vpow.pop %v982
      %v984 = vmul.f32 %v844, 1.442695
      %v985 = vpow.pop %v984
      %v986 = vmul.f32 %v845, 1.442695
      %v987 = vpow.pop %v986
      %v988 = vmul.f32 %v846, 1.442695
      %v989 = vpow.pop %v988
      %v990 = vmul.f32 %v847, 1.442695
      %v991 = vpow.pop %v990
      %v992 = vmul.f32 %v848, 1.442695
      %v993 = vpow.pop %v992
      %v994 = vmul.f32 %v849, 1.442695
      %v995 = vpow.pop %v994
      %v996 = vmul.f32 %v850, 1.442695
      %v997 = vpow.pop %v996
      %v998 = vmul.f32 %v851, 1.442695
      %v999 = vpow.pop %v998
      %v1000 = vmul.f32 %v852, 1.442695
      %v1001 = vpow.pop %v1000
      %v1002 = vmul.f32 %v853, 1.442695
      %v1003 = vpow.pop %v1002
      %v1004 = vmul.f32 %v854, 1.442695
      %v1005 = vpow.pop %v1004
      %v1006 = vmul.f32 %v855, 1.442695
      %v1007 = vpow.pop %v1006
      %v1008 = vmul.f32 %v856, 1.442695
      %v1009 = vpow.pop %v1008
      %v1010 = vmul.f32 %v857, 1.442695
      %v1011 = vpow.pop %v1010
      %v1012 = vmul.f32 %v858, 1.442695
      %v1013 = vpow.pop %v1012
      %v1014 = vmul.f32 %v859, 1.442695
      %v1015 = vpow.pop %v1014
      %v1016 = vmul.f32 %v860, 1.442695
      %v1017 = vpow.pop %v1016
      %v1018 = vmul.f32 %v861, 1.442695
      %v1019 = vpow.pop %v1018
      %v1020 = vmul.f32 %v862, 1.442695
      %v1021 = vpow.pop %v1020
      %v1022 = vmul.f32 %v863, 1.442695
      %v1023 = vpow.pop %v1022
      %v1024 = vmul.f32 %v864, 1.442695
      %v1025 = vpow.pop %v1024
      %v1026 = vmul.f32 %v865, 1.442695
      %v1027 = vpow.pop %v1026
      %v1028 = vmul.f32 %v866, 1.442695
      %v1029 = vpow.pop %v1028
      %v1030 = vmul.f32 %v867, 1.442695
      %v1031 = vpow.pop %v1030
      %v1032 = vmul.f32 %v868, 1.442695
      %v1033 = vpow.pop %v1032
      %v1034 = vmul.f32 %v869, 1.442695
      %v1035 = vpow.pop %v1034
      %v1036 = vmul.f32 %v870, 1.442695
      %v1037 = vpow.pop %v1036
      %v1038 = vmul.f32 %v871, 1.442695
      %v1039 = vpow.pop %v1038
      %v1040 = vmul.f32 %v872, 1.442695
      %v1041 = vpow.pop %v1040
      %v1042 = vmul.f32 %v873, 1.442695
      %v1043 = vpow.pop %v1042
      %v1044 = vmul.f32 %v874, 1.442695
      %v1045 = vpow.pop %v1044
      %v1046 = vmul.f32 %v875, 1.442695
      %v1047 = vpow.pop %v1046
      %v1048 = vmul.f32 %v876, 1.442695
      %v1049 = vpow.pop %v1048
      %v1050 = vmul.f32 %v877, 1.442695
      %v1051 = vpow.pop %v1050
      %v1052 = vmul.f32 %v878, 1.442695
      %v1053 = vpow.pop %v1052
      %v1054 = vmul.f32 %v879, 1.442695
      %v1055 = vpow.pop %v1054
      %v1056 = vmul.f32 %v880, 1.442695
      %v1057 = vpow.pop %v1056
      %v1058 = vmul.f32 %v881, 1.442695
      %v1059 = vpow.pop %v1058
      %v1060 = vmul.f32 %v882, 1.442695
      %v1061 = vpow.pop %v1060
      %v1062 = vmul.f32 %v883, 1.442695
      %v1063 = vpow.pop %v1062
      %v1064 = vmul.f32 %v884, 1.442695
      %v1065 = vpow.pop %v1064
      %v1066 = vmul.f32 %v885, 1.442695
      %v1067 = vpow.pop %v1066
      %v1068 = vmul.f32 %v886, 1.442695
      %v1069 = vpow.pop %v1068
      %v1070 = vmul.f32 %v887, 1.442695
      %v1071 = vpow.pop %v1070
      %v1072 = vmul.f32 %v888, 1.442695
      %v1073 = vpow.pop %v1072
      %v1074 = vmul.f32 %v889, 1.442695
      %v1075 = vpow.pop %v1074
      %v1076 = vmul.f32 %v890, 1.442695
      %v1077 = vpow.pop %v1076
      %v1078 = vmul.f32 %v891, 1.442695
      %v1079 = vpow.pop %v1078
      %v1080 = vmul.f32 %v892, 1.442695
      %v1081 = vpow.pop %v1080
      %v1082 = vmul.f32 %v893, 1.442695
      %v1083 = vpow.pop %v1082
      %v1084 = vmul.f32 %v894, 1.442695
      %v1085 = vpow.pop %v1084
      %v1086 = vmul.f32 %v895, 1.442695
      %v1087 = vpow.pop %v1086
      %v1088 = vsub.f32 %v961, 1.0
      %v1089 = vsub.f32 %v963, 1.0
      %v1090 = vsub.f32 %v965, 1.0
      %v1091 = vsub.f32 %v967, 1.0
      %v1092 = vsub.f32 %v969, 1.0
      %v1093 = vsub.f32 %v971, 1.0
      %v1094 = vsub.f32 %v973, 1.0
      %v1095 = vsub.f32 %v975, 1.0
      %v1096 = vsub.f32 %v977, 1.0
      %v1097 = vsub.f32 %v979, 1.0
      %v1098 = vsub.f32 %v981, 1.0
      %v1099 = vsub.f32 %v983, 1.0
      %v1100 = vsub.f32 %v985, 1.0
      %v1101 = vsub.f32 %v987, 1.0
      %v1102 = vsub.f32 %v989, 1.0
      %v1103 = vsub.f32 %v991, 1.0
      %v1104 = vsub.f32 %v993, 1.0
      %v1105 = vsub.f32 %v995, 1.0
      %v1106 = vsub.f32 %v997, 1.0
      %v1107 = vsub.f32 %v999, 1.0
      %v1108 = vsub.f32 %v1001, 1.0
      %v1109 = vsub.f32 %v1003, 1.0
      %v1110 = vsub.f32 %v1005, 1.0
      %v1111 = vsub.f32 %v1007, 1.0
      %v1112 = vsub.f32 %v1009, 1.0
      %v1113 = vsub.f32 %v1011, 1.0
      %v1114 = vsub.f32 %v1013, 1.0
      %v1115 = vsub.f32 %v1015, 1.0
      %v1116 = vsub.f32 %v1017, 1.0
      %v1117 = vsub.f32 %v1019, 1.0
      %v1118 = vsub.f32 %v1021, 1.0
      %v1119 = vsub.f32 %v1023, 1.0
      %v1120 = vsub.f32 %v1025, 1.0
      %v1121 = vsub.f32 %v1027, 1.0
      %v1122 = vsub.f32 %v1029, 1.0
      %v1123 = vsub.f32 %v1031, 1.0
      %v1124 = vsub.f32 %v1033, 1.0
      %v1125 = vsub.f32 %v1035, 1.0
      %v1126 = vsub.f32 %v1037, 1.0
      %v1127 = vsub.f32 %v1039, 1.0
      %v1128 = vsub.f32 %v1041, 1.0
      %v1129 = vsub.f32 %v1043, 1.0
      %v1130 = vsub.f32 %v1045, 1.0
      %v1131 = vsub.f32 %v1047, 1.0
      %v1132 = vsub.f32 %v1049, 1.0
      %v1133 = vsub.f32 %v1051, 1.0
      %v1134 = vsub.f32 %v1053, 1.0
      %v1135 = vsub.f32 %v1055, 1.0
      %v1136 = vsub.f32 %v1057, 1.0
      %v1137 = vsub.f32 %v1059, 1.0
      %v1138 = vsub.f32 %v1061, 1.0
      %v1139 = vsub.f32 %v1063, 1.0
      %v1140 = vsub.f32 %v1065, 1.0
      %v1141 = vsub.f32 %v1067, 1.0
      %v1142 = vsub.f32 %v1069, 1.0
      %v1143 = vsub.f32 %v1071, 1.0
      %v1144 = vsub.f32 %v1073, 1.0
      %v1145 = vsub.f32 %v1075, 1.0
      %v1146 = vsub.f32 %v1077, 1.0
      %v1147 = vsub.f32 %v1079, 1.0
      %v1148 = vsub.f32 %v1081, 1.0
      %v1149 = vsub.f32 %v1083, 1.0
      %v1150 = vsub.f32 %v1085, 1.0
      %v1151 = vsub.f32 %v1087, 1.0
      %v1152 = vmul.f32 %v1088, 1.6732632
      %v1153 = vmul.f32 %v1089, 1.6732632
      %v1154 = vmul.f32 %v1090, 1.6732632
      %v1155 = vmul.f32 %v1091, 1.6732632
      %v1156 = vmul.f32 %v1092, 1.6732632
      %v1157 = vmul.f32 %v1093, 1.6732632
      %v1158 = vmul.f32 %v1094, 1.6732632
      %v1159 = vmul.f32 %v1095, 1.6732632
      %v1160 = vmul.f32 %v1096, 1.6732632
      %v1161 = vmul.f32 %v1097, 1.6732632
      %v1162 = vmul.f32 %v1098, 1.6732632
      %v1163 = vmul.f32 %v1099, 1.6732632
      %v1164 = vmul.f32 %v1100, 1.6732632
      %v1165 = vmul.f32 %v1101, 1.6732632
      %v1166 = vmul.f32 %v1102, 1.6732632
      %v1167 = vmul.f32 %v1103, 1.6732632
      %v1168 = vmul.f32 %v1104, 1.6732632
      %v1169 = vmul.f32 %v1105, 1.6732632
      %v1170 = vmul.f32 %v1106, 1.6732632
      %v1171 = vmul.f32 %v1107, 1.6732632
      %v1172 = vmul.f32 %v1108, 1.6732632
      %v1173 = vmul.f32 %v1109, 1.6732632
      %v1174 = vmul.f32 %v1110, 1.6732632
      %v1175 = vmul.f32 %v1111, 1.6732632
      %v1176 = vmul.f32 %v1112, 1.6732632
      %v1177 = vmul.f32 %v1113, 1.6732632
      %v1178 = vmul.f32 %v1114, 1.6732632
      %v1179 = vmul.f32 %v1115, 1.6732632
      %v1180 = vmul.f32 %v1116, 1.6732632
      %v1181 = vmul.f32 %v1117, 1.6732632
      %v1182 = vmul.f32 %v1118, 1.6732632
      %v1183 = vmul.f32 %v1119, 1.6732632
      %v1184 = vmul.f32 %v1120, 1.6732632
      %v1185 = vmul.f32 %v1121, 1.6732632
      %v1186 = vmul.f32 %v1122, 1.6732632
      %v1187 = vmul.f32 %v1123, 1.6732632
      %v1188 = vmul.f32 %v1124, 1.6732632
      %v1189 = vmul.f32 %v1125, 1.6732632
      %v1190 = vmul.f32 %v1126, 1.6732632
      %v1191 = vmul.f32 %v1127, 1.6732632
      %v1192 = vmul.f32 %v1128, 1.6732632
      %v1193 = vmul.f32 %v1129, 1.6732632
      %v1194 = vmul.f32 %v1130, 1.6732632
      %v1195 = vmul.f32 %v1131, 1.6732632
      %v1196 = vmul.f32 %v1132, 1.6732632
      %v1197 = vmul.f32 %v1133, 1.6732632
      %v1198 = vmul.f32 %v1134, 1.6732632
      %v1199 = vmul.f32 %v1135, 1.6732632
      %v1200 = vmul.f32 %v1136, 1.6732632
      %v1201 = vmul.f32 %v1137, 1.6732632
      %v1202 = vmul.f32 %v1138, 1.6732632
      %v1203 = vmul.f32 %v1139, 1.6732632
      %v1204 = vmul.f32 %v1140, 1.6732632
      %v1205 = vmul.f32 %v1141, 1.6732632
      %v1206 = vmul.f32 %v1142, 1.6732632
      %v1207 = vmul.f32 %v1143, 1.6732632
      %v1208 = vmul.f32 %v1144, 1.6732632
      %v1209 = vmul.f32 %v1145, 1.6732632
      %v1210 = vmul.f32 %v1146, 1.6732632
      %v1211 = vmul.f32 %v1147, 1.6732632
      %v1212 = vmul.f32 %v1148, 1.6732632
      %v1213 = vmul.f32 %v1149, 1.6732632
      %v1214 = vmul.f32 %v1150, 1.6732632
      %v1215 = vmul.f32 %v1151, 1.6732632
      %v1216 = vsel %vm896, %v832, %v1152
      %v1217 = vsel %vm897, %v833, %v1153
      %v1218 = vsel %vm898, %v834, %v1154
      %v1219 = vsel %vm899, %v835, %v1155
      %v1220 = vsel %vm900, %v836, %v1156
      %v1221 = vsel %vm901, %v837, %v1157
      %v1222 = vsel %vm902, %v838, %v1158
      %v1223 = vsel %vm903, %v839, %v1159
      %v1224 = vsel %vm904, %v840, %v1160
      %v1225 = vsel %vm905, %v841, %v1161
      %v1226 = vsel %vm906, %v842, %v1162
      %v1227 = vsel %vm907, %v843, %v1163
      %v1228 = vsel %vm908, %v844, %v1164
      %v1229 = vsel %vm909, %v845, %v1165
      %v1230 = vsel %vm910, %v846, %v1166
      %v1231 = vsel %vm911, %v847, %v1167
      %v1232 = vsel %vm912, %v848, %v1168
      %v1233 = vsel %vm913, %v849, %v1169
      %v1234 = vsel %vm914, %v850, %v1170
      %v1235 = vsel %vm915, %v851, %v1171
      %v1236 = vsel %vm916, %v852, %v1172
      %v1237 = vsel %vm917, %v853, %v1173
      %v1238 = vsel %vm918, %v854, %v1174
      %v1239 = vsel %vm919, %v855, %v1175
      %v1240 = vsel %vm920, %v856, %v1176
      %v1241 = vsel %vm921, %v857, %v1177
      %v1242 = vsel %vm922, %v858, %v1178
      %v1243 = vsel %vm923, %v859, %v1179
      %v1244 = vsel %vm924, %v860, %v1180
      %v1245 = vsel %vm925, %v861, %v1181
      %v1246 = vsel %vm926, %v862, %v1182
      %v1247 = vsel %vm927, %v863, %v1183
      %v1248 = vsel %vm928, %v864, %v1184
      %v1249 = vsel %vm929, %v865, %v1185
      %v1250 = vsel %vm930, %v866, %v1186
      %v1251 = vsel %vm931, %v867, %v1187
      %v1252 = vsel %vm932, %v868, %v1188
      %v1253 = vsel %vm933, %v869, %v1189
      %v1254 = vsel %vm934, %v870, %v1190
      %v1255 = vsel %vm935, %v871, %v1191
      %v1256 = vsel %vm936, %v872, %v1192
      %v1257 = vsel %vm937, %v873, %v1193
      %v1258 = vsel %vm938, %v874, %v1194
      %v1259 = vsel %vm939, %v875, %v1195
      %v1260 = vsel %vm940, %v876, %v1196
      %v1261 = vsel %vm941, %v877, %v1197
      %v1262 = vsel %vm942, %v878, %v1198
      %v1263 = vsel %vm943, %v879, %v1199
      %v1264 = vsel %vm944, %v880, %v1200
      %v1265 = vsel %vm945, %v881, %v1201
      %v1266 = vsel %vm946, %v882, %v1202
      %v1267 = vsel %vm947, %v883, %v1203
      %v1268 = vsel %vm948, %v884, %v1204
      %v1269 = vsel %vm949, %v885, %v1205
      %v1270 = vsel %vm950, %v886, %v1206
      %v1271 = vsel %vm951, %v887, %v1207
      %v1272 = vsel %vm952, %v888, %v1208
      %v1273 = vsel %vm953, %v889, %v1209
      %v1274 = vsel %vm954, %v890, %v1210
      %v1275 = vsel %vm955, %v891, %v1211
      %v1276 = vsel %vm956, %v892, %v1212
      %v1277 = vsel %vm957, %v893, %v1213
      %v1278 = vsel %vm958, %v894, %v1214
      %v1279 = vsel %vm959, %v895, %v1215
      %v1280 = vmul.f32 %v1216, 1.050701
      %v1281 = vmul.f32 %v1217, 1.050701
      %v1282 = vmul.f32 %v1218, 1.050701
      %v1283 = vmul.f32 %v1219, 1.050701
      %v1284 = vmul.f32 %v1220, 1.050701
      %v1285 = vmul.f32 %v1221, 1.050701
      %v1286 = vmul.f32 %v1222, 1.050701
      %v1287 = vmul.f32 %v1223, 1.050701
      %v1288 = vmul.f32 %v1224, 1.050701
      %v1289 = vmul.f32 %v1225, 1.050701
      %v1290 = vmul.f32 %v1226, 1.050701
      %v1291 = vmul.f32 %v1227, 1.050701
      %v1292 = vmul.f32 %v1228, 1.050701
      %v1293 = vmul.f32 %v1229, 1.050701
      %v1294 = vmul.f32 %v1230, 1.050701
      %v1295 = vmul.f32 %v1231, 1.050701
      %v1296 = vmul.f32 %v1232, 1.050701
      %v1297 = vmul.f32 %v1233, 1.050701
      %v1298 = vmul.f32 %v1234, 1.050701
      %v1299 = vmul.f32 %v1235, 1.050701
      %v1300 = vmul.f32 %v1236, 1.050701
      %v1301 = vmul.f32 %v1237, 1.050701
      %v1302 = vmul.f32 %v1238, 1.050701
      %v1303 = vmul.f32 %v1239, 1.050701
      %v1304 = vmul.f32 %v1240, 1.050701
      %v1305 = vmul.f32 %v1241, 1.050701
      %v1306 = vmul.f32 %v1242, 1.050701
      %v1307 = vmul.f32 %v1243, 1.050701
      %v1308 = vmul.f32 %v1244, 1.050701
      %v1309 = vmul.f32 %v1245, 1.050701
      %v1310 = vmul.f32 %v1246, 1.050701
      %v1311 = vmul.f32 %v1247, 1.050701
      %v1312 = vmul.f32 %v1248, 1.050701
      %v1313 = vmul.f32 %v1249, 1.050701
      %v1314 = vmul.f32 %v1250, 1.050701
      %v1315 = vmul.f32 %v1251, 1.050701
      %v1316 = vmul.f32 %v1252, 1.050701
      %v1317 = vmul.f32 %v1253, 1.050701
      %v1318 = vmul.f32 %v1254, 1.050701
      %v1319 = vmul.f32 %v1255, 1.050701
      %v1320 = vmul.f32 %v1256, 1.050701
      %v1321 = vmul.f32 %v1257, 1.050701
      %v1322 = vmul.f32 %v1258, 1.050701
      %v1323 = vmul.f32 %v1259, 1.050701
      %v1324 = vmul.f32 %v1260, 1.050701
      %v1325 = vmul.f32 %v1261, 1.050701
      %v1326 = vmul.f32 %v1262, 1.050701
      %v1327 = vmul.f32 %v1263, 1.050701
      %v1328 = vmul.f32 %v1264, 1.050701
      %v1329 = vmul.f32 %v1265, 1.050701
      %v1330 = vmul.f32 %v1266, 1.050701
      %v1331 = vmul.f32 %v1267, 1.050701
      %v1332 = vmul.f32 %v1268, 1.050701
      %v1333 = vmul.f32 %v1269, 1.050701
      %v1334 = vmul.f32 %v1270, 1.050701
      %v1335 = vmul.f32 %v1271, 1.050701
      %v1336 = vmul.f32 %v1272, 1.050701
      %v1337 = vmul.f32 %v1273, 1.050701
      %v1338 = vmul.f32 %v1274, 1.050701
      %v1339 = vmul.f32 %v1275, 1.050701
      %v1340 = vmul.f32 %v1276, 1.050701
      %v1341 = vmul.f32 %v1277, 1.050701
      %v1342 = vmul.f32 %v1278, 1.050701
      %v1343 = vmul.f32 %v1279, 1.050701
      %v1344 = vpack.c.bf16 %v1282, %v1280
      %v1345 = vpack.c.bf16 %v1283, %v1281
      %v1346 = vpack.c.bf16 %v1286, %v1284
      %v1347 = vpack.c.bf16 %v1287, %v1285
      %v1348 = vpack.c.bf16 %v1290, %v1288
      %v1349 = vpack.c.bf16 %v1291, %v1289
      %v1350 = vpack.c.bf16 %v1294, %v1292
      %v1351 = vpack.c.bf16 %v1295, %v1293
      %v1352 = vpack.c.bf16 %v1298, %v1296
      %v1353 = vpack.c.bf16 %v1299, %v1297
      %v1354 = vpack.c.bf16 %v1302, %v1300
      %v1355 = vpack.c.bf16 %v1303, %v1301
      %v1356 = vpack.c.bf16 %v1306, %v1304
      %v1357 = vpack.c.bf16 %v1307, %v1305
      %v1358 = vpack.c.bf16 %v1310, %v1308
      %v1359 = vpack.c.bf16 %v1311, %v1309
      %v1360 = vpack.c.bf16 %v1314, %v1312
      %v1361 = vpack.c.bf16 %v1315, %v1313
      %v1362 = vpack.c.bf16 %v1318, %v1316
      %v1363 = vpack.c.bf16 %v1319, %v1317
      %v1364 = vpack.c.bf16 %v1322, %v1320
      %v1365 = vpack.c.bf16 %v1323, %v1321
      %v1366 = vpack.c.bf16 %v1326, %v1324
      %v1367 = vpack.c.bf16 %v1327, %v1325
      %v1368 = vpack.c.bf16 %v1330, %v1328
      %v1369 = vpack.c.bf16 %v1331, %v1329
      %v1370 = vpack.c.bf16 %v1334, %v1332
      %v1371 = vpack.c.bf16 %v1335, %v1333
      %v1372 = vpack.c.bf16 %v1338, %v1336
      %v1373 = vpack.c.bf16 %v1339, %v1337
      %v1374 = vpack.c.bf16 %v1342, %v1340
      %v1375 = vpack.c.bf16 %v1343, %v1341
      %v1376 = vld [vmem:[#allocation8] sm:$0xff]
      %v1377 = vld [vmem:[#allocation8 + $0x8] sm:$0xff]
      %v1378 = vld [vmem:[#allocation8 + $0x10] sm:$0xff]
      %v1379 = vld [vmem:[#allocation8 + $0x18] sm:$0xff]
      %v1380 = vld [vmem:[#allocation8 + $0x20] sm:$0xff]
      %v1381 = vld [vmem:[#allocation8 + $0x28] sm:$0xff]
      %v1382 = vld [vmem:[#allocation8 + $0x30] sm:$0xff]
      %v1383 = vld [vmem:[#allocation8 + $0x38] sm:$0xff]
      %v1384 = vld [vmem:[#allocation8 + $0x40] sm:$0xff]
      %v1385 = vld [vmem:[#allocation8 + $0x48] sm:$0xff]
      %v1386 = vld [vmem:[#allocation8 + $0x50] sm:$0xff]
      %v1387 = vld [vmem:[#allocation8 + $0x58] sm:$0xff]
      %v1388 = vld [vmem:[#allocation8 + $0x60] sm:$0xff]
      %v1389 = vld [vmem:[#allocation8 + $0x68] sm:$0xff]
      %v1390 = vld [vmem:[#allocation8 + $0x70] sm:$0xff]
      %v1391 = vld [vmem:[#allocation8 + $0x78] sm:$0xff]
      %v1392 = vld [vmem:[#allocation8 + $0x80] sm:$0xff]
      %v1393 = vld [vmem:[#allocation8 + $0x88] sm:$0xff]
      %v1394 = vld [vmem:[#allocation8 + $0x90] sm:$0xff]
      %v1395 = vld [vmem:[#allocation8 + $0x98] sm:$0xff]
      %v1396 = vld [vmem:[#allocation8 + $0xa0] sm:$0xff]
      %v1397 = vld [vmem:[#allocation8 + $0xa8] sm:$0xff]
      %v1398 = vld [vmem:[#allocation8 + $0xb0] sm:$0xff]
      %v1399 = vld [vmem:[#allocation8 + $0xb8] sm:$0xff]
      %v1400 = vld [vmem:[#allocation8 + $0xc0] sm:$0xff]
      %v1401 = vld [vmem:[#allocation8 + $0xc8] sm:$0xff]
      %v1402 = vld [vmem:[#allocation8 + $0xd0] sm:$0xff]
      %v1403 = vld [vmem:[#allocation8 + $0xd8] sm:$0xff]
      %v1404 = vld [vmem:[#allocation8 + $0xe0] sm:$0xff]
      %v1405 = vld [vmem:[#allocation8 + $0xe8] sm:$0xff]
      %v1406 = vld [vmem:[#allocation8 + $0xf0] sm:$0xff]
      %v1407 = vld [vmem:[#allocation8 + $0xf8] sm:$0xff]
      %v1408 = vld [vmem:[#allocation11 + $0x2] sm:$0x3]
      %v1410 = vperm.slane %v1408, 0
      %v1411 = vperm.slane %v1408, 1
      %v1446 = vunpack.c.l.b16 %v1376
      %v1447 = vunpack.c.h.b16 %v1376
      %v1448 = vunpack.c.l.b16 %v1377
      %v1449 = vunpack.c.h.b16 %v1377
      %v1450 = vunpack.c.l.b16 %v1378
      %v1451 = vunpack.c.h.b16 %v1378
      %v1452 = vunpack.c.l.b16 %v1379
      %v1453 = vunpack.c.h.b16 %v1379
      %v1454 = vunpack.c.l.b16 %v1380
      %v1455 = vunpack.c.h.b16 %v1380
      %v1456 = vunpack.c.l.b16 %v1381
      %v1457 = vunpack.c.h.b16 %v1381
      %v1458 = vunpack.c.l.b16 %v1382
      %v1459 = vunpack.c.h.b16 %v1382
      %v1460 = vunpack.c.l.b16 %v1383
      %v1461 = vunpack.c.h.b16 %v1383
      %v1462 = vunpack.c.l.b16 %v1384
      %v1463 = vunpack.c.h.b16 %v1384
      %v1464 = vunpack.c.l.b16 %v1385
      %v1465 = vunpack.c.h.b16 %v1385
      %v1466 = vunpack.c.l.b16 %v1386
      %v1467 = vunpack.c.h.b16 %v1386
      %v1468 = vunpack.c.l.b16 %v1387
      %v1469 = vunpack.c.h.b16 %v1387
      %v1470 = vunpack.c.l.b16 %v1388
      %v1471 = vunpack.c.h.b16 %v1388
      %v1472 = vunpack.c.l.b16 %v1389
      %v1473 = vunpack.c.h.b16 %v1389
      %v1474 = vunpack.c.l.b16 %v1390
      %v1475 = vunpack.c.h.b16 %v1390
      %v1476 = vunpack.c.l.b16 %v1391
      %v1477 = vunpack.c.h.b16 %v1391
      %v1478 = vunpack.c.l.b16 %v1392
      %v1479 = vunpack.c.h.b16 %v1392
      %v1480 = vunpack.c.l.b16 %v1393
      %v1481 = vunpack.c.h.b16 %v1393
      %v1482 = vunpack.c.l.b16 %v1394
      %v1483 = vunpack.c.h.b16 %v1394
      %v1484 = vunpack.c.l.b16 %v1395
      %v1485 = vunpack.c.h.b16 %v1395
      %v1486 = vunpack.c.l.b16 %v1396
      %v1487 = vunpack.c.h.b16 %v1396
      %v1488 = vunpack.c.l.b16 %v1397
      %v1489 = vunpack.c.h.b16 %v1397
      %v1490 = vunpack.c.l.b16 %v1398
      %v1491 = vunpack.c.h.b16 %v1398
      %v1492 = vunpack.c.l.b16 %v1399
      %v1493 = vunpack.c.h.b16 %v1399
      %v1494 = vunpack.c.l.b16 %v1400
      %v1495 = vunpack.c.h.b16 %v1400
      %v1496 = vunpack.c.l.b16 %v1401
      %v1497 = vunpack.c.h.b16 %v1401
      %v1498 = vunpack.c.l.b16 %v1402
      %v1499 = vunpack.c.h.b16 %v1402
      %v1500 = vunpack.c.l.b16 %v1403
      %v1501 = vunpack.c.h.b16 %v1403
      %v1502 = vunpack.c.l.b16 %v1404
      %v1503 = vunpack.c.h.b16 %v1404
      %v1504 = vunpack.c.l.b16 %v1405
      %v1505 = vunpack.c.h.b16 %v1405
      %v1506 = vunpack.c.l.b16 %v1406
      %v1507 = vunpack.c.h.b16 %v1406
      %v1508 = vunpack.c.l.b16 %v1407
      %v1509 = vunpack.c.h.b16 %v1407
      %v1510 = vpack.c.b16 %v1448, %v1446
      %v1511 = vpack.c.b16 %v1449, %v1447
      %v1512 = vpack.c.b16 %v1452, %v1450
      %v1513 = vpack.c.b16 %v1453, %v1451
      %v1514 = vpack.c.b16 %v1456, %v1454
      %v1515 = vpack.c.b16 %v1457, %v1455
      %v1516 = vpack.c.b16 %v1460, %v1458
      %v1517 = vpack.c.b16 %v1461, %v1459
      %v1518 = vpack.c.b16 %v1464, %v1462
      %v1519 = vpack.c.b16 %v1465, %v1463
      %v1520 = vpack.c.b16 %v1468, %v1466
      %v1521 = vpack.c.b16 %v1469, %v1467
      %v1522 = vpack.c.b16 %v1472, %v1470
      %v1523 = vpack.c.b16 %v1473, %v1471
      %v1524 = vpack.c.b16 %v1476, %v1474
      %v1525 = vpack.c.b16 %v1477, %v1475
      %v1526 = vpack.c.b16 %v1480, %v1478
      %v1527 = vpack.c.b16 %v1481, %v1479
      %v1528 = vpack.c.b16 %v1484, %v1482
      %v1529 = vpack.c.b16 %v1485, %v1483
      %v1530 = vpack.c.b16 %v1488, %v1486
      %v1531 = vpack.c.b16 %v1489, %v1487
      %v1532 = vpack.c.b16 %v1492, %v1490
      %v1533 = vpack.c.b16 %v1493, %v1491
      %v1534 = vpack.c.b16 %v1496, %v1494
      %v1535 = vpack.c.b16 %v1497, %v1495
      %v1536 = vpack.c.b16 %v1500, %v1498
      %v1537 = vpack.c.b16 %v1501, %v1499
      %v1538 = vpack.c.b16 %v1504, %v1502
      %v1539 = vpack.c.b16 %v1505, %v1503
      %v1540 = vpack.c.b16 %v1508, %v1506
      %v1541 = vpack.c.b16 %v1509, %v1507
      %1574 = vmatpush.bf16.msra.mxu0 %v1524
      %1575 = vmatpush.bf16.msra.mxu0 %v1522
      %1576 = vmatpush.bf16.msra.mxu0 %v1520
      %1577 = vmatpush.bf16.msra.mxu0 %v1518
      %1578 = vmatpush.bf16.msra.mxu0 %v1516
      %1579 = vmatpush.bf16.msra.mxu0 %v1514
      %1580 = vmatpush.bf16.msra.mxu0 %v1512
      %1581 = vmatpush.bf16.msra.mxu0 %v1510
      %1582 = vmatmul.bf16.gmra.mxu0 %v1344
      %v1583 = vpop.f32.mrf.mxu0
      %v1584 = vadd.f32 %v1410, %v1583
      %v1585 = vpop.f32.mrf.mxu0
      %v1586 = vadd.f32 %v1410, %v1585
      %1587 = vmatmul.bf16.gmra.mxu0 %v1346
      %v1588 = vpop.f32.mrf.mxu0
      %v1589 = vadd.f32 %v1410, %v1588
      %v1590 = vpop.f32.mrf.mxu0
      %v1591 = vadd.f32 %v1410, %v1590
      %1592 = vmatmul.bf16.gmra.mxu0 %v1348
      %v1593 = vpop.f32.mrf.mxu0
      %v1594 = vadd.f32 %v1410, %v1593
      %v1595 = vpop.f32.mrf.mxu0
      %v1596 = vadd.f32 %v1410, %v1595
      %1597 = vmatmul.bf16.gmra.mxu0 %v1350
      %v1598 = vpop.f32.mrf.mxu0
      %v1599 = vadd.f32 %v1410, %v1598
      %v1600 = vpop.f32.mrf.mxu0
      %v1601 = vadd.f32 %v1410, %v1600
      %1602 = vmatmul.bf16.gmra.mxu0 %v1352
      %v1603 = vpop.f32.mrf.mxu0
      %v1604 = vadd.f32 %v1410, %v1603
      %v1605 = vpop.f32.mrf.mxu0
      %v1606 = vadd.f32 %v1410, %v1605
      %1607 = vmatmul.bf16.gmra.mxu0 %v1354
      %v1608 = vpop.f32.mrf.mxu0
      %v1609 = vadd.f32 %v1410, %v1608
      %v1610 = vpop.f32.mrf.mxu0
      %v1611 = vadd.f32 %v1410, %v1610
      %1612 = vmatmul.bf16.gmra.mxu0 %v1356
      %v1613 = vpop.f32.mrf.mxu0
      %v1614 = vadd.f32 %v1410, %v1613
      %v1615 = vpop.f32.mrf.mxu0
      %v1616 = vadd.f32 %v1410, %v1615
      %1617 = vmatmul.bf16.gmra.mxu0 %v1358
      %v1618 = vpop.f32.mrf.mxu0
      %v1619 = vadd.f32 %v1410, %v1618
      %v1620 = vpop.f32.mrf.mxu0
      %v1621 = vadd.f32 %v1410, %v1620
      %1622 = vmatmul.bf16.gmra.mxu0 %v1360
      %v1623 = vpop.f32.mrf.mxu0
      %v1624 = vadd.f32 %v1410, %v1623
      %v1625 = vpop.f32.mrf.mxu0
      %v1626 = vadd.f32 %v1410, %v1625
      %1627 = vmatmul.bf16.gmra.mxu0 %v1362
      %v1628 = vpop.f32.mrf.mxu0
      %v1629 = vadd.f32 %v1410, %v1628
      %v1630 = vpop.f32.mrf.mxu0
      %v1631 = vadd.f32 %v1410, %v1630
      %1632 = vmatmul.bf16.gmra.mxu0 %v1364
      %v1633 = vpop.f32.mrf.mxu0
      %v1634 = vadd.f32 %v1410, %v1633
      %v1635 = vpop.f32.mrf.mxu0
      %v1636 = vadd.f32 %v1410, %v1635
      %1637 = vmatmul.bf16.gmra.mxu0 %v1366
      %v1638 = vpop.f32.mrf.mxu0
      %v1639 = vadd.f32 %v1410, %v1638
      %v1640 = vpop.f32.mrf.mxu0
      %v1641 = vadd.f32 %v1410, %v1640
      %1642 = vmatmul.bf16.gmra.mxu0 %v1368
      %v1643 = vpop.f32.mrf.mxu0
      %v1644 = vadd.f32 %v1410, %v1643
      %v1645 = vpop.f32.mrf.mxu0
      %v1646 = vadd.f32 %v1410, %v1645
      %1647 = vmatmul.bf16.gmra.mxu0 %v1370
      %v1648 = vpop.f32.mrf.mxu0
      %v1649 = vadd.f32 %v1410, %v1648
      %v1650 = vpop.f32.mrf.mxu0
      %v1651 = vadd.f32 %v1410, %v1650
      %1652 = vmatmul.bf16.gmra.mxu0 %v1372
      %v1653 = vpop.f32.mrf.mxu0
      %v1654 = vadd.f32 %v1410, %v1653
      %v1655 = vpop.f32.mrf.mxu0
      %v1656 = vadd.f32 %v1410, %v1655
      %1657 = vmatmul.bf16.gmra.mxu0 %v1374
      %v1658 = vpop.f32.mrf.mxu0
      %v1659 = vadd.f32 %v1410, %v1658
      %v1660 = vpop.f32.mrf.mxu0
      %v1661 = vadd.f32 %v1410, %v1660
      %1662 = vdwg.mxu0
      %1663 = vmatpush.bf16.msra.mxu0 %v1540
      %1664 = vmatpush.bf16.msra.mxu0 %v1538
      %1665 = vmatpush.bf16.msra.mxu0 %v1536
      %1666 = vmatpush.bf16.msra.mxu0 %v1534
      %1667 = vmatpush.bf16.msra.mxu0 %v1532
      %1668 = vmatpush.bf16.msra.mxu0 %v1530
      %1669 = vmatpush.bf16.msra.mxu0 %v1528
      %1670 = vmatpush.bf16.msra.mxu0 %v1526
      %1671 = vmatmul.bf16.gmra.mxu0 %v1345
      %v1672 = vpop.f32.mrf.mxu0
      %v1673 = vadd.f32 %v1584, %v1672
      %v1674 = vpop.f32.mrf.mxu0
      %v1675 = vadd.f32 %v1586, %v1674
      %1676 = vmatmul.bf16.gmra.mxu0 %v1347
      %v1677 = vpop.f32.mrf.mxu0
      %v1678 = vadd.f32 %v1589, %v1677
      %v1679 = vpop.f32.mrf.mxu0
      %v1680 = vadd.f32 %v1591, %v1679
      %1681 = vmatmul.bf16.gmra.mxu0 %v1349
      %v1682 = vpop.f32.mrf.mxu0
      %v1683 = vadd.f32 %v1594, %v1682
      %v1684 = vpop.f32.mrf.mxu0
      %v1685 = vadd.f32 %v1596, %v1684
      %1686 = vmatmul.bf16.gmra.mxu0 %v1351
      %v1687 = vpop.f32.mrf.mxu0
      %v1688 = vadd.f32 %v1599, %v1687
      %v1689 = vpop.f32.mrf.mxu0
      %v1690 = vadd.f32 %v1601, %v1689
      %1691 = vmatmul.bf16.gmra.mxu0 %v1353
      %v1692 = vpop.f32.mrf.mxu0
      %v1693 = vadd.f32 %v1604, %v1692
      %v1694 = vpop.f32.mrf.mxu0
      %v1695 = vadd.f32 %v1606, %v1694
      %1696 = vmatmul.bf16.gmra.mxu0 %v1355
      %v1697 = vpop.f32.mrf.mxu0
      %v1698 = vadd.f32 %v1609, %v1697
      %v1699 = vpop.f32.mrf.mxu0
      %v1700 = vadd.f32 %v1611, %v1699
      %1701 = vmatmul.bf16.gmra.mxu0 %v1357
      %v1702 = vpop.f32.mrf.mxu0
      %v1703 = vadd.f32 %v1614, %v1702
      %v1704 = vpop.f32.mrf.mxu0
      %v1705 = vadd.f32 %v1616, %v1704
      %1706 = vmatmul.bf16.gmra.mxu0 %v1359
      %v1707 = vpop.f32.mrf.mxu0
      %v1708 = vadd.f32 %v1619, %v1707
      %v1709 = vpop.f32.mrf.mxu0
      %v1710 = vadd.f32 %v1621, %v1709
      %1711 = vmatmul.bf16.gmra.mxu0 %v1361
      %v1712 = vpop.f32.mrf.mxu0
      %v1713 = vadd.f32 %v1624, %v1712
      %v1714 = vpop.f32.mrf.mxu0
      %v1715 = vadd.f32 %v1626, %v1714
      %1716 = vmatmul.bf16.gmra.mxu0 %v1363
      %v1717 = vpop.f32.mrf.mxu0
      %v1718 = vadd.f32 %v1629, %v1717
      %v1719 = vpop.f32.mrf.mxu0
      %v1720 = vadd.f32 %v1631, %v1719
      %1721 = vmatmul.bf16.gmra.mxu0 %v1365
      %v1722 = vpop.f32.mrf.mxu0
      %v1723 = vadd.f32 %v1634, %v1722
      %v1724 = vpop.f32.mrf.mxu0
      %v1725 = vadd.f32 %v1636, %v1724
      %1726 = vmatmul.bf16.gmra.mxu0 %v1367
      %v1727 = vpop.f32.mrf.mxu0
      %v1728 = vadd.f32 %v1639, %v1727
      %v1729 = vpop.f32.mrf.mxu0
      %v1730 = vadd.f32 %v1641, %v1729
      %1731 = vmatmul.bf16.gmra.mxu0 %v1369
      %v1732 = vpop.f32.mrf.mxu0
      %v1733 = vadd.f32 %v1644, %v1732
      %v1734 = vpop.f32.mrf.mxu0
      %v1735 = vadd.f32 %v1646, %v1734
      %1736 = vmatmul.bf16.gmra.mxu0 %v1371
      %v1737 = vpop.f32.mrf.mxu0
      %v1738 = vadd.f32 %v1649, %v1737
      %v1739 = vpop.f32.mrf.mxu0
      %v1740 = vadd.f32 %v1651, %v1739
      %1741 = vmatmul.bf16.gmra.mxu0 %v1373
      %v1742 = vpop.f32.mrf.mxu0
      %v1743 = vadd.f32 %v1654, %v1742
      %v1744 = vpop.f32.mrf.mxu0
      %v1745 = vadd.f32 %v1656, %v1744
      %1746 = vmatmul.bf16.gmra.mxu0 %v1375
      %v1747 = vpop.f32.mrf.mxu0
      %v1748 = vadd.f32 %v1659, %v1747
      %v1749 = vpop.f32.mrf.mxu0
      %v1750 = vadd.f32 %v1661, %v1749
      %1751 = vdwg.mxu0
      %1752 = vmatpush.bf16.msra.mxu0 %v1525
      %1753 = vmatpush.bf16.msra.mxu0 %v1523
      %1754 = vmatpush.bf16.msra.mxu0 %v1521
      %1755 = vmatpush.bf16.msra.mxu0 %v1519
      %1756 = vmatpush.bf16.msra.mxu0 %v1517
      %1757 = vmatpush.bf16.msra.mxu0 %v1515
      %1758 = vmatpush.bf16.msra.mxu0 %v1513
      %1759 = vmatpush.bf16.msra.mxu0 %v1511
      %1760 = vmatmul.bf16.gmra.mxu0 %v1344
      %v1761 = vpop.f32.mrf.mxu0
      %v1762 = vadd.f32 %v1411, %v1761
      %v1763 = vpop.f32.mrf.mxu0
      %v1764 = vadd.f32 %v1411, %v1763
      %1765 = vmatmul.bf16.gmra.mxu0 %v1346
      %v1766 = vpop.f32.mrf.mxu0
      %v1767 = vadd.f32 %v1411, %v1766
      %v1768 = vpop.f32.mrf.mxu0
      %v1769 = vadd.f32 %v1411, %v1768
      %1770 = vmatmul.bf16.gmra.mxu0 %v1348
      %v1771 = vpop.f32.mrf.mxu0
      %v1772 = vadd.f32 %v1411, %v1771
      %v1773 = vpop.f32.mrf.mxu0
      %v1774 = vadd.f32 %v1411, %v1773
      %1775 = vmatmul.bf16.gmra.mxu0 %v1350
      %v1776 = vpop.f32.mrf.mxu0
      %v1777 = vadd.f32 %v1411, %v1776
      %v1778 = vpop.f32.mrf.mxu0
      %v1779 = vadd.f32 %v1411, %v1778
      %1780 = vmatmul.bf16.gmra.mxu0 %v1352
      %v1781 = vpop.f32.mrf.mxu0
      %v1782 = vadd.f32 %v1411, %v1781
      %v1783 = vpop.f32.mrf.mxu0
      %v1784 = vadd.f32 %v1411, %v1783
      %1785 = vmatmul.bf16.gmra.mxu0 %v1354
      %v1786 = vpop.f32.mrf.mxu0
      %v1787 = vadd.f32 %v1411, %v1786
      %v1788 = vpop.f32.mrf.mxu0
      %v1789 = vadd.f32 %v1411, %v1788
      %1790 = vmatmul.bf16.gmra.mxu0 %v1356
      %v1791 = vpop.f32.mrf.mxu0
      %v1792 = vadd.f32 %v1411, %v1791
      %v1793 = vpop.f32.mrf.mxu0
      %v1794 = vadd.f32 %v1411, %v1793
      %1795 = vmatmul.bf16.gmra.mxu0 %v1358
      %v1796 = vpop.f32.mrf.mxu0
      %v1797 = vadd.f32 %v1411, %v1796
      %v1798 = vpop.f32.mrf.mxu0
      %v1799 = vadd.f32 %v1411, %v1798
      %1800 = vmatmul.bf16.gmra.mxu0 %v1360
      %v1801 = vpop.f32.mrf.mxu0
      %v1802 = vadd.f32 %v1411, %v1801
      %v1803 = vpop.f32.mrf.mxu0
      %v1804 = vadd.f32 %v1411, %v1803
      %1805 = vmatmul.bf16.gmra.mxu0 %v1362
      %v1806 = vpop.f32.mrf.mxu0
      %v1807 = vadd.f32 %v1411, %v1806
      %v1808 = vpop.f32.mrf.mxu0
      %v1809 = vadd.f32 %v1411, %v1808
      %1810 = vmatmul.bf16.gmra.mxu0 %v1364
      %v1811 = vpop.f32.mrf.mxu0
      %v1812 = vadd.f32 %v1411, %v1811
      %v1813 = vpop.f32.mrf.mxu0
      %v1814 = vadd.f32 %v1411, %v1813
      %1815 = vmatmul.bf16.gmra.mxu0 %v1366
      %v1816 = vpop.f32.mrf.mxu0
      %v1817 = vadd.f32 %v1411, %v1816
      %v1818 = vpop.f32.mrf.mxu0
      %v1819 = vadd.f32 %v1411, %v1818
      %1820 = vmatmul.bf16.gmra.mxu0 %v1368
      %v1821 = vpop.f32.mrf.mxu0
      %v1822 = vadd.f32 %v1411, %v1821
      %v1823 = vpop.f32.mrf.mxu0
      %v1824 = vadd.f32 %v1411, %v1823
      %1825 = vmatmul.bf16.gmra.mxu0 %v1370
      %v1826 = vpop.f32.mrf.mxu0
      %v1827 = vadd.f32 %v1411, %v1826
      %v1828 = vpop.f32.mrf.mxu0
      %v1829 = vadd.f32 %v1411, %v1828
      %1830 = vmatmul.bf16.gmra.mxu0 %v1372
      %v1831 = vpop.f32.mrf.mxu0
      %v1832 = vadd.f32 %v1411, %v1831
      %v1833 = vpop.f32.mrf.mxu0
      %v1834 = vadd.f32 %v1411, %v1833
      %1835 = vmatmul.bf16.gmra.mxu0 %v1374
      %v1836 = vpop.f32.mrf.mxu0
      %v1837 = vadd.f32 %v1411, %v1836
      %v1838 = vpop.f32.mrf.mxu0
      %v1839 = vadd.f32 %v1411, %v1838
      %1840 = vdwg.mxu0
      %1841 = vmatpush.bf16.msra.mxu0 %v1541
      %1842 = vmatpush.bf16.msra.mxu0 %v1539
      %1843 = vmatpush.bf16.msra.mxu0 %v1537
      %1844 = vmatpush.bf16.msra.mxu0 %v1535
      %1845 = vmatpush.bf16.msra.mxu0 %v1533
      %1846 = vmatpush.bf16.msra.mxu0 %v1531
      %1847 = vmatpush.bf16.msra.mxu0 %v1529
      %1848 = vmatpush.bf16.msra.mxu0 %v1527
      %1849 = vmatmul.bf16.gmra.mxu0 %v1345
      %v1850 = vpop.f32.mrf.mxu0
      %v1851 = vadd.f32 %v1762, %v1850
      %v1852 = vpop.f32.mrf.mxu0
      %v1853 = vadd.f32 %v1764, %v1852
      %1854 = vmatmul.bf16.gmra.mxu0 %v1347
      %v1855 = vpop.f32.mrf.mxu0
      %v1856 = vadd.f32 %v1767, %v1855
      %v1857 = vpop.f32.mrf.mxu0
      %v1858 = vadd.f32 %v1769, %v1857
      %1859 = vmatmul.bf16.gmra.mxu0 %v1349
      %v1860 = vpop.f32.mrf.mxu0
      %v1861 = vadd.f32 %v1772, %v1860
      %v1862 = vpop.f32.mrf.mxu0
      %v1863 = vadd.f32 %v1774, %v1862
      %1864 = vmatmul.bf16.gmra.mxu0 %v1351
      %v1865 = vpop.f32.mrf.mxu0
      %v1866 = vadd.f32 %v1777, %v1865
      %v1867 = vpop.f32.mrf.mxu0
      %v1868 = vadd.f32 %v1779, %v1867
      %1869 = vmatmul.bf16.gmra.mxu0 %v1353
      %v1870 = vpop.f32.mrf.mxu0
      %v1871 = vadd.f32 %v1782, %v1870
      %v1872 = vpop.f32.mrf.mxu0
      %v1873 = vadd.f32 %v1784, %v1872
      %1874 = vmatmul.bf16.gmra.mxu0 %v1355
      %v1875 = vpop.f32.mrf.mxu0
      %v1876 = vadd.f32 %v1787, %v1875
      %v1877 = vpop.f32.mrf.mxu0
      %v1878 = vadd.f32 %v1789, %v1877
      %1879 = vmatmul.bf16.gmra.mxu0 %v1357
      %v1880 = vpop.f32.mrf.mxu0
      %v1881 = vadd.f32 %v1792, %v1880
      %v1882 = vpop.f32.mrf.mxu0
      %v1883 = vadd.f32 %v1794, %v1882
      %1884 = vmatmul.bf16.gmra.mxu0 %v1359
      %v1885 = vpop.f32.mrf.mxu0
      %v1886 = vadd.f32 %v1797, %v1885
      %v1887 = vpop.f32.mrf.mxu0
      %v1888 = vadd.f32 %v1799, %v1887
      %1889 = vmatmul.bf16.gmra.mxu0 %v1361
      %v1890 = vpop.f32.mrf.mxu0
      %v1891 = vadd.f32 %v1802, %v1890
      %v1892 = vpop.f32.mrf.mxu0
      %v1893 = vadd.f32 %v1804, %v1892
      %1894 = vmatmul.bf16.gmra.mxu0 %v1363
      %v1895 = vpop.f32.mrf.mxu0
      %v1896 = vadd.f32 %v1807, %v1895
      %v1897 = vpop.f32.mrf.mxu0
      %v1898 = vadd.f32 %v1809, %v1897
      %1899 = vmatmul.bf16.gmra.mxu0 %v1365
      %v1900 = vpop.f32.mrf.mxu0
      %v1901 = vadd.f32 %v1812, %v1900
      %v1902 = vpop.f32.mrf.mxu0
      %v1903 = vadd.f32 %v1814, %v1902
      %1904 = vmatmul.bf16.gmra.mxu0 %v1367
      %v1905 = vpop.f32.mrf.mxu0
      %v1906 = vadd.f32 %v1817, %v1905
      %v1907 = vpop.f32.mrf.mxu0
      %v1908 = vadd.f32 %v1819, %v1907
      %1909 = vmatmul.bf16.gmra.mxu0 %v1369
      %v1910 = vpop.f32.mrf.mxu0
      %v1911 = vadd.f32 %v1822, %v1910
      %v1912 = vpop.f32.mrf.mxu0
      %v1913 = vadd.f32 %v1824, %v1912
      %1914 = vmatmul.bf16.gmra.mxu0 %v1371
      %v1915 = vpop.f32.mrf.mxu0
      %v1916 = vadd.f32 %v1827, %v1915
      %v1917 = vpop.f32.mrf.mxu0
      %v1918 = vadd.f32 %v1829, %v1917
      %1919 = vmatmul.bf16.gmra.mxu0 %v1373
      %v1920 = vpop.f32.mrf.mxu0
      %v1921 = vadd.f32 %v1832, %v1920
      %v1922 = vpop.f32.mrf.mxu0
      %v1923 = vadd.f32 %v1834, %v1922
      %1924 = vmatmul.bf16.gmra.mxu0 %v1375
      %v1925 = vpop.f32.mrf.mxu0
      %v1926 = vadd.f32 %v1837, %v1925
      %v1927 = vpop.f32.mrf.mxu0
      %v1928 = vadd.f32 %v1839, %v1927
      %1929 = vdwg.mxu0
      %vm1930 = vcmp.gt.f32.partialorder %v1673, 0.0
      %vm1931 = vcmp.gt.f32.partialorder %v1851, 0.0
      %vm1932 = vcmp.gt.f32.partialorder %v1675, 0.0
      %vm1933 = vcmp.gt.f32.partialorder %v1853, 0.0
      %vm1934 = vcmp.gt.f32.partialorder %v1678, 0.0
      %vm1935 = vcmp.gt.f32.partialorder %v1856, 0.0
      %vm1936 = vcmp.gt.f32.partialorder %v1680, 0.0
      %vm1937 = vcmp.gt.f32.partialorder %v1858, 0.0
      %vm1938 = vcmp.gt.f32.partialorder %v1683, 0.0
      %vm1939 = vcmp.gt.f32.partialorder %v1861, 0.0
      %vm1940 = vcmp.gt.f32.partialorder %v1685, 0.0
      %vm1941 = vcmp.gt.f32.partialorder %v1863, 0.0
      %vm1942 = vcmp.gt.f32.partialorder %v1688, 0.0
      %vm1943 = vcmp.gt.f32.partialorder %v1866, 0.0
      %vm1944 = vcmp.gt.f32.partialorder %v1690, 0.0
      %vm1945 = vcmp.gt.f32.partialorder %v1868, 0.0
      %vm1946 = vcmp.gt.f32.partialorder %v1693, 0.0
      %vm1947 = vcmp.gt.f32.partialorder %v1871, 0.0
      %vm1948 = vcmp.gt.f32.partialorder %v1695, 0.0
      %vm1949 = vcmp.gt.f32.partialorder %v1873, 0.0
      %vm1950 = vcmp.gt.f32.partialorder %v1698, 0.0
      %vm1951 = vcmp.gt.f32.partialorder %v1876, 0.0
      %vm1952 = vcmp.gt.f32.partialorder %v1700, 0.0
      %vm1953 = vcmp.gt.f32.partialorder %v1878, 0.0
      %vm1954 = vcmp.gt.f32.partialorder %v1703, 0.0
      %vm1955 = vcmp.gt.f32.partialorder %v1881, 0.0
      %vm1956 = vcmp.gt.f32.partialorder %v1705, 0.0
      %vm1957 = vcmp.gt.f32.partialorder %v1883, 0.0
      %vm1958 = vcmp.gt.f32.partialorder %v1708, 0.0
      %vm1959 = vcmp.gt.f32.partialorder %v1886, 0.0
      %vm1960 = vcmp.gt.f32.partialorder %v1710, 0.0
      %vm1961 = vcmp.gt.f32.partialorder %v1888, 0.0
      %vm1962 = vcmp.gt.f32.partialorder %v1713, 0.0
      %vm1963 = vcmp.gt.f32.partialorder %v1891, 0.0
      %vm1964 = vcmp.gt.f32.partialorder %v1715, 0.0
      %vm1965 = vcmp.gt.f32.partialorder %v1893, 0.0
      %vm1966 = vcmp.gt.f32.partialorder %v1718, 0.0
      %vm1967 = vcmp.gt.f32.partialorder %v1896, 0.0
      %vm1968 = vcmp.gt.f32.partialorder %v1720, 0.0
      %vm1969 = vcmp.gt.f32.partialorder %v1898, 0.0
      %vm1970 = vcmp.gt.f32.partialorder %v1723, 0.0
      %vm1971 = vcmp.gt.f32.partialorder %v1901, 0.0
      %vm1972 = vcmp.gt.f32.partialorder %v1725, 0.0
      %vm1973 = vcmp.gt.f32.partialorder %v1903, 0.0
      %vm1974 = vcmp.gt.f32.partialorder %v1728, 0.0
      %vm1975 = vcmp.gt.f32.partialorder %v1906, 0.0
      %vm1976 = vcmp.gt.f32.partialorder %v1730, 0.0
      %vm1977 = vcmp.gt.f32.partialorder %v1908, 0.0
      %vm1978 = vcmp.gt.f32.partialorder %v1733, 0.0
      %vm1979 = vcmp.gt.f32.partialorder %v1911, 0.0
      %vm1980 = vcmp.gt.f32.partialorder %v1735, 0.0
      %vm1981 = vcmp.gt.f32.partialorder %v1913, 0.0
      %vm1982 = vcmp.gt.f32.partialorder %v1738, 0.0
      %vm1983 = vcmp.gt.f32.partialorder %v1916, 0.0
      %vm1984 = vcmp.gt.f32.partialorder %v1740, 0.0
      %vm1985 = vcmp.gt.f32.partialorder %v1918, 0.0
      %vm1986 = vcmp.gt.f32.partialorder %v1743, 0.0
      %vm1987 = vcmp.gt.f32.partialorder %v1921, 0.0
      %vm1988 = vcmp.gt.f32.partialorder %v1745, 0.0
      %vm1989 = vcmp.gt.f32.partialorder %v1923, 0.0
      %vm1990 = vcmp.gt.f32.partialorder %v1748, 0.0
      %vm1991 = vcmp.gt.f32.partialorder %v1926, 0.0
      %vm1992 = vcmp.gt.f32.partialorder %v1750, 0.0
      %vm1993 = vcmp.gt.f32.partialorder %v1928, 0.0
      %v1994 = vmul.f32 %v1673, 1.442695
      %v1995 = vpow.pop %v1994
      %v1996 = vmul.f32 %v1851, 1.442695
      %v1997 = vpow.pop %v1996
      %v1998 = vmul.f32 %v1675, 1.442695
      %v1999 = vpow.pop %v1998
      %v2000 = vmul.f32 %v1853, 1.442695
      %v2001 = vpow.pop %v2000
      %v2002 = vmul.f32 %v1678, 1.442695
      %v2003 = vpow.pop %v2002
      %v2004 = vmul.f32 %v1856, 1.442695
      %v2005 = vpow.pop %v2004
      %v2006 = vmul.f32 %v1680, 1.442695
      %v2007 = vpow.pop %v2006
      %v2008 = vmul.f32 %v1858, 1.442695
      %v2009 = vpow.pop %v2008
      %v2010 = vmul.f32 %v1683, 1.442695
      %v2011 = vpow.pop %v2010
      %v2012 = vmul.f32 %v1861, 1.442695
      %v2013 = vpow.pop %v2012
      %v2014 = vmul.f32 %v1685, 1.442695
      %v2015 = vpow.pop %v2014
      %v2016 = vmul.f32 %v1863, 1.442695
      %v2017 = vpow.pop %v2016
      %v2018 = vmul.f32 %v1688, 1.442695
      %v2019 = vpow.pop %v2018
      %v2020 = vmul.f32 %v1866, 1.442695
      %v2021 = vpow.pop %v2020
      %v2022 = vmul.f32 %v1690, 1.442695
      %v2023 = vpow.pop %v2022
      %v2024 = vmul.f32 %v1868, 1.442695
      %v2025 = vpow.pop %v2024
      %v2026 = vmul.f32 %v1693, 1.442695
      %v2027 = vpow.pop %v2026
      %v2028 = vmul.f32 %v1871, 1.442695
      %v2029 = vpow.pop %v2028
      %v2030 = vmul.f32 %v1695, 1.442695
      %v2031 = vpow.pop %v2030
      %v2032 = vmul.f32 %v1873, 1.442695
      %v2033 = vpow.pop %v2032
      %v2034 = vmul.f32 %v1698, 1.442695
      %v2035 = vpow.pop %v2034
      %v2036 = vmul.f32 %v1876, 1.442695
      %v2037 = vpow.pop %v2036
      %v2038 = vmul.f32 %v1700, 1.442695
      %v2039 = vpow.pop %v2038
      %v2040 = vmul.f32 %v1878, 1.442695
      %v2041 = vpow.pop %v2040
      %v2042 = vmul.f32 %v1703, 1.442695
      %v2043 = vpow.pop %v2042
      %v2044 = vmul.f32 %v1881, 1.442695
      %v2045 = vpow.pop %v2044
      %v2046 = vmul.f32 %v1705, 1.442695
      %v2047 = vpow.pop %v2046
      %v2048 = vmul.f32 %v1883, 1.442695
      %v2049 = vpow.pop %v2048
      %v2050 = vmul.f32 %v1708, 1.442695
      %v2051 = vpow.pop %v2050
      %v2052 = vmul.f32 %v1886, 1.442695
      %v2053 = vpow.pop %v2052
      %v2054 = vmul.f32 %v1710, 1.442695
      %v2055 = vpow.pop %v2054
      %v2056 = vmul.f32 %v1888, 1.442695
      %v2057 = vpow.pop %v2056
      %v2058 = vmul.f32 %v1713, 1.442695
      %v2059 = vpow.pop %v2058
      %v2060 = vmul.f32 %v1891, 1.442695
      %v2061 = vpow.pop %v2060
      %v2062 = vmul.f32 %v1715, 1.442695
      %v2063 = vpow.pop %v2062
      %v2064 = vmul.f32 %v1893, 1.442695
      %v2065 = vpow.pop %v2064
      %v2066 = vmul.f32 %v1718, 1.442695
      %v2067 = vpow.pop %v2066
      %v2068 = vmul.f32 %v1896, 1.442695
      %v2069 = vpow.pop %v2068
      %v2070 = vmul.f32 %v1720, 1.442695
      %v2071 = vpow.pop %v2070
      %v2072 = vmul.f32 %v1898, 1.442695
      %v2073 = vpow.pop %v2072
      %v2074 = vmul.f32 %v1723, 1.442695
      %v2075 = vpow.pop %v2074
      %v2076 = vmul.f32 %v1901, 1.442695
      %v2077 = vpow.pop %v2076
      %v2078 = vmul.f32 %v1725, 1.442695
      %v2079 = vpow.pop %v2078
      %v2080 = vmul.f32 %v1903, 1.442695
      %v2081 = vpow.pop %v2080
      %v2082 = vmul.f32 %v1728, 1.442695
      %v2083 = vpow.pop %v2082
      %v2084 = vmul.f32 %v1906, 1.442695
      %v2085 = vpow.pop %v2084
      %v2086 = vmul.f32 %v1730, 1.442695
      %v2087 = vpow.pop %v2086
      %v2088 = vmul.f32 %v1908, 1.442695
      %v2089 = vpow.pop %v2088
      %v2090 = vmul.f32 %v1733, 1.442695
      %v2091 = vpow.pop %v2090
      %v2092 = vmul.f32 %v1911, 1.442695
      %v2093 = vpow.pop %v2092
      %v2094 = vmul.f32 %v1735, 1.442695
      %v2095 = vpow.pop %v2094
      %v2096 = vmul.f32 %v1913, 1.442695
      %v2097 = vpow.pop %v2096
      %v2098 = vmul.f32 %v1738, 1.442695
      %v2099 = vpow.pop %v2098
      %v2100 = vmul.f32 %v1916, 1.442695
      %v2101 = vpow.pop %v2100
      %v2102 = vmul.f32 %v1740, 1.442695
      %v2103 = vpow.pop %v2102
      %v2104 = vmul.f32 %v1918, 1.442695
      %v2105 = vpow.pop %v2104
      %v2106 = vmul.f32 %v1743, 1.442695
      %v2107 = vpow.pop %v2106
      %v2108 = vmul.f32 %v1921, 1.442695
      %v2109 = vpow.pop %v2108
      %v2110 = vmul.f32 %v1745, 1.442695
      %v2111 = vpow.pop %v2110
      %v2112 = vmul.f32 %v1923, 1.442695
      %v2113 = vpow.pop %v2112
      %v2114 = vmul.f32 %v1748, 1.442695
      %v2115 = vpow.pop %v2114
      %v2116 = vmul.f32 %v1926, 1.442695
      %v2117 = vpow.pop %v2116
      %v2118 = vmul.f32 %v1750, 1.442695
      %v2119 = vpow.pop %v2118
      %v2120 = vmul.f32 %v1928, 1.442695
      %v2121 = vpow.pop %v2120
      %v2122 = vsub.f32 %v1995, 1.0
      %v2123 = vsub.f32 %v1997, 1.0
      %v2124 = vsub.f32 %v1999, 1.0
      %v2125 = vsub.f32 %v2001, 1.0
      %v2126 = vsub.f32 %v2003, 1.0
      %v2127 = vsub.f32 %v2005, 1.0
      %v2128 = vsub.f32 %v2007, 1.0
      %v2129 = vsub.f32 %v2009, 1.0
      %v2130 = vsub.f32 %v2011, 1.0
      %v2131 = vsub.f32 %v2013, 1.0
      %v2132 = vsub.f32 %v2015, 1.0
      %v2133 = vsub.f32 %v2017, 1.0
      %v2134 = vsub.f32 %v2019, 1.0
      %v2135 = vsub.f32 %v2021, 1.0
      %v2136 = vsub.f32 %v2023, 1.0
      %v2137 = vsub.f32 %v2025, 1.0
      %v2138 = vsub.f32 %v2027, 1.0
      %v2139 = vsub.f32 %v2029, 1.0
      %v2140 = vsub.f32 %v2031, 1.0
      %v2141 = vsub.f32 %v2033, 1.0
      %v2142 = vsub.f32 %v2035, 1.0
      %v2143 = vsub.f32 %v2037, 1.0
      %v2144 = vsub.f32 %v2039, 1.0
      %v2145 = vsub.f32 %v2041, 1.0
      %v2146 = vsub.f32 %v2043, 1.0
      %v2147 = vsub.f32 %v2045, 1.0
      %v2148 = vsub.f32 %v2047, 1.0
      %v2149 = vsub.f32 %v2049, 1.0
      %v2150 = vsub.f32 %v2051, 1.0
      %v2151 = vsub.f32 %v2053, 1.0
      %v2152 = vsub.f32 %v2055, 1.0
      %v2153 = vsub.f32 %v2057, 1.0
      %v2154 = vsub.f32 %v2059, 1.0
      %v2155 = vsub.f32 %v2061, 1.0
      %v2156 = vsub.f32 %v2063, 1.0
      %v2157 = vsub.f32 %v2065, 1.0
      %v2158 = vsub.f32 %v2067, 1.0
      %v2159 = vsub.f32 %v2069, 1.0
      %v2160 = vsub.f32 %v2071, 1.0
      %v2161 = vsub.f32 %v2073, 1.0
      %v2162 = vsub.f32 %v2075, 1.0
      %v2163 = vsub.f32 %v2077, 1.0
      %v2164 = vsub.f32 %v2079, 1.0
      %v2165 = vsub.f32 %v2081, 1.0
      %v2166 = vsub.f32 %v2083, 1.0
      %v2167 = vsub.f32 %v2085, 1.0
      %v2168 = vsub.f32 %v2087, 1.0
      %v2169 = vsub.f32 %v2089, 1.0
      %v2170 = vsub.f32 %v2091, 1.0
      %v2171 = vsub.f32 %v2093, 1.0
      %v2172 = vsub.f32 %v2095, 1.0
      %v2173 = vsub.f32 %v2097, 1.0
      %v2174 = vsub.f32 %v2099, 1.0
      %v2175 = vsub.f32 %v2101, 1.0
      %v2176 = vsub.f32 %v2103, 1.0
      %v2177 = vsub.f32 %v2105, 1.0
      %v2178 = vsub.f32 %v2107, 1.0
      %v2179 = vsub.f32 %v2109, 1.0
      %v2180 = vsub.f32 %v2111, 1.0
      %v2181 = vsub.f32 %v2113, 1.0
      %v2182 = vsub.f32 %v2115, 1.0
      %v2183 = vsub.f32 %v2117, 1.0
      %v2184 = vsub.f32 %v2119, 1.0
      %v2185 = vsub.f32 %v2121, 1.0
      %v2186 = vmul.f32 %v2122, 1.6732632
      %v2187 = vmul.f32 %v2123, 1.6732632
      %v2188 = vmul.f32 %v2124, 1.6732632
      %v2189 = vmul.f32 %v2125, 1.6732632
      %v2190 = vmul.f32 %v2126, 1.6732632
      %v2191 = vmul.f32 %v2127, 1.6732632
      %v2192 = vmul.f32 %v2128, 1.6732632
      %v2193 = vmul.f32 %v2129, 1.6732632
      %v2194 = vmul.f32 %v2130, 1.6732632
      %v2195 = vmul.f32 %v2131, 1.6732632
      %v2196 = vmul.f32 %v2132, 1.6732632
      %v2197 = vmul.f32 %v2133, 1.6732632
      %v2198 = vmul.f32 %v2134, 1.6732632
      %v2199 = vmul.f32 %v2135, 1.6732632
      %v2200 = vmul.f32 %v2136, 1.6732632
      %v2201 = vmul.f32 %v2137, 1.6732632
      %v2202 = vmul.f32 %v2138, 1.6732632
      %v2203 = vmul.f32 %v2139, 1.6732632
      %v2204 = vmul.f32 %v2140, 1.6732632
      %v2205 = vmul.f32 %v2141, 1.6732632
      %v2206 = vmul.f32 %v2142, 1.6732632
      %v2207 = vmul.f32 %v2143, 1.6732632
      %v2208 = vmul.f32 %v2144, 1.6732632
      %v2209 = vmul.f32 %v2145, 1.6732632
      %v2210 = vmul.f32 %v2146, 1.6732632
      %v2211 = vmul.f32 %v2147, 1.6732632
      %v2212 = vmul.f32 %v2148, 1.6732632
      %v2213 = vmul.f32 %v2149, 1.6732632
      %v2214 = vmul.f32 %v2150, 1.6732632
      %v2215 = vmul.f32 %v2151, 1.6732632
      %v2216 = vmul.f32 %v2152, 1.6732632
      %v2217 = vmul.f32 %v2153, 1.6732632
      %v2218 = vmul.f32 %v2154, 1.6732632
      %v2219 = vmul.f32 %v2155, 1.6732632
      %v2220 = vmul.f32 %v2156, 1.6732632
      %v2221 = vmul.f32 %v2157, 1.6732632
      %v2222 = vmul.f32 %v2158, 1.6732632
      %v2223 = vmul.f32 %v2159, 1.6732632
      %v2224 = vmul.f32 %v2160, 1.6732632
      %v2225 = vmul.f32 %v2161, 1.6732632
      %v2226 = vmul.f32 %v2162, 1.6732632
      %v2227 = vmul.f32 %v2163, 1.6732632
      %v2228 = vmul.f32 %v2164, 1.6732632
      %v2229 = vmul.f32 %v2165, 1.6732632
      %v2230 = vmul.f32 %v2166, 1.6732632
      %v2231 = vmul.f32 %v2167, 1.6732632
      %v2232 = vmul.f32 %v2168, 1.6732632
      %v2233 = vmul.f32 %v2169, 1.6732632
      %v2234 = vmul.f32 %v2170, 1.6732632
      %v2235 = vmul.f32 %v2171, 1.6732632
      %v2236 = vmul.f32 %v2172, 1.6732632
      %v2237 = vmul.f32 %v2173, 1.6732632
      %v2238 = vmul.f32 %v2174, 1.6732632
      %v2239 = vmul.f32 %v2175, 1.6732632
      %v2240 = vmul.f32 %v2176, 1.6732632
      %v2241 = vmul.f32 %v2177, 1.6732632
      %v2242 = vmul.f32 %v2178, 1.6732632
      %v2243 = vmul.f32 %v2179, 1.6732632
      %v2244 = vmul.f32 %v2180, 1.6732632
      %v2245 = vmul.f32 %v2181, 1.6732632
      %v2246 = vmul.f32 %v2182, 1.6732632
      %v2247 = vmul.f32 %v2183, 1.6732632
      %v2248 = vmul.f32 %v2184, 1.6732632
      %v2249 = vmul.f32 %v2185, 1.6732632
      %v2250 = vsel %vm1930, %v1673, %v2186
      %v2251 = vsel %vm1931, %v1851, %v2187
      %v2252 = vsel %vm1932, %v1675, %v2188
      %v2253 = vsel %vm1933, %v1853, %v2189
      %v2254 = vsel %vm1934, %v1678, %v2190
      %v2255 = vsel %vm1935, %v1856, %v2191
      %v2256 = vsel %vm1936, %v1680, %v2192
      %v2257 = vsel %vm1937, %v1858, %v2193
      %v2258 = vsel %vm1938, %v1683, %v2194
      %v2259 = vsel %vm1939, %v1861, %v2195
      %v2260 = vsel %vm1940, %v1685, %v2196
      %v2261 = vsel %vm1941, %v1863, %v2197
      %v2262 = vsel %vm1942, %v1688, %v2198
      %v2263 = vsel %vm1943, %v1866, %v2199
      %v2264 = vsel %vm1944, %v1690, %v2200
      %v2265 = vsel %vm1945, %v1868, %v2201
      %v2266 = vsel %vm1946, %v1693, %v2202
      %v2267 = vsel %vm1947, %v1871, %v2203
      %v2268 = vsel %vm1948, %v1695, %v2204
      %v2269 = vsel %vm1949, %v1873, %v2205
      %v2270 = vsel %vm1950, %v1698, %v2206
      %v2271 = vsel %vm1951, %v1876, %v2207
      %v2272 = vsel %vm1952, %v1700, %v2208
      %v2273 = vsel %vm1953, %v1878, %v2209
      %v2274 = vsel %vm1954, %v1703, %v2210
      %v2275 = vsel %vm1955, %v1881, %v2211
      %v2276 = vsel %vm1956, %v1705, %v2212
      %v2277 = vsel %vm1957, %v1883, %v2213
      %v2278 = vsel %vm1958, %v1708, %v2214
      %v2279 = vsel %vm1959, %v1886, %v2215
      %v2280 = vsel %vm1960, %v1710, %v2216
      %v2281 = vsel %vm1961, %v1888, %v2217
      %v2282 = vsel %vm1962, %v1713, %v2218
      %v2283 = vsel %vm1963, %v1891, %v2219
      %v2284 = vsel %vm1964, %v1715, %v2220
      %v2285 = vsel %vm1965, %v1893, %v2221
      %v2286 = vsel %vm1966, %v1718, %v2222
      %v2287 = vsel %vm1967, %v1896, %v2223
      %v2288 = vsel %vm1968, %v1720, %v2224
      %v2289 = vsel %vm1969, %v1898, %v2225
      %v2290 = vsel %vm1970, %v1723, %v2226
      %v2291 = vsel %vm1971, %v1901, %v2227
      %v2292 = vsel %vm1972, %v1725, %v2228
      %v2293 = vsel %vm1973, %v1903, %v2229
      %v2294 = vsel %vm1974, %v1728, %v2230
      %v2295 = vsel %vm1975, %v1906, %v2231
      %v2296 = vsel %vm1976, %v1730, %v2232
      %v2297 = vsel %vm1977, %v1908, %v2233
      %v2298 = vsel %vm1978, %v1733, %v2234
      %v2299 = vsel %vm1979, %v1911, %v2235
      %v2300 = vsel %vm1980, %v1735, %v2236
      %v2301 = vsel %vm1981, %v1913, %v2237
      %v2302 = vsel %vm1982, %v1738, %v2238
      %v2303 = vsel %vm1983, %v1916, %v2239
      %v2304 = vsel %vm1984, %v1740, %v2240
      %v2305 = vsel %vm1985, %v1918, %v2241
      %v2306 = vsel %vm1986, %v1743, %v2242
      %v2307 = vsel %vm1987, %v1921, %v2243
      %v2308 = vsel %vm1988, %v1745, %v2244
      %v2309 = vsel %vm1989, %v1923, %v2245
      %v2310 = vsel %vm1990, %v1748, %v2246
      %v2311 = vsel %vm1991, %v1926, %v2247
      %v2312 = vsel %vm1992, %v1750, %v2248
      %v2313 = vsel %vm1993, %v1928, %v2249
      %v2314 = vmul.f32 %v2250, 1.050701
      %v2315 = vmul.f32 %v2251, 1.050701
      %v2316 = vmul.f32 %v2252, 1.050701
      %v2317 = vmul.f32 %v2253, 1.050701
      %v2318 = vmul.f32 %v2254, 1.050701
      %v2319 = vmul.f32 %v2255, 1.050701
      %v2320 = vmul.f32 %v2256, 1.050701
      %v2321 = vmul.f32 %v2257, 1.050701
      %v2322 = vmul.f32 %v2258, 1.050701
      %v2323 = vmul.f32 %v2259, 1.050701
      %v2324 = vmul.f32 %v2260, 1.050701
      %v2325 = vmul.f32 %v2261, 1.050701
      %v2326 = vmul.f32 %v2262, 1.050701
      %v2327 = vmul.f32 %v2263, 1.050701
      %v2328 = vmul.f32 %v2264, 1.050701
      %v2329 = vmul.f32 %v2265, 1.050701
      %v2330 = vmul.f32 %v2266, 1.050701
      %v2331 = vmul.f32 %v2267, 1.050701
      %v2332 = vmul.f32 %v2268, 1.050701
      %v2333 = vmul.f32 %v2269, 1.050701
      %v2334 = vmul.f32 %v2270, 1.050701
      %v2335 = vmul.f32 %v2271, 1.050701
      %v2336 = vmul.f32 %v2272, 1.050701
      %v2337 = vmul.f32 %v2273, 1.050701
      %v2338 = vmul.f32 %v2274, 1.050701
      %v2339 = vmul.f32 %v2275, 1.050701
      %v2340 = vmul.f32 %v2276, 1.050701
      %v2341 = vmul.f32 %v2277, 1.050701
      %v2342 = vmul.f32 %v2278, 1.050701
      %v2343 = vmul.f32 %v2279, 1.050701
      %v2344 = vmul.f32 %v2280, 1.050701
      %v2345 = vmul.f32 %v2281, 1.050701
      %v2346 = vmul.f32 %v2282, 1.050701
      %v2347 = vmul.f32 %v2283, 1.050701
      %v2348 = vmul.f32 %v2284, 1.050701
      %v2349 = vmul.f32 %v2285, 1.050701
      %v2350 = vmul.f32 %v2286, 1.050701
      %v2351 = vmul.f32 %v2287, 1.050701
      %v2352 = vmul.f32 %v2288, 1.050701
      %v2353 = vmul.f32 %v2289, 1.050701
      %v2354 = vmul.f32 %v2290, 1.050701
      %v2355 = vmul.f32 %v2291, 1.050701
      %v2356 = vmul.f32 %v2292, 1.050701
      %v2357 = vmul.f32 %v2293, 1.050701
      %v2358 = vmul.f32 %v2294, 1.050701
      %v2359 = vmul.f32 %v2295, 1.050701
      %v2360 = vmul.f32 %v2296, 1.050701
      %v2361 = vmul.f32 %v2297, 1.050701
      %v2362 = vmul.f32 %v2298, 1.050701
      %v2363 = vmul.f32 %v2299, 1.050701
      %v2364 = vmul.f32 %v2300, 1.050701
      %v2365 = vmul.f32 %v2301, 1.050701
      %v2366 = vmul.f32 %v2302, 1.050701
      %v2367 = vmul.f32 %v2303, 1.050701
      %v2368 = vmul.f32 %v2304, 1.050701
      %v2369 = vmul.f32 %v2305, 1.050701
      %v2370 = vmul.f32 %v2306, 1.050701
      %v2371 = vmul.f32 %v2307, 1.050701
      %v2372 = vmul.f32 %v2308, 1.050701
      %v2373 = vmul.f32 %v2309, 1.050701
      %v2374 = vmul.f32 %v2310, 1.050701
      %v2375 = vmul.f32 %v2311, 1.050701
      %v2376 = vmul.f32 %v2312, 1.050701
      %v2377 = vmul.f32 %v2313, 1.050701
      %v2378 = vpack.c.bf16 %v2316, %v2314
      %v2379 = vpack.c.bf16 %v2317, %v2315
      %v2380 = vpack.c.bf16 %v2320, %v2318
      %v2381 = vpack.c.bf16 %v2321, %v2319
      %v2382 = vpack.c.bf16 %v2324, %v2322
      %v2383 = vpack.c.bf16 %v2325, %v2323
      %v2384 = vpack.c.bf16 %v2328, %v2326
      %v2385 = vpack.c.bf16 %v2329, %v2327
      %v2386 = vpack.c.bf16 %v2332, %v2330
      %v2387 = vpack.c.bf16 %v2333, %v2331
      %v2388 = vpack.c.bf16 %v2336, %v2334
      %v2389 = vpack.c.bf16 %v2337, %v2335
      %v2390 = vpack.c.bf16 %v2340, %v2338
      %v2391 = vpack.c.bf16 %v2341, %v2339
      %v2392 = vpack.c.bf16 %v2344, %v2342
      %v2393 = vpack.c.bf16 %v2345, %v2343
      %v2394 = vpack.c.bf16 %v2348, %v2346
      %v2395 = vpack.c.bf16 %v2349, %v2347
      %v2396 = vpack.c.bf16 %v2352, %v2350
      %v2397 = vpack.c.bf16 %v2353, %v2351
      %v2398 = vpack.c.bf16 %v2356, %v2354
      %v2399 = vpack.c.bf16 %v2357, %v2355
      %v2400 = vpack.c.bf16 %v2360, %v2358
      %v2401 = vpack.c.bf16 %v2361, %v2359
      %v2402 = vpack.c.bf16 %v2364, %v2362
      %v2403 = vpack.c.bf16 %v2365, %v2363
      %v2404 = vpack.c.bf16 %v2368, %v2366
      %v2405 = vpack.c.bf16 %v2369, %v2367
      %v2406 = vpack.c.bf16 %v2372, %v2370
      %v2407 = vpack.c.bf16 %v2373, %v2371
      %v2408 = vpack.c.bf16 %v2376, %v2374
      %v2409 = vpack.c.bf16 %v2377, %v2375
      %v2410 = vld [vmem:[#allocation9] sm:$0xf]
      %v2411 = vld [vmem:[#allocation9 + $0xc] sm:$0xf]
      %v2412 = vld [vmem:[#allocation9 + $0x18] sm:$0xf]
      %v2413 = vld [vmem:[#allocation9 + $0x24] sm:$0xf]
      %v2414 = vld [vmem:[#allocation9 + $0x30] sm:$0xf]
      %v2415 = vld [vmem:[#allocation9 + $0x3c] sm:$0xf]
      %v2416 = vld [vmem:[#allocation9 + $0x48] sm:$0xf]
      %v2417 = vld [vmem:[#allocation9 + $0x54] sm:$0xf]
      %v2418 = vld [vmem:[#allocation9 + $0x60] sm:$0xf]
      %v2419 = vld [vmem:[#allocation9 + $0x6c] sm:$0xf]
      %v2420 = vld [vmem:[#allocation9 + $0x78] sm:$0xf]
      %v2421 = vld [vmem:[#allocation9 + $0x84] sm:$0xf]
      %v2422 = vld [vmem:[#allocation9 + $0x90] sm:$0xf]
      %v2423 = vld [vmem:[#allocation9 + $0x9c] sm:$0xf]
      %v2424 = vld [vmem:[#allocation9 + $0xa8] sm:$0xf]
      %v2425 = vld [vmem:[#allocation9 + $0xb4] sm:$0xf]
      %v2426 = vld [vmem:[#allocation9 + $0xc0] sm:$0xf]
      %v2427 = vld [vmem:[#allocation9 + $0xcc] sm:$0xf]
      %v2428 = vld [vmem:[#allocation9 + $0xd8] sm:$0xf]
      %v2429 = vld [vmem:[#allocation9 + $0xe4] sm:$0xf]
      %v2430 = vld [vmem:[#allocation9 + $0xf0] sm:$0xf]
      %v2431 = vld [vmem:[#allocation9 + $0xfc] sm:$0xf]
      %v2432 = vld [vmem:[#allocation9 + $0x108] sm:$0xf]
      %v2433 = vld [vmem:[#allocation9 + $0x114] sm:$0xf]
      %v2434 = vld [vmem:[#allocation9 + $0x120] sm:$0xf]
      %v2435 = vld [vmem:[#allocation9 + $0x12c] sm:$0xf]
      %v2436 = vld [vmem:[#allocation9 + $0x138] sm:$0xf]
      %v2437 = vld [vmem:[#allocation9 + $0x144] sm:$0xf]
      %v2438 = vld [vmem:[#allocation9 + $0x150] sm:$0xf]
      %v2439 = vld [vmem:[#allocation9 + $0x15c] sm:$0xf]
      %v2440 = vld [vmem:[#allocation9 + $0x168] sm:$0xf]
      %v2441 = vld [vmem:[#allocation9 + $0x174] sm:$0xf]
      %v2442 = vld [vmem:[#allocation11 + $0x4] sm:$0x1]
      %v2444 = vperm.slane %v2442, 0
      %v2478 = vunpack.c.l.b16 %v2410
      %v2479 = vunpack.c.l.b16 %v2411
      %v2480 = vunpack.c.l.b16 %v2412
      %v2481 = vunpack.c.l.b16 %v2413
      %v2482 = vunpack.c.l.b16 %v2414
      %v2483 = vunpack.c.l.b16 %v2415
      %v2484 = vunpack.c.l.b16 %v2416
      %v2485 = vunpack.c.l.b16 %v2417
      %v2486 = vunpack.c.l.b16 %v2418
      %v2487 = vunpack.c.l.b16 %v2419
      %v2488 = vunpack.c.l.b16 %v2420
      %v2489 = vunpack.c.l.b16 %v2421
      %v2490 = vunpack.c.l.b16 %v2422
      %v2491 = vunpack.c.l.b16 %v2423
      %v2492 = vunpack.c.l.b16 %v2424
      %v2493 = vunpack.c.l.b16 %v2425
      %v2494 = vunpack.c.l.b16 %v2426
      %v2495 = vunpack.c.l.b16 %v2427
      %v2496 = vunpack.c.l.b16 %v2428
      %v2497 = vunpack.c.l.b16 %v2429
      %v2498 = vunpack.c.l.b16 %v2430
      %v2499 = vunpack.c.l.b16 %v2431
      %v2500 = vunpack.c.l.b16 %v2432
      %v2501 = vunpack.c.l.b16 %v2433
      %v2502 = vunpack.c.l.b16 %v2434
      %v2503 = vunpack.c.l.b16 %v2435
      %v2504 = vunpack.c.l.b16 %v2436
      %v2505 = vunpack.c.l.b16 %v2437
      %v2506 = vunpack.c.l.b16 %v2438
      %v2507 = vunpack.c.l.b16 %v2439
      %v2508 = vunpack.c.l.b16 %v2440
      %v2509 = vunpack.c.l.b16 %v2441
      %v2510 = vpack.c.b16 %v2479, %v2478
      %v2511 = vpack.c.b16 %v2481, %v2480
      %v2512 = vpack.c.b16 %v2483, %v2482
      %v2513 = vpack.c.b16 %v2485, %v2484
      %v2514 = vpack.c.b16 %v2487, %v2486
      %v2515 = vpack.c.b16 %v2489, %v2488
      %v2516 = vpack.c.b16 %v2491, %v2490
      %v2517 = vpack.c.b16 %v2493, %v2492
      %v2518 = vpack.c.b16 %v2495, %v2494
      %v2519 = vpack.c.b16 %v2497, %v2496
      %v2520 = vpack.c.b16 %v2499, %v2498
      %v2521 = vpack.c.b16 %v2501, %v2500
      %v2522 = vpack.c.b16 %v2503, %v2502
      %v2523 = vpack.c.b16 %v2505, %v2504
      %v2524 = vpack.c.b16 %v2507, %v2506
      %v2525 = vpack.c.b16 %v2509, %v2508
      %2542 = vmatpush.bf16.msra.mxu0 %v2517
      %2543 = vmatpush.bf16.msra.mxu0 %v2516
      %2544 = vmatpush.bf16.msra.mxu0 %v2515
      %2545 = vmatpush.bf16.msra.mxu0 %v2514
      %2546 = vmatpush.bf16.msra.mxu0 %v2513
      %2547 = vmatpush.bf16.msra.mxu0 %v2512
      %2548 = vmatpush.bf16.msra.mxu0 %v2511
      %2549 = vmatpush.bf16.msra.mxu0 %v2510
      %2550 = vmatmul.bf16.gmra.mxu0 %v2378
      %v2551 = vpop.f32.mrf.mxu0
      %v2552 = vadd.f32 %v2444, %v2551
      %v2553 = vpop.f32.mrf.mxu0
      %v2554 = vadd.f32 %v2444, %v2553
      %2555 = vmatmul.bf16.gmra.mxu0 %v2380
      %v2556 = vpop.f32.mrf.mxu0
      %v2557 = vadd.f32 %v2444, %v2556
      %v2558 = vpop.f32.mrf.mxu0
      %v2559 = vadd.f32 %v2444, %v2558
      %2560 = vmatmul.bf16.gmra.mxu0 %v2382
      %v2561 = vpop.f32.mrf.mxu0
      %v2562 = vadd.f32 %v2444, %v2561
      %v2563 = vpop.f32.mrf.mxu0
      %v2564 = vadd.f32 %v2444, %v2563
      %2565 = vmatmul.bf16.gmra.mxu0 %v2384
      %v2566 = vpop.f32.mrf.mxu0
      %v2567 = vadd.f32 %v2444, %v2566
      %v2568 = vpop.f32.mrf.mxu0
      %v2569 = vadd.f32 %v2444, %v2568
      %2570 = vmatmul.bf16.gmra.mxu0 %v2386
      %v2571 = vpop.f32.mrf.mxu0
      %v2572 = vadd.f32 %v2444, %v2571
      %v2573 = vpop.f32.mrf.mxu0
      %v2574 = vadd.f32 %v2444, %v2573
      %2575 = vmatmul.bf16.gmra.mxu0 %v2388
      %v2576 = vpop.f32.mrf.mxu0
      %v2577 = vadd.f32 %v2444, %v2576
      %v2578 = vpop.f32.mrf.mxu0
      %v2579 = vadd.f32 %v2444, %v2578
      %2580 = vmatmul.bf16.gmra.mxu0 %v2390
      %v2581 = vpop.f32.mrf.mxu0
      %v2582 = vadd.f32 %v2444, %v2581
      %v2583 = vpop.f32.mrf.mxu0
      %v2584 = vadd.f32 %v2444, %v2583
      %2585 = vmatmul.bf16.gmra.mxu0 %v2392
      %v2586 = vpop.f32.mrf.mxu0
      %v2587 = vadd.f32 %v2444, %v2586
      %v2588 = vpop.f32.mrf.mxu0
      %v2589 = vadd.f32 %v2444, %v2588
      %2590 = vmatmul.bf16.gmra.mxu0 %v2394
      %v2591 = vpop.f32.mrf.mxu0
      %v2592 = vadd.f32 %v2444, %v2591
      %v2593 = vpop.f32.mrf.mxu0
      %v2594 = vadd.f32 %v2444, %v2593
      %2595 = vmatmul.bf16.gmra.mxu0 %v2396
      %v2596 = vpop.f32.mrf.mxu0
      %v2597 = vadd.f32 %v2444, %v2596
      %v2598 = vpop.f32.mrf.mxu0
      %v2599 = vadd.f32 %v2444, %v2598
      %2600 = vmatmul.bf16.gmra.mxu0 %v2398
      %v2601 = vpop.f32.mrf.mxu0
      %v2602 = vadd.f32 %v2444, %v2601
      %v2603 = vpop.f32.mrf.mxu0
      %v2604 = vadd.f32 %v2444, %v2603
      %2605 = vmatmul.bf16.gmra.mxu0 %v2400
      %v2606 = vpop.f32.mrf.mxu0
      %v2607 = vadd.f32 %v2444, %v2606
      %v2608 = vpop.f32.mrf.mxu0
      %v2609 = vadd.f32 %v2444, %v2608
      %2610 = vmatmul.bf16.gmra.mxu0 %v2402
      %v2611 = vpop.f32.mrf.mxu0
      %v2612 = vadd.f32 %v2444, %v2611
      %v2613 = vpop.f32.mrf.mxu0
      %v2614 = vadd.f32 %v2444, %v2613
      %2615 = vmatmul.bf16.gmra.mxu0 %v2404
      %v2616 = vpop.f32.mrf.mxu0
      %v2617 = vadd.f32 %v2444, %v2616
      %v2618 = vpop.f32.mrf.mxu0
      %v2619 = vadd.f32 %v2444, %v2618
      %2620 = vmatmul.bf16.gmra.mxu0 %v2406
      %v2621 = vpop.f32.mrf.mxu0
      %v2622 = vadd.f32 %v2444, %v2621
      %v2623 = vpop.f32.mrf.mxu0
      %v2624 = vadd.f32 %v2444, %v2623
      %2625 = vmatmul.bf16.gmra.mxu0 %v2408
      %v2626 = vpop.f32.mrf.mxu0
      %v2627 = vadd.f32 %v2444, %v2626
      %v2628 = vpop.f32.mrf.mxu0
      %v2629 = vadd.f32 %v2444, %v2628
      %2630 = vdwg.mxu0
      %2631 = vmatpush.bf16.msra.mxu0 %v2525
      %2632 = vmatpush.bf16.msra.mxu0 %v2524
      %2633 = vmatpush.bf16.msra.mxu0 %v2523
      %2634 = vmatpush.bf16.msra.mxu0 %v2522
      %2635 = vmatpush.bf16.msra.mxu0 %v2521
      %2636 = vmatpush.bf16.msra.mxu0 %v2520
      %2637 = vmatpush.bf16.msra.mxu0 %v2519
      %2638 = vmatpush.bf16.msra.mxu0 %v2518
      %2639 = vmatmul.bf16.gmra.mxu0 %v2379
      %v2640 = vpop.f32.mrf.mxu0
      %v2641 = vadd.f32 %v2552, %v2640
      %v2642 = vpop.f32.mrf.mxu0
      %v2643 = vadd.f32 %v2554, %v2642
      %2644 = vmatmul.bf16.gmra.mxu0 %v2381
      %v2645 = vpop.f32.mrf.mxu0
      %v2646 = vadd.f32 %v2557, %v2645
      %v2647 = vpop.f32.mrf.mxu0
      %v2648 = vadd.f32 %v2559, %v2647
      %2649 = vmatmul.bf16.gmra.mxu0 %v2383
      %v2650 = vpop.f32.mrf.mxu0
      %v2651 = vadd.f32 %v2562, %v2650
      %v2652 = vpop.f32.mrf.mxu0
      %v2653 = vadd.f32 %v2564, %v2652
      %2654 = vmatmul.bf16.gmra.mxu0 %v2385
      %v2655 = vpop.f32.mrf.mxu0
      %v2656 = vadd.f32 %v2567, %v2655
      %v2657 = vpop.f32.mrf.mxu0
      %v2658 = vadd.f32 %v2569, %v2657
      %2659 = vmatmul.bf16.gmra.mxu0 %v2387
      %v2660 = vpop.f32.mrf.mxu0
      %v2661 = vadd.f32 %v2572, %v2660
      %v2662 = vpop.f32.mrf.mxu0
      %v2663 = vadd.f32 %v2574, %v2662
      %2664 = vmatmul.bf16.gmra.mxu0 %v2389
      %v2665 = vpop.f32.mrf.mxu0
      %v2666 = vadd.f32 %v2577, %v2665
      %v2667 = vpop.f32.mrf.mxu0
      %v2668 = vadd.f32 %v2579, %v2667
      %2669 = vmatmul.bf16.gmra.mxu0 %v2391
      %v2670 = vpop.f32.mrf.mxu0
      %v2671 = vadd.f32 %v2582, %v2670
      %v2672 = vpop.f32.mrf.mxu0
      %v2673 = vadd.f32 %v2584, %v2672
      %2674 = vmatmul.bf16.gmra.mxu0 %v2393
      %v2675 = vpop.f32.mrf.mxu0
      %v2676 = vadd.f32 %v2587, %v2675
      %v2677 = vpop.f32.mrf.mxu0
      %v2678 = vadd.f32 %v2589, %v2677
      %2679 = vmatmul.bf16.gmra.mxu0 %v2395
      %v2680 = vpop.f32.mrf.mxu0
      %v2681 = vadd.f32 %v2592, %v2680
      %v2682 = vpop.f32.mrf.mxu0
      %v2683 = vadd.f32 %v2594, %v2682
      %2684 = vmatmul.bf16.gmra.mxu0 %v2397
      %v2685 = vpop.f32.mrf.mxu0
      %v2686 = vadd.f32 %v2597, %v2685
      %v2687 = vpop.f32.mrf.mxu0
      %v2688 = vadd.f32 %v2599, %v2687
      %2689 = vmatmul.bf16.gmra.mxu0 %v2399
      %v2690 = vpop.f32.mrf.mxu0
      %v2691 = vadd.f32 %v2602, %v2690
      %v2692 = vpop.f32.mrf.mxu0
      %v2693 = vadd.f32 %v2604, %v2692
      %2694 = vmatmul.bf16.gmra.mxu0 %v2401
      %v2695 = vpop.f32.mrf.mxu0
      %v2696 = vadd.f32 %v2607, %v2695
      %v2697 = vpop.f32.mrf.mxu0
      %v2698 = vadd.f32 %v2609, %v2697
      %2699 = vmatmul.bf16.gmra.mxu0 %v2403
      %v2700 = vpop.f32.mrf.mxu0
      %v2701 = vadd.f32 %v2612, %v2700
      %v2702 = vpop.f32.mrf.mxu0
      %v2703 = vadd.f32 %v2614, %v2702
      %2704 = vmatmul.bf16.gmra.mxu0 %v2405
      %v2705 = vpop.f32.mrf.mxu0
      %v2706 = vadd.f32 %v2617, %v2705
      %v2707 = vpop.f32.mrf.mxu0
      %v2708 = vadd.f32 %v2619, %v2707
      %2709 = vmatmul.bf16.gmra.mxu0 %v2407
      %v2710 = vpop.f32.mrf.mxu0
      %v2711 = vadd.f32 %v2622, %v2710
      %v2712 = vpop.f32.mrf.mxu0
      %v2713 = vadd.f32 %v2624, %v2712
      %2714 = vmatmul.bf16.gmra.mxu0 %v2409
      %v2715 = vpop.f32.mrf.mxu0
      %v2716 = vadd.f32 %v2627, %v2715
      %v2717 = vpop.f32.mrf.mxu0
      %v2718 = vadd.f32 %v2629, %v2717
      %2719 = vdwg.mxu0
      %v2720 = vld [vmem:[#allocation9 + $0x180] sm:$0xf]
      %v2721 = vld [vmem:[#allocation9 + $0x18c] sm:$0xf]
      %v2722 = vld [vmem:[#allocation9 + $0x198] sm:$0xf]
      %v2723 = vld [vmem:[#allocation9 + $0x1a4] sm:$0xf]
      %v2724 = vld [vmem:[#allocation9 + $0x1b0] sm:$0xf]
      %v2725 = vld [vmem:[#allocation9 + $0x1bc] sm:$0xf]
      %v2726 = vld [vmem:[#allocation9 + $0x1c8] sm:$0xf]
      %v2727 = vld [vmem:[#allocation9 + $0x1d4] sm:$0xf]
      %v2728 = vld [vmem:[#allocation9 + $0x1e0] sm:$0xf]
      %v2729 = vld [vmem:[#allocation9 + $0x1ec] sm:$0xf]
      %v2730 = vld [vmem:[#allocation9 + $0x1f8] sm:$0xf]
      %v2731 = vld [vmem:[#allocation9 + $0x204] sm:$0xf]
      %v2732 = vld [vmem:[#allocation9 + $0x210] sm:$0xf]
      %v2733 = vld [vmem:[#allocation9 + $0x21c] sm:$0xf]
      %v2734 = vld [vmem:[#allocation9 + $0x228] sm:$0xf]
      %v2735 = vld [vmem:[#allocation9 + $0x234] sm:$0xf]
      %v2736 = vld [vmem:[#allocation9 + $0x240] sm:$0xf]
      %v2737 = vld [vmem:[#allocation9 + $0x24c] sm:$0xf]
      %v2738 = vld [vmem:[#allocation9 + $0x258] sm:$0xf]
      %v2739 = vld [vmem:[#allocation9 + $0x264] sm:$0xf]
      %v2740 = vld [vmem:[#allocation9 + $0x270] sm:$0xf]
      %v2741 = vld [vmem:[#allocation9 + $0x27c] sm:$0xf]
      %v2742 = vld [vmem:[#allocation9 + $0x288] sm:$0xf]
      %v2743 = vld [vmem:[#allocation9 + $0x294] sm:$0xf]
      %v2744 = vld [vmem:[#allocation9 + $0x2a0] sm:$0xf]
      %v2745 = vld [vmem:[#allocation9 + $0x2ac] sm:$0xf]
      %v2746 = vld [vmem:[#allocation9 + $0x2b8] sm:$0xf]
      %v2747 = vld [vmem:[#allocation9 + $0x2c4] sm:$0xf]
      %v2748 = vld [vmem:[#allocation9 + $0x2d0] sm:$0xf]
      %v2749 = vld [vmem:[#allocation9 + $0x2dc] sm:$0xf]
      %v2750 = vld [vmem:[#allocation9 + $0x2e8] sm:$0xf]
      %v2751 = vld [vmem:[#allocation9 + $0x2f4] sm:$0xf]
      %v2752 = vld [vmem:[#allocation9 + $0x300] sm:$0xf]
      %v2753 = vld [vmem:[#allocation9 + $0x30c] sm:$0xf]
      %v2754 = vld [vmem:[#allocation9 + $0x318] sm:$0xf]
      %v2755 = vld [vmem:[#allocation9 + $0x324] sm:$0xf]
      %v2756 = vld [vmem:[#allocation9 + $0x330] sm:$0xf]
      %v2757 = vld [vmem:[#allocation9 + $0x33c] sm:$0xf]
      %v2758 = vld [vmem:[#allocation9 + $0x348] sm:$0xf]
      %v2759 = vld [vmem:[#allocation9 + $0x354] sm:$0xf]
      %v2760 = vld [vmem:[#allocation9 + $0x360] sm:$0xf]
      %v2761 = vld [vmem:[#allocation9 + $0x36c] sm:$0xf]
      %v2762 = vld [vmem:[#allocation9 + $0x378] sm:$0xf]
      %v2763 = vld [vmem:[#allocation9 + $0x384] sm:$0xf]
      %v2764 = vld [vmem:[#allocation9 + $0x390] sm:$0xf]
      %v2765 = vld [vmem:[#allocation9 + $0x39c] sm:$0xf]
      %v2766 = vld [vmem:[#allocation9 + $0x3a8] sm:$0xf]
      %v2767 = vld [vmem:[#allocation9 + $0x3b4] sm:$0xf]
      %v2768 = vld [vmem:[#allocation9 + $0x3c0] sm:$0xf]
      %v2769 = vld [vmem:[#allocation9 + $0x3cc] sm:$0xf]
      %v2770 = vld [vmem:[#allocation9 + $0x3d8] sm:$0xf]
      %v2771 = vld [vmem:[#allocation9 + $0x3e4] sm:$0xf]
      %v2772 = vld [vmem:[#allocation9 + $0x3f0] sm:$0xf]
      %v2773 = vld [vmem:[#allocation9 + $0x3fc] sm:$0xf]
      %v2774 = vld [vmem:[#allocation9 + $0x408] sm:$0xf]
      %v2775 = vld [vmem:[#allocation9 + $0x414] sm:$0xf]
      %v2776 = vld [vmem:[#allocation9 + $0x420] sm:$0xf]
      %v2777 = vld [vmem:[#allocation9 + $0x42c] sm:$0xf]
      %v2778 = vld [vmem:[#allocation9 + $0x438] sm:$0xf]
      %v2779 = vld [vmem:[#allocation9 + $0x444] sm:$0xf]
      %v2780 = vld [vmem:[#allocation9 + $0x450] sm:$0xf]
      %v2781 = vld [vmem:[#allocation9 + $0x45c] sm:$0xf]
      %v2782 = vld [vmem:[#allocation9 + $0x468] sm:$0xf]
      %v2783 = vld [vmem:[#allocation9 + $0x474] sm:$0xf]
      %v2816 = vunpack.c.l.b16 %v2752
      %v2817 = vunpack.c.l.b16 %v2753
      %v2818 = vunpack.c.l.b16 %v2754
      %v2819 = vunpack.c.l.b16 %v2755
      %v2820 = vunpack.c.l.b16 %v2756
      %v2821 = vunpack.c.l.b16 %v2757
      %v2822 = vunpack.c.l.b16 %v2758
      %v2823 = vunpack.c.l.b16 %v2759
      %v2824 = vunpack.c.l.b16 %v2760
      %v2825 = vunpack.c.l.b16 %v2761
      %v2826 = vunpack.c.l.b16 %v2762
      %v2827 = vunpack.c.l.b16 %v2763
      %v2828 = vunpack.c.l.b16 %v2764
      %v2829 = vunpack.c.l.b16 %v2765
      %v2830 = vunpack.c.l.b16 %v2766
      %v2831 = vunpack.c.l.b16 %v2767
      %v2832 = vunpack.c.l.b16 %v2768
      %v2833 = vunpack.c.l.b16 %v2769
      %v2834 = vunpack.c.l.b16 %v2770
      %v2835 = vunpack.c.l.b16 %v2771
      %v2836 = vunpack.c.l.b16 %v2772
      %v2837 = vunpack.c.l.b16 %v2773
      %v2838 = vunpack.c.l.b16 %v2774
      %v2839 = vunpack.c.l.b16 %v2775
      %v2840 = vunpack.c.l.b16 %v2776
      %v2841 = vunpack.c.l.b16 %v2777
      %v2842 = vunpack.c.l.b16 %v2778
      %v2843 = vunpack.c.l.b16 %v2779
      %v2844 = vunpack.c.l.b16 %v2780
      %v2845 = vunpack.c.l.b16 %v2781
      %v2846 = vunpack.c.l.b16 %v2782
      %v2847 = vunpack.c.l.b16 %v2783
      %v2848 = vpack.c.b16 %v2817, %v2816
      %v2849 = vpack.c.b16 %v2819, %v2818
      %v2850 = vpack.c.b16 %v2821, %v2820
      %v2851 = vpack.c.b16 %v2823, %v2822
      %v2852 = vpack.c.b16 %v2825, %v2824
      %v2853 = vpack.c.b16 %v2827, %v2826
      %v2854 = vpack.c.b16 %v2829, %v2828
      %v2855 = vpack.c.b16 %v2831, %v2830
      %v2856 = vpack.c.b16 %v2833, %v2832
      %v2857 = vpack.c.b16 %v2835, %v2834
      %v2858 = vpack.c.b16 %v2837, %v2836
      %v2859 = vpack.c.b16 %v2839, %v2838
      %v2860 = vpack.c.b16 %v2841, %v2840
      %v2861 = vpack.c.b16 %v2843, %v2842
      %v2862 = vpack.c.b16 %v2845, %v2844
      %v2863 = vpack.c.b16 %v2847, %v2846
      %2880 = vmatpush.bf16.msra.mxu0 %v2855
      %2881 = vmatpush.bf16.msra.mxu0 %v2854
      %2882 = vmatpush.bf16.msra.mxu0 %v2853
      %2883 = vmatpush.bf16.msra.mxu0 %v2852
      %2884 = vmatpush.bf16.msra.mxu0 %v2851
      %2885 = vmatpush.bf16.msra.mxu0 %v2850
      %2886 = vmatpush.bf16.msra.mxu0 %v2849
      %2887 = vmatpush.bf16.msra.mxu0 %v2848
      %2888 = vmatmul.bf16.gmra.mxu0 %v2378
      %v2889 = vpop.f32.mrf.mxu0
      %v2890 = vadd.f32 0.0, %v2889
      %v2891 = vpop.f32.mrf.mxu0
      %v2892 = vadd.f32 0.0, %v2891
      %2893 = vmatmul.bf16.gmra.mxu0 %v2380
      %v2894 = vpop.f32.mrf.mxu0
      %v2895 = vadd.f32 0.0, %v2894
      %v2896 = vpop.f32.mrf.mxu0
      %v2897 = vadd.f32 0.0, %v2896
      %2898 = vmatmul.bf16.gmra.mxu0 %v2382
      %v2899 = vpop.f32.mrf.mxu0
      %v2900 = vadd.f32 0.0, %v2899
      %v2901 = vpop.f32.mrf.mxu0
      %v2902 = vadd.f32 0.0, %v2901
      %2903 = vmatmul.bf16.gmra.mxu0 %v2384
      %v2904 = vpop.f32.mrf.mxu0
      %v2905 = vadd.f32 0.0, %v2904
      %v2906 = vpop.f32.mrf.mxu0
      %v2907 = vadd.f32 0.0, %v2906
      %2908 = vmatmul.bf16.gmra.mxu0 %v2386
      %v2909 = vpop.f32.mrf.mxu0
      %v2910 = vadd.f32 0.0, %v2909
      %v2911 = vpop.f32.mrf.mxu0
      %v2912 = vadd.f32 0.0, %v2911
      %2913 = vmatmul.bf16.gmra.mxu0 %v2388
      %v2914 = vpop.f32.mrf.mxu0
      %v2915 = vadd.f32 0.0, %v2914
      %v2916 = vpop.f32.mrf.mxu0
      %v2917 = vadd.f32 0.0, %v2916
      %2918 = vmatmul.bf16.gmra.mxu0 %v2390
      %v2919 = vpop.f32.mrf.mxu0
      %v2920 = vadd.f32 0.0, %v2919
      %v2921 = vpop.f32.mrf.mxu0
      %v2922 = vadd.f32 0.0, %v2921
      %2923 = vmatmul.bf16.gmra.mxu0 %v2392
      %v2924 = vpop.f32.mrf.mxu0
      %v2925 = vadd.f32 0.0, %v2924
      %v2926 = vpop.f32.mrf.mxu0
      %v2927 = vadd.f32 0.0, %v2926
      %2928 = vmatmul.bf16.gmra.mxu0 %v2394
      %v2929 = vpop.f32.mrf.mxu0
      %v2930 = vadd.f32 0.0, %v2929
      %v2931 = vpop.f32.mrf.mxu0
      %v2932 = vadd.f32 0.0, %v2931
      %2933 = vmatmul.bf16.gmra.mxu0 %v2396
      %v2934 = vpop.f32.mrf.mxu0
      %v2935 = vadd.f32 0.0, %v2934
      %v2936 = vpop.f32.mrf.mxu0
      %v2937 = vadd.f32 0.0, %v2936
      %2938 = vmatmul.bf16.gmra.mxu0 %v2398
      %v2939 = vpop.f32.mrf.mxu0
      %v2940 = vadd.f32 0.0, %v2939
      %v2941 = vpop.f32.mrf.mxu0
      %v2942 = vadd.f32 0.0, %v2941
      %2943 = vmatmul.bf16.gmra.mxu0 %v2400
      %v2944 = vpop.f32.mrf.mxu0
      %v2945 = vadd.f32 0.0, %v2944
      %v2946 = vpop.f32.mrf.mxu0
      %v2947 = vadd.f32 0.0, %v2946
      %2948 = vmatmul.bf16.gmra.mxu0 %v2402
      %v2949 = vpop.f32.mrf.mxu0
      %v2950 = vadd.f32 0.0, %v2949
      %v2951 = vpop.f32.mrf.mxu0
      %v2952 = vadd.f32 0.0, %v2951
      %2953 = vmatmul.bf16.gmra.mxu0 %v2404
      %v2954 = vpop.f32.mrf.mxu0
      %v2955 = vadd.f32 0.0, %v2954
      %v2956 = vpop.f32.mrf.mxu0
      %v2957 = vadd.f32 0.0, %v2956
      %2958 = vmatmul.bf16.gmra.mxu0 %v2406
      %v2959 = vpop.f32.mrf.mxu0
      %v2960 = vadd.f32 0.0, %v2959
      %v2961 = vpop.f32.mrf.mxu0
      %v2962 = vadd.f32 0.0, %v2961
      %2963 = vmatmul.bf16.gmra.mxu0 %v2408
      %v2964 = vpop.f32.mrf.mxu0
      %v2965 = vadd.f32 0.0, %v2964
      %v2966 = vpop.f32.mrf.mxu0
      %v2967 = vadd.f32 0.0, %v2966
      %2968 = vdwg.mxu0
      %2969 = vmatpush.bf16.msra.mxu0 %v2863
      %2970 = vmatpush.bf16.msra.mxu0 %v2862
      %2971 = vmatpush.bf16.msra.mxu0 %v2861
      %2972 = vmatpush.bf16.msra.mxu0 %v2860
      %2973 = vmatpush.bf16.msra.mxu0 %v2859
      %2974 = vmatpush.bf16.msra.mxu0 %v2858
      %2975 = vmatpush.bf16.msra.mxu0 %v2857
      %2976 = vmatpush.bf16.msra.mxu0 %v2856
      %2977 = vmatmul.bf16.gmra.mxu0 %v2379
      %v2978 = vpop.f32.mrf.mxu0
      %v2979 = vadd.f32 %v2890, %v2978
      %v2980 = vpop.f32.mrf.mxu0
      %v2981 = vadd.f32 %v2892, %v2980
      %2982 = vmatmul.bf16.gmra.mxu0 %v2381
      %v2983 = vpop.f32.mrf.mxu0
      %v2984 = vadd.f32 %v2895, %v2983
      %v2985 = vpop.f32.mrf.mxu0
      %v2986 = vadd.f32 %v2897, %v2985
      %2987 = vmatmul.bf16.gmra.mxu0 %v2383
      %v2988 = vpop.f32.mrf.mxu0
      %v2989 = vadd.f32 %v2900, %v2988
      %v2990 = vpop.f32.mrf.mxu0
      %v2991 = vadd.f32 %v2902, %v2990
      %2992 = vmatmul.bf16.gmra.mxu0 %v2385
      %v2993 = vpop.f32.mrf.mxu0
      %v2994 = vadd.f32 %v2905, %v2993
      %v2995 = vpop.f32.mrf.mxu0
      %v2996 = vadd.f32 %v2907, %v2995
      %2997 = vmatmul.bf16.gmra.mxu0 %v2387
      %v2998 = vpop.f32.mrf.mxu0
      %v2999 = vadd.f32 %v2910, %v2998
      %v3000 = vpop.f32.mrf.mxu0
      %v3001 = vadd.f32 %v2912, %v3000
      %3002 = vmatmul.bf16.gmra.mxu0 %v2389
      %v3003 = vpop.f32.mrf.mxu0
      %v3004 = vadd.f32 %v2915, %v3003
      %v3005 = vpop.f32.mrf.mxu0
      %v3006 = vadd.f32 %v2917, %v3005
      %3007 = vmatmul.bf16.gmra.mxu0 %v2391
      %v3008 = vpop.f32.mrf.mxu0
      %v3009 = vadd.f32 %v2920, %v3008
      %v3010 = vpop.f32.mrf.mxu0
      %v3011 = vadd.f32 %v2922, %v3010
      %3012 = vmatmul.bf16.gmra.mxu0 %v2393
      %v3013 = vpop.f32.mrf.mxu0
      %v3014 = vadd.f32 %v2925, %v3013
      %v3015 = vpop.f32.mrf.mxu0
      %v3016 = vadd.f32 %v2927, %v3015
      %3017 = vmatmul.bf16.gmra.mxu0 %v2395
      %v3018 = vpop.f32.mrf.mxu0
      %v3019 = vadd.f32 %v2930, %v3018
      %v3020 = vpop.f32.mrf.mxu0
      %v3021 = vadd.f32 %v2932, %v3020
      %3022 = vmatmul.bf16.gmra.mxu0 %v2397
      %v3023 = vpop.f32.mrf.mxu0
      %v3024 = vadd.f32 %v2935, %v3023
      %v3025 = vpop.f32.mrf.mxu0
      %v3026 = vadd.f32 %v2937, %v3025
      %3027 = vmatmul.bf16.gmra.mxu0 %v2399
      %v3028 = vpop.f32.mrf.mxu0
      %v3029 = vadd.f32 %v2940, %v3028
      %v3030 = vpop.f32.mrf.mxu0
      %v3031 = vadd.f32 %v2942, %v3030
      %3032 = vmatmul.bf16.gmra.mxu0 %v2401
      %v3033 = vpop.f32.mrf.mxu0
      %v3034 = vadd.f32 %v2945, %v3033
      %v3035 = vpop.f32.mrf.mxu0
      %v3036 = vadd.f32 %v2947, %v3035
      %3037 = vmatmul.bf16.gmra.mxu0 %v2403
      %v3038 = vpop.f32.mrf.mxu0
      %v3039 = vadd.f32 %v2950, %v3038
      %v3040 = vpop.f32.mrf.mxu0
      %v3041 = vadd.f32 %v2952, %v3040
      %3042 = vmatmul.bf16.gmra.mxu0 %v2405
      %v3043 = vpop.f32.mrf.mxu0
      %v3044 = vadd.f32 %v2955, %v3043
      %v3045 = vpop.f32.mrf.mxu0
      %v3046 = vadd.f32 %v2957, %v3045
      %3047 = vmatmul.bf16.gmra.mxu0 %v2407
      %v3048 = vpop.f32.mrf.mxu0
      %v3049 = vadd.f32 %v2960, %v3048
      %v3050 = vpop.f32.mrf.mxu0
      %v3051 = vadd.f32 %v2962, %v3050
      %3052 = vmatmul.bf16.gmra.mxu0 %v2409
      %v3053 = vpop.f32.mrf.mxu0
      %v3054 = vadd.f32 %v2965, %v3053
      %v3055 = vpop.f32.mrf.mxu0
      %v3056 = vadd.f32 %v2967, %v3055
      %3057 = vdwg.mxu0
      %v3090 = vunpack.c.l.b16 %v2720
      %v3091 = vunpack.c.l.b16 %v2721
      %v3092 = vunpack.c.l.b16 %v2722
      %v3093 = vunpack.c.l.b16 %v2723
      %v3094 = vunpack.c.l.b16 %v2724
      %v3095 = vunpack.c.l.b16 %v2725
      %v3096 = vunpack.c.l.b16 %v2726
      %v3097 = vunpack.c.l.b16 %v2727
      %v3098 = vunpack.c.l.b16 %v2728
      %v3099 = vunpack.c.l.b16 %v2729
      %v3100 = vunpack.c.l.b16 %v2730
      %v3101 = vunpack.c.l.b16 %v2731
      %v3102 = vunpack.c.l.b16 %v2732
      %v3103 = vunpack.c.l.b16 %v2733
      %v3104 = vunpack.c.l.b16 %v2734
      %v3105 = vunpack.c.l.b16 %v2735
      %v3106 = vunpack.c.l.b16 %v2736
      %v3107 = vunpack.c.l.b16 %v2737
      %v3108 = vunpack.c.l.b16 %v2738
      %v3109 = vunpack.c.l.b16 %v2739
      %v3110 = vunpack.c.l.b16 %v2740
      %v3111 = vunpack.c.l.b16 %v2741
      %v3112 = vunpack.c.l.b16 %v2742
      %v3113 = vunpack.c.l.b16 %v2743
      %v3114 = vunpack.c.l.b16 %v2744
      %v3115 = vunpack.c.l.b16 %v2745
      %v3116 = vunpack.c.l.b16 %v2746
      %v3117 = vunpack.c.l.b16 %v2747
      %v3118 = vunpack.c.l.b16 %v2748
      %v3119 = vunpack.c.l.b16 %v2749
      %v3120 = vunpack.c.l.b16 %v2750
      %v3121 = vunpack.c.l.b16 %v2751
      %v3122 = vpack.c.b16 %v3091, %v3090
      %v3123 = vpack.c.b16 %v3093, %v3092
      %v3124 = vpack.c.b16 %v3095, %v3094
      %v3125 = vpack.c.b16 %v3097, %v3096
      %v3126 = vpack.c.b16 %v3099, %v3098
      %v3127 = vpack.c.b16 %v3101, %v3100
      %v3128 = vpack.c.b16 %v3103, %v3102
      %v3129 = vpack.c.b16 %v3105, %v3104
      %v3130 = vpack.c.b16 %v3107, %v3106
      %v3131 = vpack.c.b16 %v3109, %v3108
      %v3132 = vpack.c.b16 %v3111, %v3110
      %v3133 = vpack.c.b16 %v3113, %v3112
      %v3134 = vpack.c.b16 %v3115, %v3114
      %v3135 = vpack.c.b16 %v3117, %v3116
      %v3136 = vpack.c.b16 %v3119, %v3118
      %v3137 = vpack.c.b16 %v3121, %v3120
      %3154 = vmatpush.bf16.msra.mxu0 %v3129
      %3155 = vmatpush.bf16.msra.mxu0 %v3128
      %3156 = vmatpush.bf16.msra.mxu0 %v3127
      %3157 = vmatpush.bf16.msra.mxu0 %v3126
      %3158 = vmatpush.bf16.msra.mxu0 %v3125
      %3159 = vmatpush.bf16.msra.mxu0 %v3124
      %3160 = vmatpush.bf16.msra.mxu0 %v3123
      %3161 = vmatpush.bf16.msra.mxu0 %v3122
      %3162 = vmatmul.bf16.gmra.mxu0 %v1344
      %v3163 = vpop.f32.mrf.mxu0
      %v3164 = vadd.f32 %v2979, %v3163
      %v3165 = vpop.f32.mrf.mxu0
      %v3166 = vadd.f32 %v2981, %v3165
      %3167 = vmatmul.bf16.gmra.mxu0 %v1346
      %v3168 = vpop.f32.mrf.mxu0
      %v3169 = vadd.f32 %v2984, %v3168
      %v3170 = vpop.f32.mrf.mxu0
      %v3171 = vadd.f32 %v2986, %v3170
      %3172 = vmatmul.bf16.gmra.mxu0 %v1348
      %v3173 = vpop.f32.mrf.mxu0
      %v3174 = vadd.f32 %v2989, %v3173
      %v3175 = vpop.f32.mrf.mxu0
      %v3176 = vadd.f32 %v2991, %v3175
      %3177 = vmatmul.bf16.gmra.mxu0 %v1350
      %v3178 = vpop.f32.mrf.mxu0
      %v3179 = vadd.f32 %v2994, %v3178
      %v3180 = vpop.f32.mrf.mxu0
      %v3181 = vadd.f32 %v2996, %v3180
      %3182 = vmatmul.bf16.gmra.mxu0 %v1352
      %v3183 = vpop.f32.mrf.mxu0
      %v3184 = vadd.f32 %v2999, %v3183
      %v3185 = vpop.f32.mrf.mxu0
      %v3186 = vadd.f32 %v3001, %v3185
      %3187 = vmatmul.bf16.gmra.mxu0 %v1354
      %v3188 = vpop.f32.mrf.mxu0
      %v3189 = vadd.f32 %v3004, %v3188
      %v3190 = vpop.f32.mrf.mxu0
      %v3191 = vadd.f32 %v3006, %v3190
      %3192 = vmatmul.bf16.gmra.mxu0 %v1356
      %v3193 = vpop.f32.mrf.mxu0
      %v3194 = vadd.f32 %v3009, %v3193
      %v3195 = vpop.f32.mrf.mxu0
      %v3196 = vadd.f32 %v3011, %v3195
      %3197 = vmatmul.bf16.gmra.mxu0 %v1358
      %v3198 = vpop.f32.mrf.mxu0
      %v3199 = vadd.f32 %v3014, %v3198
      %v3200 = vpop.f32.mrf.mxu0
      %v3201 = vadd.f32 %v3016, %v3200
      %3202 = vmatmul.bf16.gmra.mxu0 %v1360
      %v3203 = vpop.f32.mrf.mxu0
      %v3204 = vadd.f32 %v3019, %v3203
      %v3205 = vpop.f32.mrf.mxu0
      %v3206 = vadd.f32 %v3021, %v3205
      %3207 = vmatmul.bf16.gmra.mxu0 %v1362
      %v3208 = vpop.f32.mrf.mxu0
      %v3209 = vadd.f32 %v3024, %v3208
      %v3210 = vpop.f32.mrf.mxu0
      %v3211 = vadd.f32 %v3026, %v3210
      %3212 = vmatmul.bf16.gmra.mxu0 %v1364
      %v3213 = vpop.f32.mrf.mxu0
      %v3214 = vadd.f32 %v3029, %v3213
      %v3215 = vpop.f32.mrf.mxu0
      %v3216 = vadd.f32 %v3031, %v3215
      %3217 = vmatmul.bf16.gmra.mxu0 %v1366
      %v3218 = vpop.f32.mrf.mxu0
      %v3219 = vadd.f32 %v3034, %v3218
      %v3220 = vpop.f32.mrf.mxu0
      %v3221 = vadd.f32 %v3036, %v3220
      %3222 = vmatmul.bf16.gmra.mxu0 %v1368
      %v3223 = vpop.f32.mrf.mxu0
      %v3224 = vadd.f32 %v3039, %v3223
      %v3225 = vpop.f32.mrf.mxu0
      %v3226 = vadd.f32 %v3041, %v3225
      %3227 = vmatmul.bf16.gmra.mxu0 %v1370
      %v3228 = vpop.f32.mrf.mxu0
      %v3229 = vadd.f32 %v3044, %v3228
      %v3230 = vpop.f32.mrf.mxu0
      %v3231 = vadd.f32 %v3046, %v3230
      %3232 = vmatmul.bf16.gmra.mxu0 %v1372
      %v3233 = vpop.f32.mrf.mxu0
      %v3234 = vadd.f32 %v3049, %v3233
      %v3235 = vpop.f32.mrf.mxu0
      %v3236 = vadd.f32 %v3051, %v3235
      %3237 = vmatmul.bf16.gmra.mxu0 %v1374
      %v3238 = vpop.f32.mrf.mxu0
      %v3239 = vadd.f32 %v3054, %v3238
      %v3240 = vpop.f32.mrf.mxu0
      %v3241 = vadd.f32 %v3056, %v3240
      %3242 = vdwg.mxu0
      %3243 = vmatpush.bf16.msra.mxu0 %v3137
      %3244 = vmatpush.bf16.msra.mxu0 %v3136
      %3245 = vmatpush.bf16.msra.mxu0 %v3135
      %3246 = vmatpush.bf16.msra.mxu0 %v3134
      %3247 = vmatpush.bf16.msra.mxu0 %v3133
      %3248 = vmatpush.bf16.msra.mxu0 %v3132
      %3249 = vmatpush.bf16.msra.mxu0 %v3131
      %3250 = vmatpush.bf16.msra.mxu0 %v3130
      %3251 = vmatmul.bf16.gmra.mxu0 %v1345
      %v3252 = vpop.f32.mrf.mxu0
      %v3253 = vadd.f32 %v3164, %v3252
      %v3254 = vpop.f32.mrf.mxu0
      %v3255 = vadd.f32 %v3166, %v3254
      %3256 = vmatmul.bf16.gmra.mxu0 %v1347
      %v3257 = vpop.f32.mrf.mxu0
      %v3258 = vadd.f32 %v3169, %v3257
      %v3259 = vpop.f32.mrf.mxu0
      %v3260 = vadd.f32 %v3171, %v3259
      %3261 = vmatmul.bf16.gmra.mxu0 %v1349
      %v3262 = vpop.f32.mrf.mxu0
      %v3263 = vadd.f32 %v3174, %v3262
      %v3264 = vpop.f32.mrf.mxu0
      %v3265 = vadd.f32 %v3176, %v3264
      %3266 = vmatmul.bf16.gmra.mxu0 %v1351
      %v3267 = vpop.f32.mrf.mxu0
      %v3268 = vadd.f32 %v3179, %v3267
      %v3269 = vpop.f32.mrf.mxu0
      %v3270 = vadd.f32 %v3181, %v3269
      %3271 = vmatmul.bf16.gmra.mxu0 %v1353
      %v3272 = vpop.f32.mrf.mxu0
      %v3273 = vadd.f32 %v3184, %v3272
      %v3274 = vpop.f32.mrf.mxu0
      %v3275 = vadd.f32 %v3186, %v3274
      %3276 = vmatmul.bf16.gmra.mxu0 %v1355
      %v3277 = vpop.f32.mrf.mxu0
      %v3278 = vadd.f32 %v3189, %v3277
      %v3279 = vpop.f32.mrf.mxu0
      %v3280 = vadd.f32 %v3191, %v3279
      %3281 = vmatmul.bf16.gmra.mxu0 %v1357
      %v3282 = vpop.f32.mrf.mxu0
      %v3283 = vadd.f32 %v3194, %v3282
      %v3284 = vpop.f32.mrf.mxu0
      %v3285 = vadd.f32 %v3196, %v3284
      %3286 = vmatmul.bf16.gmra.mxu0 %v1359
      %v3287 = vpop.f32.mrf.mxu0
      %v3288 = vadd.f32 %v3199, %v3287
      %v3289 = vpop.f32.mrf.mxu0
      %v3290 = vadd.f32 %v3201, %v3289
      %3291 = vmatmul.bf16.gmra.mxu0 %v1361
      %v3292 = vpop.f32.mrf.mxu0
      %v3293 = vadd.f32 %v3204, %v3292
      %v3294 = vpop.f32.mrf.mxu0
      %v3295 = vadd.f32 %v3206, %v3294
      %3296 = vmatmul.bf16.gmra.mxu0 %v1363
      %v3297 = vpop.f32.mrf.mxu0
      %v3298 = vadd.f32 %v3209, %v3297
      %v3299 = vpop.f32.mrf.mxu0
      %v3300 = vadd.f32 %v3211, %v3299
      %3301 = vmatmul.bf16.gmra.mxu0 %v1365
      %v3302 = vpop.f32.mrf.mxu0
      %v3303 = vadd.f32 %v3214, %v3302
      %v3304 = vpop.f32.mrf.mxu0
      %v3305 = vadd.f32 %v3216, %v3304
      %3306 = vmatmul.bf16.gmra.mxu0 %v1367
      %v3307 = vpop.f32.mrf.mxu0
      %v3308 = vadd.f32 %v3219, %v3307
      %v3309 = vpop.f32.mrf.mxu0
      %v3310 = vadd.f32 %v3221, %v3309
      %3311 = vmatmul.bf16.gmra.mxu0 %v1369
      %v3312 = vpop.f32.mrf.mxu0
      %v3313 = vadd.f32 %v3224, %v3312
      %v3314 = vpop.f32.mrf.mxu0
      %v3315 = vadd.f32 %v3226, %v3314
      %3316 = vmatmul.bf16.gmra.mxu0 %v1371
      %v3317 = vpop.f32.mrf.mxu0
      %v3318 = vadd.f32 %v3229, %v3317
      %v3319 = vpop.f32.mrf.mxu0
      %v3320 = vadd.f32 %v3231, %v3319
      %3321 = vmatmul.bf16.gmra.mxu0 %v1373
      %v3322 = vpop.f32.mrf.mxu0
      %v3323 = vadd.f32 %v3234, %v3322
      %v3324 = vpop.f32.mrf.mxu0
      %v3325 = vadd.f32 %v3236, %v3324
      %3326 = vmatmul.bf16.gmra.mxu0 %v1375
      %v3327 = vpop.f32.mrf.mxu0
      %v3328 = vadd.f32 %v3239, %v3327
      %v3329 = vpop.f32.mrf.mxu0
      %v3330 = vadd.f32 %v3241, %v3329
      %3331 = vdwg.mxu0
      %v3332 = vld [vmem:[#allocation11 + $0x5] sm:$0x1]
      %v3334 = vperm.slane %v3332, 0
      %v3336 = vadd.f32 %v3253, %v3334
      %v3337 = vadd.f32 %v3255, %v3334
      %v3338 = vadd.f32 %v3258, %v3334
      %v3339 = vadd.f32 %v3260, %v3334
      %v3340 = vadd.f32 %v3263, %v3334
      %v3341 = vadd.f32 %v3265, %v3334
      %v3342 = vadd.f32 %v3268, %v3334
      %v3343 = vadd.f32 %v3270, %v3334
      %v3344 = vadd.f32 %v3273, %v3334
      %v3345 = vadd.f32 %v3275, %v3334
      %v3346 = vadd.f32 %v3278, %v3334
      %v3347 = vadd.f32 %v3280, %v3334
      %v3348 = vadd.f32 %v3283, %v3334
      %v3349 = vadd.f32 %v3285, %v3334
      %v3350 = vadd.f32 %v3288, %v3334
      %v3351 = vadd.f32 %v3290, %v3334
      %v3352 = vadd.f32 %v3293, %v3334
      %v3353 = vadd.f32 %v3295, %v3334
      %v3354 = vadd.f32 %v3298, %v3334
      %v3355 = vadd.f32 %v3300, %v3334
      %v3356 = vadd.f32 %v3303, %v3334
      %v3357 = vadd.f32 %v3305, %v3334
      %v3358 = vadd.f32 %v3308, %v3334
      %v3359 = vadd.f32 %v3310, %v3334
      %v3360 = vadd.f32 %v3313, %v3334
      %v3361 = vadd.f32 %v3315, %v3334
      %v3362 = vadd.f32 %v3318, %v3334
      %v3363 = vadd.f32 %v3320, %v3334
      %v3364 = vadd.f32 %v3323, %v3334
      %v3365 = vadd.f32 %v3325, %v3334
      %v3366 = vadd.f32 %v3328, %v3334
      %v3367 = vadd.f32 %v3330, %v3334
      %v3368 = vmax.f32 %v3336, 0.0
      %v3369 = vmax.f32 %v3337, 0.0
      %v3370 = vmax.f32 %v3338, 0.0
      %v3371 = vmax.f32 %v3339, 0.0
      %v3372 = vmax.f32 %v3340, 0.0
      %v3373 = vmax.f32 %v3341, 0.0
      %v3374 = vmax.f32 %v3342, 0.0
      %v3375 = vmax.f32 %v3343, 0.0
      %v3376 = vmax.f32 %v3344, 0.0
      %v3377 = vmax.f32 %v3345, 0.0
      %v3378 = vmax.f32 %v3346, 0.0
      %v3379 = vmax.f32 %v3347, 0.0
      %v3380 = vmax.f32 %v3348, 0.0
      %v3381 = vmax.f32 %v3349, 0.0
      %v3382 = vmax.f32 %v3350, 0.0
      %v3383 = vmax.f32 %v3351, 0.0
      %v3384 = vmax.f32 %v3352, 0.0
      %v3385 = vmax.f32 %v3353, 0.0
      %v3386 = vmax.f32 %v3354, 0.0
      %v3387 = vmax.f32 %v3355, 0.0
      %v3388 = vmax.f32 %v3356, 0.0
      %v3389 = vmax.f32 %v3357, 0.0
      %v3390 = vmax.f32 %v3358, 0.0
      %v3391 = vmax.f32 %v3359, 0.0
      %v3392 = vmax.f32 %v3360, 0.0
      %v3393 = vmax.f32 %v3361, 0.0
      %v3394 = vmax.f32 %v3362, 0.0
      %v3395 = vmax.f32 %v3363, 0.0
      %v3396 = vmax.f32 %v3364, 0.0
      %v3397 = vmax.f32 %v3365, 0.0
      %v3398 = vmax.f32 %v3366, 0.0
      %v3399 = vmax.f32 %v3367, 0.0
      %v3400 = vpack.c.bf16 %v3369, %v3368
      %v3401 = vpack.c.bf16 %v3371, %v3370
      %v3402 = vpack.c.bf16 %v3373, %v3372
      %v3403 = vpack.c.bf16 %v3375, %v3374
      %v3404 = vpack.c.bf16 %v3377, %v3376
      %v3405 = vpack.c.bf16 %v3379, %v3378
      %v3406 = vpack.c.bf16 %v3381, %v3380
      %v3407 = vpack.c.bf16 %v3383, %v3382
      %v3408 = vpack.c.bf16 %v3385, %v3384
      %v3409 = vpack.c.bf16 %v3387, %v3386
      %v3410 = vpack.c.bf16 %v3389, %v3388
      %v3411 = vpack.c.bf16 %v3391, %v3390
      %v3412 = vpack.c.bf16 %v3393, %v3392
      %v3413 = vpack.c.bf16 %v3395, %v3394
      %v3414 = vpack.c.bf16 %v3397, %v3396
      %v3415 = vpack.c.bf16 %v3399, %v3398
      %v3416 = vld [vmem:[#allocation9 + $0x480] sm:$0xf]
      %v3417 = vld [vmem:[#allocation9 + $0x48c] sm:$0xf]
      %v3418 = vld [vmem:[#allocation9 + $0x498] sm:$0xf]
      %v3419 = vld [vmem:[#allocation9 + $0x4a4] sm:$0xf]
      %v3420 = vld [vmem:[#allocation9 + $0x4b0] sm:$0xf]
      %v3421 = vld [vmem:[#allocation9 + $0x4bc] sm:$0xf]
      %v3422 = vld [vmem:[#allocation9 + $0x4c8] sm:$0xf]
      %v3423 = vld [vmem:[#allocation9 + $0x4d4] sm:$0xf]
      %v3424 = vld [vmem:[#allocation9 + $0x4e0] sm:$0xf]
      %v3425 = vld [vmem:[#allocation9 + $0x4ec] sm:$0xf]
      %v3426 = vld [vmem:[#allocation9 + $0x4f8] sm:$0xf]
      %v3427 = vld [vmem:[#allocation9 + $0x504] sm:$0xf]
      %v3428 = vld [vmem:[#allocation9 + $0x510] sm:$0xf]
      %v3429 = vld [vmem:[#allocation9 + $0x51c] sm:$0xf]
      %v3430 = vld [vmem:[#allocation9 + $0x528] sm:$0xf]
      %v3431 = vld [vmem:[#allocation9 + $0x534] sm:$0xf]
      %v3432 = vld [vmem:[#allocation11 + $0x6] sm:$0x1]
      %v3434 = vperm.slane %v3432, 0
      %v3452 = vunpack.c.l.b16 %v3416
      %v3453 = vunpack.c.l.b16 %v3417
      %v3454 = vunpack.c.l.b16 %v3418
      %v3455 = vunpack.c.l.b16 %v3419
      %v3456 = vunpack.c.l.b16 %v3420
      %v3457 = vunpack.c.l.b16 %v3421
      %v3458 = vunpack.c.l.b16 %v3422
      %v3459 = vunpack.c.l.b16 %v3423
      %v3460 = vunpack.c.l.b16 %v3424
      %v3461 = vunpack.c.l.b16 %v3425
      %v3462 = vunpack.c.l.b16 %v3426
      %v3463 = vunpack.c.l.b16 %v3427
      %v3464 = vunpack.c.l.b16 %v3428
      %v3465 = vunpack.c.l.b16 %v3429
      %v3466 = vunpack.c.l.b16 %v3430
      %v3467 = vunpack.c.l.b16 %v3431
      %v3468 = vpack.c.b16 %v3453, %v3452
      %v3469 = vpack.c.b16 %v3455, %v3454
      %v3470 = vpack.c.b16 %v3457, %v3456
      %v3471 = vpack.c.b16 %v3459, %v3458
      %v3472 = vpack.c.b16 %v3461, %v3460
      %v3473 = vpack.c.b16 %v3463, %v3462
      %v3474 = vpack.c.b16 %v3465, %v3464
      %v3475 = vpack.c.b16 %v3467, %v3466
      %3484 = vmatpush.bf16.msra.mxu0 %v3475
      %3485 = vmatpush.bf16.msra.mxu0 %v3474
      %3486 = vmatpush.bf16.msra.mxu0 %v3473
      %3487 = vmatpush.bf16.msra.mxu0 %v3472
      %3488 = vmatpush.bf16.msra.mxu0 %v3471
      %3489 = vmatpush.bf16.msra.mxu0 %v3470
      %3490 = vmatpush.bf16.msra.mxu0 %v3469
      %3491 = vmatpush.bf16.msra.mxu0 %v3468
      %3492 = vmatmul.bf16.gmra.mxu0 %v3400
      %v3493 = vpop.f32.mrf.mxu0
      %v3494 = vadd.f32 %v3434, %v3493
      %v3495 = vpop.f32.mrf.mxu0
      %v3496 = vadd.f32 %v3434, %v3495
      %3497 = vmatmul.bf16.gmra.mxu0 %v3401
      %v3498 = vpop.f32.mrf.mxu0
      %v3499 = vadd.f32 %v3434, %v3498
      %v3500 = vpop.f32.mrf.mxu0
      %v3501 = vadd.f32 %v3434, %v3500
      %3502 = vmatmul.bf16.gmra.mxu0 %v3402
      %v3503 = vpop.f32.mrf.mxu0
      %v3504 = vadd.f32 %v3434, %v3503
      %v3505 = vpop.f32.mrf.mxu0
      %v3506 = vadd.f32 %v3434, %v3505
      %3507 = vmatmul.bf16.gmra.mxu0 %v3403
      %v3508 = vpop.f32.mrf.mxu0
      %v3509 = vadd.f32 %v3434, %v3508
      %v3510 = vpop.f32.mrf.mxu0
      %v3511 = vadd.f32 %v3434, %v3510
      %3512 = vmatmul.bf16.gmra.mxu0 %v3404
      %v3513 = vpop.f32.mrf.mxu0
      %v3514 = vadd.f32 %v3434, %v3513
      %v3515 = vpop.f32.mrf.mxu0
      %v3516 = vadd.f32 %v3434, %v3515
      %3517 = vmatmul.bf16.gmra.mxu0 %v3405
      %v3518 = vpop.f32.mrf.mxu0
      %v3519 = vadd.f32 %v3434, %v3518
      %v3520 = vpop.f32.mrf.mxu0
      %v3521 = vadd.f32 %v3434, %v3520
      %3522 = vmatmul.bf16.gmra.mxu0 %v3406
      %v3523 = vpop.f32.mrf.mxu0
      %v3524 = vadd.f32 %v3434, %v3523
      %v3525 = vpop.f32.mrf.mxu0
      %v3526 = vadd.f32 %v3434, %v3525
      %3527 = vmatmul.bf16.gmra.mxu0 %v3407
      %v3528 = vpop.f32.mrf.mxu0
      %v3529 = vadd.f32 %v3434, %v3528
      %v3530 = vpop.f32.mrf.mxu0
      %v3531 = vadd.f32 %v3434, %v3530
      %3532 = vmatmul.bf16.gmra.mxu0 %v3408
      %v3533 = vpop.f32.mrf.mxu0
      %v3534 = vadd.f32 %v3434, %v3533
      %v3535 = vpop.f32.mrf.mxu0
      %v3536 = vadd.f32 %v3434, %v3535
      %3537 = vmatmul.bf16.gmra.mxu0 %v3409
      %v3538 = vpop.f32.mrf.mxu0
      %v3539 = vadd.f32 %v3434, %v3538
      %v3540 = vpop.f32.mrf.mxu0
      %v3541 = vadd.f32 %v3434, %v3540
      %3542 = vmatmul.bf16.gmra.mxu0 %v3410
      %v3543 = vpop.f32.mrf.mxu0
      %v3544 = vadd.f32 %v3434, %v3543
      %v3545 = vpop.f32.mrf.mxu0
      %v3546 = vadd.f32 %v3434, %v3545
      %3547 = vmatmul.bf16.gmra.mxu0 %v3411
      %v3548 = vpop.f32.mrf.mxu0
      %v3549 = vadd.f32 %v3434, %v3548
      %v3550 = vpop.f32.mrf.mxu0
      %v3551 = vadd.f32 %v3434, %v3550
      %3552 = vmatmul.bf16.gmra.mxu0 %v3412
      %v3553 = vpop.f32.mrf.mxu0
      %v3554 = vadd.f32 %v3434, %v3553
      %v3555 = vpop.f32.mrf.mxu0
      %v3556 = vadd.f32 %v3434, %v3555
      %3557 = vmatmul.bf16.gmra.mxu0 %v3413
      %v3558 = vpop.f32.mrf.mxu0
      %v3559 = vadd.f32 %v3434, %v3558
      %v3560 = vpop.f32.mrf.mxu0
      %v3561 = vadd.f32 %v3434, %v3560
      %3562 = vmatmul.bf16.gmra.mxu0 %v3414
      %v3563 = vpop.f32.mrf.mxu0
      %v3564 = vadd.f32 %v3434, %v3563
      %v3565 = vpop.f32.mrf.mxu0
      %v3566 = vadd.f32 %v3434, %v3565
      %3567 = vmatmul.bf16.gmra.mxu0 %v3415
      %v3568 = vpop.f32.mrf.mxu0
      %v3569 = vadd.f32 %v3434, %v3568
      %v3570 = vpop.f32.mrf.mxu0
      %v3571 = vadd.f32 %v3434, %v3570
      %3572 = vdwg.mxu0
      %v3573 = vmax.f32 %v3494, 0.0
      %v3574 = vmax.f32 %v3496, 0.0
      %v3575 = vmax.f32 %v3499, 0.0
      %v3576 = vmax.f32 %v3501, 0.0
      %v3577 = vmax.f32 %v3504, 0.0
      %v3578 = vmax.f32 %v3506, 0.0
      %v3579 = vmax.f32 %v3509, 0.0
      %v3580 = vmax.f32 %v3511, 0.0
      %v3581 = vmax.f32 %v3514, 0.0
      %v3582 = vmax.f32 %v3516, 0.0
      %v3583 = vmax.f32 %v3519, 0.0
      %v3584 = vmax.f32 %v3521, 0.0
      %v3585 = vmax.f32 %v3524, 0.0
      %v3586 = vmax.f32 %v3526, 0.0
      %v3587 = vmax.f32 %v3529, 0.0
      %v3588 = vmax.f32 %v3531, 0.0
      %v3589 = vmax.f32 %v3534, 0.0
      %v3590 = vmax.f32 %v3536, 0.0
      %v3591 = vmax.f32 %v3539, 0.0
      %v3592 = vmax.f32 %v3541, 0.0
      %v3593 = vmax.f32 %v3544, 0.0
      %v3594 = vmax.f32 %v3546, 0.0
      %v3595 = vmax.f32 %v3549, 0.0
      %v3596 = vmax.f32 %v3551, 0.0
      %v3597 = vmax.f32 %v3554, 0.0
      %v3598 = vmax.f32 %v3556, 0.0
      %v3599 = vmax.f32 %v3559, 0.0
      %v3600 = vmax.f32 %v3561, 0.0
      %v3601 = vmax.f32 %v3564, 0.0
      %v3602 = vmax.f32 %v3566, 0.0
      %v3603 = vmax.f32 %v3569, 0.0
      %v3604 = vmax.f32 %v3571, 0.0
      %v3605 = vpack.c.bf16 %v3574, %v3573
      %v3606 = vpack.c.bf16 %v3576, %v3575
      %v3607 = vpack.c.bf16 %v3578, %v3577
      %v3608 = vpack.c.bf16 %v3580, %v3579
      %v3609 = vpack.c.bf16 %v3582, %v3581
      %v3610 = vpack.c.bf16 %v3584, %v3583
      %v3611 = vpack.c.bf16 %v3586, %v3585
      %v3612 = vpack.c.bf16 %v3588, %v3587
      %v3613 = vpack.c.bf16 %v3590, %v3589
      %v3614 = vpack.c.bf16 %v3592, %v3591
      %v3615 = vpack.c.bf16 %v3594, %v3593
      %v3616 = vpack.c.bf16 %v3596, %v3595
      %v3617 = vpack.c.bf16 %v3598, %v3597
      %v3618 = vpack.c.bf16 %v3600, %v3599
      %v3619 = vpack.c.bf16 %v3602, %v3601
      %v3620 = vpack.c.bf16 %v3604, %v3603
      %v3621 = vld [vmem:[#allocation9 + $0x540] sm:$0xff]
      %v3622 = vld [vmem:[#allocation9 + $0x548] sm:$0xf]
      %v3623 = vld [vmem:[#allocation9 + $0x54c] sm:$0xff]
      %v3624 = vld [vmem:[#allocation9 + $0x554] sm:$0xf]
      %v3625 = vld [vmem:[#allocation9 + $0x558] sm:$0xff]
      %v3626 = vld [vmem:[#allocation9 + $0x560] sm:$0xf]
      %v3627 = vld [vmem:[#allocation9 + $0x564] sm:$0xff]
      %v3628 = vld [vmem:[#allocation9 + $0x56c] sm:$0xf]
      %v3629 = vld [vmem:[#allocation9 + $0x570] sm:$0xff]
      %v3630 = vld [vmem:[#allocation9 + $0x578] sm:$0xf]
      %v3631 = vld [vmem:[#allocation9 + $0x57c] sm:$0xff]
      %v3632 = vld [vmem:[#allocation9 + $0x584] sm:$0xf]
      %v3633 = vld [vmem:[#allocation9 + $0x588] sm:$0xff]
      %v3634 = vld [vmem:[#allocation9 + $0x590] sm:$0xf]
      %v3635 = vld [vmem:[#allocation9 + $0x594] sm:$0xff]
      %v3636 = vld [vmem:[#allocation9 + $0x59c] sm:$0xf]
      %v3637 = vld [vmem:[#allocation9 + $0x5a0] sm:$0xff]
      %v3638 = vld [vmem:[#allocation9 + $0x5a8] sm:$0xf]
      %v3639 = vld [vmem:[#allocation9 + $0x5ac] sm:$0xff]
      %v3640 = vld [vmem:[#allocation9 + $0x5b4] sm:$0xf]
      %v3641 = vld [vmem:[#allocation9 + $0x5b8] sm:$0xff]
      %v3642 = vld [vmem:[#allocation9 + $0x5c0] sm:$0xf]
      %v3643 = vld [vmem:[#allocation9 + $0x5c4] sm:$0xff]
      %v3644 = vld [vmem:[#allocation9 + $0x5cc] sm:$0xf]
      %v3645 = vld [vmem:[#allocation9 + $0x5d0] sm:$0xff]
      %v3646 = vld [vmem:[#allocation9 + $0x5d8] sm:$0xf]
      %v3647 = vld [vmem:[#allocation9 + $0x5dc] sm:$0xff]
      %v3648 = vld [vmem:[#allocation9 + $0x5e4] sm:$0xf]
      %v3649 = vld [vmem:[#allocation9 + $0x5e8] sm:$0xff]
      %v3650 = vld [vmem:[#allocation9 + $0x5f0] sm:$0xf]
      %v3651 = vld [vmem:[#allocation9 + $0x5f4] sm:$0xff]
      %v3652 = vld [vmem:[#allocation9 + $0x5fc] sm:$0xf]
      %v3653 = vld [vmem:[#allocation11 + $0x7] sm:$0x7]
      %v3655 = vperm.slane %v3653, 0
      %v3656 = vperm.slane %v3653, 1
      %v3657 = vperm.slane %v3653, 2
      %v3693 = vunpack.c.l.b16 %v3621
      %v3694 = vunpack.c.h.b16 %v3621
      %v3695 = vunpack.c.l.b16 %v3622
      %v3696 = vunpack.c.l.b16 %v3623
      %v3697 = vunpack.c.h.b16 %v3623
      %v3698 = vunpack.c.l.b16 %v3624
      %v3699 = vunpack.c.l.b16 %v3625
      %v3700 = vunpack.c.h.b16 %v3625
      %v3701 = vunpack.c.l.b16 %v3626
      %v3702 = vunpack.c.l.b16 %v3627
      %v3703 = vunpack.c.h.b16 %v3627
      %v3704 = vunpack.c.l.b16 %v3628
      %v3705 = vunpack.c.l.b16 %v3629
      %v3706 = vunpack.c.h.b16 %v3629
      %v3707 = vunpack.c.l.b16 %v3630
      %v3708 = vunpack.c.l.b16 %v3631
      %v3709 = vunpack.c.h.b16 %v3631
      %v3710 = vunpack.c.l.b16 %v3632
      %v3711 = vunpack.c.l.b16 %v3633
      %v3712 = vunpack.c.h.b16 %v3633
      %v3713 = vunpack.c.l.b16 %v3634
      %v3714 = vunpack.c.l.b16 %v3635
      %v3715 = vunpack.c.h.b16 %v3635
      %v3716 = vunpack.c.l.b16 %v3636
      %v3717 = vunpack.c.l.b16 %v3637
      %v3718 = vunpack.c.h.b16 %v3637
      %v3719 = vunpack.c.l.b16 %v3638
      %v3720 = vunpack.c.l.b16 %v3639
      %v3721 = vunpack.c.h.b16 %v3639
      %v3722 = vunpack.c.l.b16 %v3640
      %v3723 = vunpack.c.l.b16 %v3641
      %v3724 = vunpack.c.h.b16 %v3641
      %v3725 = vunpack.c.l.b16 %v3642
      %v3726 = vunpack.c.l.b16 %v3643
      %v3727 = vunpack.c.h.b16 %v3643
      %v3728 = vunpack.c.l.b16 %v3644
      %v3729 = vunpack.c.l.b16 %v3645
      %v3730 = vunpack.c.h.b16 %v3645
      %v3731 = vunpack.c.l.b16 %v3646
      %v3732 = vunpack.c.l.b16 %v3647
      %v3733 = vunpack.c.h.b16 %v3647
      %v3734 = vunpack.c.l.b16 %v3648
      %v3735 = vunpack.c.l.b16 %v3649
      %v3736 = vunpack.c.h.b16 %v3649
      %v3737 = vunpack.c.l.b16 %v3650
      %v3738 = vunpack.c.l.b16 %v3651
      %v3739 = vunpack.c.h.b16 %v3651
      %v3740 = vunpack.c.l.b16 %v3652
      %v3741 = vpack.c.b16 %v3696, %v3693
      %v3742 = vpack.c.b16 %v3697, %v3694
      %v3743 = vpack.c.b16 %v3698, %v3695
      %v3744 = vpack.c.b16 %v3702, %v3699
      %v3745 = vpack.c.b16 %v3703, %v3700
      %v3746 = vpack.c.b16 %v3704, %v3701
      %v3747 = vpack.c.b16 %v3708, %v3705
      %v3748 = vpack.c.b16 %v3709, %v3706
      %v3749 = vpack.c.b16 %v3710, %v3707
      %v3750 = vpack.c.b16 %v3714, %v3711
      %v3751 = vpack.c.b16 %v3715, %v3712
      %v3752 = vpack.c.b16 %v3716, %v3713
      %v3753 = vpack.c.b16 %v3720, %v3717
      %v3754 = vpack.c.b16 %v3721, %v3718
      %v3755 = vpack.c.b16 %v3722, %v3719
      %v3756 = vpack.c.b16 %v3726, %v3723
      %v3757 = vpack.c.b16 %v3727, %v3724
      %v3758 = vpack.c.b16 %v3728, %v3725
      %v3759 = vpack.c.b16 %v3732, %v3729
      %v3760 = vpack.c.b16 %v3733, %v3730
      %v3761 = vpack.c.b16 %v3734, %v3731
      %v3762 = vpack.c.b16 %v3738, %v3735
      %v3763 = vpack.c.b16 %v3739, %v3736
      %v3764 = vpack.c.b16 %v3740, %v3737
      %3789 = vmatpush.bf16.msra.mxu0 %v3762
      %3790 = vmatpush.bf16.msra.mxu0 %v3759
      %3791 = vmatpush.bf16.msra.mxu0 %v3756
      %3792 = vmatpush.bf16.msra.mxu0 %v3753
      %3793 = vmatpush.bf16.msra.mxu0 %v3750
      %3794 = vmatpush.bf16.msra.mxu0 %v3747
      %3795 = vmatpush.bf16.msra.mxu0 %v3744
      %3796 = vmatpush.bf16.msra.mxu0 %v3741
      %3797 = vmatmul.bf16.gmra.mxu0 %v3605
      %v3798 = vpop.f32.mrf.mxu0
      %v3799 = vadd.f32 %v3655, %v3798
      %v3800 = vpop.f32.mrf.mxu0
      %v3801 = vadd.f32 %v3655, %v3800
      %3802 = vmatmul.bf16.gmra.mxu0 %v3606
      %v3803 = vpop.f32.mrf.mxu0
      %v3804 = vadd.f32 %v3655, %v3803
      %v3805 = vpop.f32.mrf.mxu0
      %v3806 = vadd.f32 %v3655, %v3805
      %3807 = vmatmul.bf16.gmra.mxu0 %v3607
      %v3808 = vpop.f32.mrf.mxu0
      %v3809 = vadd.f32 %v3655, %v3808
      %v3810 = vpop.f32.mrf.mxu0
      %v3811 = vadd.f32 %v3655, %v3810
      %3812 = vmatmul.bf16.gmra.mxu0 %v3608
      %v3813 = vpop.f32.mrf.mxu0
      %v3814 = vadd.f32 %v3655, %v3813
      %v3815 = vpop.f32.mrf.mxu0
      %v3816 = vadd.f32 %v3655, %v3815
      %3817 = vmatmul.bf16.gmra.mxu0 %v3609
      %v3818 = vpop.f32.mrf.mxu0
      %v3819 = vadd.f32 %v3655, %v3818
      %v3820 = vpop.f32.mrf.mxu0
      %v3821 = vadd.f32 %v3655, %v3820
      %3822 = vmatmul.bf16.gmra.mxu0 %v3610
      %v3823 = vpop.f32.mrf.mxu0
      %v3824 = vadd.f32 %v3655, %v3823
      %v3825 = vpop.f32.mrf.mxu0
      %v3826 = vadd.f32 %v3655, %v3825
      %3827 = vmatmul.bf16.gmra.mxu0 %v3611
      %v3828 = vpop.f32.mrf.mxu0
      %v3829 = vadd.f32 %v3655, %v3828
      %v3830 = vpop.f32.mrf.mxu0
      %v3831 = vadd.f32 %v3655, %v3830
      %3832 = vmatmul.bf16.gmra.mxu0 %v3612
      %v3833 = vpop.f32.mrf.mxu0
      %v3834 = vadd.f32 %v3655, %v3833
      %v3835 = vpop.f32.mrf.mxu0
      %v3836 = vadd.f32 %v3655, %v3835
      %3837 = vmatmul.bf16.gmra.mxu0 %v3613
      %v3838 = vpop.f32.mrf.mxu0
      %v3839 = vadd.f32 %v3655, %v3838
      %v3840 = vpop.f32.mrf.mxu0
      %v3841 = vadd.f32 %v3655, %v3840
      %3842 = vmatmul.bf16.gmra.mxu0 %v3614
      %v3843 = vpop.f32.mrf.mxu0
      %v3844 = vadd.f32 %v3655, %v3843
      %v3845 = vpop.f32.mrf.mxu0
      %v3846 = vadd.f32 %v3655, %v3845
      %3847 = vmatmul.bf16.gmra.mxu0 %v3615
      %v3848 = vpop.f32.mrf.mxu0
      %v3849 = vadd.f32 %v3655, %v3848
      %v3850 = vpop.f32.mrf.mxu0
      %v3851 = vadd.f32 %v3655, %v3850
      %3852 = vmatmul.bf16.gmra.mxu0 %v3616
      %v3853 = vpop.f32.mrf.mxu0
      %v3854 = vadd.f32 %v3655, %v3853
      %v3855 = vpop.f32.mrf.mxu0
      %v3856 = vadd.f32 %v3655, %v3855
      %3857 = vmatmul.bf16.gmra.mxu0 %v3617
      %v3858 = vpop.f32.mrf.mxu0
      %v3859 = vadd.f32 %v3655, %v3858
      %v3860 = vpop.f32.mrf.mxu0
      %v3861 = vadd.f32 %v3655, %v3860
      %3862 = vmatmul.bf16.gmra.mxu0 %v3618
      %v3863 = vpop.f32.mrf.mxu0
      %v3864 = vadd.f32 %v3655, %v3863
      %v3865 = vpop.f32.mrf.mxu0
      %v3866 = vadd.f32 %v3655, %v3865
      %3867 = vmatmul.bf16.gmra.mxu0 %v3619
      %v3868 = vpop.f32.mrf.mxu0
      %v3869 = vadd.f32 %v3655, %v3868
      %v3870 = vpop.f32.mrf.mxu0
      %v3871 = vadd.f32 %v3655, %v3870
      %3872 = vmatmul.bf16.gmra.mxu0 %v3620
      %v3873 = vpop.f32.mrf.mxu0
      %v3874 = vadd.f32 %v3655, %v3873
      %v3875 = vpop.f32.mrf.mxu0
      %v3876 = vadd.f32 %v3655, %v3875
      %3877 = vdwg.mxu0
      %3878 = vmatpush.bf16.msra.mxu0 %v3763
      %3879 = vmatpush.bf16.msra.mxu0 %v3760
      %3880 = vmatpush.bf16.msra.mxu0 %v3757
      %3881 = vmatpush.bf16.msra.mxu0 %v3754
      %3882 = vmatpush.bf16.msra.mxu0 %v3751
      %3883 = vmatpush.bf16.msra.mxu0 %v3748
      %3884 = vmatpush.bf16.msra.mxu0 %v3745
      %3885 = vmatpush.bf16.msra.mxu0 %v3742
      %3886 = vmatmul.bf16.gmra.mxu0 %v3605
      %v3887 = vpop.f32.mrf.mxu0
      %v3888 = vadd.f32 %v3656, %v3887
      %v3889 = vpop.f32.mrf.mxu0
      %v3890 = vadd.f32 %v3656, %v3889
      %3891 = vmatmul.bf16.gmra.mxu0 %v3606
      %v3892 = vpop.f32.mrf.mxu0
      %v3893 = vadd.f32 %v3656, %v3892
      %v3894 = vpop.f32.mrf.mxu0
      %v3895 = vadd.f32 %v3656, %v3894
      %3896 = vmatmul.bf16.gmra.mxu0 %v3607
      %v3897 = vpop.f32.mrf.mxu0
      %v3898 = vadd.f32 %v3656, %v3897
      %v3899 = vpop.f32.mrf.mxu0
      %v3900 = vadd.f32 %v3656, %v3899
      %3901 = vmatmul.bf16.gmra.mxu0 %v3608
      %v3902 = vpop.f32.mrf.mxu0
      %v3903 = vadd.f32 %v3656, %v3902
      %v3904 = vpop.f32.mrf.mxu0
      %v3905 = vadd.f32 %v3656, %v3904
      %3906 = vmatmul.bf16.gmra.mxu0 %v3609
      %v3907 = vpop.f32.mrf.mxu0
      %v3908 = vadd.f32 %v3656, %v3907
      %v3909 = vpop.f32.mrf.mxu0
      %v3910 = vadd.f32 %v3656, %v3909
      %3911 = vmatmul.bf16.gmra.mxu0 %v3610
      %v3912 = vpop.f32.mrf.mxu0
      %v3913 = vadd.f32 %v3656, %v3912
      %v3914 = vpop.f32.mrf.mxu0
      %v3915 = vadd.f32 %v3656, %v3914
      %3916 = vmatmul.bf16.gmra.mxu0 %v3611
      %v3917 = vpop.f32.mrf.mxu0
      %v3918 = vadd.f32 %v3656, %v3917
      %v3919 = vpop.f32.mrf.mxu0
      %v3920 = vadd.f32 %v3656, %v3919
      %3921 = vmatmul.bf16.gmra.mxu0 %v3612
      %v3922 = vpop.f32.mrf.mxu0
      %v3923 = vadd.f32 %v3656, %v3922
      %v3924 = vpop.f32.mrf.mxu0
      %v3925 = vadd.f32 %v3656, %v3924
      %3926 = vmatmul.bf16.gmra.mxu0 %v3613
      %v3927 = vpop.f32.mrf.mxu0
      %v3928 = vadd.f32 %v3656, %v3927
      %v3929 = vpop.f32.mrf.mxu0
      %v3930 = vadd.f32 %v3656, %v3929
      %3931 = vmatmul.bf16.gmra.mxu0 %v3614
      %v3932 = vpop.f32.mrf.mxu0
      %v3933 = vadd.f32 %v3656, %v3932
      %v3934 = vpop.f32.mrf.mxu0
      %v3935 = vadd.f32 %v3656, %v3934
      %3936 = vmatmul.bf16.gmra.mxu0 %v3615
      %v3937 = vpop.f32.mrf.mxu0
      %v3938 = vadd.f32 %v3656, %v3937
      %v3939 = vpop.f32.mrf.mxu0
      %v3940 = vadd.f32 %v3656, %v3939
      %3941 = vmatmul.bf16.gmra.mxu0 %v3616
      %v3942 = vpop.f32.mrf.mxu0
      %v3943 = vadd.f32 %v3656, %v3942
      %v3944 = vpop.f32.mrf.mxu0
      %v3945 = vadd.f32 %v3656, %v3944
      %3946 = vmatmul.bf16.gmra.mxu0 %v3617
      %v3947 = vpop.f32.mrf.mxu0
      %v3948 = vadd.f32 %v3656, %v3947
      %v3949 = vpop.f32.mrf.mxu0
      %v3950 = vadd.f32 %v3656, %v3949
      %3951 = vmatmul.bf16.gmra.mxu0 %v3618
      %v3952 = vpop.f32.mrf.mxu0
      %v3953 = vadd.f32 %v3656, %v3952
      %v3954 = vpop.f32.mrf.mxu0
      %v3955 = vadd.f32 %v3656, %v3954
      %3956 = vmatmul.bf16.gmra.mxu0 %v3619
      %v3957 = vpop.f32.mrf.mxu0
      %v3958 = vadd.f32 %v3656, %v3957
      %v3959 = vpop.f32.mrf.mxu0
      %v3960 = vadd.f32 %v3656, %v3959
      %3961 = vmatmul.bf16.gmra.mxu0 %v3620
      %v3962 = vpop.f32.mrf.mxu0
      %v3963 = vadd.f32 %v3656, %v3962
      %v3964 = vpop.f32.mrf.mxu0
      %v3965 = vadd.f32 %v3656, %v3964
      %3966 = vdwg.mxu0
      %3967 = vmatpush.bf16.msra.mxu0 %v3764
      %3968 = vmatpush.bf16.msra.mxu0 %v3761
      %3969 = vmatpush.bf16.msra.mxu0 %v3758
      %3970 = vmatpush.bf16.msra.mxu0 %v3755
      %3971 = vmatpush.bf16.msra.mxu0 %v3752
      %3972 = vmatpush.bf16.msra.mxu0 %v3749
      %3973 = vmatpush.bf16.msra.mxu0 %v3746
      %3974 = vmatpush.bf16.msra.mxu0 %v3743
      %3975 = vmatmul.bf16.gmra.mxu0 %v3605
      %v3976 = vpop.f32.mrf.mxu0
      %v3977 = vadd.f32 %v3657, %v3976
      %v3978 = vpop.f32.mrf.mxu0
      %v3979 = vadd.f32 %v3657, %v3978
      %3980 = vmatmul.bf16.gmra.mxu0 %v3606
      %v3981 = vpop.f32.mrf.mxu0
      %v3982 = vadd.f32 %v3657, %v3981
      %v3983 = vpop.f32.mrf.mxu0
      %v3984 = vadd.f32 %v3657, %v3983
      %3985 = vmatmul.bf16.gmra.mxu0 %v3607
      %v3986 = vpop.f32.mrf.mxu0
      %v3987 = vadd.f32 %v3657, %v3986
      %v3988 = vpop.f32.mrf.mxu0
      %v3989 = vadd.f32 %v3657, %v3988
      %3990 = vmatmul.bf16.gmra.mxu0 %v3608
      %v3991 = vpop.f32.mrf.mxu0
      %v3992 = vadd.f32 %v3657, %v3991
      %v3993 = vpop.f32.mrf.mxu0
      %v3994 = vadd.f32 %v3657, %v3993
      %3995 = vmatmul.bf16.gmra.mxu0 %v3609
      %v3996 = vpop.f32.mrf.mxu0
      %v3997 = vadd.f32 %v3657, %v3996
      %v3998 = vpop.f32.mrf.mxu0
      %v3999 = vadd.f32 %v3657, %v3998
      %4000 = vmatmul.bf16.gmra.mxu0 %v3610
      %v4001 = vpop.f32.mrf.mxu0
      %v4002 = vadd.f32 %v3657, %v4001
      %v4003 = vpop.f32.mrf.mxu0
      %v4004 = vadd.f32 %v3657, %v4003
      %4005 = vmatmul.bf16.gmra.mxu0 %v3611
      %v4006 = vpop.f32.mrf.mxu0
      %v4007 = vadd.f32 %v3657, %v4006
      %v4008 = vpop.f32.mrf.mxu0
      %v4009 = vadd.f32 %v3657, %v4008
      %4010 = vmatmul.bf16.gmra.mxu0 %v3612
      %v4011 = vpop.f32.mrf.mxu0
      %v4012 = vadd.f32 %v3657, %v4011
      %v4013 = vpop.f32.mrf.mxu0
      %v4014 = vadd.f32 %v3657, %v4013
      %4015 = vmatmul.bf16.gmra.mxu0 %v3613
      %v4016 = vpop.f32.mrf.mxu0
      %v4017 = vadd.f32 %v3657, %v4016
      %v4018 = vpop.f32.mrf.mxu0
      %v4019 = vadd.f32 %v3657, %v4018
      %4020 = vmatmul.bf16.gmra.mxu0 %v3614
      %v4021 = vpop.f32.mrf.mxu0
      %v4022 = vadd.f32 %v3657, %v4021
      %v4023 = vpop.f32.mrf.mxu0
      %v4024 = vadd.f32 %v3657, %v4023
      %4025 = vmatmul.bf16.gmra.mxu0 %v3615
      %v4026 = vpop.f32.mrf.mxu0
      %v4027 = vadd.f32 %v3657, %v4026
      %v4028 = vpop.f32.mrf.mxu0
      %v4029 = vadd.f32 %v3657, %v4028
      %4030 = vmatmul.bf16.gmra.mxu0 %v3616
      %v4031 = vpop.f32.mrf.mxu0
      %v4032 = vadd.f32 %v3657, %v4031
      %v4033 = vpop.f32.mrf.mxu0
      %v4034 = vadd.f32 %v3657, %v4033
      %4035 = vmatmul.bf16.gmra.mxu0 %v3617
      %v4036 = vpop.f32.mrf.mxu0
      %v4037 = vadd.f32 %v3657, %v4036
      %v4038 = vpop.f32.mrf.mxu0
      %v4039 = vadd.f32 %v3657, %v4038
      %4040 = vmatmul.bf16.gmra.mxu0 %v3618
      %v4041 = vpop.f32.mrf.mxu0
      %v4042 = vadd.f32 %v3657, %v4041
      %v4043 = vpop.f32.mrf.mxu0
      %v4044 = vadd.f32 %v3657, %v4043
      %4045 = vmatmul.bf16.gmra.mxu0 %v3619
      %v4046 = vpop.f32.mrf.mxu0
      %v4047 = vadd.f32 %v3657, %v4046
      %v4048 = vpop.f32.mrf.mxu0
      %v4049 = vadd.f32 %v3657, %v4048
      %4050 = vmatmul.bf16.gmra.mxu0 %v3620
      %v4051 = vpop.f32.mrf.mxu0
      %v4052 = vadd.f32 %v3657, %v4051
      %v4053 = vpop.f32.mrf.mxu0
      %v4054 = vadd.f32 %v3657, %v4053
      %4055 = vdwg.mxu0
      %v4056 = vmax.f32 %v3799, 0.0
      %v4057 = vmax.f32 %v3888, 0.0
      %v4058 = vmax.f32 %v3977, 0.0
      %v4059 = vmax.f32 %v3801, 0.0
      %v4060 = vmax.f32 %v3890, 0.0
      %v4061 = vmax.f32 %v3979, 0.0
      %v4062 = vmax.f32 %v3804, 0.0
      %v4063 = vmax.f32 %v3893, 0.0
      %v4064 = vmax.f32 %v3982, 0.0
      %v4065 = vmax.f32 %v3806, 0.0
      %v4066 = vmax.f32 %v3895, 0.0
      %v4067 = vmax.f32 %v3984, 0.0
      %v4068 = vmax.f32 %v3809, 0.0
      %v4069 = vmax.f32 %v3898, 0.0
      %v4070 = vmax.f32 %v3987, 0.0
      %v4071 = vmax.f32 %v3811, 0.0
      %v4072 = vmax.f32 %v3900, 0.0
      %v4073 = vmax.f32 %v3989, 0.0
      %v4074 = vmax.f32 %v3814, 0.0
      %v4075 = vmax.f32 %v3903, 0.0
      %v4076 = vmax.f32 %v3992, 0.0
      %v4077 = vmax.f32 %v3816, 0.0
      %v4078 = vmax.f32 %v3905, 0.0
      %v4079 = vmax.f32 %v3994, 0.0
      %v4080 = vmax.f32 %v3819, 0.0
      %v4081 = vmax.f32 %v3908, 0.0
      %v4082 = vmax.f32 %v3997, 0.0
      %v4083 = vmax.f32 %v3821, 0.0
      %v4084 = vmax.f32 %v3910, 0.0
      %v4085 = vmax.f32 %v3999, 0.0
      %v4086 = vmax.f32 %v3824, 0.0
      %v4087 = vmax.f32 %v3913, 0.0
      %v4088 = vmax.f32 %v4002, 0.0
      %v4089 = vmax.f32 %v3826, 0.0
      %v4090 = vmax.f32 %v3915, 0.0
      %v4091 = vmax.f32 %v4004, 0.0
      %v4092 = vmax.f32 %v3829, 0.0
      %v4093 = vmax.f32 %v3918, 0.0
      %v4094 = vmax.f32 %v4007, 0.0
      %v4095 = vmax.f32 %v3831, 0.0
      %v4096 = vmax.f32 %v3920, 0.0
      %v4097 = vmax.f32 %v4009, 0.0
      %v4098 = vmax.f32 %v3834, 0.0
      %v4099 = vmax.f32 %v3923, 0.0
      %v4100 = vmax.f32 %v4012, 0.0
      %v4101 = vmax.f32 %v3836, 0.0
      %v4102 = vmax.f32 %v3925, 0.0
      %v4103 = vmax.f32 %v4014, 0.0
      %v4104 = vmax.f32 %v3839, 0.0
      %v4105 = vmax.f32 %v3928, 0.0
      %v4106 = vmax.f32 %v4017, 0.0
      %v4107 = vmax.f32 %v3841, 0.0
      %v4108 = vmax.f32 %v3930, 0.0
      %v4109 = vmax.f32 %v4019, 0.0
      %v4110 = vmax.f32 %v3844, 0.0
      %v4111 = vmax.f32 %v3933, 0.0
      %v4112 = vmax.f32 %v4022, 0.0
      %v4113 = vmax.f32 %v3846, 0.0
      %v4114 = vmax.f32 %v3935, 0.0
      %v4115 = vmax.f32 %v4024, 0.0
      %v4116 = vmax.f32 %v3849, 0.0
      %v4117 = vmax.f32 %v3938, 0.0
      %v4118 = vmax.f32 %v4027, 0.0
      %v4119 = vmax.f32 %v3851, 0.0
      %v4120 = vmax.f32 %v3940, 0.0
      %v4121 = vmax.f32 %v4029, 0.0
      %v4122 = vmax.f32 %v3854, 0.0
      %v4123 = vmax.f32 %v3943, 0.0
      %v4124 = vmax.f32 %v4032, 0.0
      %v4125 = vmax.f32 %v3856, 0.0
      %v4126 = vmax.f32 %v3945, 0.0
      %v4127 = vmax.f32 %v4034, 0.0
      %v4128 = vmax.f32 %v3859, 0.0
      %v4129 = vmax.f32 %v3948, 0.0
      %v4130 = vmax.f32 %v4037, 0.0
      %v4131 = vmax.f32 %v3861, 0.0
      %v4132 = vmax.f32 %v3950, 0.0
      %v4133 = vmax.f32 %v4039, 0.0
      %v4134 = vmax.f32 %v3864, 0.0
      %v4135 = vmax.f32 %v3953, 0.0
      %v4136 = vmax.f32 %v4042, 0.0
      %v4137 = vmax.f32 %v3866, 0.0
      %v4138 = vmax.f32 %v3955, 0.0
      %v4139 = vmax.f32 %v4044, 0.0
      %v4140 = vmax.f32 %v3869, 0.0
      %v4141 = vmax.f32 %v3958, 0.0
      %v4142 = vmax.f32 %v4047, 0.0
      %v4143 = vmax.f32 %v3871, 0.0
      %v4144 = vmax.f32 %v3960, 0.0
      %v4145 = vmax.f32 %v4049, 0.0
      %v4146 = vmax.f32 %v3874, 0.0
      %v4147 = vmax.f32 %v3963, 0.0
      %v4148 = vmax.f32 %v4052, 0.0
      %v4149 = vmax.f32 %v3876, 0.0
      %v4150 = vmax.f32 %v3965, 0.0
      %v4151 = vmax.f32 %v4054, 0.0
      %v4152 = vpack.c.bf16 %v4059, %v4056
      %v4153 = vpack.c.bf16 %v4060, %v4057
      %v4154 = vpack.c.bf16 %v4061, %v4058
      %v4155 = vpack.c.bf16 %v4065, %v4062
      %v4156 = vpack.c.bf16 %v4066, %v4063
      %v4157 = vpack.c.bf16 %v4067, %v4064
      %v4158 = vpack.c.bf16 %v4071, %v4068
      %v4159 = vpack.c.bf16 %v4072, %v4069
      %v4160 = vpack.c.bf16 %v4073, %v4070
      %v4161 = vpack.c.bf16 %v4077, %v4074
      %v4162 = vpack.c.bf16 %v4078, %v4075
      %v4163 = vpack.c.bf16 %v4079, %v4076
      %v4164 = vpack.c.bf16 %v4083, %v4080
      %v4165 = vpack.c.bf16 %v4084, %v4081
      %v4166 = vpack.c.bf16 %v4085, %v4082
      %v4167 = vpack.c.bf16 %v4089, %v4086
      %v4168 = vpack.c.bf16 %v4090, %v4087
      %v4169 = vpack.c.bf16 %v4091, %v4088
      %v4170 = vpack.c.bf16 %v4095, %v4092
      %v4171 = vpack.c.bf16 %v4096, %v4093
      %v4172 = vpack.c.bf16 %v4097, %v4094
      %v4173 = vpack.c.bf16 %v4101, %v4098
      %v4174 = vpack.c.bf16 %v4102, %v4099
      %v4175 = vpack.c.bf16 %v4103, %v4100
      %v4176 = vpack.c.bf16 %v4107, %v4104
      %v4177 = vpack.c.bf16 %v4108, %v4105
      %v4178 = vpack.c.bf16 %v4109, %v4106
      %v4179 = vpack.c.bf16 %v4113, %v4110
      %v4180 = vpack.c.bf16 %v4114, %v4111
      %v4181 = vpack.c.bf16 %v4115, %v4112
      %v4182 = vpack.c.bf16 %v4119, %v4116
      %v4183 = vpack.c.bf16 %v4120, %v4117
      %v4184 = vpack.c.bf16 %v4121, %v4118
      %v4185 = vpack.c.bf16 %v4125, %v4122
      %v4186 = vpack.c.bf16 %v4126, %v4123
      %v4187 = vpack.c.bf16 %v4127, %v4124
      %v4188 = vpack.c.bf16 %v4131, %v4128
      %v4189 = vpack.c.bf16 %v4132, %v4129
      %v4190 = vpack.c.bf16 %v4133, %v4130
      %v4191 = vpack.c.bf16 %v4137, %v4134
      %v4192 = vpack.c.bf16 %v4138, %v4135
      %v4193 = vpack.c.bf16 %v4139, %v4136
      %v4194 = vpack.c.bf16 %v4143, %v4140
      %v4195 = vpack.c.bf16 %v4144, %v4141
      %v4196 = vpack.c.bf16 %v4145, %v4142
      %v4197 = vpack.c.bf16 %v4149, %v4146
      %v4198 = vpack.c.bf16 %v4150, %v4147
      %v4199 = vpack.c.bf16 %v4151, %v4148
      %v4200 = vld [vmem:[#allocation9 + $0x600] sm:$0xff]
      %v4201 = vld [vmem:[#allocation9 + $0x60c] sm:$0xff]
      %v4202 = vld [vmem:[#allocation9 + $0x618] sm:$0xff]
      %v4203 = vld [vmem:[#allocation9 + $0x624] sm:$0xff]
      %v4204 = vld [vmem:[#allocation9 + $0x630] sm:$0xff]
      %v4205 = vld [vmem:[#allocation9 + $0x63c] sm:$0xff]
      %v4206 = vld [vmem:[#allocation9 + $0x648] sm:$0xff]
      %v4207 = vld [vmem:[#allocation9 + $0x654] sm:$0xff]
      %v4208 = vld [vmem:[#allocation9 + $0x660] sm:$0xff]
      %v4209 = vld [vmem:[#allocation9 + $0x66c] sm:$0xff]
      %v4210 = vld [vmem:[#allocation9 + $0x678] sm:$0xff]
      %v4211 = vld [vmem:[#allocation9 + $0x684] sm:$0xff]
      %v4212 = vld [vmem:[#allocation9 + $0x690] sm:$0xff]
      %v4213 = vld [vmem:[#allocation9 + $0x69c] sm:$0xff]
      %v4214 = vld [vmem:[#allocation9 + $0x6a8] sm:$0xff]
      %v4215 = vld [vmem:[#allocation9 + $0x6b4] sm:$0xff]
      %v4216 = vld [vmem:[#allocation9 + $0x6c0] sm:$0xff]
      %v4217 = vld [vmem:[#allocation9 + $0x6cc] sm:$0xff]
      %v4218 = vld [vmem:[#allocation9 + $0x6d8] sm:$0xff]
      %v4219 = vld [vmem:[#allocation9 + $0x6e4] sm:$0xff]
      %v4220 = vld [vmem:[#allocation9 + $0x6f0] sm:$0xff]
      %v4221 = vld [vmem:[#allocation9 + $0x6fc] sm:$0xff]
      %v4222 = vld [vmem:[#allocation9 + $0x708] sm:$0xff]
      %v4223 = vld [vmem:[#allocation9 + $0x714] sm:$0xff]
      %v4224 = vld [vmem:[#allocation9 + $0x720] sm:$0xff]
      %v4225 = vld [vmem:[#allocation9 + $0x72c] sm:$0xff]
      %v4226 = vld [vmem:[#allocation9 + $0x738] sm:$0xff]
      %v4227 = vld [vmem:[#allocation9 + $0x744] sm:$0xff]
      %v4228 = vld [vmem:[#allocation9 + $0x750] sm:$0xff]
      %v4229 = vld [vmem:[#allocation9 + $0x75c] sm:$0xff]
      %v4230 = vld [vmem:[#allocation9 + $0x768] sm:$0xff]
      %v4231 = vld [vmem:[#allocation9 + $0x774] sm:$0xff]
      %v4232 = vld [vmem:[#allocation9 + $0x780] sm:$0xff]
      %v4233 = vld [vmem:[#allocation9 + $0x78c] sm:$0xff]
      %v4234 = vld [vmem:[#allocation9 + $0x798] sm:$0xff]
      %v4235 = vld [vmem:[#allocation9 + $0x7a4] sm:$0xff]
      %v4236 = vld [vmem:[#allocation9 + $0x7b0] sm:$0xff]
      %v4237 = vld [vmem:[#allocation9 + $0x7bc] sm:$0xff]
      %v4238 = vld [vmem:[#allocation9 + $0x7c8] sm:$0xff]
      %v4239 = vld [vmem:[#allocation9 + $0x7d4] sm:$0xff]
      %v4240 = vld [vmem:[#allocation9 + $0x7e0] sm:$0xff]
      %v4241 = vld [vmem:[#allocation9 + $0x7ec] sm:$0xff]
      %v4242 = vld [vmem:[#allocation9 + $0x7f8] sm:$0xff]
      %v4243 = vld [vmem:[#allocation9 + $0x804] sm:$0xff]
      %v4244 = vld [vmem:[#allocation9 + $0x810] sm:$0xff]
      %v4245 = vld [vmem:[#allocation9 + $0x81c] sm:$0xff]
      %v4246 = vld [vmem:[#allocation9 + $0x828] sm:$0xff]
      %v4247 = vld [vmem:[#allocation9 + $0x834] sm:$0xff]
      %v4248 = vld [vmem:[#allocation11 + $0xa] sm:$0x3]
      %v4250 = vperm.slane %v4248, 0
      %v4251 = vperm.slane %v4248, 1
      %v4302 = vunpack.c.l.b16 %v4200
      %v4303 = vunpack.c.h.b16 %v4200
      %v4304 = vunpack.c.l.b16 %v4201
      %v4305 = vunpack.c.h.b16 %v4201
      %v4306 = vunpack.c.l.b16 %v4202
      %v4307 = vunpack.c.h.b16 %v4202
      %v4308 = vunpack.c.l.b16 %v4203
      %v4309 = vunpack.c.h.b16 %v4203
      %v4310 = vunpack.c.l.b16 %v4204
      %v4311 = vunpack.c.h.b16 %v4204
      %v4312 = vunpack.c.l.b16 %v4205
      %v4313 = vunpack.c.h.b16 %v4205
      %v4314 = vunpack.c.l.b16 %v4206
      %v4315 = vunpack.c.h.b16 %v4206
      %v4316 = vunpack.c.l.b16 %v4207
      %v4317 = vunpack.c.h.b16 %v4207
      %v4318 = vunpack.c.l.b16 %v4208
      %v4319 = vunpack.c.h.b16 %v4208
      %v4320 = vunpack.c.l.b16 %v4209
      %v4321 = vunpack.c.h.b16 %v4209
      %v4322 = vunpack.c.l.b16 %v4210
      %v4323 = vunpack.c.h.b16 %v4210
      %v4324 = vunpack.c.l.b16 %v4211
      %v4325 = vunpack.c.h.b16 %v4211
      %v4326 = vunpack.c.l.b16 %v4212
      %v4327 = vunpack.c.h.b16 %v4212
      %v4328 = vunpack.c.l.b16 %v4213
      %v4329 = vunpack.c.h.b16 %v4213
      %v4330 = vunpack.c.l.b16 %v4214
      %v4331 = vunpack.c.h.b16 %v4214
      %v4332 = vunpack.c.l.b16 %v4215
      %v4333 = vunpack.c.h.b16 %v4215
      %v4334 = vunpack.c.l.b16 %v4216
      %v4335 = vunpack.c.h.b16 %v4216
      %v4336 = vunpack.c.l.b16 %v4217
      %v4337 = vunpack.c.h.b16 %v4217
      %v4338 = vunpack.c.l.b16 %v4218
      %v4339 = vunpack.c.h.b16 %v4218
      %v4340 = vunpack.c.l.b16 %v4219
      %v4341 = vunpack.c.h.b16 %v4219
      %v4342 = vunpack.c.l.b16 %v4220
      %v4343 = vunpack.c.h.b16 %v4220
      %v4344 = vunpack.c.l.b16 %v4221
      %v4345 = vunpack.c.h.b16 %v4221
      %v4346 = vunpack.c.l.b16 %v4222
      %v4347 = vunpack.c.h.b16 %v4222
      %v4348 = vunpack.c.l.b16 %v4223
      %v4349 = vunpack.c.h.b16 %v4223
      %v4350 = vunpack.c.l.b16 %v4224
      %v4351 = vunpack.c.h.b16 %v4224
      %v4352 = vunpack.c.l.b16 %v4225
      %v4353 = vunpack.c.h.b16 %v4225
      %v4354 = vunpack.c.l.b16 %v4226
      %v4355 = vunpack.c.h.b16 %v4226
      %v4356 = vunpack.c.l.b16 %v4227
      %v4357 = vunpack.c.h.b16 %v4227
      %v4358 = vunpack.c.l.b16 %v4228
      %v4359 = vunpack.c.h.b16 %v4228
      %v4360 = vunpack.c.l.b16 %v4229
      %v4361 = vunpack.c.h.b16 %v4229
      %v4362 = vunpack.c.l.b16 %v4230
      %v4363 = vunpack.c.h.b16 %v4230
      %v4364 = vunpack.c.l.b16 %v4231
      %v4365 = vunpack.c.h.b16 %v4231
      %v4366 = vunpack.c.l.b16 %v4232
      %v4367 = vunpack.c.h.b16 %v4232
      %v4368 = vunpack.c.l.b16 %v4233
      %v4369 = vunpack.c.h.b16 %v4233
      %v4370 = vunpack.c.l.b16 %v4234
      %v4371 = vunpack.c.h.b16 %v4234
      %v4372 = vunpack.c.l.b16 %v4235
      %v4373 = vunpack.c.h.b16 %v4235
      %v4374 = vunpack.c.l.b16 %v4236
      %v4375 = vunpack.c.h.b16 %v4236
      %v4376 = vunpack.c.l.b16 %v4237
      %v4377 = vunpack.c.h.b16 %v4237
      %v4378 = vunpack.c.l.b16 %v4238
      %v4379 = vunpack.c.h.b16 %v4238
      %v4380 = vunpack.c.l.b16 %v4239
      %v4381 = vunpack.c.h.b16 %v4239
      %v4382 = vunpack.c.l.b16 %v4240
      %v4383 = vunpack.c.h.b16 %v4240
      %v4384 = vunpack.c.l.b16 %v4241
      %v4385 = vunpack.c.h.b16 %v4241
      %v4386 = vunpack.c.l.b16 %v4242
      %v4387 = vunpack.c.h.b16 %v4242
      %v4388 = vunpack.c.l.b16 %v4243
      %v4389 = vunpack.c.h.b16 %v4243
      %v4390 = vunpack.c.l.b16 %v4244
      %v4391 = vunpack.c.h.b16 %v4244
      %v4392 = vunpack.c.l.b16 %v4245
      %v4393 = vunpack.c.h.b16 %v4245
      %v4394 = vunpack.c.l.b16 %v4246
      %v4395 = vunpack.c.h.b16 %v4246
      %v4396 = vunpack.c.l.b16 %v4247
      %v4397 = vunpack.c.h.b16 %v4247
      %v4398 = vpack.c.b16 %v4304, %v4302
      %v4399 = vpack.c.b16 %v4305, %v4303
      %v4400 = vpack.c.b16 %v4308, %v4306
      %v4401 = vpack.c.b16 %v4309, %v4307
      %v4402 = vpack.c.b16 %v4312, %v4310
      %v4403 = vpack.c.b16 %v4313, %v4311
      %v4404 = vpack.c.b16 %v4316, %v4314
      %v4405 = vpack.c.b16 %v4317, %v4315
      %v4406 = vpack.c.b16 %v4320, %v4318
      %v4407 = vpack.c.b16 %v4321, %v4319
      %v4408 = vpack.c.b16 %v4324, %v4322
      %v4409 = vpack.c.b16 %v4325, %v4323
      %v4410 = vpack.c.b16 %v4328, %v4326
      %v4411 = vpack.c.b16 %v4329, %v4327
      %v4412 = vpack.c.b16 %v4332, %v4330
      %v4413 = vpack.c.b16 %v4333, %v4331
      %v4414 = vpack.c.b16 %v4336, %v4334
      %v4415 = vpack.c.b16 %v4337, %v4335
      %v4416 = vpack.c.b16 %v4340, %v4338
      %v4417 = vpack.c.b16 %v4341, %v4339
      %v4418 = vpack.c.b16 %v4344, %v4342
      %v4419 = vpack.c.b16 %v4345, %v4343
      %v4420 = vpack.c.b16 %v4348, %v4346
      %v4421 = vpack.c.b16 %v4349, %v4347
      %v4422 = vpack.c.b16 %v4352, %v4350
      %v4423 = vpack.c.b16 %v4353, %v4351
      %v4424 = vpack.c.b16 %v4356, %v4354
      %v4425 = vpack.c.b16 %v4357, %v4355
      %v4426 = vpack.c.b16 %v4360, %v4358
      %v4427 = vpack.c.b16 %v4361, %v4359
      %v4428 = vpack.c.b16 %v4364, %v4362
      %v4429 = vpack.c.b16 %v4365, %v4363
      %v4430 = vpack.c.b16 %v4368, %v4366
      %v4431 = vpack.c.b16 %v4369, %v4367
      %v4432 = vpack.c.b16 %v4372, %v4370
      %v4433 = vpack.c.b16 %v4373, %v4371
      %v4434 = vpack.c.b16 %v4376, %v4374
      %v4435 = vpack.c.b16 %v4377, %v4375
      %v4436 = vpack.c.b16 %v4380, %v4378
      %v4437 = vpack.c.b16 %v4381, %v4379
      %v4438 = vpack.c.b16 %v4384, %v4382
      %v4439 = vpack.c.b16 %v4385, %v4383
      %v4440 = vpack.c.b16 %v4388, %v4386
      %v4441 = vpack.c.b16 %v4389, %v4387
      %v4442 = vpack.c.b16 %v4392, %v4390
      %v4443 = vpack.c.b16 %v4393, %v4391
      %v4444 = vpack.c.b16 %v4396, %v4394
      %v4445 = vpack.c.b16 %v4397, %v4395
      %4494 = vmatpush.bf16.msra.mxu0 %v4412
      %4495 = vmatpush.bf16.msra.mxu0 %v4410
      %4496 = vmatpush.bf16.msra.mxu0 %v4408
      %4497 = vmatpush.bf16.msra.mxu0 %v4406
      %4498 = vmatpush.bf16.msra.mxu0 %v4404
      %4499 = vmatpush.bf16.msra.mxu0 %v4402
      %4500 = vmatpush.bf16.msra.mxu0 %v4400
      %4501 = vmatpush.bf16.msra.mxu0 %v4398
      %4502 = vmatmul.bf16.gmra.mxu0 %v4152
      %v4503 = vpop.f32.mrf.mxu0
      %v4504 = vadd.f32 %v4250, %v4503
      %v4505 = vpop.f32.mrf.mxu0
      %v4506 = vadd.f32 %v4250, %v4505
      %4507 = vmatmul.bf16.gmra.mxu0 %v4155
      %v4508 = vpop.f32.mrf.mxu0
      %v4509 = vadd.f32 %v4250, %v4508
      %v4510 = vpop.f32.mrf.mxu0
      %v4511 = vadd.f32 %v4250, %v4510
      %4512 = vmatmul.bf16.gmra.mxu0 %v4158
      %v4513 = vpop.f32.mrf.mxu0
      %v4514 = vadd.f32 %v4250, %v4513
      %v4515 = vpop.f32.mrf.mxu0
      %v4516 = vadd.f32 %v4250, %v4515
      %4517 = vmatmul.bf16.gmra.mxu0 %v4161
      %v4518 = vpop.f32.mrf.mxu0
      %v4519 = vadd.f32 %v4250, %v4518
      %v4520 = vpop.f32.mrf.mxu0
      %v4521 = vadd.f32 %v4250, %v4520
      %4522 = vmatmul.bf16.gmra.mxu0 %v4164
      %v4523 = vpop.f32.mrf.mxu0
      %v4524 = vadd.f32 %v4250, %v4523
      %v4525 = vpop.f32.mrf.mxu0
      %v4526 = vadd.f32 %v4250, %v4525
      %4527 = vmatmul.bf16.gmra.mxu0 %v4167
      %v4528 = vpop.f32.mrf.mxu0
      %v4529 = vadd.f32 %v4250, %v4528
      %v4530 = vpop.f32.mrf.mxu0
      %v4531 = vadd.f32 %v4250, %v4530
      %4532 = vmatmul.bf16.gmra.mxu0 %v4170
      %v4533 = vpop.f32.mrf.mxu0
      %v4534 = vadd.f32 %v4250, %v4533
      %v4535 = vpop.f32.mrf.mxu0
      %v4536 = vadd.f32 %v4250, %v4535
      %4537 = vmatmul.bf16.gmra.mxu0 %v4173
      %v4538 = vpop.f32.mrf.mxu0
      %v4539 = vadd.f32 %v4250, %v4538
      %v4540 = vpop.f32.mrf.mxu0
      %v4541 = vadd.f32 %v4250, %v4540
      %4542 = vmatmul.bf16.gmra.mxu0 %v4176
      %v4543 = vpop.f32.mrf.mxu0
      %v4544 = vadd.f32 %v4250, %v4543
      %v4545 = vpop.f32.mrf.mxu0
      %v4546 = vadd.f32 %v4250, %v4545
      %4547 = vmatmul.bf16.gmra.mxu0 %v4179
      %v4548 = vpop.f32.mrf.mxu0
      %v4549 = vadd.f32 %v4250, %v4548
      %v4550 = vpop.f32.mrf.mxu0
      %v4551 = vadd.f32 %v4250, %v4550
      %4552 = vmatmul.bf16.gmra.mxu0 %v4182
      %v4553 = vpop.f32.mrf.mxu0
      %v4554 = vadd.f32 %v4250, %v4553
      %v4555 = vpop.f32.mrf.mxu0
      %v4556 = vadd.f32 %v4250, %v4555
      %4557 = vmatmul.bf16.gmra.mxu0 %v4185
      %v4558 = vpop.f32.mrf.mxu0
      %v4559 = vadd.f32 %v4250, %v4558
      %v4560 = vpop.f32.mrf.mxu0
      %v4561 = vadd.f32 %v4250, %v4560
      %4562 = vmatmul.bf16.gmra.mxu0 %v4188
      %v4563 = vpop.f32.mrf.mxu0
      %v4564 = vadd.f32 %v4250, %v4563
      %v4565 = vpop.f32.mrf.mxu0
      %v4566 = vadd.f32 %v4250, %v4565
      %4567 = vmatmul.bf16.gmra.mxu0 %v4191
      %v4568 = vpop.f32.mrf.mxu0
      %v4569 = vadd.f32 %v4250, %v4568
      %v4570 = vpop.f32.mrf.mxu0
      %v4571 = vadd.f32 %v4250, %v4570
      %4572 = vmatmul.bf16.gmra.mxu0 %v4194
      %v4573 = vpop.f32.mrf.mxu0
      %v4574 = vadd.f32 %v4250, %v4573
      %v4575 = vpop.f32.mrf.mxu0
      %v4576 = vadd.f32 %v4250, %v4575
      %4577 = vmatmul.bf16.gmra.mxu0 %v4197
      %v4578 = vpop.f32.mrf.mxu0
      %v4579 = vadd.f32 %v4250, %v4578
      %v4580 = vpop.f32.mrf.mxu0
      %v4581 = vadd.f32 %v4250, %v4580
      %4582 = vdwg.mxu0
      %4583 = vmatpush.bf16.msra.mxu0 %v4428
      %4584 = vmatpush.bf16.msra.mxu0 %v4426
      %4585 = vmatpush.bf16.msra.mxu0 %v4424
      %4586 = vmatpush.bf16.msra.mxu0 %v4422
      %4587 = vmatpush.bf16.msra.mxu0 %v4420
      %4588 = vmatpush.bf16.msra.mxu0 %v4418
      %4589 = vmatpush.bf16.msra.mxu0 %v4416
      %4590 = vmatpush.bf16.msra.mxu0 %v4414
      %4591 = vmatmul.bf16.gmra.mxu0 %v4153
      %v4592 = vpop.f32.mrf.mxu0
      %v4593 = vadd.f32 %v4504, %v4592
      %v4594 = vpop.f32.mrf.mxu0
      %v4595 = vadd.f32 %v4506, %v4594
      %4596 = vmatmul.bf16.gmra.mxu0 %v4156
      %v4597 = vpop.f32.mrf.mxu0
      %v4598 = vadd.f32 %v4509, %v4597
      %v4599 = vpop.f32.mrf.mxu0
      %v4600 = vadd.f32 %v4511, %v4599
      %4601 = vmatmul.bf16.gmra.mxu0 %v4159
      %v4602 = vpop.f32.mrf.mxu0
      %v4603 = vadd.f32 %v4514, %v4602
      %v4604 = vpop.f32.mrf.mxu0
      %v4605 = vadd.f32 %v4516, %v4604
      %4606 = vmatmul.bf16.gmra.mxu0 %v4162
      %v4607 = vpop.f32.mrf.mxu0
      %v4608 = vadd.f32 %v4519, %v4607
      %v4609 = vpop.f32.mrf.mxu0
      %v4610 = vadd.f32 %v4521, %v4609
      %4611 = vmatmul.bf16.gmra.mxu0 %v4165
      %v4612 = vpop.f32.mrf.mxu0
      %v4613 = vadd.f32 %v4524, %v4612
      %v4614 = vpop.f32.mrf.mxu0
      %v4615 = vadd.f32 %v4526, %v4614
      %4616 = vmatmul.bf16.gmra.mxu0 %v4168
      %v4617 = vpop.f32.mrf.mxu0
      %v4618 = vadd.f32 %v4529, %v4617
      %v4619 = vpop.f32.mrf.mxu0
      %v4620 = vadd.f32 %v4531, %v4619
      %4621 = vmatmul.bf16.gmra.mxu0 %v4171
      %v4622 = vpop.f32.mrf.mxu0
      %v4623 = vadd.f32 %v4534, %v4622
      %v4624 = vpop.f32.mrf.mxu0
      %v4625 = vadd.f32 %v4536, %v4624
      %4626 = vmatmul.bf16.gmra.mxu0 %v4174
      %v4627 = vpop.f32.mrf.mxu0
      %v4628 = vadd.f32 %v4539, %v4627
      %v4629 = vpop.f32.mrf.mxu0
      %v4630 = vadd.f32 %v4541, %v4629
      %4631 = vmatmul.bf16.gmra.mxu0 %v4177
      %v4632 = vpop.f32.mrf.mxu0
      %v4633 = vadd.f32 %v4544, %v4632
      %v4634 = vpop.f32.mrf.mxu0
      %v4635 = vadd.f32 %v4546, %v4634
      %4636 = vmatmul.bf16.gmra.mxu0 %v4180
      %v4637 = vpop.f32.mrf.mxu0
      %v4638 = vadd.f32 %v4549, %v4637
      %v4639 = vpop.f32.mrf.mxu0
      %v4640 = vadd.f32 %v4551, %v4639
      %4641 = vmatmul.bf16.gmra.mxu0 %v4183
      %v4642 = vpop.f32.mrf.mxu0
      %v4643 = vadd.f32 %v4554, %v4642
      %v4644 = vpop.f32.mrf.mxu0
      %v4645 = vadd.f32 %v4556, %v4644
      %4646 = vmatmul.bf16.gmra.mxu0 %v4186
      %v4647 = vpop.f32.mrf.mxu0
      %v4648 = vadd.f32 %v4559, %v4647
      %v4649 = vpop.f32.mrf.mxu0
      %v4650 = vadd.f32 %v4561, %v4649
      %4651 = vmatmul.bf16.gmra.mxu0 %v4189
      %v4652 = vpop.f32.mrf.mxu0
      %v4653 = vadd.f32 %v4564, %v4652
      %v4654 = vpop.f32.mrf.mxu0
      %v4655 = vadd.f32 %v4566, %v4654
      %4656 = vmatmul.bf16.gmra.mxu0 %v4192
      %v4657 = vpop.f32.mrf.mxu0
      %v4658 = vadd.f32 %v4569, %v4657
      %v4659 = vpop.f32.mrf.mxu0
      %v4660 = vadd.f32 %v4571, %v4659
      %4661 = vmatmul.bf16.gmra.mxu0 %v4195
      %v4662 = vpop.f32.mrf.mxu0
      %v4663 = vadd.f32 %v4574, %v4662
      %v4664 = vpop.f32.mrf.mxu0
      %v4665 = vadd.f32 %v4576, %v4664
      %4666 = vmatmul.bf16.gmra.mxu0 %v4198
      %v4667 = vpop.f32.mrf.mxu0
      %v4668 = vadd.f32 %v4579, %v4667
      %v4669 = vpop.f32.mrf.mxu0
      %v4670 = vadd.f32 %v4581, %v4669
      %4671 = vdwg.mxu0
      %4672 = vmatpush.bf16.msra.mxu0 %v4444
      %4673 = vmatpush.bf16.msra.mxu0 %v4442
      %4674 = vmatpush.bf16.msra.mxu0 %v4440
      %4675 = vmatpush.bf16.msra.mxu0 %v4438
      %4676 = vmatpush.bf16.msra.mxu0 %v4436
      %4677 = vmatpush.bf16.msra.mxu0 %v4434
      %4678 = vmatpush.bf16.msra.mxu0 %v4432
      %4679 = vmatpush.bf16.msra.mxu0 %v4430
      %4680 = vmatmul.bf16.gmra.mxu0 %v4154
      %v4681 = vpop.f32.mrf.mxu0
      %v4682 = vadd.f32 %v4593, %v4681
      %v4683 = vpop.f32.mrf.mxu0
      %v4684 = vadd.f32 %v4595, %v4683
      %4685 = vmatmul.bf16.gmra.mxu0 %v4157
      %v4686 = vpop.f32.mrf.mxu0
      %v4687 = vadd.f32 %v4598, %v4686
      %v4688 = vpop.f32.mrf.mxu0
      %v4689 = vadd.f32 %v4600, %v4688
      %4690 = vmatmul.bf16.gmra.mxu0 %v4160
      %v4691 = vpop.f32.mrf.mxu0
      %v4692 = vadd.f32 %v4603, %v4691
      %v4693 = vpop.f32.mrf.mxu0
      %v4694 = vadd.f32 %v4605, %v4693
      %4695 = vmatmul.bf16.gmra.mxu0 %v4163
      %v4696 = vpop.f32.mrf.mxu0
      %v4697 = vadd.f32 %v4608, %v4696
      %v4698 = vpop.f32.mrf.mxu0
      %v4699 = vadd.f32 %v4610, %v4698
      %4700 = vmatmul.bf16.gmra.mxu0 %v4166
      %v4701 = vpop.f32.mrf.mxu0
      %v4702 = vadd.f32 %v4613, %v4701
      %v4703 = vpop.f32.mrf.mxu0
      %v4704 = vadd.f32 %v4615, %v4703
      %4705 = vmatmul.bf16.gmra.mxu0 %v4169
      %v4706 = vpop.f32.mrf.mxu0
      %v4707 = vadd.f32 %v4618, %v4706
      %v4708 = vpop.f32.mrf.mxu0
      %v4709 = vadd.f32 %v4620, %v4708
      %4710 = vmatmul.bf16.gmra.mxu0 %v4172
      %v4711 = vpop.f32.mrf.mxu0
      %v4712 = vadd.f32 %v4623, %v4711
      %v4713 = vpop.f32.mrf.mxu0
      %v4714 = vadd.f32 %v4625, %v4713
      %4715 = vmatmul.bf16.gmra.mxu0 %v4175
      %v4716 = vpop.f32.mrf.mxu0
      %v4717 = vadd.f32 %v4628, %v4716
      %v4718 = vpop.f32.mrf.mxu0
      %v4719 = vadd.f32 %v4630, %v4718
      %4720 = vmatmul.bf16.gmra.mxu0 %v4178
      %v4721 = vpop.f32.mrf.mxu0
      %v4722 = vadd.f32 %v4633, %v4721
      %v4723 = vpop.f32.mrf.mxu0
      %v4724 = vadd.f32 %v4635, %v4723
      %4725 = vmatmul.bf16.gmra.mxu0 %v4181
      %v4726 = vpop.f32.mrf.mxu0
      %v4727 = vadd.f32 %v4638, %v4726
      %v4728 = vpop.f32.mrf.mxu0
      %v4729 = vadd.f32 %v4640, %v4728
      %4730 = vmatmul.bf16.gmra.mxu0 %v4184
      %v4731 = vpop.f32.mrf.mxu0
      %v4732 = vadd.f32 %v4643, %v4731
      %v4733 = vpop.f32.mrf.mxu0
      %v4734 = vadd.f32 %v4645, %v4733
      %4735 = vmatmul.bf16.gmra.mxu0 %v4187
      %v4736 = vpop.f32.mrf.mxu0
      %v4737 = vadd.f32 %v4648, %v4736
      %v4738 = vpop.f32.mrf.mxu0
      %v4739 = vadd.f32 %v4650, %v4738
      %4740 = vmatmul.bf16.gmra.mxu0 %v4190
      %v4741 = vpop.f32.mrf.mxu0
      %v4742 = vadd.f32 %v4653, %v4741
      %v4743 = vpop.f32.mrf.mxu0
      %v4744 = vadd.f32 %v4655, %v4743
      %4745 = vmatmul.bf16.gmra.mxu0 %v4193
      %v4746 = vpop.f32.mrf.mxu0
      %v4747 = vadd.f32 %v4658, %v4746
      %v4748 = vpop.f32.mrf.mxu0
      %v4749 = vadd.f32 %v4660, %v4748
      %4750 = vmatmul.bf16.gmra.mxu0 %v4196
      %v4751 = vpop.f32.mrf.mxu0
      %v4752 = vadd.f32 %v4663, %v4751
      %v4753 = vpop.f32.mrf.mxu0
      %v4754 = vadd.f32 %v4665, %v4753
      %4755 = vmatmul.bf16.gmra.mxu0 %v4199
      %v4756 = vpop.f32.mrf.mxu0
      %v4757 = vadd.f32 %v4668, %v4756
      %v4758 = vpop.f32.mrf.mxu0
      %v4759 = vadd.f32 %v4670, %v4758
      %4760 = vdwg.mxu0
      %4761 = vmatpush.bf16.msra.mxu0 %v4413
      %4762 = vmatpush.bf16.msra.mxu0 %v4411
      %4763 = vmatpush.bf16.msra.mxu0 %v4409
      %4764 = vmatpush.bf16.msra.mxu0 %v4407
      %4765 = vmatpush.bf16.msra.mxu0 %v4405
      %4766 = vmatpush.bf16.msra.mxu0 %v4403
      %4767 = vmatpush.bf16.msra.mxu0 %v4401
      %4768 = vmatpush.bf16.msra.mxu0 %v4399
      %4769 = vmatmul.bf16.gmra.mxu0 %v4152
      %v4770 = vpop.f32.mrf.mxu0
      %v4771 = vadd.f32 %v4251, %v4770
      %v4772 = vpop.f32.mrf.mxu0
      %v4773 = vadd.f32 %v4251, %v4772
      %4774 = vmatmul.bf16.gmra.mxu0 %v4155
      %v4775 = vpop.f32.mrf.mxu0
      %v4776 = vadd.f32 %v4251, %v4775
      %v4777 = vpop.f32.mrf.mxu0
      %v4778 = vadd.f32 %v4251, %v4777
      %4779 = vmatmul.bf16.gmra.mxu0 %v4158
      %v4780 = vpop.f32.mrf.mxu0
      %v4781 = vadd.f32 %v4251, %v4780
      %v4782 = vpop.f32.mrf.mxu0
      %v4783 = vadd.f32 %v4251, %v4782
      %4784 = vmatmul.bf16.gmra.mxu0 %v4161
      %v4785 = vpop.f32.mrf.mxu0
      %v4786 = vadd.f32 %v4251, %v4785
      %v4787 = vpop.f32.mrf.mxu0
      %v4788 = vadd.f32 %v4251, %v4787
      %4789 = vmatmul.bf16.gmra.mxu0 %v4164
      %v4790 = vpop.f32.mrf.mxu0
      %v4791 = vadd.f32 %v4251, %v4790
      %v4792 = vpop.f32.mrf.mxu0
      %v4793 = vadd.f32 %v4251, %v4792
      %4794 = vmatmul.bf16.gmra.mxu0 %v4167
      %v4795 = vpop.f32.mrf.mxu0
      %v4796 = vadd.f32 %v4251, %v4795
      %v4797 = vpop.f32.mrf.mxu0
      %v4798 = vadd.f32 %v4251, %v4797
      %4799 = vmatmul.bf16.gmra.mxu0 %v4170
      %v4800 = vpop.f32.mrf.mxu0
      %v4801 = vadd.f32 %v4251, %v4800
      %v4802 = vpop.f32.mrf.mxu0
      %v4803 = vadd.f32 %v4251, %v4802
      %4804 = vmatmul.bf16.gmra.mxu0 %v4173
      %v4805 = vpop.f32.mrf.mxu0
      %v4806 = vadd.f32 %v4251, %v4805
      %v4807 = vpop.f32.mrf.mxu0
      %v4808 = vadd.f32 %v4251, %v4807
      %4809 = vmatmul.bf16.gmra.mxu0 %v4176
      %v4810 = vpop.f32.mrf.mxu0
      %v4811 = vadd.f32 %v4251, %v4810
      %v4812 = vpop.f32.mrf.mxu0
      %v4813 = vadd.f32 %v4251, %v4812
      %4814 = vmatmul.bf16.gmra.mxu0 %v4179
      %v4815 = vpop.f32.mrf.mxu0
      %v4816 = vadd.f32 %v4251, %v4815
      %v4817 = vpop.f32.mrf.mxu0
      %v4818 = vadd.f32 %v4251, %v4817
      %4819 = vmatmul.bf16.gmra.mxu0 %v4182
      %v4820 = vpop.f32.mrf.mxu0
      %v4821 = vadd.f32 %v4251, %v4820
      %v4822 = vpop.f32.mrf.mxu0
      %v4823 = vadd.f32 %v4251, %v4822
      %4824 = vmatmul.bf16.gmra.mxu0 %v4185
      %v4825 = vpop.f32.mrf.mxu0
      %v4826 = vadd.f32 %v4251, %v4825
      %v4827 = vpop.f32.mrf.mxu0
      %v4828 = vadd.f32 %v4251, %v4827
      %4829 = vmatmul.bf16.gmra.mxu0 %v4188
      %v4830 = vpop.f32.mrf.mxu0
      %v4831 = vadd.f32 %v4251, %v4830
      %v4832 = vpop.f32.mrf.mxu0
      %v4833 = vadd.f32 %v4251, %v4832
      %4834 = vmatmul.bf16.gmra.mxu0 %v4191
      %v4835 = vpop.f32.mrf.mxu0
      %v4836 = vadd.f32 %v4251, %v4835
      %v4837 = vpop.f32.mrf.mxu0
      %v4838 = vadd.f32 %v4251, %v4837
      %4839 = vmatmul.bf16.gmra.mxu0 %v4194
      %v4840 = vpop.f32.mrf.mxu0
      %v4841 = vadd.f32 %v4251, %v4840
      %v4842 = vpop.f32.mrf.mxu0
      %v4843 = vadd.f32 %v4251, %v4842
      %4844 = vmatmul.bf16.gmra.mxu0 %v4197
      %v4845 = vpop.f32.mrf.mxu0
      %v4846 = vadd.f32 %v4251, %v4845
      %v4847 = vpop.f32.mrf.mxu0
      %v4848 = vadd.f32 %v4251, %v4847
      %4849 = vdwg.mxu0
      %4850 = vmatpush.bf16.msra.mxu0 %v4429
      %4851 = vmatpush.bf16.msra.mxu0 %v4427
      %4852 = vmatpush.bf16.msra.mxu0 %v4425
      %4853 = vmatpush.bf16.msra.mxu0 %v4423
      %4854 = vmatpush.bf16.msra.mxu0 %v4421
      %4855 = vmatpush.bf16.msra.mxu0 %v4419
      %4856 = vmatpush.bf16.msra.mxu0 %v4417
      %4857 = vmatpush.bf16.msra.mxu0 %v4415
      %4858 = vmatmul.bf16.gmra.mxu0 %v4153
      %v4859 = vpop.f32.mrf.mxu0
      %v4860 = vadd.f32 %v4771, %v4859
      %v4861 = vpop.f32.mrf.mxu0
      %v4862 = vadd.f32 %v4773, %v4861
      %4863 = vmatmul.bf16.gmra.mxu0 %v4156
      %v4864 = vpop.f32.mrf.mxu0
      %v4865 = vadd.f32 %v4776, %v4864
      %v4866 = vpop.f32.mrf.mxu0
      %v4867 = vadd.f32 %v4778, %v4866
      %4868 = vmatmul.bf16.gmra.mxu0 %v4159
      %v4869 = vpop.f32.mrf.mxu0
      %v4870 = vadd.f32 %v4781, %v4869
      %v4871 = vpop.f32.mrf.mxu0
      %v4872 = vadd.f32 %v4783, %v4871
      %4873 = vmatmul.bf16.gmra.mxu0 %v4162
      %v4874 = vpop.f32.mrf.mxu0
      %v4875 = vadd.f32 %v4786, %v4874
      %v4876 = vpop.f32.mrf.mxu0
      %v4877 = vadd.f32 %v4788, %v4876
      %4878 = vmatmul.bf16.gmra.mxu0 %v4165
      %v4879 = vpop.f32.mrf.mxu0
      %v4880 = vadd.f32 %v4791, %v4879
      %v4881 = vpop.f32.mrf.mxu0
      %v4882 = vadd.f32 %v4793, %v4881
      %4883 = vmatmul.bf16.gmra.mxu0 %v4168
      %v4884 = vpop.f32.mrf.mxu0
      %v4885 = vadd.f32 %v4796, %v4884
      %v4886 = vpop.f32.mrf.mxu0
      %v4887 = vadd.f32 %v4798, %v4886
      %4888 = vmatmul.bf16.gmra.mxu0 %v4171
      %v4889 = vpop.f32.mrf.mxu0
      %v4890 = vadd.f32 %v4801, %v4889
      %v4891 = vpop.f32.mrf.mxu0
      %v4892 = vadd.f32 %v4803, %v4891
      %4893 = vmatmul.bf16.gmra.mxu0 %v4174
      %v4894 = vpop.f32.mrf.mxu0
      %v4895 = vadd.f32 %v4806, %v4894
      %v4896 = vpop.f32.mrf.mxu0
      %v4897 = vadd.f32 %v4808, %v4896
      %4898 = vmatmul.bf16.gmra.mxu0 %v4177
      %v4899 = vpop.f32.mrf.mxu0
      %v4900 = vadd.f32 %v4811, %v4899
      %v4901 = vpop.f32.mrf.mxu0
      %v4902 = vadd.f32 %v4813, %v4901
      %4903 = vmatmul.bf16.gmra.mxu0 %v4180
      %v4904 = vpop.f32.mrf.mxu0
      %v4905 = vadd.f32 %v4816, %v4904
      %v4906 = vpop.f32.mrf.mxu0
      %v4907 = vadd.f32 %v4818, %v4906
      %4908 = vmatmul.bf16.gmra.mxu0 %v4183
      %v4909 = vpop.f32.mrf.mxu0
      %v4910 = vadd.f32 %v4821, %v4909
      %v4911 = vpop.f32.mrf.mxu0
      %v4912 = vadd.f32 %v4823, %v4911
      %4913 = vmatmul.bf16.gmra.mxu0 %v4186
      %v4914 = vpop.f32.mrf.mxu0
      %v4915 = vadd.f32 %v4826, %v4914
      %v4916 = vpop.f32.mrf.mxu0
      %v4917 = vadd.f32 %v4828, %v4916
      %4918 = vmatmul.bf16.gmra.mxu0 %v4189
      %v4919 = vpop.f32.mrf.mxu0
      %v4920 = vadd.f32 %v4831, %v4919
      %v4921 = vpop.f32.mrf.mxu0
      %v4922 = vadd.f32 %v4833, %v4921
      %4923 = vmatmul.bf16.gmra.mxu0 %v4192
      %v4924 = vpop.f32.mrf.mxu0
      %v4925 = vadd.f32 %v4836, %v4924
      %v4926 = vpop.f32.mrf.mxu0
      %v4927 = vadd.f32 %v4838, %v4926
      %4928 = vmatmul.bf16.gmra.mxu0 %v4195
      %v4929 = vpop.f32.mrf.mxu0
      %v4930 = vadd.f32 %v4841, %v4929
      %v4931 = vpop.f32.mrf.mxu0
      %v4932 = vadd.f32 %v4843, %v4931
      %4933 = vmatmul.bf16.gmra.mxu0 %v4198
      %v4934 = vpop.f32.mrf.mxu0
      %v4935 = vadd.f32 %v4846, %v4934
      %v4936 = vpop.f32.mrf.mxu0
      %v4937 = vadd.f32 %v4848, %v4936
      %4938 = vdwg.mxu0
      %4939 = vmatpush.bf16.msra.mxu0 %v4445
      %4940 = vmatpush.bf16.msra.mxu0 %v4443
      %4941 = vmatpush.bf16.msra.mxu0 %v4441
      %4942 = vmatpush.bf16.msra.mxu0 %v4439
      %4943 = vmatpush.bf16.msra.mxu0 %v4437
      %4944 = vmatpush.bf16.msra.mxu0 %v4435
      %4945 = vmatpush.bf16.msra.mxu0 %v4433
      %4946 = vmatpush.bf16.msra.mxu0 %v4431
      %4947 = vmatmul.bf16.gmra.mxu0 %v4154
      %v4948 = vpop.f32.mrf.mxu0
      %v4949 = vadd.f32 %v4860, %v4948
      %v4950 = vpop.f32.mrf.mxu0
      %v4951 = vadd.f32 %v4862, %v4950
      %4952 = vmatmul.bf16.gmra.mxu0 %v4157
      %v4953 = vpop.f32.mrf.mxu0
      %v4954 = vadd.f32 %v4865, %v4953
      %v4955 = vpop.f32.mrf.mxu0
      %v4956 = vadd.f32 %v4867, %v4955
      %4957 = vmatmul.bf16.gmra.mxu0 %v4160
      %v4958 = vpop.f32.mrf.mxu0
      %v4959 = vadd.f32 %v4870, %v4958
      %v4960 = vpop.f32.mrf.mxu0
      %v4961 = vadd.f32 %v4872, %v4960
      %4962 = vmatmul.bf16.gmra.mxu0 %v4163
      %v4963 = vpop.f32.mrf.mxu0
      %v4964 = vadd.f32 %v4875, %v4963
      %v4965 = vpop.f32.mrf.mxu0
      %v4966 = vadd.f32 %v4877, %v4965
      %4967 = vmatmul.bf16.gmra.mxu0 %v4166
      %v4968 = vpop.f32.mrf.mxu0
      %v4969 = vadd.f32 %v4880, %v4968
      %v4970 = vpop.f32.mrf.mxu0
      %v4971 = vadd.f32 %v4882, %v4970
      %4972 = vmatmul.bf16.gmra.mxu0 %v4169
      %v4973 = vpop.f32.mrf.mxu0
      %v4974 = vadd.f32 %v4885, %v4973
      %v4975 = vpop.f32.mrf.mxu0
      %v4976 = vadd.f32 %v4887, %v4975
      %4977 = vmatmul.bf16.gmra.mxu0 %v4172
      %v4978 = vpop.f32.mrf.mxu0
      %v4979 = vadd.f32 %v4890, %v4978
      %v4980 = vpop.f32.mrf.mxu0
      %v4981 = vadd.f32 %v4892, %v4980
      %4982 = vmatmul.bf16.gmra.mxu0 %v4175
      %v4983 = vpop.f32.mrf.mxu0
      %v4984 = vadd.f32 %v4895, %v4983
      %v4985 = vpop.f32.mrf.mxu0
      %v4986 = vadd.f32 %v4897, %v4985
      %4987 = vmatmul.bf16.gmra.mxu0 %v4178
      %v4988 = vpop.f32.mrf.mxu0
      %v4989 = vadd.f32 %v4900, %v4988
      %v4990 = vpop.f32.mrf.mxu0
      %v4991 = vadd.f32 %v4902, %v4990
      %4992 = vmatmul.bf16.gmra.mxu0 %v4181
      %v4993 = vpop.f32.mrf.mxu0
      %v4994 = vadd.f32 %v4905, %v4993
      %v4995 = vpop.f32.mrf.mxu0
      %v4996 = vadd.f32 %v4907, %v4995
      %4997 = vmatmul.bf16.gmra.mxu0 %v4184
      %v4998 = vpop.f32.mrf.mxu0
      %v4999 = vadd.f32 %v4910, %v4998
      %v5000 = vpop.f32.mrf.mxu0
      %v5001 = vadd.f32 %v4912, %v5000
      %5002 = vmatmul.bf16.gmra.mxu0 %v4187
      %v5003 = vpop.f32.mrf.mxu0
      %v5004 = vadd.f32 %v4915, %v5003
      %v5005 = vpop.f32.mrf.mxu0
      %v5006 = vadd.f32 %v4917, %v5005
      %5007 = vmatmul.bf16.gmra.mxu0 %v4190
      %v5008 = vpop.f32.mrf.mxu0
      %v5009 = vadd.f32 %v4920, %v5008
      %v5010 = vpop.f32.mrf.mxu0
      %v5011 = vadd.f32 %v4922, %v5010
      %5012 = vmatmul.bf16.gmra.mxu0 %v4193
      %v5013 = vpop.f32.mrf.mxu0
      %v5014 = vadd.f32 %v4925, %v5013
      %v5015 = vpop.f32.mrf.mxu0
      %v5016 = vadd.f32 %v4927, %v5015
      %5017 = vmatmul.bf16.gmra.mxu0 %v4196
      %v5018 = vpop.f32.mrf.mxu0
      %v5019 = vadd.f32 %v4930, %v5018
      %v5020 = vpop.f32.mrf.mxu0
      %v5021 = vadd.f32 %v4932, %v5020
      %5022 = vmatmul.bf16.gmra.mxu0 %v4199
      %v5023 = vpop.f32.mrf.mxu0
      %v5024 = vadd.f32 %v4935, %v5023
      %v5025 = vpop.f32.mrf.mxu0
      %v5026 = vadd.f32 %v4937, %v5025
      %5027 = vdwg.mxu0
      %v5028 = vmax.f32 %v4682, 0.0
      %v5029 = vmax.f32 %v4949, 0.0
      %v5030 = vmax.f32 %v4684, 0.0
      %v5031 = vmax.f32 %v4951, 0.0
      %v5032 = vmax.f32 %v4687, 0.0
      %v5033 = vmax.f32 %v4954, 0.0
      %v5034 = vmax.f32 %v4689, 0.0
      %v5035 = vmax.f32 %v4956, 0.0
      %v5036 = vmax.f32 %v4692, 0.0
      %v5037 = vmax.f32 %v4959, 0.0
      %v5038 = vmax.f32 %v4694, 0.0
      %v5039 = vmax.f32 %v4961, 0.0
      %v5040 = vmax.f32 %v4697, 0.0
      %v5041 = vmax.f32 %v4964, 0.0
      %v5042 = vmax.f32 %v4699, 0.0
      %v5043 = vmax.f32 %v4966, 0.0
      %v5044 = vmax.f32 %v4702, 0.0
      %v5045 = vmax.f32 %v4969, 0.0
      %v5046 = vmax.f32 %v4704, 0.0
      %v5047 = vmax.f32 %v4971, 0.0
      %v5048 = vmax.f32 %v4707, 0.0
      %v5049 = vmax.f32 %v4974, 0.0
      %v5050 = vmax.f32 %v4709, 0.0
      %v5051 = vmax.f32 %v4976, 0.0
      %v5052 = vmax.f32 %v4712, 0.0
      %v5053 = vmax.f32 %v4979, 0.0
      %v5054 = vmax.f32 %v4714, 0.0
      %v5055 = vmax.f32 %v4981, 0.0
      %v5056 = vmax.f32 %v4717, 0.0
      %v5057 = vmax.f32 %v4984, 0.0
      %v5058 = vmax.f32 %v4719, 0.0
      %v5059 = vmax.f32 %v4986, 0.0
      %v5060 = vmax.f32 %v4722, 0.0
      %v5061 = vmax.f32 %v4989, 0.0
      %v5062 = vmax.f32 %v4724, 0.0
      %v5063 = vmax.f32 %v4991, 0.0
      %v5064 = vmax.f32 %v4727, 0.0
      %v5065 = vmax.f32 %v4994, 0.0
      %v5066 = vmax.f32 %v4729, 0.0
      %v5067 = vmax.f32 %v4996, 0.0
      %v5068 = vmax.f32 %v4732, 0.0
      %v5069 = vmax.f32 %v4999, 0.0
      %v5070 = vmax.f32 %v4734, 0.0
      %v5071 = vmax.f32 %v5001, 0.0
      %v5072 = vmax.f32 %v4737, 0.0
      %v5073 = vmax.f32 %v5004, 0.0
      %v5074 = vmax.f32 %v4739, 0.0
      %v5075 = vmax.f32 %v5006, 0.0
      %v5076 = vmax.f32 %v4742, 0.0
      %v5077 = vmax.f32 %v5009, 0.0
      %v5078 = vmax.f32 %v4744, 0.0
      %v5079 = vmax.f32 %v5011, 0.0
      %v5080 = vmax.f32 %v4747, 0.0
      %v5081 = vmax.f32 %v5014, 0.0
      %v5082 = vmax.f32 %v4749, 0.0
      %v5083 = vmax.f32 %v5016, 0.0
      %v5084 = vmax.f32 %v4752, 0.0
      %v5085 = vmax.f32 %v5019, 0.0
      %v5086 = vmax.f32 %v4754, 0.0
      %v5087 = vmax.f32 %v5021, 0.0
      %v5088 = vmax.f32 %v4757, 0.0
      %v5089 = vmax.f32 %v5024, 0.0
      %v5090 = vmax.f32 %v4759, 0.0
      %v5091 = vmax.f32 %v5026, 0.0
      %v5092 = vpack.c.bf16 %v5030, %v5028
      %v5093 = vpack.c.bf16 %v5031, %v5029
      %v5094 = vpack.c.bf16 %v5034, %v5032
      %v5095 = vpack.c.bf16 %v5035, %v5033
      %v5096 = vpack.c.bf16 %v5038, %v5036
      %v5097 = vpack.c.bf16 %v5039, %v5037
      %v5098 = vpack.c.bf16 %v5042, %v5040
      %v5099 = vpack.c.bf16 %v5043, %v5041
      %v5100 = vpack.c.bf16 %v5046, %v5044
      %v5101 = vpack.c.bf16 %v5047, %v5045
      %v5102 = vpack.c.bf16 %v5050, %v5048
      %v5103 = vpack.c.bf16 %v5051, %v5049
      %v5104 = vpack.c.bf16 %v5054, %v5052
      %v5105 = vpack.c.bf16 %v5055, %v5053
      %v5106 = vpack.c.bf16 %v5058, %v5056
      %v5107 = vpack.c.bf16 %v5059, %v5057
      %v5108 = vpack.c.bf16 %v5062, %v5060
      %v5109 = vpack.c.bf16 %v5063, %v5061
      %v5110 = vpack.c.bf16 %v5066, %v5064
      %v5111 = vpack.c.bf16 %v5067, %v5065
      %v5112 = vpack.c.bf16 %v5070, %v5068
      %v5113 = vpack.c.bf16 %v5071, %v5069
      %v5114 = vpack.c.bf16 %v5074, %v5072
      %v5115 = vpack.c.bf16 %v5075, %v5073
      %v5116 = vpack.c.bf16 %v5078, %v5076
      %v5117 = vpack.c.bf16 %v5079, %v5077
      %v5118 = vpack.c.bf16 %v5082, %v5080
      %v5119 = vpack.c.bf16 %v5083, %v5081
      %v5120 = vpack.c.bf16 %v5086, %v5084
      %v5121 = vpack.c.bf16 %v5087, %v5085
      %v5122 = vpack.c.bf16 %v5090, %v5088
      %v5123 = vpack.c.bf16 %v5091, %v5089
      %v5124 = vld [vmem:[#allocation9 + $0x840] sm:$0xf]
      %v5125 = vld [vmem:[#allocation9 + $0x84c] sm:$0xf]
      %v5126 = vld [vmem:[#allocation9 + $0x858] sm:$0xf]
      %v5127 = vld [vmem:[#allocation9 + $0x864] sm:$0xf]
      %v5128 = vld [vmem:[#allocation9 + $0x870] sm:$0xf]
      %v5129 = vld [vmem:[#allocation9 + $0x87c] sm:$0xf]
      %v5130 = vld [vmem:[#allocation9 + $0x888] sm:$0xf]
      %v5131 = vld [vmem:[#allocation9 + $0x894] sm:$0xf]
      %v5132 = vld [vmem:[#allocation9 + $0x8a0] sm:$0xf]
      %v5133 = vld [vmem:[#allocation9 + $0x8ac] sm:$0xf]
      %v5134 = vld [vmem:[#allocation9 + $0x8b8] sm:$0xf]
      %v5135 = vld [vmem:[#allocation9 + $0x8c4] sm:$0xf]
      %v5136 = vld [vmem:[#allocation9 + $0x8d0] sm:$0xf]
      %v5137 = vld [vmem:[#allocation9 + $0x8dc] sm:$0xf]
      %v5138 = vld [vmem:[#allocation9 + $0x8e8] sm:$0xf]
      %v5139 = vld [vmem:[#allocation9 + $0x8f4] sm:$0xf]
      %v5140 = vld [vmem:[#allocation9 + $0x900] sm:$0xf]
      %v5141 = vld [vmem:[#allocation9 + $0x90c] sm:$0xf]
      %v5142 = vld [vmem:[#allocation9 + $0x918] sm:$0xf]
      %v5143 = vld [vmem:[#allocation9 + $0x924] sm:$0xf]
      %v5144 = vld [vmem:[#allocation9 + $0x930] sm:$0xf]
      %v5145 = vld [vmem:[#allocation9 + $0x93c] sm:$0xf]
      %v5146 = vld [vmem:[#allocation9 + $0x948] sm:$0xf]
      %v5147 = vld [vmem:[#allocation9 + $0x954] sm:$0xf]
      %v5148 = vld [vmem:[#allocation9 + $0x960] sm:$0xf]
      %v5149 = vld [vmem:[#allocation9 + $0x96c] sm:$0xf]
      %v5150 = vld [vmem:[#allocation9 + $0x978] sm:$0xf]
      %v5151 = vld [vmem:[#allocation9 + $0x984] sm:$0xf]
      %v5152 = vld [vmem:[#allocation9 + $0x990] sm:$0xf]
      %v5153 = vld [vmem:[#allocation9 + $0x99c] sm:$0xf]
      %v5154 = vld [vmem:[#allocation9 + $0x9a8] sm:$0xf]
      %v5155 = vld [vmem:[#allocation9 + $0x9b4] sm:$0xf]
      %v5156 = vld [vmem:[#allocation11 + $0xc] sm:$0x1]
      %v5158 = vperm.slane %v5156, 0
      %v5192 = vunpack.c.l.b16 %v5124
      %v5193 = vunpack.c.l.b16 %v5125
      %v5194 = vunpack.c.l.b16 %v5126
      %v5195 = vunpack.c.l.b16 %v5127
      %v5196 = vunpack.c.l.b16 %v5128
      %v5197 = vunpack.c.l.b16 %v5129
      %v5198 = vunpack.c.l.b16 %v5130
      %v5199 = vunpack.c.l.b16 %v5131
      %v5200 = vunpack.c.l.b16 %v5132
      %v5201 = vunpack.c.l.b16 %v5133
      %v5202 = vunpack.c.l.b16 %v5134
      %v5203 = vunpack.c.l.b16 %v5135
      %v5204 = vunpack.c.l.b16 %v5136
      %v5205 = vunpack.c.l.b16 %v5137
      %v5206 = vunpack.c.l.b16 %v5138
      %v5207 = vunpack.c.l.b16 %v5139
      %v5208 = vunpack.c.l.b16 %v5140
      %v5209 = vunpack.c.l.b16 %v5141
      %v5210 = vunpack.c.l.b16 %v5142
      %v5211 = vunpack.c.l.b16 %v5143
      %v5212 = vunpack.c.l.b16 %v5144
      %v5213 = vunpack.c.l.b16 %v5145
      %v5214 = vunpack.c.l.b16 %v5146
      %v5215 = vunpack.c.l.b16 %v5147
      %v5216 = vunpack.c.l.b16 %v5148
      %v5217 = vunpack.c.l.b16 %v5149
      %v5218 = vunpack.c.l.b16 %v5150
      %v5219 = vunpack.c.l.b16 %v5151
      %v5220 = vunpack.c.l.b16 %v5152
      %v5221 = vunpack.c.l.b16 %v5153
      %v5222 = vunpack.c.l.b16 %v5154
      %v5223 = vunpack.c.l.b16 %v5155
      %v5224 = vpack.c.b16 %v5193, %v5192
      %v5225 = vpack.c.b16 %v5195, %v5194
      %v5226 = vpack.c.b16 %v5197, %v5196
      %v5227 = vpack.c.b16 %v5199, %v5198
      %v5228 = vpack.c.b16 %v5201, %v5200
      %v5229 = vpack.c.b16 %v5203, %v5202
      %v5230 = vpack.c.b16 %v5205, %v5204
      %v5231 = vpack.c.b16 %v5207, %v5206
      %v5232 = vpack.c.b16 %v5209, %v5208
      %v5233 = vpack.c.b16 %v5211, %v5210
      %v5234 = vpack.c.b16 %v5213, %v5212
      %v5235 = vpack.c.b16 %v5215, %v5214
      %v5236 = vpack.c.b16 %v5217, %v5216
      %v5237 = vpack.c.b16 %v5219, %v5218
      %v5238 = vpack.c.b16 %v5221, %v5220
      %v5239 = vpack.c.b16 %v5223, %v5222
      %5256 = vmatpush.bf16.msra.mxu0 %v5231
      %5257 = vmatpush.bf16.msra.mxu0 %v5230
      %5258 = vmatpush.bf16.msra.mxu0 %v5229
      %5259 = vmatpush.bf16.msra.mxu0 %v5228
      %5260 = vmatpush.bf16.msra.mxu0 %v5227
      %5261 = vmatpush.bf16.msra.mxu0 %v5226
      %5262 = vmatpush.bf16.msra.mxu0 %v5225
      %5263 = vmatpush.bf16.msra.mxu0 %v5224
      %5264 = vmatmul.bf16.gmra.mxu0 %v5092
      %v5265 = vpop.f32.mrf.mxu0
      %v5266 = vadd.f32 %v5158, %v5265
      %v5267 = vpop.f32.mrf.mxu0
      %v5268 = vadd.f32 %v5158, %v5267
      %5269 = vmatmul.bf16.gmra.mxu0 %v5094
      %v5270 = vpop.f32.mrf.mxu0
      %v5271 = vadd.f32 %v5158, %v5270
      %v5272 = vpop.f32.mrf.mxu0
      %v5273 = vadd.f32 %v5158, %v5272
      %5274 = vmatmul.bf16.gmra.mxu0 %v5096
      %v5275 = vpop.f32.mrf.mxu0
      %v5276 = vadd.f32 %v5158, %v5275
      %v5277 = vpop.f32.mrf.mxu0
      %v5278 = vadd.f32 %v5158, %v5277
      %5279 = vmatmul.bf16.gmra.mxu0 %v5098
      %v5280 = vpop.f32.mrf.mxu0
      %v5281 = vadd.f32 %v5158, %v5280
      %v5282 = vpop.f32.mrf.mxu0
      %v5283 = vadd.f32 %v5158, %v5282
      %5284 = vmatmul.bf16.gmra.mxu0 %v5100
      %v5285 = vpop.f32.mrf.mxu0
      %v5286 = vadd.f32 %v5158, %v5285
      %v5287 = vpop.f32.mrf.mxu0
      %v5288 = vadd.f32 %v5158, %v5287
      %5289 = vmatmul.bf16.gmra.mxu0 %v5102
      %v5290 = vpop.f32.mrf.mxu0
      %v5291 = vadd.f32 %v5158, %v5290
      %v5292 = vpop.f32.mrf.mxu0
      %v5293 = vadd.f32 %v5158, %v5292
      %5294 = vmatmul.bf16.gmra.mxu0 %v5104
      %v5295 = vpop.f32.mrf.mxu0
      %v5296 = vadd.f32 %v5158, %v5295
      %v5297 = vpop.f32.mrf.mxu0
      %v5298 = vadd.f32 %v5158, %v5297
      %5299 = vmatmul.bf16.gmra.mxu0 %v5106
      %v5300 = vpop.f32.mrf.mxu0
      %v5301 = vadd.f32 %v5158, %v5300
      %v5302 = vpop.f32.mrf.mxu0
      %v5303 = vadd.f32 %v5158, %v5302
      %5304 = vmatmul.bf16.gmra.mxu0 %v5108
      %v5305 = vpop.f32.mrf.mxu0
      %v5306 = vadd.f32 %v5158, %v5305
      %v5307 = vpop.f32.mrf.mxu0
      %v5308 = vadd.f32 %v5158, %v5307
      %5309 = vmatmul.bf16.gmra.mxu0 %v5110
      %v5310 = vpop.f32.mrf.mxu0
      %v5311 = vadd.f32 %v5158, %v5310
      %v5312 = vpop.f32.mrf.mxu0
      %v5313 = vadd.f32 %v5158, %v5312
      %5314 = vmatmul.bf16.gmra.mxu0 %v5112
      %v5315 = vpop.f32.mrf.mxu0
      %v5316 = vadd.f32 %v5158, %v5315
      %v5317 = vpop.f32.mrf.mxu0
      %v5318 = vadd.f32 %v5158, %v5317
      %5319 = vmatmul.bf16.gmra.mxu0 %v5114
      %v5320 = vpop.f32.mrf.mxu0
      %v5321 = vadd.f32 %v5158, %v5320
      %v5322 = vpop.f32.mrf.mxu0
      %v5323 = vadd.f32 %v5158, %v5322
      %5324 = vmatmul.bf16.gmra.mxu0 %v5116
      %v5325 = vpop.f32.mrf.mxu0
      %v5326 = vadd.f32 %v5158, %v5325
      %v5327 = vpop.f32.mrf.mxu0
      %v5328 = vadd.f32 %v5158, %v5327
      %5329 = vmatmul.bf16.gmra.mxu0 %v5118
      %v5330 = vpop.f32.mrf.mxu0
      %v5331 = vadd.f32 %v5158, %v5330
      %v5332 = vpop.f32.mrf.mxu0
      %v5333 = vadd.f32 %v5158, %v5332
      %5334 = vmatmul.bf16.gmra.mxu0 %v5120
      %v5335 = vpop.f32.mrf.mxu0
      %v5336 = vadd.f32 %v5158, %v5335
      %v5337 = vpop.f32.mrf.mxu0
      %v5338 = vadd.f32 %v5158, %v5337
      %5339 = vmatmul.bf16.gmra.mxu0 %v5122
      %v5340 = vpop.f32.mrf.mxu0
      %v5341 = vadd.f32 %v5158, %v5340
      %v5342 = vpop.f32.mrf.mxu0
      %v5343 = vadd.f32 %v5158, %v5342
      %5344 = vdwg.mxu0
      %5345 = vmatpush.bf16.msra.mxu0 %v5239
      %5346 = vmatpush.bf16.msra.mxu0 %v5238
      %5347 = vmatpush.bf16.msra.mxu0 %v5237
      %5348 = vmatpush.bf16.msra.mxu0 %v5236
      %5349 = vmatpush.bf16.msra.mxu0 %v5235
      %5350 = vmatpush.bf16.msra.mxu0 %v5234
      %5351 = vmatpush.bf16.msra.mxu0 %v5233
      %5352 = vmatpush.bf16.msra.mxu0 %v5232
      %5353 = vmatmul.bf16.gmra.mxu0 %v5093
      %v5354 = vpop.f32.mrf.mxu0
      %v5355 = vadd.f32 %v5266, %v5354
      %v5356 = vpop.f32.mrf.mxu0
      %v5357 = vadd.f32 %v5268, %v5356
      %5358 = vmatmul.bf16.gmra.mxu0 %v5095
      %v5359 = vpop.f32.mrf.mxu0
      %v5360 = vadd.f32 %v5271, %v5359
      %v5361 = vpop.f32.mrf.mxu0
      %v5362 = vadd.f32 %v5273, %v5361
      %5363 = vmatmul.bf16.gmra.mxu0 %v5097
      %v5364 = vpop.f32.mrf.mxu0
      %v5365 = vadd.f32 %v5276, %v5364
      %v5366 = vpop.f32.mrf.mxu0
      %v5367 = vadd.f32 %v5278, %v5366
      %5368 = vmatmul.bf16.gmra.mxu0 %v5099
      %v5369 = vpop.f32.mrf.mxu0
      %v5370 = vadd.f32 %v5281, %v5369
      %v5371 = vpop.f32.mrf.mxu0
      %v5372 = vadd.f32 %v5283, %v5371
      %5373 = vmatmul.bf16.gmra.mxu0 %v5101
      %v5374 = vpop.f32.mrf.mxu0
      %v5375 = vadd.f32 %v5286, %v5374
      %v5376 = vpop.f32.mrf.mxu0
      %v5377 = vadd.f32 %v5288, %v5376
      %5378 = vmatmul.bf16.gmra.mxu0 %v5103
      %v5379 = vpop.f32.mrf.mxu0
      %v5380 = vadd.f32 %v5291, %v5379
      %v5381 = vpop.f32.mrf.mxu0
      %v5382 = vadd.f32 %v5293, %v5381
      %5383 = vmatmul.bf16.gmra.mxu0 %v5105
      %v5384 = vpop.f32.mrf.mxu0
      %v5385 = vadd.f32 %v5296, %v5384
      %v5386 = vpop.f32.mrf.mxu0
      %v5387 = vadd.f32 %v5298, %v5386
      %5388 = vmatmul.bf16.gmra.mxu0 %v5107
      %v5389 = vpop.f32.mrf.mxu0
      %v5390 = vadd.f32 %v5301, %v5389
      %v5391 = vpop.f32.mrf.mxu0
      %v5392 = vadd.f32 %v5303, %v5391
      %5393 = vmatmul.bf16.gmra.mxu0 %v5109
      %v5394 = vpop.f32.mrf.mxu0
      %v5395 = vadd.f32 %v5306, %v5394
      %v5396 = vpop.f32.mrf.mxu0
      %v5397 = vadd.f32 %v5308, %v5396
      %5398 = vmatmul.bf16.gmra.mxu0 %v5111
      %v5399 = vpop.f32.mrf.mxu0
      %v5400 = vadd.f32 %v5311, %v5399
      %v5401 = vpop.f32.mrf.mxu0
      %v5402 = vadd.f32 %v5313, %v5401
      %5403 = vmatmul.bf16.gmra.mxu0 %v5113
      %v5404 = vpop.f32.mrf.mxu0
      %v5405 = vadd.f32 %v5316, %v5404
      %v5406 = vpop.f32.mrf.mxu0
      %v5407 = vadd.f32 %v5318, %v5406
      %5408 = vmatmul.bf16.gmra.mxu0 %v5115
      %v5409 = vpop.f32.mrf.mxu0
      %v5410 = vadd.f32 %v5321, %v5409
      %v5411 = vpop.f32.mrf.mxu0
      %v5412 = vadd.f32 %v5323, %v5411
      %5413 = vmatmul.bf16.gmra.mxu0 %v5117
      %v5414 = vpop.f32.mrf.mxu0
      %v5415 = vadd.f32 %v5326, %v5414
      %v5416 = vpop.f32.mrf.mxu0
      %v5417 = vadd.f32 %v5328, %v5416
      %5418 = vmatmul.bf16.gmra.mxu0 %v5119
      %v5419 = vpop.f32.mrf.mxu0
      %v5420 = vadd.f32 %v5331, %v5419
      %v5421 = vpop.f32.mrf.mxu0
      %v5422 = vadd.f32 %v5333, %v5421
      %5423 = vmatmul.bf16.gmra.mxu0 %v5121
      %v5424 = vpop.f32.mrf.mxu0
      %v5425 = vadd.f32 %v5336, %v5424
      %v5426 = vpop.f32.mrf.mxu0
      %v5427 = vadd.f32 %v5338, %v5426
      %5428 = vmatmul.bf16.gmra.mxu0 %v5123
      %v5429 = vpop.f32.mrf.mxu0
      %v5430 = vadd.f32 %v5341, %v5429
      %v5431 = vpop.f32.mrf.mxu0
      %v5432 = vadd.f32 %v5343, %v5431
      %5433 = vdwg.mxu0
      %v5434 = vmax.f32 %v5355, 0.0
      %v5435 = vmax.f32 %v5357, 0.0
      %v5436 = vmax.f32 %v5360, 0.0
      %v5437 = vmax.f32 %v5362, 0.0
      %v5438 = vmax.f32 %v5365, 0.0
      %v5439 = vmax.f32 %v5367, 0.0
      %v5440 = vmax.f32 %v5370, 0.0
      %v5441 = vmax.f32 %v5372, 0.0
      %v5442 = vmax.f32 %v5375, 0.0
      %v5443 = vmax.f32 %v5377, 0.0
      %v5444 = vmax.f32 %v5380, 0.0
      %v5445 = vmax.f32 %v5382, 0.0
      %v5446 = vmax.f32 %v5385, 0.0
      %v5447 = vmax.f32 %v5387, 0.0
      %v5448 = vmax.f32 %v5390, 0.0
      %v5449 = vmax.f32 %v5392, 0.0
      %v5450 = vmax.f32 %v5395, 0.0
      %v5451 = vmax.f32 %v5397, 0.0
      %v5452 = vmax.f32 %v5400, 0.0
      %v5453 = vmax.f32 %v5402, 0.0
      %v5454 = vmax.f32 %v5405, 0.0
      %v5455 = vmax.f32 %v5407, 0.0
      %v5456 = vmax.f32 %v5410, 0.0
      %v5457 = vmax.f32 %v5412, 0.0
      %v5458 = vmax.f32 %v5415, 0.0
      %v5459 = vmax.f32 %v5417, 0.0
      %v5460 = vmax.f32 %v5420, 0.0
      %v5461 = vmax.f32 %v5422, 0.0
      %v5462 = vmax.f32 %v5425, 0.0
      %v5463 = vmax.f32 %v5427, 0.0
      %v5464 = vmax.f32 %v5430, 0.0
      %v5465 = vmax.f32 %v5432, 0.0
      %v5466 = vpack.c.bf16 %v5435, %v5434
      %v5467 = vpack.c.bf16 %v5437, %v5436
      %v5468 = vpack.c.bf16 %v5439, %v5438
      %v5469 = vpack.c.bf16 %v5441, %v5440
      %v5470 = vpack.c.bf16 %v5443, %v5442
      %v5471 = vpack.c.bf16 %v5445, %v5444
      %v5472 = vpack.c.bf16 %v5447, %v5446
      %v5473 = vpack.c.bf16 %v5449, %v5448
      %v5474 = vpack.c.bf16 %v5451, %v5450
      %v5475 = vpack.c.bf16 %v5453, %v5452
      %v5476 = vpack.c.bf16 %v5455, %v5454
      %v5477 = vpack.c.bf16 %v5457, %v5456
      %v5478 = vpack.c.bf16 %v5459, %v5458
      %v5479 = vpack.c.bf16 %v5461, %v5460
      %v5480 = vpack.c.bf16 %v5463, %v5462
      %v5481 = vpack.c.bf16 %v5465, %v5464
      %v5482 = vld [vmem:[#allocation9 + $0x9c0] sm:$0xf]
      %v5483 = vld [vmem:[#allocation9 + $0x9cc] sm:$0xf]
      %v5484 = vld [vmem:[#allocation9 + $0x9d8] sm:$0xf]
      %v5485 = vld [vmem:[#allocation9 + $0x9e4] sm:$0xf]
      %v5486 = vld [vmem:[#allocation9 + $0x9f0] sm:$0xf]
      %v5487 = vld [vmem:[#allocation9 + $0x9fc] sm:$0xf]
      %v5488 = vld [vmem:[#allocation9 + $0xa08] sm:$0xf]
      %v5489 = vld [vmem:[#allocation9 + $0xa14] sm:$0xf]
      %v5490 = vld [vmem:[#allocation9 + $0xa20] sm:$0xf]
      %v5491 = vld [vmem:[#allocation9 + $0xa2c] sm:$0xf]
      %v5492 = vld [vmem:[#allocation9 + $0xa38] sm:$0xf]
      %v5493 = vld [vmem:[#allocation9 + $0xa44] sm:$0xf]
      %v5494 = vld [vmem:[#allocation9 + $0xa50] sm:$0xf]
      %v5495 = vld [vmem:[#allocation9 + $0xa5c] sm:$0xf]
      %v5496 = vld [vmem:[#allocation9 + $0xa68] sm:$0xf]
      %v5497 = vld [vmem:[#allocation9 + $0xa74] sm:$0xf]
      %v5498 = vld [vmem:[#allocation11 + $0xd] sm:$0x1]
      %v5500 = vperm.slane %v5498, 0
      %v5518 = vunpack.c.l.b16 %v5482
      %v5519 = vunpack.c.l.b16 %v5483
      %v5520 = vunpack.c.l.b16 %v5484
      %v5521 = vunpack.c.l.b16 %v5485
      %v5522 = vunpack.c.l.b16 %v5486
      %v5523 = vunpack.c.l.b16 %v5487
      %v5524 = vunpack.c.l.b16 %v5488
      %v5525 = vunpack.c.l.b16 %v5489
      %v5526 = vunpack.c.l.b16 %v5490
      %v5527 = vunpack.c.l.b16 %v5491
      %v5528 = vunpack.c.l.b16 %v5492
      %v5529 = vunpack.c.l.b16 %v5493
      %v5530 = vunpack.c.l.b16 %v5494
      %v5531 = vunpack.c.l.b16 %v5495
      %v5532 = vunpack.c.l.b16 %v5496
      %v5533 = vunpack.c.l.b16 %v5497
      %v5534 = vpack.c.b16 %v5519, %v5518
      %v5535 = vpack.c.b16 %v5521, %v5520
      %v5536 = vpack.c.b16 %v5523, %v5522
      %v5537 = vpack.c.b16 %v5525, %v5524
      %v5538 = vpack.c.b16 %v5527, %v5526
      %v5539 = vpack.c.b16 %v5529, %v5528
      %v5540 = vpack.c.b16 %v5531, %v5530
      %v5541 = vpack.c.b16 %v5533, %v5532
      %5550 = vmatpush.bf16.msra.mxu0 %v5541
      %5551 = vmatpush.bf16.msra.mxu0 %v5540
      %5552 = vmatpush.bf16.msra.mxu0 %v5539
      %5553 = vmatpush.bf16.msra.mxu0 %v5538
      %5554 = vmatpush.bf16.msra.mxu0 %v5537
      %5555 = vmatpush.bf16.msra.mxu0 %v5536
      %5556 = vmatpush.bf16.msra.mxu0 %v5535
      %5557 = vmatpush.bf16.msra.mxu0 %v5534
      %5558 = vmatmul.bf16.gmra.mxu0 %v5466
      %v5559 = vpop.f32.mrf.mxu0
      %v5560 = vadd.f32 %v5500, %v5559
      %v5561 = vpop.f32.mrf.mxu0
      %v5562 = vadd.f32 %v5500, %v5561
      %5563 = vmatmul.bf16.gmra.mxu0 %v5467
      %v5564 = vpop.f32.mrf.mxu0
      %v5565 = vadd.f32 %v5500, %v5564
      %v5566 = vpop.f32.mrf.mxu0
      %v5567 = vadd.f32 %v5500, %v5566
      %5568 = vmatmul.bf16.gmra.mxu0 %v5468
      %v5569 = vpop.f32.mrf.mxu0
      %v5570 = vadd.f32 %v5500, %v5569
      %v5571 = vpop.f32.mrf.mxu0
      %v5572 = vadd.f32 %v5500, %v5571
      %5573 = vmatmul.bf16.gmra.mxu0 %v5469
      %v5574 = vpop.f32.mrf.mxu0
      %v5575 = vadd.f32 %v5500, %v5574
      %v5576 = vpop.f32.mrf.mxu0
      %v5577 = vadd.f32 %v5500, %v5576
      %5578 = vmatmul.bf16.gmra.mxu0 %v5470
      %v5579 = vpop.f32.mrf.mxu0
      %v5580 = vadd.f32 %v5500, %v5579
      %v5581 = vpop.f32.mrf.mxu0
      %v5582 = vadd.f32 %v5500, %v5581
      %5583 = vmatmul.bf16.gmra.mxu0 %v5471
      %v5584 = vpop.f32.mrf.mxu0
      %v5585 = vadd.f32 %v5500, %v5584
      %v5586 = vpop.f32.mrf.mxu0
      %v5587 = vadd.f32 %v5500, %v5586
      %5588 = vmatmul.bf16.gmra.mxu0 %v5472
      %v5589 = vpop.f32.mrf.mxu0
      %v5590 = vadd.f32 %v5500, %v5589
      %v5591 = vpop.f32.mrf.mxu0
      %v5592 = vadd.f32 %v5500, %v5591
      %5593 = vmatmul.bf16.gmra.mxu0 %v5473
      %v5594 = vpop.f32.mrf.mxu0
      %v5595 = vadd.f32 %v5500, %v5594
      %v5596 = vpop.f32.mrf.mxu0
      %v5597 = vadd.f32 %v5500, %v5596
      %5598 = vmatmul.bf16.gmra.mxu0 %v5474
      %v5599 = vpop.f32.mrf.mxu0
      %v5600 = vadd.f32 %v5500, %v5599
      %v5601 = vpop.f32.mrf.mxu0
      %v5602 = vadd.f32 %v5500, %v5601
      %5603 = vmatmul.bf16.gmra.mxu0 %v5475
      %v5604 = vpop.f32.mrf.mxu0
      %v5605 = vadd.f32 %v5500, %v5604
      %v5606 = vpop.f32.mrf.mxu0
      %v5607 = vadd.f32 %v5500, %v5606
      %5608 = vmatmul.bf16.gmra.mxu0 %v5476
      %v5609 = vpop.f32.mrf.mxu0
      %v5610 = vadd.f32 %v5500, %v5609
      %v5611 = vpop.f32.mrf.mxu0
      %v5612 = vadd.f32 %v5500, %v5611
      %5613 = vmatmul.bf16.gmra.mxu0 %v5477
      %v5614 = vpop.f32.mrf.mxu0
      %v5615 = vadd.f32 %v5500, %v5614
      %v5616 = vpop.f32.mrf.mxu0
      %v5617 = vadd.f32 %v5500, %v5616
      %5618 = vmatmul.bf16.gmra.mxu0 %v5478
      %v5619 = vpop.f32.mrf.mxu0
      %v5620 = vadd.f32 %v5500, %v5619
      %v5621 = vpop.f32.mrf.mxu0
      %v5622 = vadd.f32 %v5500, %v5621
      %5623 = vmatmul.bf16.gmra.mxu0 %v5479
      %v5624 = vpop.f32.mrf.mxu0
      %v5625 = vadd.f32 %v5500, %v5624
      %v5626 = vpop.f32.mrf.mxu0
      %v5627 = vadd.f32 %v5500, %v5626
      %5628 = vmatmul.bf16.gmra.mxu0 %v5480
      %v5629 = vpop.f32.mrf.mxu0
      %v5630 = vadd.f32 %v5500, %v5629
      %v5631 = vpop.f32.mrf.mxu0
      %v5632 = vadd.f32 %v5500, %v5631
      %5633 = vmatmul.bf16.gmra.mxu0 %v5481
      %v5634 = vpop.f32.mrf.mxu0
      %v5635 = vadd.f32 %v5500, %v5634
      %v5636 = vpop.f32.mrf.mxu0
      %v5637 = vadd.f32 %v5500, %v5636
      %5638 = vdwg.mxu0
      %v5639 = vadd.f32 %v2641, %v5560
      %v5640 = vadd.f32 %v2643, %v5562
      %v5641 = vadd.f32 %v2646, %v5565
      %v5642 = vadd.f32 %v2648, %v5567
      %v5643 = vadd.f32 %v2651, %v5570
      %v5644 = vadd.f32 %v2653, %v5572
      %v5645 = vadd.f32 %v2656, %v5575
      %v5646 = vadd.f32 %v2658, %v5577
      %v5647 = vadd.f32 %v2661, %v5580
      %v5648 = vadd.f32 %v2663, %v5582
      %v5649 = vadd.f32 %v2666, %v5585
      %v5650 = vadd.f32 %v2668, %v5587
      %v5651 = vadd.f32 %v2671, %v5590
      %v5652 = vadd.f32 %v2673, %v5592
      %v5653 = vadd.f32 %v2676, %v5595
      %v5654 = vadd.f32 %v2678, %v5597
      %v5655 = vadd.f32 %v2681, %v5600
      %v5656 = vadd.f32 %v2683, %v5602
      %v5657 = vadd.f32 %v2686, %v5605
      %v5658 = vadd.f32 %v2688, %v5607
      %v5659 = vadd.f32 %v2691, %v5610
      %v5660 = vadd.f32 %v2693, %v5612
      %v5661 = vadd.f32 %v2696, %v5615
      %v5662 = vadd.f32 %v2698, %v5617
      %v5663 = vadd.f32 %v2701, %v5620
      %v5664 = vadd.f32 %v2703, %v5622
      %v5665 = vadd.f32 %v2706, %v5625
      %v5666 = vadd.f32 %v2708, %v5627
      %v5667 = vadd.f32 %v2711, %v5630
      %v5668 = vadd.f32 %v2713, %v5632
      %v5669 = vadd.f32 %v2716, %v5635
      %v5670 = vadd.f32 %v2718, %v5637
      %5671 = vst [vmem:[#allocation12] sm:$0xff] %v5639
      %5672 = vst [vmem:[#allocation12 + $0x8] sm:$0xff] %v5640
      %5673 = vst [vmem:[#allocation12 + $0x10] sm:$0xff] %v5641
      %5674 = vst [vmem:[#allocation12 + $0x18] sm:$0xff] %v5642
      %5675 = vst [vmem:[#allocation12 + $0x20] sm:$0xff] %v5643
      %5676 = vst [vmem:[#allocation12 + $0x28] sm:$0xff] %v5644
      %5677 = vst [vmem:[#allocation12 + $0x30] sm:$0xff] %v5645
      %5678 = vst [vmem:[#allocation12 + $0x38] sm:$0xff] %v5646
      %5679 = vst [vmem:[#allocation12 + $0x40] sm:$0xff] %v5647
      %5680 = vst [vmem:[#allocation12 + $0x48] sm:$0xff] %v5648
      %5681 = vst [vmem:[#allocation12 + $0x50] sm:$0xff] %v5649
      %5682 = vst [vmem:[#allocation12 + $0x58] sm:$0xff] %v5650
      %5683 = vst [vmem:[#allocation12 + $0x60] sm:$0xff] %v5651
      %5684 = vst [vmem:[#allocation12 + $0x68] sm:$0xff] %v5652
      %5685 = vst [vmem:[#allocation12 + $0x70] sm:$0xff] %v5653
      %5686 = vst [vmem:[#allocation12 + $0x78] sm:$0xff] %v5654
      %5687 = vst [vmem:[#allocation12 + $0x80] sm:$0xff] %v5655
      %5688 = vst [vmem:[#allocation12 + $0x88] sm:$0xff] %v5656
      %5689 = vst [vmem:[#allocation12 + $0x90] sm:$0xff] %v5657
      %5690 = vst [vmem:[#allocation12 + $0x98] sm:$0xff] %v5658
      %5691 = vst [vmem:[#allocation12 + $0xa0] sm:$0xff] %v5659
      %5692 = vst [vmem:[#allocation12 + $0xa8] sm:$0xff] %v5660
      %5693 = vst [vmem:[#allocation12 + $0xb0] sm:$0xff] %v5661
      %5694 = vst [vmem:[#allocation12 + $0xb8] sm:$0xff] %v5662
      %5695 = vst [vmem:[#allocation12 + $0xc0] sm:$0xff] %v5663
      %5696 = vst [vmem:[#allocation12 + $0xc8] sm:$0xff] %v5664
      %5697 = vst [vmem:[#allocation12 + $0xd0] sm:$0xff] %v5665
      %5698 = vst [vmem:[#allocation12 + $0xd8] sm:$0xff] %v5666
      %5699 = vst [vmem:[#allocation12 + $0xe0] sm:$0xff] %v5667
      %5700 = vst [vmem:[#allocation12 + $0xe8] sm:$0xff] %v5668
      %5701 = vst [vmem:[#allocation12 + $0xf0] sm:$0xff] %v5669
      %5702 = vst [vmem:[#allocation12 + $0xf8] sm:$0xff] %v5670
    $region49: #{tpu_custom_call.1} parent=1 // pred_fallthru
      _
    // Predicated region
    $region50: #{tpu_custom_call.1} parent=1 // pred_check
      _
    $region51: #{tpu_custom_call.1} parent=1 // pred_check_branch
      %5704 = sbr.rel (0) target = $region53
    $region52: #{tpu_custom_call.1} parent=1 // pred_region
      %5706 = vsyncadd [#allocation5], 0
      %s5707 = sshll.u32 [#allocation12], 4
      %s5708 = int_to_ptr.vmem [resolvable:$true] %s5707
      %s5709 = sshll.u32 %s5, 4
      %s5710 = int_to_ptr.hbm [resolvable:$true] %s5709
      %5715 = dma.vmem_to_hbm [thread:$0]  %s5708, 4096, %s5710, [#allocation5], 128, 128, 8
    $region53: #{tpu_custom_call.1} parent=1 // pred_fallthru
      _
    // Predicated region
    $region54: #{tpu_custom_call.1} parent=1 // pred_check
      _
    $region55: #{tpu_custom_call.1} parent=1 // pred_check_branch
      %5717 = sbr.rel (0) target = $region57
    $region56: #{tpu_custom_call.1} parent=1 // pred_region
      %5719 = dma.done [#allocation5], 4096
    $region57: #{tpu_custom_call.1} parent=1 // pred_fallthru
      _
    %5720 = vsyncpa [#allocation4], 1
    %5721 = vsyncpa [#allocation7], 1
    %5722 = vsyncpa [#allocation10], 1
    %5723 = vsyncpa [#allocation5], 1

// kernel: tpu_custom_call.1
$region0: #{tpu_custom_call.1}
  #allocation0 [shape = 'u32[]', space=smem, size = 0x4, offset = 0x4, fixed_abs, tag = 'smem constant byte address 0x4 - core index']
  #allocation1 [shape = 'u32[72,128]{1,0:T(1,128)}', space=vmem, size = 0x9000, scoped, tag = 'internal scratch']
  #allocation2 [shape = 'f32[256,256]{1,0:T(8,128)}', space=vmem, size = 0x40000, scoped, tag = 'scratch operand']
  %s0 = inlined_call_operand.hbm [shape: bf16[256,128], index: 0, kind: input, shape index: {}]
  %s1 = inlined_call_operand.hbm [shape: bf16[128,256], index: 1, kind: input, shape index: {}]
  %s2 = inlined_call_operand.hbm [shape: bf16[256,256], index: 2, kind: input, shape index: {}]
  %s3 = inlined_call_operand.hbm [shape: bf16[1792,384], index: 3, kind: input, shape index: {}]
  %s4 = inlined_call_operand.hbm [shape: f32[1,1792], index: 4, kind: input, shape index: {}]
  %s5 = inlined_call_operand.hbm [shape: f32[256,128], index: 5, kind: output, shape index: {}]
  %s6 = sld [smem:[#allocation0]]
  $region58: #{tpu_custom_call.1} parent=0
    _
  %s8 = ssub.s32 1, %s6
  %s9 = scalar_select 0, %s8, %s6
  $region1: #{tpu_custom_call.1} parent=0
    #allocation3 [shape = 'u8[65536]{0}', space=vmem, size = 0x10000, scoped, tag = 'input window, operand 0, single buffered']
    #allocation4 [shape = 's32[1]{0}', space=sflag, size = 0x4, scoped, tag = 'scoped memory for tpu_custom_call.1']
    #allocation5 [shape = 's32[1]{0}', space=sflag, size = 0x4, scoped, tag = 'scoped memory for tpu_custom_call.1']
    #allocation6 [shape = 'u8[65536]{0}', space=vmem, size = 0x10000, scoped, tag = 'input window, operand 1, single buffered']
    #allocation7 [shape = 's32[1]{0}', space=sflag, size = 0x4, scoped, tag = 'scoped memory for tpu_custom_call.1']
    #allocation8 [shape = 'u8[131072]{0}', space=vmem, size = 0x20000, scoped, tag = 'input window, operand 2, single buffered']
    #allocation9 [shape = 'u8[1376256]{0}', space=vmem, size = 0x150000, scoped, tag = 'input window, operand 3, single buffered']
    #allocation10 [shape = 's32[1]{0}', space=sflag, size = 0x4, scoped, tag = 'scoped memory for tpu_custom_call.1']
    #allocation11 [shape = 'u8[7168]{0}', space=vmem, size = 0x1c00, scoped, tag = 'input window, operand 4, single buffered']
    #allocation12 [shape = 'u8[131072]{0}', space=vmem, size = 0x20000, scoped, tag = 'output window, operand 0, single buffered']
    %10 = vsyncpa [#allocation4], 0
    %11 = vsyncpa [#allocation7], 0
    %12 = vsyncpa [#allocation10], 0
    %13 = vsyncpa [#allocation5], 0
    // Predicated region
    $region2: #{tpu_custom_call.1} parent=1 // pred_check
      _
    $region3: #{tpu_custom_call.1} parent=1 // pred_check_branch
      %15 = sbr.rel (0) target = $region5
    $region4: #{tpu_custom_call.1} parent=1 // pred_region
      %17 = vsyncadd [#allocation4], 0
      %s18 = sshll.u32 %s0, 4
      %s19 = int_to_ptr.hbm [resolvable:$true] %s18
      %s20 = sshll.u32 [#allocation3], 4
      %s21 = int_to_ptr.vmem [resolvable:$true] %s20
      %26 = dma.hbm_to_vmem [thread:$0]  %s19, 2048, %s21, [#allocation4], 64, 64, 4
    $region5: #{tpu_custom_call.1} parent=1 // pred_fallthru
      _
    // Predicated region
    $region6: #{tpu_custom_call.1} parent=1 // pred_check
      _
    $region7: #{tpu_custom_call.1} parent=1 // pred_check_branch
      %28 = sbr.rel (0) target = $region9
    $region8: #{tpu_custom_call.1} parent=1 // pred_region
      %30 = vsyncadd [#allocation7], 0
      %s31 = sshll.u32 %s1, 4
      %s32 = int_to_ptr.hbm [resolvable:$true] %s31
      %s33 = sshll.u32 [#allocation6], 4
      %s34 = int_to_ptr.vmem [resolvable:$true] %s33
      %39 = dma.hbm_to_vmem [thread:$0]  %s32, 2048, %s34, [#allocation7], 128, 128, 8
    $region9: #{tpu_custom_call.1} parent=1 // pred_fallthru
      _
    // Predicated region
    $region10: #{tpu_custom_call.1} parent=1 // pred_check
      _
    $region11: #{tpu_custom_call.1} parent=1 // pred_check_branch
      %41 = sbr.rel (0) target = $region13
    $region12: #{tpu_custom_call.1} parent=1 // pred_region
      %43 = vsyncadd [#allocation7], 0
      %s44 = sshll.u32 %s2, 4
      %s45 = int_to_ptr.hbm [resolvable:$true] %s44
      %s46 = sshll.u32 [#allocation8], 4
      %s47 = int_to_ptr.vmem [resolvable:$true] %s46
      %52 = dma.hbm_to_vmem [thread:$0]  %s45, 4096, %s47, [#allocation7], 128, 128, 8
    $region13: #{tpu_custom_call.1} parent=1 // pred_fallthru
      _
    // Predicated region
    $region14: #{tpu_custom_call.1} parent=1 // pred_check
      _
    $region15: #{tpu_custom_call.1} parent=1 // pred_check_branch
      %54 = sbr.rel (0) target = $region17
    $region16: #{tpu_custom_call.1} parent=1 // pred_region
      %56 = vsyncadd [#allocation10], 0
      %s57 = sshll.u32 %s3, 4
      %s58 = int_to_ptr.hbm [resolvable:$true] %s57
      %s59 = sshll.u32 [#allocation9], 4
      %s60 = int_to_ptr.vmem [resolvable:$true] %s59
      %65 = dma.hbm_to_vmem [thread:$0]  %s58, 43008, %s60, [#allocation10], 192, 192, 12
    $region17: #{tpu_custom_call.1} parent=1 // pred_fallthru
      _
    // Predicated region
    $region18: #{tpu_custom_call.1} parent=1 // pred_check
      _
    $region19: #{tpu_custom_call.1} parent=1 // pred_check_branch
      %67 = sbr.rel (0) target = $region21
    $region20: #{tpu_custom_call.1} parent=1 // pred_region
      %69 = vsyncadd [#allocation10], 0
      %s71 = sshll.u32 %s4, 4
      %s72 = int_to_ptr.hbm [resolvable:$true] %s71
      %s73 = sshll.u32 [#allocation11], 4
      %s74 = int_to_ptr.vmem [resolvable:$true] %s73
      %76 = dma.hbm_to_vmem [thread:$0]  %s72, 224, %s74, [#allocation10]
    $region21: #{tpu_custom_call.1} parent=1 // pred_fallthru
      _
    // Predicated region
    $region22: #{tpu_custom_call.1} parent=1 // pred_check
      _
    $region23: #{tpu_custom_call.1} parent=1 // pred_check_branch
      %78 = sbr.rel (0) target = $region25
    $region24: #{tpu_custom_call.1} parent=1 // pred_region
      %80 = dma.done [#allocation4], 2048
    $region25: #{tpu_custom_call.1} parent=1 // pred_fallthru
      _
    // Predicated region
    $region26: #{tpu_custom_call.1} parent=1 // pred_check
      _
    $region27: #{tpu_custom_call.1} parent=1 // pred_check_branch
      %82 = sbr.rel (0) target = $region29
    $region28: #{tpu_custom_call.1} parent=1 // pred_region
      %84 = dma.done [#allocation7], 2048
    $region29: #{tpu_custom_call.1} parent=1 // pred_fallthru
      _
    // Predicated region
    $region30: #{tpu_custom_call.1} parent=1 // pred_check
      _
    $region31: #{tpu_custom_call.1} parent=1 // pred_check_branch
      %86 = sbr.rel (0) target = $region33
    $region32: #{tpu_custom_call.1} parent=1 // pred_region
      %88 = dma.done [#allocation7], 4096
    $region33: #{tpu_custom_call.1} parent=1 // pred_fallthru
      _
    // Predicated region
    $region34: #{tpu_custom_call.1} parent=1 // pred_check
      _
    $region35: #{tpu_custom_call.1} parent=1 // pred_check_branch
      %90 = sbr.rel (0) target = $region37
    $region36: #{tpu_custom_call.1} parent=1 // pred_region
      %92 = dma.done [#allocation10], 43008
    $region37: #{tpu_custom_call.1} parent=1 // pred_fallthru
      _
    // Predicated region
    $region38: #{tpu_custom_call.1} parent=1 // pred_check
      _
    $region39: #{tpu_custom_call.1} parent=1 // pred_check_branch
      %94 = sbr.rel (0) target = $region41
    $region40: #{tpu_custom_call.1} parent=1 // pred_region
      %96 = dma.done [#allocation10], 224
    $region41: #{tpu_custom_call.1} parent=1 // pred_fallthru
      _
    %p97 = scmp.eq.s32.totalorder 0, 0
    // Predicated region
    $region42: #{tpu_custom_call.1} parent=1 // pred_check
      %p98 = pneg %p97
    $region43: #{tpu_custom_call.1} parent=1 // pred_check_branch
      %100 = sbr.rel (%p98) target = $region45
    $region44: #{tpu_custom_call.1} parent=1 // pred_region
      %101 = vst [vmem:[#allocation2] sm:$0xff] 0.0
      %102 = vst [vmem:[#allocation2 + $0x8] sm:$0xff] 0.0
      %103 = vst [vmem:[#allocation2 + $0x10] sm:$0xff] 0.0
      %104 = vst [vmem:[#allocation2 + $0x18] sm:$0xff] 0.0
      %105 = vst [vmem:[#allocation2 + $0x20] sm:$0xff] 0.0
      %106 = vst [vmem:[#allocation2 + $0x28] sm:$0xff] 0.0
      %107 = vst [vmem:[#allocation2 + $0x30] sm:$0xff] 0.0
      %108 = vst [vmem:[#allocation2 + $0x38] sm:$0xff] 0.0
      %109 = vst [vmem:[#allocation2 + $0x40] sm:$0xff] 0.0
      %110 = vst [vmem:[#allocation2 + $0x48] sm:$0xff] 0.0
      %111 = vst [vmem:[#allocation2 + $0x50] sm:$0xff] 0.0
      %112 = vst [vmem:[#allocation2 + $0x58] sm:$0xff] 0.0
      %113 = vst [vmem:[#allocation2 + $0x60] sm:$0xff] 0.0
      %114 = vst [vmem:[#allocation2 + $0x68] sm:$0xff] 0.0
      %115 = vst [vmem:[#allocation2 + $0x70] sm:$0xff] 0.0
      %116 = vst [vmem:[#allocation2 + $0x78] sm:$0xff] 0.0
      %117 = vst [vmem:[#allocation2 + $0x80] sm:$0xff] 0.0
      %118 = vst [vmem:[#allocation2 + $0x88] sm:$0xff] 0.0
      %119 = vst [vmem:[#allocation2 + $0x90] sm:$0xff] 0.0
      %120 = vst [vmem:[#allocation2 + $0x98] sm:$0xff] 0.0
      %121 = vst [vmem:[#allocation2 + $0xa0] sm:$0xff] 0.0
      %122 = vst [vmem:[#allocation2 + $0xa8] sm:$0xff] 0.0
      %123 = vst [vmem:[#allocation2 + $0xb0] sm:$0xff] 0.0
      %124 = vst [vmem:[#allocation2 + $0xb8] sm:$0xff] 0.0
      %125 = vst [vmem:[#allocation2 + $0xc0] sm:$0xff] 0.0
      %126 = vst [vmem:[#allocation2 + $0xc8] sm:$0xff] 0.0
      %127 = vst [vmem:[#allocation2 + $0xd0] sm:$0xff] 0.0
      %128 = vst [vmem:[#allocation2 + $0xd8] sm:$0xff] 0.0
      %129 = vst [vmem:[#allocation2 + $0xe0] sm:$0xff] 0.0
      %130 = vst [vmem:[#allocation2 + $0xe8] sm:$0xff] 0.0
      %131 = vst [vmem:[#allocation2 + $0xf0] sm:$0xff] 0.0
      %132 = vst [vmem:[#allocation2 + $0xf8] sm:$0xff] 0.0
      %133 = vst [vmem:[#allocation2 + $0x100] sm:$0xff] 0.0
      %134 = vst [vmem:[#allocation2 + $0x108] sm:$0xff] 0.0
      %135 = vst [vmem:[#allocation2 + $0x110] sm:$0xff] 0.0
      %136 = vst [vmem:[#allocation2 + $0x118] sm:$0xff] 0.0
      %137 = vst [vmem:[#allocation2 + $0x120] sm:$0xff] 0.0
      %138 = vst [vmem:[#allocation2 + $0x128] sm:$0xff] 0.0
      %139 = vst [vmem:[#allocation2 + $0x130] sm:$0xff] 0.0
      %140 = vst [vmem:[#allocation2 + $0x138] sm:$0xff] 0.0
      %141 = vst [vmem:[#allocation2 + $0x140] sm:$0xff] 0.0
      %142 = vst [vmem:[#allocation2 + $0x148] sm:$0xff] 0.0
      %143 = vst [vmem:[#allocation2 + $0x150] sm:$0xff] 0.0
      %144 = vst [vmem:[#allocation2 + $0x158] sm:$0xff] 0.0
      %145 = vst [vmem:[#allocation2 + $0x160] sm:$0xff] 0.0
      %146 = vst [vmem:[#allocation2 + $0x168] sm:$0xff] 0.0
      %147 = vst [vmem:[#allocation2 + $0x170] sm:$0xff] 0.0
      %148 = vst [vmem:[#allocation2 + $0x178] sm:$0xff] 0.0
      %149 = vst [vmem:[#allocation2 + $0x180] sm:$0xff] 0.0
      %150 = vst [vmem:[#allocation2 + $0x188] sm:$0xff] 0.0
      %151 = vst [vmem:[#allocation2 + $0x190] sm:$0xff] 0.0
      %152 = vst [vmem:[#allocation2 + $0x198] sm:$0xff] 0.0
      %153 = vst [vmem:[#allocation2 + $0x1a0] sm:$0xff] 0.0
      %154 = vst [vmem:[#allocation2 + $0x1a8] sm:$0xff] 0.0
      %155 = vst [vmem:[#allocation2 + $0x1b0] sm:$0xff] 0.0
      %156 = vst [vmem:[#allocation2 + $0x1b8] sm:$0xff] 0.0
      %157 = vst [vmem:[#allocation2 + $0x1c0] sm:$0xff] 0.0
      %158 = vst [vmem:[#allocation2 + $0x1c8] sm:$0xff] 0.0
      %159 = vst [vmem:[#allocation2 + $0x1d0] sm:$0xff] 0.0
      %160 = vst [vmem:[#allocation2 + $0x1d8] sm:$0xff] 0.0
      %161 = vst [vmem:[#allocation2 + $0x1e0] sm:$0xff] 0.0
      %162 = vst [vmem:[#allocation2 + $0x1e8] sm:$0xff] 0.0
      %163 = vst [vmem:[#allocation2 + $0x1f0] sm:$0xff] 0.0
      %164 = vst [vmem:[#allocation2 + $0x1f8] sm:$0xff] 0.0
    $region45: #{tpu_custom_call.1} parent=1 // pred_fallthru
      _
    %v165 = vld [vmem:[#allocation2] sm:$0xff]
    %v166 = vld [vmem:[#allocation2 + $0x8] sm:$0xff]
    %v167 = vld [vmem:[#allocation2 + $0x10] sm:$0xff]
    %v168 = vld [vmem:[#allocation2 + $0x18] sm:$0xff]
    %v169 = vld [vmem:[#allocation2 + $0x20] sm:$0xff]
    %v170 = vld [vmem:[#allocation2 + $0x28] sm:$0xff]
    %v171 = vld [vmem:[#allocation2 + $0x30] sm:$0xff]
    %v172 = vld [vmem:[#allocation2 + $0x38] sm:$0xff]
    %v173 = vld [vmem:[#allocation2 + $0x40] sm:$0xff]
    %v174 = vld [vmem:[#allocation2 + $0x48] sm:$0xff]
    %v175 = vld [vmem:[#allocation2 + $0x50] sm:$0xff]
    %v176 = vld [vmem:[#allocation2 + $0x58] sm:$0xff]
    %v177 = vld [vmem:[#allocation2 + $0x60] sm:$0xff]
    %v178 = vld [vmem:[#allocation2 + $0x68] sm:$0xff]
    %v179 = vld [vmem:[#allocation2 + $0x70] sm:$0xff]
    %v180 = vld [vmem:[#allocation2 + $0x78] sm:$0xff]
    %v181 = vld [vmem:[#allocation2 + $0x80] sm:$0xff]
    %v182 = vld [vmem:[#allocation2 + $0x88] sm:$0xff]
    %v183 = vld [vmem:[#allocation2 + $0x90] sm:$0xff]
    %v184 = vld [vmem:[#allocation2 + $0x98] sm:$0xff]
    %v185 = vld [vmem:[#allocation2 + $0xa0] sm:$0xff]
    %v186 = vld [vmem:[#allocation2 + $0xa8] sm:$0xff]
    %v187 = vld [vmem:[#allocation2 + $0xb0] sm:$0xff]
    %v188 = vld [vmem:[#allocation2 + $0xb8] sm:$0xff]
    %v189 = vld [vmem:[#allocation2 + $0xc0] sm:$0xff]
    %v190 = vld [vmem:[#allocation2 + $0xc8] sm:$0xff]
    %v191 = vld [vmem:[#allocation2 + $0xd0] sm:$0xff]
    %v192 = vld [vmem:[#allocation2 + $0xd8] sm:$0xff]
    %v193 = vld [vmem:[#allocation2 + $0xe0] sm:$0xff]
    %v194 = vld [vmem:[#allocation2 + $0xe8] sm:$0xff]
    %v195 = vld [vmem:[#allocation2 + $0xf0] sm:$0xff]
    %v196 = vld [vmem:[#allocation2 + $0xf8] sm:$0xff]
    %v197 = vld [vmem:[#allocation2 + $0x100] sm:$0xff]
    %v198 = vld [vmem:[#allocation2 + $0x108] sm:$0xff]
    %v199 = vld [vmem:[#allocation2 + $0x110] sm:$0xff]
    %v200 = vld [vmem:[#allocation2 + $0x118] sm:$0xff]
    %v201 = vld [vmem:[#allocation2 + $0x120] sm:$0xff]
    %v202 = vld [vmem:[#allocation2 + $0x128] sm:$0xff]
    %v203 = vld [vmem:[#allocation2 + $0x130] sm:$0xff]
    %v204 = vld [vmem:[#allocation2 + $0x138] sm:$0xff]
    %v205 = vld [vmem:[#allocation2 + $0x140] sm:$0xff]
    %v206 = vld [vmem:[#allocation2 + $0x148] sm:$0xff]
    %v207 = vld [vmem:[#allocation2 + $0x150] sm:$0xff]
    %v208 = vld [vmem:[#allocation2 + $0x158] sm:$0xff]
    %v209 = vld [vmem:[#allocation2 + $0x160] sm:$0xff]
    %v210 = vld [vmem:[#allocation2 + $0x168] sm:$0xff]
    %v211 = vld [vmem:[#allocation2 + $0x170] sm:$0xff]
    %v212 = vld [vmem:[#allocation2 + $0x178] sm:$0xff]
    %v213 = vld [vmem:[#allocation2 + $0x180] sm:$0xff]
    %v214 = vld [vmem:[#allocation2 + $0x188] sm:$0xff]
    %v215 = vld [vmem:[#allocation2 + $0x190] sm:$0xff]
    %v216 = vld [vmem:[#allocation2 + $0x198] sm:$0xff]
    %v217 = vld [vmem:[#allocation2 + $0x1a0] sm:$0xff]
    %v218 = vld [vmem:[#allocation2 + $0x1a8] sm:$0xff]
    %v219 = vld [vmem:[#allocation2 + $0x1b0] sm:$0xff]
    %v220 = vld [vmem:[#allocation2 + $0x1b8] sm:$0xff]
    %v221 = vld [vmem:[#allocation2 + $0x1c0] sm:$0xff]
    %v222 = vld [vmem:[#allocation2 + $0x1c8] sm:$0xff]
    %v223 = vld [vmem:[#allocation2 + $0x1d0] sm:$0xff]
    %v224 = vld [vmem:[#allocation2 + $0x1d8] sm:$0xff]
    %v225 = vld [vmem:[#allocation2 + $0x1e0] sm:$0xff]
    %v226 = vld [vmem:[#allocation2 + $0x1e8] sm:$0xff]
    %v227 = vld [vmem:[#allocation2 + $0x1f0] sm:$0xff]
    %v228 = vld [vmem:[#allocation2 + $0x1f8] sm:$0xff]
    %v229 = vld [vmem:[#allocation3] sm:$0xf]
    %v230 = vld [vmem:[#allocation3 + $0x4] sm:$0xf]
    %v231 = vld [vmem:[#allocation3 + $0x8] sm:$0xf]
    %v232 = vld [vmem:[#allocation3 + $0xc] sm:$0xf]
    %v233 = vld [vmem:[#allocation3 + $0x10] sm:$0xf]
    %v234 = vld [vmem:[#allocation3 + $0x14] sm:$0xf]
    %v235 = vld [vmem:[#allocation3 + $0x18] sm:$0xf]
    %v236 = vld [vmem:[#allocation3 + $0x1c] sm:$0xf]
    %v237 = vld [vmem:[#allocation3 + $0x20] sm:$0xf]
    %v238 = vld [vmem:[#allocation3 + $0x24] sm:$0xf]
    %v239 = vld [vmem:[#allocation3 + $0x28] sm:$0xf]
    %v240 = vld [vmem:[#allocation3 + $0x2c] sm:$0xf]
    %v241 = vld [vmem:[#allocation3 + $0x30] sm:$0xf]
    %v242 = vld [vmem:[#allocation3 + $0x34] sm:$0xf]
    %v243 = vld [vmem:[#allocation3 + $0x38] sm:$0xf]
    %v244 = vld [vmem:[#allocation3 + $0x3c] sm:$0xf]
    %v245 = vld [vmem:[#allocation3 + $0x40] sm:$0xf]
    %v246 = vld [vmem:[#allocation3 + $0x44] sm:$0xf]
    %v247 = vld [vmem:[#allocation3 + $0x48] sm:$0xf]
    %v248 = vld [vmem:[#allocation3 + $0x4c] sm:$0xf]
    %v249 = vld [vmem:[#allocation3 + $0x50] sm:$0xf]
    %v250 = vld [vmem:[#allocation3 + $0x54] sm:$0xf]
    %v251 = vld [vmem:[#allocation3 + $0x58] sm:$0xf]
    %v252 = vld [vmem:[#allocation3 + $0x5c] sm:$0xf]
    %v253 = vld [vmem:[#allocation3 + $0x60] sm:$0xf]
    %v254 = vld [vmem:[#allocation3 + $0x64] sm:$0xf]
    %v255 = vld [vmem:[#allocation3 + $0x68] sm:$0xf]
    %v256 = vld [vmem:[#allocation3 + $0x6c] sm:$0xf]
    %v257 = vld [vmem:[#allocation3 + $0x70] sm:$0xf]
    %v258 = vld [vmem:[#allocation3 + $0x74] sm:$0xf]
    %v259 = vld [vmem:[#allocation3 + $0x78] sm:$0xf]
    %v260 = vld [vmem:[#allocation3 + $0x7c] sm:$0xf]
    %v261 = vld [vmem:[#allocation6] sm:$0xff]
    %v262 = vld [vmem:[#allocation6 + $0x8] sm:$0xff]
    %v263 = vld [vmem:[#allocation6 + $0x10] sm:$0xff]
    %v264 = vld [vmem:[#allocation6 + $0x18] sm:$0xff]
    %v265 = vld [vmem:[#allocation6 + $0x20] sm:$0xff]
    %v266 = vld [vmem:[#allocation6 + $0x28] sm:$0xff]
    %v267 = vld [vmem:[#allocation6 + $0x30] sm:$0xff]
    %v268 = vld [vmem:[#allocation6 + $0x38] sm:$0xff]
    %v269 = vld [vmem:[#allocation6 + $0x40] sm:$0xff]
    %v270 = vld [vmem:[#allocation6 + $0x48] sm:$0xff]
    %v271 = vld [vmem:[#allocation6 + $0x50] sm:$0xff]
    %v272 = vld [vmem:[#allocation6 + $0x58] sm:$0xff]
    %v273 = vld [vmem:[#allocation6 + $0x60] sm:$0xff]
    %v274 = vld [vmem:[#allocation6 + $0x68] sm:$0xff]
    %v275 = vld [vmem:[#allocation6 + $0x70] sm:$0xff]
    %v276 = vld [vmem:[#allocation6 + $0x78] sm:$0xff]
    %v309 = vunpack.c.l.b16 %v229
    %v310 = vunpack.c.l.b16 %v230
    %v311 = vunpack.c.l.b16 %v231
    %v312 = vunpack.c.l.b16 %v232
    %v313 = vunpack.c.l.b16 %v233
    %v314 = vunpack.c.l.b16 %v234
    %v315 = vunpack.c.l.b16 %v235
    %v316 = vunpack.c.l.b16 %v236
    %v317 = vunpack.c.l.b16 %v237
    %v318 = vunpack.c.l.b16 %v238
    %v319 = vunpack.c.l.b16 %v239
    %v320 = vunpack.c.l.b16 %v240
    %v321 = vunpack.c.l.b16 %v241
    %v322 = vunpack.c.l.b16 %v242
    %v323 = vunpack.c.l.b16 %v243
    %v324 = vunpack.c.l.b16 %v244
    %v325 = vunpack.c.l.b16 %v245
    %v326 = vunpack.c.l.b16 %v246
    %v327 = vunpack.c.l.b16 %v247
    %v328 = vunpack.c.l.b16 %v248
    %v329 = vunpack.c.l.b16 %v249
    %v330 = vunpack.c.l.b16 %v250
    %v331 = vunpack.c.l.b16 %v251
    %v332 = vunpack.c.l.b16 %v252
    %v333 = vunpack.c.l.b16 %v253
    %v334 = vunpack.c.l.b16 %v254
    %v335 = vunpack.c.l.b16 %v255
    %v336 = vunpack.c.l.b16 %v256
    %v337 = vunpack.c.l.b16 %v257
    %v338 = vunpack.c.l.b16 %v258
    %v339 = vunpack.c.l.b16 %v259
    %v340 = vunpack.c.l.b16 %v260
    %v341 = vpack.c.b16 %v310, %v309
    %v342 = vpack.c.b16 %v312, %v311
    %v343 = vpack.c.b16 %v314, %v313
    %v344 = vpack.c.b16 %v316, %v315
    %v345 = vpack.c.b16 %v318, %v317
    %v346 = vpack.c.b16 %v320, %v319
    %v347 = vpack.c.b16 %v322, %v321
    %v348 = vpack.c.b16 %v324, %v323
    %v349 = vpack.c.b16 %v326, %v325
    %v350 = vpack.c.b16 %v328, %v327
    %v351 = vpack.c.b16 %v330, %v329
    %v352 = vpack.c.b16 %v332, %v331
    %v353 = vpack.c.b16 %v334, %v333
    %v354 = vpack.c.b16 %v336, %v335
    %v355 = vpack.c.b16 %v338, %v337
    %v356 = vpack.c.b16 %v340, %v339
    %v389 = vunpack.c.l.b16 %v261
    %v390 = vunpack.c.h.b16 %v261
    %v391 = vunpack.c.l.b16 %v262
    %v392 = vunpack.c.h.b16 %v262
    %v393 = vunpack.c.l.b16 %v263
    %v394 = vunpack.c.h.b16 %v263
    %v395 = vunpack.c.l.b16 %v264
    %v396 = vunpack.c.h.b16 %v264
    %v397 = vunpack.c.l.b16 %v265
    %v398 = vunpack.c.h.b16 %v265
    %v399 = vunpack.c.l.b16 %v266
    %v400 = vunpack.c.h.b16 %v266
    %v401 = vunpack.c.l.b16 %v267
    %v402 = vunpack.c.h.b16 %v267
    %v403 = vunpack.c.l.b16 %v268
    %v404 = vunpack.c.h.b16 %v268
    %v405 = vunpack.c.l.b16 %v269
    %v406 = vunpack.c.h.b16 %v269
    %v407 = vunpack.c.l.b16 %v270
    %v408 = vunpack.c.h.b16 %v270
    %v409 = vunpack.c.l.b16 %v271
    %v410 = vunpack.c.h.b16 %v271
    %v411 = vunpack.c.l.b16 %v272
    %v412 = vunpack.c.h.b16 %v272
    %v413 = vunpack.c.l.b16 %v273
    %v414 = vunpack.c.h.b16 %v273
    %v415 = vunpack.c.l.b16 %v274
    %v416 = vunpack.c.h.b16 %v274
    %v417 = vunpack.c.l.b16 %v275
    %v418 = vunpack.c.h.b16 %v275
    %v419 = vunpack.c.l.b16 %v276
    %v420 = vunpack.c.h.b16 %v276
    %v421 = vpack.c.b16 %v391, %v389
    %v422 = vpack.c.b16 %v392, %v390
    %v423 = vpack.c.b16 %v395, %v393
    %v424 = vpack.c.b16 %v396, %v394
    %v425 = vpack.c.b16 %v399, %v397
    %v426 = vpack.c.b16 %v400, %v398
    %v427 = vpack.c.b16 %v403, %v401
    %v428 = vpack.c.b16 %v404, %v402
    %v429 = vpack.c.b16 %v407, %v405
    %v430 = vpack.c.b16 %v408, %v406
    %v431 = vpack.c.b16 %v411, %v409
    %v432 = vpack.c.b16 %v412, %v410
    %v433 = vpack.c.b16 %v415, %v413
    %v434 = vpack.c.b16 %v416, %v414
    %v435 = vpack.c.b16 %v419, %v417
    %v436 = vpack.c.b16 %v420, %v418
    %453 = vmatpush.bf16.msra.mxu0 %v435
    %454 = vmatpush.bf16.msra.mxu0 %v433
    %455 = vmatpush.bf16.msra.mxu0 %v431
    %456 = vmatpush.bf16.msra.mxu0 %v429
    %457 = vmatpush.bf16.msra.mxu0 %v427
    %458 = vmatpush.bf16.msra.mxu0 %v425
    %459 = vmatpush.bf16.msra.mxu0 %v423
    %460 = vmatpush.bf16.msra.mxu0 %v421
    %461 = vmatmul.bf16.gmra.mxu0 %v341
    %v462 = vpop.f32.mrf.mxu0
    %v463 = vadd.f32 0.0, %v462
    %v464 = vpop.f32.mrf.mxu0
    %v465 = vadd.f32 0.0, %v464
    %466 = vmatmul.bf16.gmra.mxu0 %v342
    %v467 = vpop.f32.mrf.mxu0
    %v468 = vadd.f32 0.0, %v467
    %v469 = vpop.f32.mrf.mxu0
    %v470 = vadd.f32 0.0, %v469
    %471 = vmatmul.bf16.gmra.mxu0 %v343
    %v472 = vpop.f32.mrf.mxu0
    %v473 = vadd.f32 0.0, %v472
    %v474 = vpop.f32.mrf.mxu0
    %v475 = vadd.f32 0.0, %v474
    %476 = vmatmul.bf16.gmra.mxu0 %v344
    %v477 = vpop.f32.mrf.mxu0
    %v478 = vadd.f32 0.0, %v477
    %v479 = vpop.f32.mrf.mxu0
    %v480 = vadd.f32 0.0, %v479
    %481 = vmatmul.bf16.gmra.mxu0 %v345
    %v482 = vpop.f32.mrf.mxu0
    %v483 = vadd.f32 0.0, %v482
    %v484 = vpop.f32.mrf.mxu0
    %v485 = vadd.f32 0.0, %v484
    %486 = vmatmul.bf16.gmra.mxu0 %v346
    %v487 = vpop.f32.mrf.mxu0
    %v488 = vadd.f32 0.0, %v487
    %v489 = vpop.f32.mrf.mxu0
    %v490 = vadd.f32 0.0, %v489
    %491 = vmatmul.bf16.gmra.mxu0 %v347
    %v492 = vpop.f32.mrf.mxu0
    %v493 = vadd.f32 0.0, %v492
    %v494 = vpop.f32.mrf.mxu0
    %v495 = vadd.f32 0.0, %v494
    %496 = vmatmul.bf16.gmra.mxu0 %v348
    %v497 = vpop.f32.mrf.mxu0
    %v498 = vadd.f32 0.0, %v497
    %v499 = vpop.f32.mrf.mxu0
    %v500 = vadd.f32 0.0, %v499
    %501 = vmatmul.bf16.gmra.mxu0 %v349
    %v502 = vpop.f32.mrf.mxu0
    %v503 = vadd.f32 0.0, %v502
    %v504 = vpop.f32.mrf.mxu0
    %v505 = vadd.f32 0.0, %v504
    %506 = vmatmul.bf16.gmra.mxu0 %v350
    %v507 = vpop.f32.mrf.mxu0
    %v508 = vadd.f32 0.0, %v507
    %v509 = vpop.f32.mrf.mxu0
    %v510 = vadd.f32 0.0, %v509
    %511 = vmatmul.bf16.gmra.mxu0 %v351
    %v512 = vpop.f32.mrf.mxu0
    %v513 = vadd.f32 0.0, %v512
    %v514 = vpop.f32.mrf.mxu0
    %v515 = vadd.f32 0.0, %v514
    %516 = vmatmul.bf16.gmra.mxu0 %v352
    %v517 = vpop.f32.mrf.mxu0
    %v518 = vadd.f32 0.0, %v517
    %v519 = vpop.f32.mrf.mxu0
    %v520 = vadd.f32 0.0, %v519
    %521 = vmatmul.bf16.gmra.mxu0 %v353
    %v522 = vpop.f32.mrf.mxu0
    %v523 = vadd.f32 0.0, %v522
    %v524 = vpop.f32.mrf.mxu0
    %v525 = vadd.f32 0.0, %v524
    %526 = vmatmul.bf16.gmra.mxu0 %v354
    %v527 = vpop.f32.mrf.mxu0
    %v528 = vadd.f32 0.0, %v527
    %v529 = vpop.f32.mrf.mxu0
    %v530 = vadd.f32 0.0, %v529
    %531 = vmatmul.bf16.gmra.mxu0 %v355
    %v532 = vpop.f32.mrf.mxu0
    %v533 = vadd.f32 0.0, %v532
    %v534 = vpop.f32.mrf.mxu0
    %v535 = vadd.f32 0.0, %v534
    %536 = vmatmul.bf16.gmra.mxu0 %v356
    %v537 = vpop.f32.mrf.mxu0
    %v538 = vadd.f32 0.0, %v537
    %v539 = vpop.f32.mrf.mxu0
    %v540 = vadd.f32 0.0, %v539
    %541 = vdwg.mxu0
    %542 = vmatpush.bf16.msra.mxu0 %v436
    %543 = vmatpush.bf16.msra.mxu0 %v434
    %544 = vmatpush.bf16.msra.mxu0 %v432
    %545 = vmatpush.bf16.msra.mxu0 %v430
    %546 = vmatpush.bf16.msra.mxu0 %v428
    %547 = vmatpush.bf16.msra.mxu0 %v426
    %548 = vmatpush.bf16.msra.mxu0 %v424
    %549 = vmatpush.bf16.msra.mxu0 %v422
    %550 = vmatmul.bf16.gmra.mxu0 %v341
    %v551 = vpop.f32.mrf.mxu0
    %v552 = vadd.f32 0.0, %v551
    %v553 = vpop.f32.mrf.mxu0
    %v554 = vadd.f32 0.0, %v553
    %555 = vmatmul.bf16.gmra.mxu0 %v342
    %v556 = vpop.f32.mrf.mxu0
    %v557 = vadd.f32 0.0, %v556
    %v558 = vpop.f32.mrf.mxu0
    %v559 = vadd.f32 0.0, %v558
    %560 = vmatmul.bf16.gmra.mxu0 %v343
    %v561 = vpop.f32.mrf.mxu0
    %v562 = vadd.f32 0.0, %v561
    %v563 = vpop.f32.mrf.mxu0
    %v564 = vadd.f32 0.0, %v563
    %565 = vmatmul.bf16.gmra.mxu0 %v344
    %v566 = vpop.f32.mrf.mxu0
    %v567 = vadd.f32 0.0, %v566
    %v568 = vpop.f32.mrf.mxu0
    %v569 = vadd.f32 0.0, %v568
    %570 = vmatmul.bf16.gmra.mxu0 %v345
    %v571 = vpop.f32.mrf.mxu0
    %v572 = vadd.f32 0.0, %v571
    %v573 = vpop.f32.mrf.mxu0
    %v574 = vadd.f32 0.0, %v573
    %575 = vmatmul.bf16.gmra.mxu0 %v346
    %v576 = vpop.f32.mrf.mxu0
    %v577 = vadd.f32 0.0, %v576
    %v578 = vpop.f32.mrf.mxu0
    %v579 = vadd.f32 0.0, %v578
    %580 = vmatmul.bf16.gmra.mxu0 %v347
    %v581 = vpop.f32.mrf.mxu0
    %v582 = vadd.f32 0.0, %v581
    %v583 = vpop.f32.mrf.mxu0
    %v584 = vadd.f32 0.0, %v583
    %585 = vmatmul.bf16.gmra.mxu0 %v348
    %v586 = vpop.f32.mrf.mxu0
    %v587 = vadd.f32 0.0, %v586
    %v588 = vpop.f32.mrf.mxu0
    %v589 = vadd.f32 0.0, %v588
    %590 = vmatmul.bf16.gmra.mxu0 %v349
    %v591 = vpop.f32.mrf.mxu0
    %v592 = vadd.f32 0.0, %v591
    %v593 = vpop.f32.mrf.mxu0
    %v594 = vadd.f32 0.0, %v593
    %595 = vmatmul.bf16.gmra.mxu0 %v350
    %v596 = vpop.f32.mrf.mxu0
    %v597 = vadd.f32 0.0, %v596
    %v598 = vpop.f32.mrf.mxu0
    %v599 = vadd.f32 0.0, %v598
    %600 = vmatmul.bf16.gmra.mxu0 %v351
    %v601 = vpop.f32.mrf.mxu0
    %v602 = vadd.f32 0.0, %v601
    %v603 = vpop.f32.mrf.mxu0
    %v604 = vadd.f32 0.0, %v603
    %605 = vmatmul.bf16.gmra.mxu0 %v352
    %v606 = vpop.f32.mrf.mxu0
    %v607 = vadd.f32 0.0, %v606
    %v608 = vpop.f32.mrf.mxu0
    %v609 = vadd.f32 0.0, %v608
    %610 = vmatmul.bf16.gmra.mxu0 %v353
    %v611 = vpop.f32.mrf.mxu0
    %v612 = vadd.f32 0.0, %v611
    %v613 = vpop.f32.mrf.mxu0
    %v614 = vadd.f32 0.0, %v613
    %615 = vmatmul.bf16.gmra.mxu0 %v354
    %v616 = vpop.f32.mrf.mxu0
    %v617 = vadd.f32 0.0, %v616
    %v618 = vpop.f32.mrf.mxu0
    %v619 = vadd.f32 0.0, %v618
    %620 = vmatmul.bf16.gmra.mxu0 %v355
    %v621 = vpop.f32.mrf.mxu0
    %v622 = vadd.f32 0.0, %v621
    %v623 = vpop.f32.mrf.mxu0
    %v624 = vadd.f32 0.0, %v623
    %625 = vmatmul.bf16.gmra.mxu0 %v356
    %v626 = vpop.f32.mrf.mxu0
    %v627 = vadd.f32 0.0, %v626
    %v628 = vpop.f32.mrf.mxu0
    %v629 = vadd.f32 0.0, %v628
    %630 = vdwg.mxu0
    %v631 = vadd.f32 %v165, %v463
    %v632 = vadd.f32 %v166, %v552
    %v633 = vadd.f32 %v167, %v465
    %v634 = vadd.f32 %v168, %v554
    %v635 = vadd.f32 %v169, %v468
    %v636 = vadd.f32 %v170, %v557
    %v637 = vadd.f32 %v171, %v470
    %v638 = vadd.f32 %v172, %v559
    %v639 = vadd.f32 %v173, %v473
    %v640 = vadd.f32 %v174, %v562
    %v641 = vadd.f32 %v175, %v475
    %v642 = vadd.f32 %v176, %v564
    %v643 = vadd.f32 %v177, %v478
    %v644 = vadd.f32 %v178, %v567
    %v645 = vadd.f32 %v179, %v480
    %v646 = vadd.f32 %v180, %v569
    %v647 = vadd.f32 %v181, %v483
    %v648 = vadd.f32 %v182, %v572
    %v649 = vadd.f32 %v183, %v485
    %v650 = vadd.f32 %v184, %v574
    %v651 = vadd.f32 %v185, %v488
    %v652 = vadd.f32 %v186, %v577
    %v653 = vadd.f32 %v187, %v490
    %v654 = vadd.f32 %v188, %v579
    %v655 = vadd.f32 %v189, %v493
    %v656 = vadd.f32 %v190, %v582
    %v657 = vadd.f32 %v191, %v495
    %v658 = vadd.f32 %v192, %v584
    %v659 = vadd.f32 %v193, %v498
    %v660 = vadd.f32 %v194, %v587
    %v661 = vadd.f32 %v195, %v500
    %v662 = vadd.f32 %v196, %v589
    %v663 = vadd.f32 %v197, %v503
    %v664 = vadd.f32 %v198, %v592
    %v665 = vadd.f32 %v199, %v505
    %v666 = vadd.f32 %v200, %v594
    %v667 = vadd.f32 %v201, %v508
    %v668 = vadd.f32 %v202, %v597
    %v669 = vadd.f32 %v203, %v510
    %v670 = vadd.f32 %v204, %v599
    %v671 = vadd.f32 %v205, %v513
    %v672 = vadd.f32 %v206, %v602
    %v673 = vadd.f32 %v207, %v515
    %v674 = vadd.f32 %v208, %v604
    %v675 = vadd.f32 %v209, %v518
    %v676 = vadd.f32 %v210, %v607
    %v677 = vadd.f32 %v211, %v520
    %v678 = vadd.f32 %v212, %v609
    %v679 = vadd.f32 %v213, %v523
    %v680 = vadd.f32 %v214, %v612
    %v681 = vadd.f32 %v215, %v525
    %v682 = vadd.f32 %v216, %v614
    %v683 = vadd.f32 %v217, %v528
    %v684 = vadd.f32 %v218, %v617
    %v685 = vadd.f32 %v219, %v530
    %v686 = vadd.f32 %v220, %v619
    %v687 = vadd.f32 %v221, %v533
    %v688 = vadd.f32 %v222, %v622
    %v689 = vadd.f32 %v223, %v535
    %v690 = vadd.f32 %v224, %v624
    %v691 = vadd.f32 %v225, %v538
    %v692 = vadd.f32 %v226, %v627
    %v693 = vadd.f32 %v227, %v540
    %v694 = vadd.f32 %v228, %v629
    %695 = vst [vmem:[#allocation2] sm:$0xff] %v631
    %696 = vst [vmem:[#allocation2 + $0x8] sm:$0xff] %v632
    %697 = vst [vmem:[#allocation2 + $0x10] sm:$0xff] %v633
    %698 = vst [vmem:[#allocation2 + $0x18] sm:$0xff] %v634
    %699 = vst [vmem:[#allocation2 + $0x20] sm:$0xff] %v635
    %700 = vst [vmem:[#allocation2 + $0x28] sm:$0xff] %v636
    %701 = vst [vmem:[#allocation2 + $0x30] sm:$0xff] %v637
    %702 = vst [vmem:[#allocation2 + $0x38] sm:$0xff] %v638
    %703 = vst [vmem:[#allocation2 + $0x40] sm:$0xff] %v639
    %704 = vst [vmem:[#allocation2 + $0x48] sm:$0xff] %v640
    %705 = vst [vmem:[#allocation2 + $0x50] sm:$0xff] %v641
    %706 = vst [vmem:[#allocation2 + $0x58] sm:$0xff] %v642
    %707 = vst [vmem:[#allocation2 + $0x60] sm:$0xff] %v643
    %708 = vst [vmem:[#allocation2 + $0x68] sm:$0xff] %v644
    %709 = vst [vmem:[#allocation2 + $0x70] sm:$0xff] %v645
    %710 = vst [vmem:[#allocation2 + $0x78] sm:$0xff] %v646
    %711 = vst [vmem:[#allocation2 + $0x80] sm:$0xff] %v647
    %712 = vst [vmem:[#allocation2 + $0x88] sm:$0xff] %v648
    %713 = vst [vmem:[#allocation2 + $0x90] sm:$0xff] %v649
    %714 = vst [vmem:[#allocation2 + $0x98] sm:$0xff] %v650
    %715 = vst [vmem:[#allocation2 + $0xa0] sm:$0xff] %v651
    %716 = vst [vmem:[#allocation2 + $0xa8] sm:$0xff] %v652
    %717 = vst [vmem:[#allocation2 + $0xb0] sm:$0xff] %v653
    %718 = vst [vmem:[#allocation2 + $0xb8] sm:$0xff] %v654
    %719 = vst [vmem:[#allocation2 + $0xc0] sm:$0xff] %v655
    %720 = vst [vmem:[#allocation2 + $0xc8] sm:$0xff] %v656
    %721 = vst [vmem:[#allocation2 + $0xd0] sm:$0xff] %v657
    %722 = vst [vmem:[#allocation2 + $0xd8] sm:$0xff] %v658
    %723 = vst [vmem:[#allocation2 + $0xe0] sm:$0xff] %v659
    %724 = vst [vmem:[#allocation2 + $0xe8] sm:$0xff] %v660
    %725 = vst [vmem:[#allocation2 + $0xf0] sm:$0xff] %v661
    %726 = vst [vmem:[#allocation2 + $0xf8] sm:$0xff] %v662
    %727 = vst [vmem:[#allocation2 + $0x100] sm:$0xff] %v663
    %728 = vst [vmem:[#allocation2 + $0x108] sm:$0xff] %v664
    %729 = vst [vmem:[#allocation2 + $0x110] sm:$0xff] %v665
    %730 = vst [vmem:[#allocation2 + $0x118] sm:$0xff] %v666
    %731 = vst [vmem:[#allocation2 + $0x120] sm:$0xff] %v667
    %732 = vst [vmem:[#allocation2 + $0x128] sm:$0xff] %v668
    %733 = vst [vmem:[#allocation2 + $0x130] sm:$0xff] %v669
    %734 = vst [vmem:[#allocation2 + $0x138] sm:$0xff] %v670
    %735 = vst [vmem:[#allocation2 + $0x140] sm:$0xff] %v671
    %736 = vst [vmem:[#allocation2 + $0x148] sm:$0xff] %v672
    %737 = vst [vmem:[#allocation2 + $0x150] sm:$0xff] %v673
    %738 = vst [vmem:[#allocation2 + $0x158] sm:$0xff] %v674
    %739 = vst [vmem:[#allocation2 + $0x160] sm:$0xff] %v675
    %740 = vst [vmem:[#allocation2 + $0x168] sm:$0xff] %v676
    %741 = vst [vmem:[#allocation2 + $0x170] sm:$0xff] %v677
    %742 = vst [vmem:[#allocation2 + $0x178] sm:$0xff] %v678
    %743 = vst [vmem:[#allocation2 + $0x180] sm:$0xff] %v679
    %744 = vst [vmem:[#allocation2 + $0x188] sm:$0xff] %v680
    %745 = vst [vmem:[#allocation2 + $0x190] sm:$0xff] %v681
    %746 = vst [vmem:[#allocation2 + $0x198] sm:$0xff] %v682
    %747 = vst [vmem:[#allocation2 + $0x1a0] sm:$0xff] %v683
    %748 = vst [vmem:[#allocation2 + $0x1a8] sm:$0xff] %v684
    %749 = vst [vmem:[#allocation2 + $0x1b0] sm:$0xff] %v685
    %750 = vst [vmem:[#allocation2 + $0x1b8] sm:$0xff] %v686
    %751 = vst [vmem:[#allocation2 + $0x1c0] sm:$0xff] %v687
    %752 = vst [vmem:[#allocation2 + $0x1c8] sm:$0xff] %v688
    %753 = vst [vmem:[#allocation2 + $0x1d0] sm:$0xff] %v689
    %754 = vst [vmem:[#allocation2 + $0x1d8] sm:$0xff] %v690
    %755 = vst [vmem:[#allocation2 + $0x1e0] sm:$0xff] %v691
    %756 = vst [vmem:[#allocation2 + $0x1e8] sm:$0xff] %v692
    %757 = vst [vmem:[#allocation2 + $0x1f0] sm:$0xff] %v693
    %758 = vst [vmem:[#allocation2 + $0x1f8] sm:$0xff] %v694
    // Predicated region
    $region46: #{tpu_custom_call.1} parent=1 // pred_check
      %p759 = pneg %p97
    $region47: #{tpu_custom_call.1} parent=1 // pred_check_branch
      %761 = sbr.rel (%p759) target = $region49
    $region48: #{tpu_custom_call.1} parent=1 // pred_region
      %v762 = vld [vmem:[#allocation2] sm:$0xff]
      %v763 = vld [vmem:[#allocation2 + $0x8] sm:$0xff]
      %v764 = vld [vmem:[#allocation2 + $0x10] sm:$0xff]
      %v765 = vld [vmem:[#allocation2 + $0x18] sm:$0xff]
      %v766 = vld [vmem:[#allocation2 + $0x20] sm:$0xff]
      %v767 = vld [vmem:[#allocation2 + $0x28] sm:$0xff]
      %v768 = vld [vmem:[#allocation2 + $0x30] sm:$0xff]
      %v769 = vld [vmem:[#allocation2 + $0x38] sm:$0xff]
      %v770 = vld [vmem:[#allocation2 + $0x40] sm:$0xff]
      %v771 = vld [vmem:[#allocation2 + $0x48] sm:$0xff]
      %v772 = vld [vmem:[#allocation2 + $0x50] sm:$0xff]
      %v773 = vld [vmem:[#allocation2 + $0x58] sm:$0xff]
      %v774 = vld [vmem:[#allocation2 + $0x60] sm:$0xff]
      %v775 = vld [vmem:[#allocation2 + $0x68] sm:$0xff]
      %v776 = vld [vmem:[#allocation2 + $0x70] sm:$0xff]
      %v777 = vld [vmem:[#allocation2 + $0x78] sm:$0xff]
      %v778 = vld [vmem:[#allocation2 + $0x80] sm:$0xff]
      %v779 = vld [vmem:[#allocation2 + $0x88] sm:$0xff]
      %v780 = vld [vmem:[#allocation2 + $0x90] sm:$0xff]
      %v781 = vld [vmem:[#allocation2 + $0x98] sm:$0xff]
      %v782 = vld [vmem:[#allocation2 + $0xa0] sm:$0xff]
      %v783 = vld [vmem:[#allocation2 + $0xa8] sm:$0xff]
      %v784 = vld [vmem:[#allocation2 + $0xb0] sm:$0xff]
      %v785 = vld [vmem:[#allocation2 + $0xb8] sm:$0xff]
      %v786 = vld [vmem:[#allocation2 + $0xc0] sm:$0xff]
      %v787 = vld [vmem:[#allocation2 + $0xc8] sm:$0xff]
      %v788 = vld [vmem:[#allocation2 + $0xd0] sm:$0xff]
      %v789 = vld [vmem:[#allocation2 + $0xd8] sm:$0xff]
      %v790 = vld [vmem:[#allocation2 + $0xe0] sm:$0xff]
      %v791 = vld [vmem:[#allocation2 + $0xe8] sm:$0xff]
      %v792 = vld [vmem:[#allocation2 + $0xf0] sm:$0xff]
      %v793 = vld [vmem:[#allocation2 + $0xf8] sm:$0xff]
      %v794 = vld [vmem:[#allocation2 + $0x100] sm:$0xff]
      %v795 = vld [vmem:[#allocation2 + $0x108] sm:$0xff]
      %v796 = vld [vmem:[#allocation2 + $0x110] sm:$0xff]
      %v797 = vld [vmem:[#allocation2 + $0x118] sm:$0xff]
      %v798 = vld [vmem:[#allocation2 + $0x120] sm:$0xff]
      %v799 = vld [vmem:[#allocation2 + $0x128] sm:$0xff]
      %v800 = vld [vmem:[#allocation2 + $0x130] sm:$0xff]
      %v801 = vld [vmem:[#allocation2 + $0x138] sm:$0xff]
      %v802 = vld [vmem:[#allocation2 + $0x140] sm:$0xff]
      %v803 = vld [vmem:[#allocation2 + $0x148] sm:$0xff]
      %v804 = vld [vmem:[#allocation2 + $0x150] sm:$0xff]
      %v805 = vld [vmem:[#allocation2 + $0x158] sm:$0xff]
      %v806 = vld [vmem:[#allocation2 + $0x160] sm:$0xff]
      %v807 = vld [vmem:[#allocation2 + $0x168] sm:$0xff]
      %v808 = vld [vmem:[#allocation2 + $0x170] sm:$0xff]
      %v809 = vld [vmem:[#allocation2 + $0x178] sm:$0xff]
      %v810 = vld [vmem:[#allocation2 + $0x180] sm:$0xff]
      %v811 = vld [vmem:[#allocation2 + $0x188] sm:$0xff]
      %v812 = vld [vmem:[#allocation2 + $0x190] sm:$0xff]
      %v813 = vld [vmem:[#allocation2 + $0x198] sm:$0xff]
      %v814 = vld [vmem:[#allocation2 + $0x1a0] sm:$0xff]
      %v815 = vld [vmem:[#allocation2 + $0x1a8] sm:$0xff]
      %v816 = vld [vmem:[#allocation2 + $0x1b0] sm:$0xff]
      %v817 = vld [vmem:[#allocation2 + $0x1b8] sm:$0xff]
      %v818 = vld [vmem:[#allocation2 + $0x1c0] sm:$0xff]
      %v819 = vld [vmem:[#allocation2 + $0x1c8] sm:$0xff]
      %v820 = vld [vmem:[#allocation2 + $0x1d0] sm:$0xff]
      %v821 = vld [vmem:[#allocation2 + $0x1d8] sm:$0xff]
      %v822 = vld [vmem:[#allocation2 + $0x1e0] sm:$0xff]
      %v823 = vld [vmem:[#allocation2 + $0x1e8] sm:$0xff]
      %v824 = vld [vmem:[#allocation2 + $0x1f0] sm:$0xff]
      %v825 = vld [vmem:[#allocation2 + $0x1f8] sm:$0xff]
      %v826 = vld [vmem:[#allocation11] sm:$0x3]
      %v828 = vperm.slane %v826, 0
      %v829 = vperm.slane %v826, 1
      %v832 = vadd.f32 %v762, %v828
      %v833 = vadd.f32 %v763, %v829
      %v834 = vadd.f32 %v764, %v828
      %v835 = vadd.f32 %v765, %v829
      %v836 = vadd.f32 %v766, %v828
      %v837 = vadd.f32 %v767, %v829
      %v838 = vadd.f32 %v768, %v828
      %v839 = vadd.f32 %v769, %v829
      %v840 = vadd.f32 %v770, %v828
      %v841 = vadd.f32 %v771, %v829
      %v842 = vadd.f32 %v772, %v828
      %v843 = vadd.f32 %v773, %v829
      %v844 = vadd.f32 %v774, %v828
      %v845 = vadd.f32 %v775, %v829
      %v846 = vadd.f32 %v776, %v828
      %v847 = vadd.f32 %v777, %v829
      %v848 = vadd.f32 %v778, %v828
      %v849 = vadd.f32 %v779, %v829
      %v850 = vadd.f32 %v780, %v828
      %v851 = vadd.f32 %v781, %v829
      %v852 = vadd.f32 %v782, %v828
      %v853 = vadd.f32 %v783, %v829
      %v854 = vadd.f32 %v784, %v828
      %v855 = vadd.f32 %v785, %v829
      %v856 = vadd.f32 %v786, %v828
      %v857 = vadd.f32 %v787, %v829
      %v858 = vadd.f32 %v788, %v828
      %v859 = vadd.f32 %v789, %v829
      %v860 = vadd.f32 %v790, %v828
      %v861 = vadd.f32 %v791, %v829
      %v862 = vadd.f32 %v792, %v828
      %v863 = vadd.f32 %v793, %v829
      %v864 = vadd.f32 %v794, %v828
      %v865 = vadd.f32 %v795, %v829
      %v866 = vadd.f32 %v796, %v828
      %v867 = vadd.f32 %v797, %v829
      %v868 = vadd.f32 %v798, %v828
      %v869 = vadd.f32 %v799, %v829
      %v870 = vadd.f32 %v800, %v828
      %v871 = vadd.f32 %v801, %v829
      %v872 = vadd.f32 %v802, %v828
      %v873 = vadd.f32 %v803, %v829
      %v874 = vadd.f32 %v804, %v828
      %v875 = vadd.f32 %v805, %v829
      %v876 = vadd.f32 %v806, %v828
      %v877 = vadd.f32 %v807, %v829
      %v878 = vadd.f32 %v808, %v828
      %v879 = vadd.f32 %v809, %v829
      %v880 = vadd.f32 %v810, %v828
      %v881 = vadd.f32 %v811, %v829
      %v882 = vadd.f32 %v812, %v828
      %v883 = vadd.f32 %v813, %v829
      %v884 = vadd.f32 %v814, %v828
      %v885 = vadd.f32 %v815, %v829
      %v886 = vadd.f32 %v816, %v828
      %v887 = vadd.f32 %v817, %v829
      %v888 = vadd.f32 %v818, %v828
      %v889 = vadd.f32 %v819, %v829
      %v890 = vadd.f32 %v820, %v828
      %v891 = vadd.f32 %v821, %v829
      %v892 = vadd.f32 %v822, %v828
      %v893 = vadd.f32 %v823, %v829
      %v894 = vadd.f32 %v824, %v828
      %v895 = vadd.f32 %v825, %v829
      %vm896 = vcmp.gt.f32.partialorder %v832, 0.0
      %vm897 = vcmp.gt.f32.partialorder %v833, 0.0
      %vm898 = vcmp.gt.f32.partialorder %v834, 0.0
      %vm899 = vcmp.gt.f32.partialorder %v835, 0.0
      %vm900 = vcmp.gt.f32.partialorder %v836, 0.0
      %vm901 = vcmp.gt.f32.partialorder %v837, 0.0
      %vm902 = vcmp.gt.f32.partialorder %v838, 0.0
      %vm903 = vcmp.gt.f32.partialorder %v839, 0.0
      %vm904 = vcmp.gt.f32.partialorder %v840, 0.0
      %vm905 = vcmp.gt.f32.partialorder %v841, 0.0
      %vm906 = vcmp.gt.f32.partialorder %v842, 0.0
      %vm907 = vcmp.gt.f32.partialorder %v843, 0.0
      %vm908 = vcmp.gt.f32.partialorder %v844, 0.0
      %vm909 = vcmp.gt.f32.partialorder %v845, 0.0
      %vm910 = vcmp.gt.f32.partialorder %v846, 0.0
      %vm911 = vcmp.gt.f32.partialorder %v847, 0.0
      %vm912 = vcmp.gt.f32.partialorder %v848, 0.0
      %vm913 = vcmp.gt.f32.partialorder %v849, 0.0
      %vm914 = vcmp.gt.f32.partialorder %v850, 0.0
      %vm915 = vcmp.gt.f32.partialorder %v851, 0.0
      %vm916 = vcmp.gt.f32.partialorder %v852, 0.0
      %vm917 = vcmp.gt.f32.partialorder %v853, 0.0
      %vm918 = vcmp.gt.f32.partialorder %v854, 0.0
      %vm919 = vcmp.gt.f32.partialorder %v855, 0.0
      %vm920 = vcmp.gt.f32.partialorder %v856, 0.0
      %vm921 = vcmp.gt.f32.partialorder %v857, 0.0
      %vm922 = vcmp.gt.f32.partialorder %v858, 0.0
      %vm923 = vcmp.gt.f32.partialorder %v859, 0.0
      %vm924 = vcmp.gt.f32.partialorder %v860, 0.0
      %vm925 = vcmp.gt.f32.partialorder %v861, 0.0
      %vm926 = vcmp.gt.f32.partialorder %v862, 0.0
      %vm927 = vcmp.gt.f32.partialorder %v863, 0.0
      %vm928 = vcmp.gt.f32.partialorder %v864, 0.0
      %vm929 = vcmp.gt.f32.partialorder %v865, 0.0
      %vm930 = vcmp.gt.f32.partialorder %v866, 0.0
      %vm931 = vcmp.gt.f32.partialorder %v867, 0.0
      %vm932 = vcmp.gt.f32.partialorder %v868, 0.0
      %vm933 = vcmp.gt.f32.partialorder %v869, 0.0
      %vm934 = vcmp.gt.f32.partialorder %v870, 0.0
      %vm935 = vcmp.gt.f32.partialorder %v871, 0.0
      %vm936 = vcmp.gt.f32.partialorder %v872, 0.0
      %vm937 = vcmp.gt.f32.partialorder %v873, 0.0
      %vm938 = vcmp.gt.f32.partialorder %v874, 0.0
      %vm939 = vcmp.gt.f32.partialorder %v875, 0.0
      %vm940 = vcmp.gt.f32.partialorder %v876, 0.0
      %vm941 = vcmp.gt.f32.partialorder %v877, 0.0
      %vm942 = vcmp.gt.f32.partialorder %v878, 0.0
      %vm943 = vcmp.gt.f32.partialorder %v879, 0.0
      %vm944 = vcmp.gt.f32.partialorder %v880, 0.0
      %vm945 = vcmp.gt.f32.partialorder %v881, 0.0
      %vm946 = vcmp.gt.f32.partialorder %v882, 0.0
      %vm947 = vcmp.gt.f32.partialorder %v883, 0.0
      %vm948 = vcmp.gt.f32.partialorder %v884, 0.0
      %vm949 = vcmp.gt.f32.partialorder %v885, 0.0
      %vm950 = vcmp.gt.f32.partialorder %v886, 0.0
      %vm951 = vcmp.gt.f32.partialorder %v887, 0.0
      %vm952 = vcmp.gt.f32.partialorder %v888, 0.0
      %vm953 = vcmp.gt.f32.partialorder %v889, 0.0
      %vm954 = vcmp.gt.f32.partialorder %v890, 0.0
      %vm955 = vcmp.gt.f32.partialorder %v891, 0.0
      %vm956 = vcmp.gt.f32.partialorder %v892, 0.0
      %vm957 = vcmp.gt.f32.partialorder %v893, 0.0
      %vm958 = vcmp.gt.f32.partialorder %v894, 0.0
      %vm959 = vcmp.gt.f32.partialorder %v895, 0.0
      %v960 = vmul.f32 %v832, 1.442695
      %v961 = vpow.pop %v960
      %v962 = vmul.f32 %v833, 1.442695
      %v963 = vpow.pop %v962
      %v964 = vmul.f32 %v834, 1.442695
      %v965 = vpow.pop %v964
      %v966 = vmul.f32 %v835, 1.442695
      %v967 = vpow.pop %v966
      %v968 = vmul.f32 %v836, 1.442695
      %v969 = vpow.pop %v968
      %v970 = vmul.f32 %v837, 1.442695
      %v971 = vpow.pop %v970
      %v972 = vmul.f32 %v838, 1.442695
      %v973 = vpow.pop %v972
      %v974 = vmul.f32 %v839, 1.442695
      %v975 = vpow.pop %v974
      %v976 = vmul.f32 %v840, 1.442695
      %v977 = vpow.pop %v976
      %v978 = vmul.f32 %v841, 1.442695
      %v979 = vpow.pop %v978
      %v980 = vmul.f32 %v842, 1.442695
      %v981 = vpow.pop %v980
      %v982 = vmul.f32 %v843, 1.442695
      %v983 = vpow.pop %v982
      %v984 = vmul.f32 %v844, 1.442695
      %v985 = vpow.pop %v984
      %v986 = vmul.f32 %v845, 1.442695
      %v987 = vpow.pop %v986
      %v988 = vmul.f32 %v846, 1.442695
      %v989 = vpow.pop %v988
      %v990 = vmul.f32 %v847, 1.442695
      %v991 = vpow.pop %v990
      %v992 = vmul.f32 %v848, 1.442695
      %v993 = vpow.pop %v992
      %v994 = vmul.f32 %v849, 1.442695
      %v995 = vpow.pop %v994
      %v996 = vmul.f32 %v850, 1.442695
      %v997 = vpow.pop %v996
      %v998 = vmul.f32 %v851, 1.442695
      %v999 = vpow.pop %v998
      %v1000 = vmul.f32 %v852, 1.442695
      %v1001 = vpow.pop %v1000
      %v1002 = vmul.f32 %v853, 1.442695
      %v1003 = vpow.pop %v1002
      %v1004 = vmul.f32 %v854, 1.442695
      %v1005 = vpow.pop %v1004
      %v1006 = vmul.f32 %v855, 1.442695
      %v1007 = vpow.pop %v1006
      %v1008 = vmul.f32 %v856, 1.442695
      %v1009 = vpow.pop %v1008
      %v1010 = vmul.f32 %v857, 1.442695
      %v1011 = vpow.pop %v1010
      %v1012 = vmul.f32 %v858, 1.442695
      %v1013 = vpow.pop %v1012
      %v1014 = vmul.f32 %v859, 1.442695
      %v1015 = vpow.pop %v1014
      %v1016 = vmul.f32 %v860, 1.442695
      %v1017 = vpow.pop %v1016
      %v1018 = vmul.f32 %v861, 1.442695
      %v1019 = vpow.pop %v1018
      %v1020 = vmul.f32 %v862, 1.442695
      %v1021 = vpow.pop %v1020
      %v1022 = vmul.f32 %v863, 1.442695
      %v1023 = vpow.pop %v1022
      %v1024 = vmul.f32 %v864, 1.442695
      %v1025 = vpow.pop %v1024
      %v1026 = vmul.f32 %v865, 1.442695
      %v1027 = vpow.pop %v1026
      %v1028 = vmul.f32 %v866, 1.442695
      %v1029 = vpow.pop %v1028
      %v1030 = vmul.f32 %v867, 1.442695
      %v1031 = vpow.pop %v1030
      %v1032 = vmul.f32 %v868, 1.442695
      %v1033 = vpow.pop %v1032
      %v1034 = vmul.f32 %v869, 1.442695
      %v1035 = vpow.pop %v1034
      %v1036 = vmul.f32 %v870, 1.442695
      %v1037 = vpow.pop %v1036
      %v1038 = vmul.f32 %v871, 1.442695
      %v1039 = vpow.pop %v1038
      %v1040 = vmul.f32 %v872, 1.442695
      %v1041 = vpow.pop %v1040
      %v1042 = vmul.f32 %v873, 1.442695
      %v1043 = vpow.pop %v1042
      %v1044 = vmul.f32 %v874, 1.442695
      %v1045 = vpow.pop %v1044
      %v1046 = vmul.f32 %v875, 1.442695
      %v1047 = vpow.pop %v1046
      %v1048 = vmul.f32 %v876, 1.442695
      %v1049 = vpow.pop %v1048
      %v1050 = vmul.f32 %v877, 1.442695
      %v1051 = vpow.pop %v1050
      %v1052 = vmul.f32 %v878, 1.442695
      %v1053 = vpow.pop %v1052
      %v1054 = vmul.f32 %v879, 1.442695
      %v1055 = vpow.pop %v1054
      %v1056 = vmul.f32 %v880, 1.442695
      %v1057 = vpow.pop %v1056
      %v1058 = vmul.f32 %v881, 1.442695
      %v1059 = vpow.pop %v1058
      %v1060 = vmul.f32 %v882, 1.442695
      %v1061 = vpow.pop %v1060
      %v1062 = vmul.f32 %v883, 1.442695
      %v1063 = vpow.pop %v1062
      %v1064 = vmul.f32 %v884, 1.442695
      %v1065 = vpow.pop %v1064
      %v1066 = vmul.f32 %v885, 1.442695
      %v1067 = vpow.pop %v1066
      %v1068 = vmul.f32 %v886, 1.442695
      %v1069 = vpow.pop %v1068
      %v1070 = vmul.f32 %v887, 1.442695
      %v1071 = vpow.pop %v1070
      %v1072 = vmul.f32 %v888, 1.442695
      %v1073 = vpow.pop %v1072
      %v1074 = vmul.f32 %v889, 1.442695
      %v1075 = vpow.pop %v1074
      %v1076 = vmul.f32 %v890, 1.442695
      %v1077 = vpow.pop %v1076
      %v1078 = vmul.f32 %v891, 1.442695
      %v1079 = vpow.pop %v1078
      %v1080 = vmul.f32 %v892, 1.442695
      %v1081 = vpow.pop %v1080
      %v1082 = vmul.f32 %v893, 1.442695
      %v1083 = vpow.pop %v1082
      %v1084 = vmul.f32 %v894, 1.442695
      %v1085 = vpow.pop %v1084
      %v1086 = vmul.f32 %v895, 1.442695
      %v1087 = vpow.pop %v1086
      %v1088 = vsub.f32 %v961, 1.0
      %v1089 = vsub.f32 %v963, 1.0
      %v1090 = vsub.f32 %v965, 1.0
      %v1091 = vsub.f32 %v967, 1.0
      %v1092 = vsub.f32 %v969, 1.0
      %v1093 = vsub.f32 %v971, 1.0
      %v1094 = vsub.f32 %v973, 1.0
      %v1095 = vsub.f32 %v975, 1.0
      %v1096 = vsub.f32 %v977, 1.0
      %v1097 = vsub.f32 %v979, 1.0
      %v1098 = vsub.f32 %v981, 1.0
      %v1099 = vsub.f32 %v983, 1.0
      %v1100 = vsub.f32 %v985, 1.0
      %v1101 = vsub.f32 %v987, 1.0
      %v1102 = vsub.f32 %v989, 1.0
      %v1103 = vsub.f32 %v991, 1.0
      %v1104 = vsub.f32 %v993, 1.0
      %v1105 = vsub.f32 %v995, 1.0
      %v1106 = vsub.f32 %v997, 1.0
      %v1107 = vsub.f32 %v999, 1.0
      %v1108 = vsub.f32 %v1001, 1.0
      %v1109 = vsub.f32 %v1003, 1.0
      %v1110 = vsub.f32 %v1005, 1.0
      %v1111 = vsub.f32 %v1007, 1.0
      %v1112 = vsub.f32 %v1009, 1.0
      %v1113 = vsub.f32 %v1011, 1.0
      %v1114 = vsub.f32 %v1013, 1.0
      %v1115 = vsub.f32 %v1015, 1.0
      %v1116 = vsub.f32 %v1017, 1.0
      %v1117 = vsub.f32 %v1019, 1.0
      %v1118 = vsub.f32 %v1021, 1.0
      %v1119 = vsub.f32 %v1023, 1.0
      %v1120 = vsub.f32 %v1025, 1.0
      %v1121 = vsub.f32 %v1027, 1.0
      %v1122 = vsub.f32 %v1029, 1.0
      %v1123 = vsub.f32 %v1031, 1.0
      %v1124 = vsub.f32 %v1033, 1.0
      %v1125 = vsub.f32 %v1035, 1.0
      %v1126 = vsub.f32 %v1037, 1.0
      %v1127 = vsub.f32 %v1039, 1.0
      %v1128 = vsub.f32 %v1041, 1.0
      %v1129 = vsub.f32 %v1043, 1.0
      %v1130 = vsub.f32 %v1045, 1.0
      %v1131 = vsub.f32 %v1047, 1.0
      %v1132 = vsub.f32 %v1049, 1.0
      %v1133 = vsub.f32 %v1051, 1.0
      %v1134 = vsub.f32 %v1053, 1.0
      %v1135 = vsub.f32 %v1055, 1.0
      %v1136 = vsub.f32 %v1057, 1.0
      %v1137 = vsub.f32 %v1059, 1.0
      %v1138 = vsub.f32 %v1061, 1.0
      %v1139 = vsub.f32 %v1063, 1.0
      %v1140 = vsub.f32 %v1065, 1.0
      %v1141 = vsub.f32 %v1067, 1.0
      %v1142 = vsub.f32 %v1069, 1.0
      %v1143 = vsub.f32 %v1071, 1.0
      %v1144 = vsub.f32 %v1073, 1.0
      %v1145 = vsub.f32 %v1075, 1.0
      %v1146 = vsub.f32 %v1077, 1.0
      %v1147 = vsub.f32 %v1079, 1.0
      %v1148 = vsub.f32 %v1081, 1.0
      %v1149 = vsub.f32 %v1083, 1.0
      %v1150 = vsub.f32 %v1085, 1.0
      %v1151 = vsub.f32 %v1087, 1.0
      %v1152 = vmul.f32 %v1088, 1.6732632
      %v1153 = vmul.f32 %v1089, 1.6732632
      %v1154 = vmul.f32 %v1090, 1.6732632
      %v1155 = vmul.f32 %v1091, 1.6732632
      %v1156 = vmul.f32 %v1092, 1.6732632
      %v1157 = vmul.f32 %v1093, 1.6732632
      %v1158 = vmul.f32 %v1094, 1.6732632
      %v1159 = vmul.f32 %v1095, 1.6732632
      %v1160 = vmul.f32 %v1096, 1.6732632
      %v1161 = vmul.f32 %v1097, 1.6732632
      %v1162 = vmul.f32 %v1098, 1.6732632
      %v1163 = vmul.f32 %v1099, 1.6732632
      %v1164 = vmul.f32 %v1100, 1.6732632
      %v1165 = vmul.f32 %v1101, 1.6732632
      %v1166 = vmul.f32 %v1102, 1.6732632
      %v1167 = vmul.f32 %v1103, 1.6732632
      %v1168 = vmul.f32 %v1104, 1.6732632
      %v1169 = vmul.f32 %v1105, 1.6732632
      %v1170 = vmul.f32 %v1106, 1.6732632
      %v1171 = vmul.f32 %v1107, 1.6732632
      %v1172 = vmul.f32 %v1108, 1.6732632
      %v1173 = vmul.f32 %v1109, 1.6732632
      %v1174 = vmul.f32 %v1110, 1.6732632
      %v1175 = vmul.f32 %v1111, 1.6732632
      %v1176 = vmul.f32 %v1112, 1.6732632
      %v1177 = vmul.f32 %v1113, 1.6732632
      %v1178 = vmul.f32 %v1114, 1.6732632
      %v1179 = vmul.f32 %v1115, 1.6732632
      %v1180 = vmul.f32 %v1116, 1.6732632
      %v1181 = vmul.f32 %v1117, 1.6732632
      %v1182 = vmul.f32 %v1118, 1.6732632
      %v1183 = vmul.f32 %v1119, 1.6732632
      %v1184 = vmul.f32 %v1120, 1.6732632
      %v1185 = vmul.f32 %v1121, 1.6732632
      %v1186 = vmul.f32 %v1122, 1.6732632
      %v1187 = vmul.f32 %v1123, 1.6732632
      %v1188 = vmul.f32 %v1124, 1.6732632
      %v1189 = vmul.f32 %v1125, 1.6732632
      %v1190 = vmul.f32 %v1126, 1.6732632
      %v1191 = vmul.f32 %v1127, 1.6732632
      %v1192 = vmul.f32 %v1128, 1.6732632
      %v1193 = vmul.f32 %v1129, 1.6732632
      %v1194 = vmul.f32 %v1130, 1.6732632
      %v1195 = vmul.f32 %v1131, 1.6732632
      %v1196 = vmul.f32 %v1132, 1.6732632
      %v1197 = vmul.f32 %v1133, 1.6732632
      %v1198 = vmul.f32 %v1134, 1.6732632
      %v1199 = vmul.f32 %v1135, 1.6732632
      %v1200 = vmul.f32 %v1136, 1.6732632
      %v1201 = vmul.f32 %v1137, 1.6732632
      %v1202 = vmul.f32 %v1138, 1.6732632
      %v1203 = vmul.f32 %v1139, 1.6732632
      %v1204 = vmul.f32 %v1140, 1.6732632
      %v1205 = vmul.f32 %v1141, 1.6732632
      %v1206 = vmul.f32 %v1142, 1.6732632
      %v1207 = vmul.f32 %v1143, 1.6732632
      %v1208 = vmul.f32 %v1144, 1.6732632
      %v1209 = vmul.f32 %v1145, 1.6732632
      %v1210 = vmul.f32 %v1146, 1.6732632
      %v1211 = vmul.f32 %v1147, 1.6732632
      %v1212 = vmul.f32 %v1148, 1.6732632
      %v1213 = vmul.f32 %v1149, 1.6732632
      %v1214 = vmul.f32 %v1150, 1.6732632
      %v1215 = vmul.f32 %v1151, 1.6732632
      %v1216 = vsel %vm896, %v832, %v1152
      %v1217 = vsel %vm897, %v833, %v1153
      %v1218 = vsel %vm898, %v834, %v1154
      %v1219 = vsel %vm899, %v835, %v1155
      %v1220 = vsel %vm900, %v836, %v1156
      %v1221 = vsel %vm901, %v837, %v1157
      %v1222 = vsel %vm902, %v838, %v1158
      %v1223 = vsel %vm903, %v839, %v1159
      %v1224 = vsel %vm904, %v840, %v1160
      %v1225 = vsel %vm905, %v841, %v1161
      %v1226 = vsel %vm906, %v842, %v1162
      %v1227 = vsel %vm907, %v843, %v1163
      %v1228 = vsel %vm908, %v844, %v1164
      %v1229 = vsel %vm909, %v845, %v1165
      %v1230 = vsel %vm910, %v846, %v1166
      %v1231 = vsel %vm911, %v847, %v1167
      %v1232 = vsel %vm912, %v848, %v1168
      %v1233 = vsel %vm913, %v849, %v1169
      %v1234 = vsel %vm914, %v850, %v1170
      %v1235 = vsel %vm915, %v851, %v1171
      %v1236 = vsel %vm916, %v852, %v1172
      %v1237 = vsel %vm917, %v853, %v1173
      %v1238 = vsel %vm918, %v854, %v1174
      %v1239 = vsel %vm919, %v855, %v1175
      %v1240 = vsel %vm920, %v856, %v1176
      %v1241 = vsel %vm921, %v857, %v1177
      %v1242 = vsel %vm922, %v858, %v1178
      %v1243 = vsel %vm923, %v859, %v1179
      %v1244 = vsel %vm924, %v860, %v1180
      %v1245 = vsel %vm925, %v861, %v1181
      %v1246 = vsel %vm926, %v862, %v1182
      %v1247 = vsel %vm927, %v863, %v1183
      %v1248 = vsel %vm928, %v864, %v1184
      %v1249 = vsel %vm929, %v865, %v1185
      %v1250 = vsel %vm930, %v866, %v1186
      %v1251 = vsel %vm931, %v867, %v1187
      %v1252 = vsel %vm932, %v868, %v1188
      %v1253 = vsel %vm933, %v869, %v1189
      %v1254 = vsel %vm934, %v870, %v1190
      %v1255 = vsel %vm935, %v871, %v1191
      %v1256 = vsel %vm936, %v872, %v1192
      %v1257 = vsel %vm937, %v873, %v1193
      %v1258 = vsel %vm938, %v874, %v1194
      %v1259 = vsel %vm939, %v875, %v1195
      %v1260 = vsel %vm940, %v876, %v1196
      %v1261 = vsel %vm941, %v877, %v1197
      %v1262 = vsel %vm942, %v878, %v1198
      %v1263 = vsel %vm943, %v879, %v1199
      %v1264 = vsel %vm944, %v880, %v1200
      %v1265 = vsel %vm945, %v881, %v1201
      %v1266 = vsel %vm946, %v882, %v1202
      %v1267 = vsel %vm947, %v883, %v1203
      %v1268 = vsel %vm948, %v884, %v1204
      %v1269 = vsel %vm949, %v885, %v1205
      %v1270 = vsel %vm950, %v886, %v1206
      %v1271 = vsel %vm951, %v887, %v1207
      %v1272 = vsel %vm952, %v888, %v1208
      %v1273 = vsel %vm953, %v889, %v1209
      %v1274 = vsel %vm954, %v890, %v1210
      %v1275 = vsel %vm955, %v891, %v1211
      %v1276 = vsel %vm956, %v892, %v1212
      %v1277 = vsel %vm957, %v893, %v1213
      %v1278 = vsel %vm958, %v894, %v1214
      %v1279 = vsel %vm959, %v895, %v1215
      %v1280 = vmul.f32 %v1216, 1.050701
      %v1281 = vmul.f32 %v1217, 1.050701
      %v1282 = vmul.f32 %v1218, 1.050701
      %v1283 = vmul.f32 %v1219, 1.050701
      %v1284 = vmul.f32 %v1220, 1.050701
      %v1285 = vmul.f32 %v1221, 1.050701
      %v1286 = vmul.f32 %v1222, 1.050701
      %v1287 = vmul.f32 %v1223, 1.050701
      %v1288 = vmul.f32 %v1224, 1.050701
      %v1289 = vmul.f32 %v1225, 1.050701
      %v1290 = vmul.f32 %v1226, 1.050701
      %v1291 = vmul.f32 %v1227, 1.050701
      %v1292 = vmul.f32 %v1228, 1.050701
      %v1293 = vmul.f32 %v1229, 1.050701
      %v1294 = vmul.f32 %v1230, 1.050701
      %v1295 = vmul.f32 %v1231, 1.050701
      %v1296 = vmul.f32 %v1232, 1.050701
      %v1297 = vmul.f32 %v1233, 1.050701
      %v1298 = vmul.f32 %v1234, 1.050701
      %v1299 = vmul.f32 %v1235, 1.050701
      %v1300 = vmul.f32 %v1236, 1.050701
      %v1301 = vmul.f32 %v1237, 1.050701
      %v1302 = vmul.f32 %v1238, 1.050701
      %v1303 = vmul.f32 %v1239, 1.050701
      %v1304 = vmul.f32 %v1240, 1.050701
      %v1305 = vmul.f32 %v1241, 1.050701
      %v1306 = vmul.f32 %v1242, 1.050701
      %v1307 = vmul.f32 %v1243, 1.050701
      %v1308 = vmul.f32 %v1244, 1.050701
      %v1309 = vmul.f32 %v1245, 1.050701
      %v1310 = vmul.f32 %v1246, 1.050701
      %v1311 = vmul.f32 %v1247, 1.050701
      %v1312 = vmul.f32 %v1248, 1.050701
      %v1313 = vmul.f32 %v1249, 1.050701
      %v1314 = vmul.f32 %v1250, 1.050701
      %v1315 = vmul.f32 %v1251, 1.050701
      %v1316 = vmul.f32 %v1252, 1.050701
      %v1317 = vmul.f32 %v1253, 1.050701
      %v1318 = vmul.f32 %v1254, 1.050701
      %v1319 = vmul.f32 %v1255, 1.050701
      %v1320 = vmul.f32 %v1256, 1.050701
      %v1321 = vmul.f32 %v1257, 1.050701
      %v1322 = vmul.f32 %v1258, 1.050701
      %v1323 = vmul.f32 %v1259, 1.050701
      %v1324 = vmul.f32 %v1260, 1.050701
      %v1325 = vmul.f32 %v1261, 1.050701
      %v1326 = vmul.f32 %v1262, 1.050701
      %v1327 = vmul.f32 %v1263, 1.050701
      %v1328 = vmul.f32 %v1264, 1.050701
      %v1329 = vmul.f32 %v1265, 1.050701
      %v1330 = vmul.f32 %v1266, 1.050701
      %v1331 = vmul.f32 %v1267, 1.050701
      %v1332 = vmul.f32 %v1268, 1.050701
      %v1333 = vmul.f32 %v1269, 1.050701
      %v1334 = vmul.f32 %v1270, 1.050701
      %v1335 = vmul.f32 %v1271, 1.050701
      %v1336 = vmul.f32 %v1272, 1.050701
      %v1337 = vmul.f32 %v1273, 1.050701
      %v1338 = vmul.f32 %v1274, 1.050701
      %v1339 = vmul.f32 %v1275, 1.050701
      %v1340 = vmul.f32 %v1276, 1.050701
      %v1341 = vmul.f32 %v1277, 1.050701
      %v1342 = vmul.f32 %v1278, 1.050701
      %v1343 = vmul.f32 %v1279, 1.050701
      %v1344 = vpack.c.bf16 %v1282, %v1280
      %v1345 = vpack.c.bf16 %v1283, %v1281
      %v1346 = vpack.c.bf16 %v1286, %v1284
      %v1347 = vpack.c.bf16 %v1287, %v1285
      %v1348 = vpack.c.bf16 %v1290, %v1288
      %v1349 = vpack.c.bf16 %v1291, %v1289
      %v1350 = vpack.c.bf16 %v1294, %v1292
      %v1351 = vpack.c.bf16 %v1295, %v1293
      %v1352 = vpack.c.bf16 %v1298, %v1296
      %v1353 = vpack.c.bf16 %v1299, %v1297
      %v1354 = vpack.c.bf16 %v1302, %v1300
      %v1355 = vpack.c.bf16 %v1303, %v1301
      %v1356 = vpack.c.bf16 %v1306, %v1304
      %v1357 = vpack.c.bf16 %v1307, %v1305
      %v1358 = vpack.c.bf16 %v1310, %v1308
      %v1359 = vpack.c.bf16 %v1311, %v1309
      %v1360 = vpack.c.bf16 %v1314, %v1312
      %v1361 = vpack.c.bf16 %v1315, %v1313
      %v1362 = vpack.c.bf16 %v1318, %v1316
      %v1363 = vpack.c.bf16 %v1319, %v1317
      %v1364 = vpack.c.bf16 %v1322, %v1320
      %v1365 = vpack.c.bf16 %v1323, %v1321
      %v1366 = vpack.c.bf16 %v1326, %v1324
      %v1367 = vpack.c.bf16 %v1327, %v1325
      %v1368 = vpack.c.bf16 %v1330, %v1328
      %v1369 = vpack.c.bf16 %v1331, %v1329
      %v1370 = vpack.c.bf16 %v1334, %v1332
      %v1371 = vpack.c.bf16 %v1335, %v1333
      %v1372 = vpack.c.bf16 %v1338, %v1336
      %v1373 = vpack.c.bf16 %v1339, %v1337
      %v1374 = vpack.c.bf16 %v1342, %v1340
      %v1375 = vpack.c.bf16 %v1343, %v1341
      %v1376 = vld [vmem:[#allocation8] sm:$0xff]
      %v1377 = vld [vmem:[#allocation8 + $0x8] sm:$0xff]
      %v1378 = vld [vmem:[#allocation8 + $0x10] sm:$0xff]
      %v1379 = vld [vmem:[#allocation8 + $0x18] sm:$0xff]
      %v1380 = vld [vmem:[#allocation8 + $0x20] sm:$0xff]
      %v1381 = vld [vmem:[#allocation8 + $0x28] sm:$0xff]
      %v1382 = vld [vmem:[#allocation8 + $0x30] sm:$0xff]
      %v1383 = vld [vmem:[#allocation8 + $0x38] sm:$0xff]
      %v1384 = vld [vmem:[#allocation8 + $0x40] sm:$0xff]
      %v1385 = vld [vmem:[#allocation8 + $0x48] sm:$0xff]
      %v1386 = vld [vmem:[#allocation8 + $0x50] sm:$0xff]
      %v1387 = vld [vmem:[#allocation8 + $0x58] sm:$0xff]
      %v1388 = vld [vmem:[#allocation8 + $0x60] sm:$0xff]
      %v1389 = vld [vmem:[#allocation8 + $0x68] sm:$0xff]
      %v1390 = vld [vmem:[#allocation8 + $0x70] sm:$0xff]
      %v1391 = vld [vmem:[#allocation8 + $0x78] sm:$0xff]
      %v1392 = vld [vmem:[#allocation8 + $0x80] sm:$0xff]
      %v1393 = vld [vmem:[#allocation8 + $0x88] sm:$0xff]
      %v1394 = vld [vmem:[#allocation8 + $0x90] sm:$0xff]
      %v1395 = vld [vmem:[#allocation8 + $0x98] sm:$0xff]
      %v1396 = vld [vmem:[#allocation8 + $0xa0] sm:$0xff]
      %v1397 = vld [vmem:[#allocation8 + $0xa8] sm:$0xff]
      %v1398 = vld [vmem:[#allocation8 + $0xb0] sm:$0xff]
      %v1399 = vld [vmem:[#allocation8 + $0xb8] sm:$0xff]
      %v1400 = vld [vmem:[#allocation8 + $0xc0] sm:$0xff]
      %v1401 = vld [vmem:[#allocation8 + $0xc8] sm:$0xff]
      %v1402 = vld [vmem:[#allocation8 + $0xd0] sm:$0xff]
      %v1403 = vld [vmem:[#allocation8 + $0xd8] sm:$0xff]
      %v1404 = vld [vmem:[#allocation8 + $0xe0] sm:$0xff]
      %v1405 = vld [vmem:[#allocation8 + $0xe8] sm:$0xff]
      %v1406 = vld [vmem:[#allocation8 + $0xf0] sm:$0xff]
      %v1407 = vld [vmem:[#allocation8 + $0xf8] sm:$0xff]
      %v1408 = vld [vmem:[#allocation11 + $0x2] sm:$0x3]
      %v1410 = vperm.slane %v1408, 0
      %v1411 = vperm.slane %v1408, 1
      %v1446 = vunpack.c.l.b16 %v1376
      %v1447 = vunpack.c.h.b16 %v1376
      %v1448 = vunpack.c.l.b16 %v1377
      %v1449 = vunpack.c.h.b16 %v1377
      %v1450 = vunpack.c.l.b16 %v1378
      %v1451 = vunpack.c.h.b16 %v1378
      %v1452 = vunpack.c.l.b16 %v1379
      %v1453 = vunpack.c.h.b16 %v1379
      %v1454 = vunpack.c.l.b16 %v1380
      %v1455 = vunpack.c.h.b16 %v1380
      %v1456 = vunpack.c.l.b16 %v1381
      %v1457 = vunpack.c.h.b16 %v1381
      %v1458 = vunpack.c.l.b16 %v1382
      %v1459 = vunpack.c.h.b16 %v1382
      %v1460 = vunpack.c.l.b16 %v1383
      %v1461 = vunpack.c.h.b16 %v1383
      %v1462 = vunpack.c.l.b16 %v1384
      %v1463 = vunpack.c.h.b16 %v1384
      %v1464 = vunpack.c.l.b16 %v1385
      %v1465 = vunpack.c.h.b16 %v1385
      %v1466 = vunpack.c.l.b16 %v1386
      %v1467 = vunpack.c.h.b16 %v1386
      %v1468 = vunpack.c.l.b16 %v1387
      %v1469 = vunpack.c.h.b16 %v1387
      %v1470 = vunpack.c.l.b16 %v1388
      %v1471 = vunpack.c.h.b16 %v1388
      %v1472 = vunpack.c.l.b16 %v1389
      %v1473 = vunpack.c.h.b16 %v1389
      %v1474 = vunpack.c.l.b16 %v1390
      %v1475 = vunpack.c.h.b16 %v1390
      %v1476 = vunpack.c.l.b16 %v1391
      %v1477 = vunpack.c.h.b16 %v1391
      %v1478 = vunpack.c.l.b16 %v1392
      %v1479 = vunpack.c.h.b16 %v1392
      %v1480 = vunpack.c.l.b16 %v1393
      %v1481 = vunpack.c.h.b16 %v1393
      %v1482 = vunpack.c.l.b16 %v1394
      %v1483 = vunpack.c.h.b16 %v1394
      %v1484 = vunpack.c.l.b16 %v1395
      %v1485 = vunpack.c.h.b16 %v1395
      %v1486 = vunpack.c.l.b16 %v1396
      %v1487 = vunpack.c.h.b16 %v1396
      %v1488 = vunpack.c.l.b16 %v1397
      %v1489 = vunpack.c.h.b16 %v1397
      %v1490 = vunpack.c.l.b16 %v1398
      %v1491 = vunpack.c.h.b16 %v1398
      %v1492 = vunpack.c.l.b16 %v1399
      %v1493 = vunpack.c.h.b16 %v1399
      %v1494 = vunpack.c.l.b16 %v1400
      %v1495 = vunpack.c.h.b16 %v1400
      %v1496 = vunpack.c.l.b16 %v1401
      %v1497 = vunpack.c.h.b16 %v1401
      %v1498 = vunpack.c.l.b16 %v1402
      %v1499 = vunpack.c.h.b16 %v1402
      %v1500 = vunpack.c.l.b16 %v1403
      %v1501 = vunpack.c.h.b16 %v1403
      %v1502 = vunpack.c.l.b16 %v1404
      %v1503 = vunpack.c.h.b16 %v1404
      %v1504 = vunpack.c.l.b16 %v1405
      %v1505 = vunpack.c.h.b16 %v1405
      %v1506 = vunpack.c.l.b16 %v1406
      %v1507 = vunpack.c.h.b16 %v1406
      %v1508 = vunpack.c.l.b16 %v1407
      %v1509 = vunpack.c.h.b16 %v1407
      %v1510 = vpack.c.b16 %v1448, %v1446
      %v1511 = vpack.c.b16 %v1449, %v1447
      %v1512 = vpack.c.b16 %v1452, %v1450
      %v1513 = vpack.c.b16 %v1453, %v1451
      %v1514 = vpack.c.b16 %v1456, %v1454
      %v1515 = vpack.c.b16 %v1457, %v1455
      %v1516 = vpack.c.b16 %v1460, %v1458
      %v1517 = vpack.c.b16 %v1461, %v1459
      %v1518 = vpack.c.b16 %v1464, %v1462
      %v1519 = vpack.c.b16 %v1465, %v1463
      %v1520 = vpack.c.b16 %v1468, %v1466
      %v1521 = vpack.c.b16 %v1469, %v1467
      %v1522 = vpack.c.b16 %v1472, %v1470
      %v1523 = vpack.c.b16 %v1473, %v1471
      %v1524 = vpack.c.b16 %v1476, %v1474
      %v1525 = vpack.c.b16 %v1477, %v1475
      %v1526 = vpack.c.b16 %v1480, %v1478
      %v1527 = vpack.c.b16 %v1481, %v1479
      %v1528 = vpack.c.b16 %v1484, %v1482
      %v1529 = vpack.c.b16 %v1485, %v1483
      %v1530 = vpack.c.b16 %v1488, %v1486
      %v1531 = vpack.c.b16 %v1489, %v1487
      %v1532 = vpack.c.b16 %v1492, %v1490
      %v1533 = vpack.c.b16 %v1493, %v1491
      %v1534 = vpack.c.b16 %v1496, %v1494
      %v1535 = vpack.c.b16 %v1497, %v1495
      %v1536 = vpack.c.b16 %v1500, %v1498
      %v1537 = vpack.c.b16 %v1501, %v1499
      %v1538 = vpack.c.b16 %v1504, %v1502
      %v1539 = vpack.c.b16 %v1505, %v1503
      %v1540 = vpack.c.b16 %v1508, %v1506
      %v1541 = vpack.c.b16 %v1509, %v1507
      %1574 = vmatpush.bf16.msra.mxu0 %v1524
      %1575 = vmatpush.bf16.msra.mxu0 %v1522
      %1576 = vmatpush.bf16.msra.mxu0 %v1520
      %1577 = vmatpush.bf16.msra.mxu0 %v1518
      %1578 = vmatpush.bf16.msra.mxu0 %v1516
      %1579 = vmatpush.bf16.msra.mxu0 %v1514
      %1580 = vmatpush.bf16.msra.mxu0 %v1512
      %1581 = vmatpush.bf16.msra.mxu0 %v1510
      %1582 = vmatmul.bf16.gmra.mxu0 %v1344
      %v1583 = vpop.f32.mrf.mxu0
      %v1584 = vadd.f32 %v1410, %v1583
      %v1585 = vpop.f32.mrf.mxu0
      %v1586 = vadd.f32 %v1410, %v1585
      %1587 = vmatmul.bf16.gmra.mxu0 %v1346
      %v1588 = vpop.f32.mrf.mxu0
      %v1589 = vadd.f32 %v1410, %v1588
      %v1590 = vpop.f32.mrf.mxu0
      %v1591 = vadd.f32 %v1410, %v1590
      %1592 = vmatmul.bf16.gmra.mxu0 %v1348
      %v1593 = vpop.f32.mrf.mxu0
      %v1594 = vadd.f32 %v1410, %v1593
      %v1595 = vpop.f32.mrf.mxu0
      %v1596 = vadd.f32 %v1410, %v1595
      %1597 = vmatmul.bf16.gmra.mxu0 %v1350
      %v1598 = vpop.f32.mrf.mxu0
      %v1599 = vadd.f32 %v1410, %v1598
      %v1600 = vpop.f32.mrf.mxu0
      %v1601 = vadd.f32 %v1410, %v1600
      %1602 = vmatmul.bf16.gmra.mxu0 %v1352
      %v1603 = vpop.f32.mrf.mxu0
      %v1604 = vadd.f32 %v1410, %v1603
      %v1605 = vpop.f32.mrf.mxu0
      %v1606 = vadd.f32 %v1410, %v1605
      %1607 = vmatmul.bf16.gmra.mxu0 %v1354
      %v1608 = vpop.f32.mrf.mxu0
      %v1609 = vadd.f32 %v1410, %v1608
      %v1610 = vpop.f32.mrf.mxu0
      %v1611 = vadd.f32 %v1410, %v1610
      %1612 = vmatmul.bf16.gmra.mxu0 %v1356
      %v1613 = vpop.f32.mrf.mxu0
      %v1614 = vadd.f32 %v1410, %v1613
      %v1615 = vpop.f32.mrf.mxu0
      %v1616 = vadd.f32 %v1410, %v1615
      %1617 = vmatmul.bf16.gmra.mxu0 %v1358
      %v1618 = vpop.f32.mrf.mxu0
      %v1619 = vadd.f32 %v1410, %v1618
      %v1620 = vpop.f32.mrf.mxu0
      %v1621 = vadd.f32 %v1410, %v1620
      %1622 = vmatmul.bf16.gmra.mxu0 %v1360
      %v1623 = vpop.f32.mrf.mxu0
      %v1624 = vadd.f32 %v1410, %v1623
      %v1625 = vpop.f32.mrf.mxu0
      %v1626 = vadd.f32 %v1410, %v1625
      %1627 = vmatmul.bf16.gmra.mxu0 %v1362
      %v1628 = vpop.f32.mrf.mxu0
      %v1629 = vadd.f32 %v1410, %v1628
      %v1630 = vpop.f32.mrf.mxu0
      %v1631 = vadd.f32 %v1410, %v1630
      %1632 = vmatmul.bf16.gmra.mxu0 %v1364
      %v1633 = vpop.f32.mrf.mxu0
      %v1634 = vadd.f32 %v1410, %v1633
      %v1635 = vpop.f32.mrf.mxu0
      %v1636 = vadd.f32 %v1410, %v1635
      %1637 = vmatmul.bf16.gmra.mxu0 %v1366
      %v1638 = vpop.f32.mrf.mxu0
      %v1639 = vadd.f32 %v1410, %v1638
      %v1640 = vpop.f32.mrf.mxu0
      %v1641 = vadd.f32 %v1410, %v1640
      %1642 = vmatmul.bf16.gmra.mxu0 %v1368
      %v1643 = vpop.f32.mrf.mxu0
      %v1644 = vadd.f32 %v1410, %v1643
      %v1645 = vpop.f32.mrf.mxu0
      %v1646 = vadd.f32 %v1410, %v1645
      %1647 = vmatmul.bf16.gmra.mxu0 %v1370
      %v1648 = vpop.f32.mrf.mxu0
      %v1649 = vadd.f32 %v1410, %v1648
      %v1650 = vpop.f32.mrf.mxu0
      %v1651 = vadd.f32 %v1410, %v1650
      %1652 = vmatmul.bf16.gmra.mxu0 %v1372
      %v1653 = vpop.f32.mrf.mxu0
      %v1654 = vadd.f32 %v1410, %v1653
      %v1655 = vpop.f32.mrf.mxu0
      %v1656 = vadd.f32 %v1410, %v1655
      %1657 = vmatmul.bf16.gmra.mxu0 %v1374
      %v1658 = vpop.f32.mrf.mxu0
      %v1659 = vadd.f32 %v1410, %v1658
      %v1660 = vpop.f32.mrf.mxu0
      %v1661 = vadd.f32 %v1410, %v1660
      %1662 = vdwg.mxu0
      %1663 = vmatpush.bf16.msra.mxu0 %v1540
      %1664 = vmatpush.bf16.msra.mxu0 %v1538
      %1665 = vmatpush.bf16.msra.mxu0 %v1536
      %1666 = vmatpush.bf16.msra.mxu0 %v1534
      %1667 = vmatpush.bf16.msra.mxu0 %v1532
      %1668 = vmatpush.bf16.msra.mxu0 %v1530
      %1669 = vmatpush.bf16.msra.mxu0 %v1528
      %1670 = vmatpush.bf16.msra.mxu0 %v1526
      %1671 = vmatmul.bf16.gmra.mxu0 %v1345
      %v1672 = vpop.f32.mrf.mxu0
      %v1673 = vadd.f32 %v1584, %v1672
      %v1674 = vpop.f32.mrf.mxu0
      %v1675 = vadd.f32 %v1586, %v1674
      %1676 = vmatmul.bf16.gmra.mxu0 %v1347
      %v1677 = vpop.f32.mrf.mxu0
      %v1678 = vadd.f32 %v1589, %v1677
      %v1679 = vpop.f32.mrf.mxu0
      %v1680 = vadd.f32 %v1591, %v1679
      %1681 = vmatmul.bf16.gmra.mxu0 %v1349
      %v1682 = vpop.f32.mrf.mxu0
      %v1683 = vadd.f32 %v1594, %v1682
      %v1684 = vpop.f32.mrf.mxu0
      %v1685 = vadd.f32 %v1596, %v1684
      %1686 = vmatmul.bf16.gmra.mxu0 %v1351
      %v1687 = vpop.f32.mrf.mxu0
      %v1688 = vadd.f32 %v1599, %v1687
      %v1689 = vpop.f32.mrf.mxu0
      %v1690 = vadd.f32 %v1601, %v1689
      %1691 = vmatmul.bf16.gmra.mxu0 %v1353
      %v1692 = vpop.f32.mrf.mxu0
      %v1693 = vadd.f32 %v1604, %v1692
      %v1694 = vpop.f32.mrf.mxu0
      %v1695 = vadd.f32 %v1606, %v1694
      %1696 = vmatmul.bf16.gmra.mxu0 %v1355
      %v1697 = vpop.f32.mrf.mxu0
      %v1698 = vadd.f32 %v1609, %v1697
      %v1699 = vpop.f32.mrf.mxu0
      %v1700 = vadd.f32 %v1611, %v1699
      %1701 = vmatmul.bf16.gmra.mxu0 %v1357
      %v1702 = vpop.f32.mrf.mxu0
      %v1703 = vadd.f32 %v1614, %v1702
      %v1704 = vpop.f32.mrf.mxu0
      %v1705 = vadd.f32 %v1616, %v1704
      %1706 = vmatmul.bf16.gmra.mxu0 %v1359
      %v1707 = vpop.f32.mrf.mxu0
      %v1708 = vadd.f32 %v1619, %v1707
      %v1709 = vpop.f32.mrf.mxu0
      %v1710 = vadd.f32 %v1621, %v1709
      %1711 = vmatmul.bf16.gmra.mxu0 %v1361
      %v1712 = vpop.f32.mrf.mxu0
      %v1713 = vadd.f32 %v1624, %v1712
      %v1714 = vpop.f32.mrf.mxu0
      %v1715 = vadd.f32 %v1626, %v1714
      %1716 = vmatmul.bf16.gmra.mxu0 %v1363
      %v1717 = vpop.f32.mrf.mxu0
      %v1718 = vadd.f32 %v1629, %v1717
      %v1719 = vpop.f32.mrf.mxu0
      %v1720 = vadd.f32 %v1631, %v1719
      %1721 = vmatmul.bf16.gmra.mxu0 %v1365
      %v1722 = vpop.f32.mrf.mxu0
      %v1723 = vadd.f32 %v1634, %v1722
      %v1724 = vpop.f32.mrf.mxu0
      %v1725 = vadd.f32 %v1636, %v1724
      %1726 = vmatmul.bf16.gmra.mxu0 %v1367
      %v1727 = vpop.f32.mrf.mxu0
      %v1728 = vadd.f32 %v1639, %v1727
      %v1729 = vpop.f32.mrf.mxu0
      %v1730 = vadd.f32 %v1641, %v1729
      %1731 = vmatmul.bf16.gmra.mxu0 %v1369
      %v1732 = vpop.f32.mrf.mxu0
      %v1733 = vadd.f32 %v1644, %v1732
      %v1734 = vpop.f32.mrf.mxu0
      %v1735 = vadd.f32 %v1646, %v1734
      %1736 = vmatmul.bf16.gmra.mxu0 %v1371
      %v1737 = vpop.f32.mrf.mxu0
      %v1738 = vadd.f32 %v1649, %v1737
      %v1739 = vpop.f32.mrf.mxu0
      %v1740 = vadd.f32 %v1651, %v1739
      %1741 = vmatmul.bf16.gmra.mxu0 %v1373
      %v1742 = vpop.f32.mrf.mxu0
      %v1743 = vadd.f32 %v1654, %v1742
      %v1744 = vpop.f32.mrf.mxu0
      %v1745 = vadd.f32 %v1656, %v1744
      %1746 = vmatmul.bf16.gmra.mxu0 %v1375
      %v1747 = vpop.f32.mrf.mxu0
      %v1748 = vadd.f32 %v1659, %v1747
      %v1749 = vpop.f32.mrf.mxu0
      %v1750 = vadd.f32 %v1661, %v1749
      %1751 = vdwg.mxu0
      %1752 = vmatpush.bf16.msra.mxu0 %v1525
      %1753 = vmatpush.bf16.msra.mxu0 %v1523
      %1754 = vmatpush.bf16.msra.mxu0 %v1521
      %1755 = vmatpush.bf16.msra.mxu0 %v1519
      %1756 = vmatpush.bf16.msra.mxu0 %v1517
      %1757 = vmatpush.bf16.msra.mxu0 %v1515
      %1758 = vmatpush.bf16.msra.mxu0 %v1513
      %1759 = vmatpush.bf16.msra.mxu0 %v1511
      %1760 = vmatmul.bf16.gmra.mxu0 %v1344
      %v1761 = vpop.f32.mrf.mxu0
      %v1762 = vadd.f32 %v1411, %v1761
      %v1763 = vpop.f32.mrf.mxu0
      %v1764 = vadd.f32 %v1411, %v1763
      %1765 = vmatmul.bf16.gmra.mxu0 %v1346
      %v1766 = vpop.f32.mrf.mxu0
      %v1767 = vadd.f32 %v1411, %v1766
      %v1768 = vpop.f32.mrf.mxu0
      %v1769 = vadd.f32 %v1411, %v1768
      %1770 = vmatmul.bf16.gmra.mxu0 %v1348
      %v1771 = vpop.f32.mrf.mxu0
      %v1772 = vadd.f32 %v1411, %v1771
      %v1773 = vpop.f32.mrf.mxu0
      %v1774 = vadd.f32 %v1411, %v1773
      %1775 = vmatmul.bf16.gmra.mxu0 %v1350
      %v1776 = vpop.f32.mrf.mxu0
      %v1777 = vadd.f32 %v1411, %v1776
      %v1778 = vpop.f32.mrf.mxu0
      %v1779 = vadd.f32 %v1411, %v1778
      %1780 = vmatmul.bf16.gmra.mxu0 %v1352
      %v1781 = vpop.f32.mrf.mxu0
      %v1782 = vadd.f32 %v1411, %v1781
      %v1783 = vpop.f32.mrf.mxu0
      %v1784 = vadd.f32 %v1411, %v1783
      %1785 = vmatmul.bf16.gmra.mxu0 %v1354
      %v1786 = vpop.f32.mrf.mxu0
      %v1787 = vadd.f32 %v1411, %v1786
      %v1788 = vpop.f32.mrf.mxu0
      %v1789 = vadd.f32 %v1411, %v1788
      %1790 = vmatmul.bf16.gmra.mxu0 %v1356
      %v1791 = vpop.f32.mrf.mxu0
      %v1792 = vadd.f32 %v1411, %v1791
      %v1793 = vpop.f32.mrf.mxu0
      %v1794 = vadd.f32 %v1411, %v1793
      %1795 = vmatmul.bf16.gmra.mxu0 %v1358
      %v1796 = vpop.f32.mrf.mxu0
      %v1797 = vadd.f32 %v1411, %v1796
      %v1798 = vpop.f32.mrf.mxu0
      %v1799 = vadd.f32 %v1411, %v1798
      %1800 = vmatmul.bf16.gmra.mxu0 %v1360
      %v1801 = vpop.f32.mrf.mxu0
      %v1802 = vadd.f32 %v1411, %v1801
      %v1803 = vpop.f32.mrf.mxu0
      %v1804 = vadd.f32 %v1411, %v1803
      %1805 = vmatmul.bf16.gmra.mxu0 %v1362
      %v1806 = vpop.f32.mrf.mxu0
      %v1807 = vadd.f32 %v1411, %v1806
      %v1808 = vpop.f32.mrf.mxu0
      %v1809 = vadd.f32 %v1411, %v1808
      %1810 = vmatmul.bf16.gmra.mxu0 %v1364
      %v1811 = vpop.f32.mrf.mxu0
      %v1812 = vadd.f32 %v1411, %v1811
      %v1813 = vpop.f32.mrf.mxu0
      %v1814 = vadd.f32 %v1411, %v1813
      %1815 = vmatmul.bf16.gmra.mxu0 %v1366
      %v1816 = vpop.f32.mrf.mxu0
      %v1817 = vadd.f32 %v1411, %v1816
      %v1818 = vpop.f32.mrf.mxu0
      %v1819 = vadd.f32 %v1411, %v1818
      %1820 = vmatmul.bf16.gmra.mxu0 %v1368
      %v1821 = vpop.f32.mrf.mxu0
      %v1822 = vadd.f32 %v1411, %v1821
      %v1823 = vpop.f32.mrf.mxu0
      %v1824 = vadd.f32 %v1411, %v1823
      %1825 = vmatmul.bf16.gmra.mxu0 %v1370
      %v1826 = vpop.f32.mrf.mxu0
      %v1827 = vadd.f32 %v1411, %v1826
      %v1828 = vpop.f32.mrf.mxu0
      %v1829 = vadd.f32 %v1411, %v1828
      %1830 = vmatmul.bf16.gmra.mxu0 %v1372
      %v1831 = vpop.f32.mrf.mxu0
      %v1832 = vadd.f32 %v1411, %v1831
      %v1833 = vpop.f32.mrf.mxu0
      %v1834 = vadd.f32 %v1411, %v1833
      %1835 = vmatmul.bf16.gmra.mxu0 %v1374
      %v1836 = vpop.f32.mrf.mxu0
      %v1837 = vadd.f32 %v1411, %v1836
      %v1838 = vpop.f32.mrf.mxu0
      %v1839 = vadd.f32 %v1411, %v1838
      %1840 = vdwg.mxu0
      %1841 = vmatpush.bf16.msra.mxu0 %v1541
      %1842 = vmatpush.bf16.msra.mxu0 %v1539
      %1843 = vmatpush.bf16.msra.mxu0 %v1537
      %1844 = vmatpush.bf16.msra.mxu0 %v1535
      %1845 = vmatpush.bf16.msra.mxu0 %v1533
      %1846 = vmatpush.bf16.msra.mxu0 %v1531
      %1847 = vmatpush.bf16.msra.mxu0 %v1529
      %1848 = vmatpush.bf16.msra.mxu0 %v1527
      %1849 = vmatmul.bf16.gmra.mxu0 %v1345
      %v1850 = vpop.f32.mrf.mxu0
      %v1851 = vadd.f32 %v1762, %v1850
      %v1852 = vpop.f32.mrf.mxu0
      %v1853 = vadd.f32 %v1764, %v1852
      %1854 = vmatmul.bf16.gmra.mxu0 %v1347
      %v1855 = vpop.f32.mrf.mxu0
      %v1856 = vadd.f32 %v1767, %v1855
      %v1857 = vpop.f32.mrf.mxu0
      %v1858 = vadd.f32 %v1769, %v1857
      %1859 = vmatmul.bf16.gmra.mxu0 %v1349
      %v1860 = vpop.f32.mrf.mxu0
      %v1861 = vadd.f32 %v1772, %v1860
      %v1862 = vpop.f32.mrf.mxu0
      %v1863 = vadd.f32 %v1774, %v1862
      %1864 = vmatmul.bf16.gmra.mxu0 %v1351
      %v1865 = vpop.f32.mrf.mxu0
      %v1866 = vadd.f32 %v1777, %v1865
      %v1867 = vpop.f32.mrf.mxu0
      %v1868 = vadd.f32 %v1779, %v1867
      %1869 = vmatmul.bf16.gmra.mxu0 %v1353
      %v1870 = vpop.f32.mrf.mxu0
      %v1871 = vadd.f32 %v1782, %v1870
      %v1872 = vpop.f32.mrf.mxu0
      %v1873 = vadd.f32 %v1784, %v1872
      %1874 = vmatmul.bf16.gmra.mxu0 %v1355
      %v1875 = vpop.f32.mrf.mxu0
      %v1876 = vadd.f32 %v1787, %v1875
      %v1877 = vpop.f32.mrf.mxu0
      %v1878 = vadd.f32 %v1789, %v1877
      %1879 = vmatmul.bf16.gmra.mxu0 %v1357
      %v1880 = vpop.f32.mrf.mxu0
      %v1881 = vadd.f32 %v1792, %v1880
      %v1882 = vpop.f32.mrf.mxu0
      %v1883 = vadd.f32 %v1794, %v1882
      %1884 = vmatmul.bf16.gmra.mxu0 %v1359
      %v1885 = vpop.f32.mrf.mxu0
      %v1886 = vadd.f32 %v1797, %v1885
      %v1887 = vpop.f32.mrf.mxu0
      %v1888 = vadd.f32 %v1799, %v1887
      %1889 = vmatmul.bf16.gmra.mxu0 %v1361
      %v1890 = vpop.f32.mrf.mxu0
      %v1891 = vadd.f32 %v1802, %v1890
      %v1892 = vpop.f32.mrf.mxu0
      %v1893 = vadd.f32 %v1804, %v1892
      %1894 = vmatmul.bf16.gmra.mxu0 %v1363
      %v1895 = vpop.f32.mrf.mxu0
      %v1896 = vadd.f32 %v1807, %v1895
      %v1897 = vpop.f32.mrf.mxu0
      %v1898 = vadd.f32 %v1809, %v1897
      %1899 = vmatmul.bf16.gmra.mxu0 %v1365
      %v1900 = vpop.f32.mrf.mxu0
      %v1901 = vadd.f32 %v1812, %v1900
      %v1902 = vpop.f32.mrf.mxu0
      %v1903 = vadd.f32 %v1814, %v1902
      %1904 = vmatmul.bf16.gmra.mxu0 %v1367
      %v1905 = vpop.f32.mrf.mxu0
      %v1906 = vadd.f32 %v1817, %v1905
      %v1907 = vpop.f32.mrf.mxu0
      %v1908 = vadd.f32 %v1819, %v1907
      %1909 = vmatmul.bf16.gmra.mxu0 %v1369
      %v1910 = vpop.f32.mrf.mxu0
      %v1911 = vadd.f32 %v1822, %v1910
      %v1912 = vpop.f32.mrf.mxu0
      %v1913 = vadd.f32 %v1824, %v1912
      %1914 = vmatmul.bf16.gmra.mxu0 %v1371
      %v1915 = vpop.f32.mrf.mxu0
      %v1916 = vadd.f32 %v1827, %v1915
      %v1917 = vpop.f32.mrf.mxu0
      %v1918 = vadd.f32 %v1829, %v1917
      %1919 = vmatmul.bf16.gmra.mxu0 %v1373
      %v1920 = vpop.f32.mrf.mxu0
      %v1921 = vadd.f32 %v1832, %v1920
      %v1922 = vpop.f32.mrf.mxu0
      %v1923 = vadd.f32 %v1834, %v1922
      %1924 = vmatmul.bf16.gmra.mxu0 %v1375
      %v1925 = vpop.f32.mrf.mxu0
      %v1926 = vadd.f32 %v1837, %v1925
      %v1927 = vpop.f32.mrf.mxu0
      %v1928 = vadd.f32 %v1839, %v1927
      %1929 = vdwg.mxu0
      %vm1930 = vcmp.gt.f32.partialorder %v1673, 0.0
      %vm1931 = vcmp.gt.f32.partialorder %v1851, 0.0
      %vm1932 = vcmp.gt.f32.partialorder %v1675, 0.0
      %vm1933 = vcmp.gt.f32.partialorder %v1853, 0.0
      %vm1934 = vcmp.gt.f32.partialorder %v1678, 0.0
      %vm1935 = vcmp.gt.f32.partialorder %v1856, 0.0
      %vm1936 = vcmp.gt.f32.partialorder %v1680, 0.0
      %vm1937 = vcmp.gt.f32.partialorder %v1858, 0.0
      %vm1938 = vcmp.gt.f32.partialorder %v1683, 0.0
      %vm1939 = vcmp.gt.f32.partialorder %v1861, 0.0
      %vm1940 = vcmp.gt.f32.partialorder %v1685, 0.0
      %vm1941 = vcmp.gt.f32.partialorder %v1863, 0.0
      %vm1942 = vcmp.gt.f32.partialorder %v1688, 0.0
      %vm1943 = vcmp.gt.f32.partialorder %v1866, 0.0
      %vm1944 = vcmp.gt.f32.partialorder %v1690, 0.0
      %vm1945 = vcmp.gt.f32.partialorder %v1868, 0.0
      %vm1946 = vcmp.gt.f32.partialorder %v1693, 0.0
      %vm1947 = vcmp.gt.f32.partialorder %v1871, 0.0
      %vm1948 = vcmp.gt.f32.partialorder %v1695, 0.0
      %vm1949 = vcmp.gt.f32.partialorder %v1873, 0.0
      %vm1950 = vcmp.gt.f32.partialorder %v1698, 0.0
      %vm1951 = vcmp.gt.f32.partialorder %v1876, 0.0
      %vm1952 = vcmp.gt.f32.partialorder %v1700, 0.0
      %vm1953 = vcmp.gt.f32.partialorder %v1878, 0.0
      %vm1954 = vcmp.gt.f32.partialorder %v1703, 0.0
      %vm1955 = vcmp.gt.f32.partialorder %v1881, 0.0
      %vm1956 = vcmp.gt.f32.partialorder %v1705, 0.0
      %vm1957 = vcmp.gt.f32.partialorder %v1883, 0.0
      %vm1958 = vcmp.gt.f32.partialorder %v1708, 0.0
      %vm1959 = vcmp.gt.f32.partialorder %v1886, 0.0
      %vm1960 = vcmp.gt.f32.partialorder %v1710, 0.0
      %vm1961 = vcmp.gt.f32.partialorder %v1888, 0.0
      %vm1962 = vcmp.gt.f32.partialorder %v1713, 0.0
      %vm1963 = vcmp.gt.f32.partialorder %v1891, 0.0
      %vm1964 = vcmp.gt.f32.partialorder %v1715, 0.0
      %vm1965 = vcmp.gt.f32.partialorder %v1893, 0.0
      %vm1966 = vcmp.gt.f32.partialorder %v1718, 0.0
      %vm1967 = vcmp.gt.f32.partialorder %v1896, 0.0
      %vm1968 = vcmp.gt.f32.partialorder %v1720, 0.0
      %vm1969 = vcmp.gt.f32.partialorder %v1898, 0.0
      %vm1970 = vcmp.gt.f32.partialorder %v1723, 0.0
      %vm1971 = vcmp.gt.f32.partialorder %v1901, 0.0
      %vm1972 = vcmp.gt.f32.partialorder %v1725, 0.0
      %vm1973 = vcmp.gt.f32.partialorder %v1903, 0.0
      %vm1974 = vcmp.gt.f32.partialorder %v1728, 0.0
      %vm1975 = vcmp.gt.f32.partialorder %v1906, 0.0
      %vm1976 = vcmp.gt.f32.partialorder %v1730, 0.0
      %vm1977 = vcmp.gt.f32.partialorder %v1908, 0.0
      %vm1978 = vcmp.gt.f32.partialorder %v1733, 0.0
      %vm1979 = vcmp.gt.f32.partialorder %v1911, 0.0
      %vm1980 = vcmp.gt.f32.partialorder %v1735, 0.0
      %vm1981 = vcmp.gt.f32.partialorder %v1913, 0.0
      %vm1982 = vcmp.gt.f32.partialorder %v1738, 0.0
      %vm1983 = vcmp.gt.f32.partialorder %v1916, 0.0
      %vm1984 = vcmp.gt.f32.partialorder %v1740, 0.0
      %vm1985 = vcmp.gt.f32.partialorder %v1918, 0.0
      %vm1986 = vcmp.gt.f32.partialorder %v1743, 0.0
      %vm1987 = vcmp.gt.f32.partialorder %v1921, 0.0
      %vm1988 = vcmp.gt.f32.partialorder %v1745, 0.0
      %vm1989 = vcmp.gt.f32.partialorder %v1923, 0.0
      %vm1990 = vcmp.gt.f32.partialorder %v1748, 0.0
      %vm1991 = vcmp.gt.f32.partialorder %v1926, 0.0
      %vm1992 = vcmp.gt.f32.partialorder %v1750, 0.0
      %vm1993 = vcmp.gt.f32.partialorder %v1928, 0.0
      %v1994 = vmul.f32 %v1673, 1.442695
      %v1995 = vpow.pop %v1994
      %v1996 = vmul.f32 %v1851, 1.442695
      %v1997 = vpow.pop %v1996
      %v1998 = vmul.f32 %v1675, 1.442695
      %v1999 = vpow.pop %v1998
      %v2000 = vmul.f32 %v1853, 1.442695
      %v2001 = vpow.pop %v2000
      %v2002 = vmul.f32 %v1678, 1.442695
      %v2003 = vpow.pop %v2002
      %v2004 = vmul.f32 %v1856, 1.442695
      %v2005 = vpow.pop %v2004
      %v2006 = vmul.f32 %v1680, 1.442695
      %v2007 = vpow.pop %v2006
      %v2008 = vmul.f32 %v1858, 1.442695
      %v2009 = vpow.pop %v2008
      %v2010 = vmul.f32 %v1683, 1.442695
      %v2011 = vpow.pop %v2010
      %v2012 = vmul.f32 %v1861, 1.442695
      %v2013 = vpow.pop %v2012
      %v2014 = vmul.f32 %v1685, 1.442695
      %v2015 = vpow.pop %v2014
      %v2016 = vmul.f32 %v1863, 1.442695
      %v2017 = vpow.pop %v2016
      %v2018 = vmul.f32 %v1688, 1.442695
      %v2019 = vpow.pop %v2018
      %v2020 = vmul.f32 %v1866, 1.442695
      %v2021 = vpow.pop %v2020
      %v2022 = vmul.f32 %v1690, 1.442695
      %v2023 = vpow.pop %v2022
      %v2024 = vmul.f32 %v1868, 1.442695
      %v2025 = vpow.pop %v2024
      %v2026 = vmul.f32 %v1693, 1.442695
      %v2027 = vpow.pop %v2026
      %v2028 = vmul.f32 %v1871, 1.442695
      %v2029 = vpow.pop %v2028
      %v2030 = vmul.f32 %v1695, 1.442695
      %v2031 = vpow.pop %v2030
      %v2032 = vmul.f32 %v1873, 1.442695
      %v2033 = vpow.pop %v2032
      %v2034 = vmul.f32 %v1698, 1.442695
      %v2035 = vpow.pop %v2034
      %v2036 = vmul.f32 %v1876, 1.442695
      %v2037 = vpow.pop %v2036
      %v2038 = vmul.f32 %v1700, 1.442695
      %v2039 = vpow.pop %v2038
      %v2040 = vmul.f32 %v1878, 1.442695
      %v2041 = vpow.pop %v2040
      %v2042 = vmul.f32 %v1703, 1.442695
      %v2043 = vpow.pop %v2042
      %v2044 = vmul.f32 %v1881, 1.442695
      %v2045 = vpow.pop %v2044
      %v2046 = vmul.f32 %v1705, 1.442695
      %v2047 = vpow.pop %v2046
      %v2048 = vmul.f32 %v1883, 1.442695
      %v2049 = vpow.pop %v2048
      %v2050 = vmul.f32 %v1708, 1.442695
      %v2051 = vpow.pop %v2050
      %v2052 = vmul.f32 %v1886, 1.442695
      %v2053 = vpow.pop %v2052
      %v2054 = vmul.f32 %v1710, 1.442695
      %v2055 = vpow.pop %v2054
      %v2056 = vmul.f32 %v1888, 1.442695
      %v2057 = vpow.pop %v2056
      %v2058 = vmul.f32 %v1713, 1.442695
      %v2059 = vpow.pop %v2058
      %v2060 = vmul.f32 %v1891, 1.442695
      %v2061 = vpow.pop %v2060
      %v2062 = vmul.f32 %v1715, 1.442695
      %v2063 = vpow.pop %v2062
      %v2064 = vmul.f32 %v1893, 1.442695
      %v2065 = vpow.pop %v2064
      %v2066 = vmul.f32 %v1718, 1.442695
      %v2067 = vpow.pop %v2066
      %v2068 = vmul.f32 %v1896, 1.442695
      %v2069 = vpow.pop %v2068
      %v2070 = vmul.f32 %v1720, 1.442695
      %v2071 = vpow.pop %v2070
      %v2072 = vmul.f32 %v1898, 1.442695
      %v2073 = vpow.pop %v2072
      %v2074 = vmul.f32 %v1723, 1.442695
      %v2075 = vpow.pop %v2074
      %v2076 = vmul.f32 %v1901, 1.442695
      %v2077 = vpow.pop %v2076
      %v2078 = vmul.f32 %v1725, 1.442695
      %v2079 = vpow.pop %v2078
      %v2080 = vmul.f32 %v1903, 1.442695
      %v2081 = vpow.pop %v2080
      %v2082 = vmul.f32 %v1728, 1.442695
      %v2083 = vpow.pop %v2082
      %v2084 = vmul.f32 %v1906, 1.442695
      %v2085 = vpow.pop %v2084
      %v2086 = vmul.f32 %v1730, 1.442695
      %v2087 = vpow.pop %v2086
      %v2088 = vmul.f32 %v1908, 1.442695
      %v2089 = vpow.pop %v2088
      %v2090 = vmul.f32 %v1733, 1.442695
      %v2091 = vpow.pop %v2090
      %v2092 = vmul.f32 %v1911, 1.442695
      %v2093 = vpow.pop %v2092
      %v2094 = vmul.f32 %v1735, 1.442695
      %v2095 = vpow.pop %v2094
      %v2096 = vmul.f32 %v1913, 1.442695
      %v2097 = vpow.pop %v2096
      %v2098 = vmul.f32 %v1738, 1.442695
      %v2099 = vpow.pop %v2098
      %v2100 = vmul.f32 %v1916, 1.442695
      %v2101 = vpow.pop %v2100
      %v2102 = vmul.f32 %v1740, 1.442695
      %v2103 = vpow.pop %v2102
      %v2104 = vmul.f32 %v1918, 1.442695
      %v2105 = vpow.pop %v2104
      %v2106 = vmul.f32 %v1743, 1.442695
      %v2107 = vpow.pop %v2106
      %v2108 = vmul.f32 %v1921, 1.442695
      %v2109 = vpow.pop %v2108
      %v2110 = vmul.f32 %v1745, 1.442695
      %v2111 = vpow.pop %v2110
      %v2112 = vmul.f32 %v1923, 1.442695
      %v2113 = vpow.pop %v2112
      %v2114 = vmul.f32 %v1748, 1.442695
      %v2115 = vpow.pop %v2114
      %v2116 = vmul.f32 %v1926, 1.442695
      %v2117 = vpow.pop %v2116
      %v2118 = vmul.f32 %v1750, 1.442695
      %v2119 = vpow.pop %v2118
      %v2120 = vmul.f32 %v1928, 1.442695
      %v2121 = vpow.pop %v2120
      %v2122 = vsub.f32 %v1995, 1.0
      %v2123 = vsub.f32 %v1997, 1.0
      %v2124 = vsub.f32 %v1999, 1.0
      %v2125 = vsub.f32 %v2001, 1.0
      %v2126 = vsub.f32 %v2003, 1.0
      %v2127 = vsub.f32 %v2005, 1.0
      %v2128 = vsub.f32 %v2007, 1.0
      %v2129 = vsub.f32 %v2009, 1.0
      %v2130 = vsub.f32 %v2011, 1.0
      %v2131 = vsub.f32 %v2013, 1.0
      %v2132 = vsub.f32 %v2015, 1.0
      %v2133 = vsub.f32 %v2017, 1.0
      %v2134 = vsub.f32 %v2019, 1.0
      %v2135 = vsub.f32 %v2021, 1.0
      %v2136 = vsub.f32 %v2023, 1.0
      %v2137 = vsub.f32 %v2025, 1.0
      %v2138 = vsub.f32 %v2027, 1.0
      %v2139 = vsub.f32 %v2029, 1.0
      %v2140 = vsub.f32 %v2031, 1.0
      %v2141 = vsub.f32 %v2033, 1.0
      %v2142 = vsub.f32 %v2035, 1.0
      %v2143 = vsub.f32 %v2037, 1.0
      %v2144 = vsub.f32 %v2039, 1.0
      %v2145 = vsub.f32 %v2041, 1.0
      %v2146 = vsub.f32 %v2043, 1.0
      %v2147 = vsub.f32 %v2045, 1.0
      %v2148 = vsub.f32 %v2047, 1.0
      %v2149 = vsub.f32 %v2049, 1.0
      %v2150 = vsub.f32 %v2051, 1.0
      %v2151 = vsub.f32 %v2053, 1.0
      %v2152 = vsub.f32 %v2055, 1.0
      %v2153 = vsub.f32 %v2057, 1.0
      %v2154 = vsub.f32 %v2059, 1.0
      %v2155 = vsub.f32 %v2061, 1.0
      %v2156 = vsub.f32 %v2063, 1.0
      %v2157 = vsub.f32 %v2065, 1.0
      %v2158 = vsub.f32 %v2067, 1.0
      %v2159 = vsub.f32 %v2069, 1.0
      %v2160 = vsub.f32 %v2071, 1.0
      %v2161 = vsub.f32 %v2073, 1.0
      %v2162 = vsub.f32 %v2075, 1.0
      %v2163 = vsub.f32 %v2077, 1.0
      %v2164 = vsub.f32 %v2079, 1.0
      %v2165 = vsub.f32 %v2081, 1.0
      %v2166 = vsub.f32 %v2083, 1.0
      %v2167 = vsub.f32 %v2085, 1.0
      %v2168 = vsub.f32 %v2087, 1.0
      %v2169 = vsub.f32 %v2089, 1.0
      %v2170 = vsub.f32 %v2091, 1.0
      %v2171 = vsub.f32 %v2093, 1.0
      %v2172 = vsub.f32 %v2095, 1.0
      %v2173 = vsub.f32 %v2097, 1.0
      %v2174 = vsub.f32 %v2099, 1.0
      %v2175 = vsub.f32 %v2101, 1.0
      %v2176 = vsub.f32 %v2103, 1.0
      %v2177 = vsub.f32 %v2105, 1.0
      %v2178 = vsub.f32 %v2107, 1.0
      %v2179 = vsub.f32 %v2109, 1.0
      %v2180 = vsub.f32 %v2111, 1.0
      %v2181 = vsub.f32 %v2113, 1.0
      %v2182 = vsub.f32 %v2115, 1.0
      %v2183 = vsub.f32 %v2117, 1.0
      %v2184 = vsub.f32 %v2119, 1.0
      %v2185 = vsub.f32 %v2121, 1.0
      %v2186 = vmul.f32 %v2122, 1.6732632
      %v2187 = vmul.f32 %v2123, 1.6732632
      %v2188 = vmul.f32 %v2124, 1.6732632
      %v2189 = vmul.f32 %v2125, 1.6732632
      %v2190 = vmul.f32 %v2126, 1.6732632
      %v2191 = vmul.f32 %v2127, 1.6732632
      %v2192 = vmul.f32 %v2128, 1.6732632
      %v2193 = vmul.f32 %v2129, 1.6732632
      %v2194 = vmul.f32 %v2130, 1.6732632
      %v2195 = vmul.f32 %v2131, 1.6732632
      %v2196 = vmul.f32 %v2132, 1.6732632
      %v2197 = vmul.f32 %v2133, 1.6732632
      %v2198 = vmul.f32 %v2134, 1.6732632
      %v2199 = vmul.f32 %v2135, 1.6732632
      %v2200 = vmul.f32 %v2136, 1.6732632
      %v2201 = vmul.f32 %v2137, 1.6732632
      %v2202 = vmul.f32 %v2138, 1.6732632
      %v2203 = vmul.f32 %v2139, 1.6732632
      %v2204 = vmul.f32 %v2140, 1.6732632
      %v2205 = vmul.f32 %v2141, 1.6732632
      %v2206 = vmul.f32 %v2142, 1.6732632
      %v2207 = vmul.f32 %v2143, 1.6732632
      %v2208 = vmul.f32 %v2144, 1.6732632
      %v2209 = vmul.f32 %v2145, 1.6732632
      %v2210 = vmul.f32 %v2146, 1.6732632
      %v2211 = vmul.f32 %v2147, 1.6732632
      %v2212 = vmul.f32 %v2148, 1.6732632
      %v2213 = vmul.f32 %v2149, 1.6732632
      %v2214 = vmul.f32 %v2150, 1.6732632
      %v2215 = vmul.f32 %v2151, 1.6732632
      %v2216 = vmul.f32 %v2152, 1.6732632
      %v2217 = vmul.f32 %v2153, 1.6732632
      %v2218 = vmul.f32 %v2154, 1.6732632
      %v2219 = vmul.f32 %v2155, 1.6732632
      %v2220 = vmul.f32 %v2156, 1.6732632
      %v2221 = vmul.f32 %v2157, 1.6732632
      %v2222 = vmul.f32 %v2158, 1.6732632
      %v2223 = vmul.f32 %v2159, 1.6732632
      %v2224 = vmul.f32 %v2160, 1.6732632
      %v2225 = vmul.f32 %v2161, 1.6732632
      %v2226 = vmul.f32 %v2162, 1.6732632
      %v2227 = vmul.f32 %v2163, 1.6732632
      %v2228 = vmul.f32 %v2164, 1.6732632
      %v2229 = vmul.f32 %v2165, 1.6732632
      %v2230 = vmul.f32 %v2166, 1.6732632
      %v2231 = vmul.f32 %v2167, 1.6732632
      %v2232 = vmul.f32 %v2168, 1.6732632
      %v2233 = vmul.f32 %v2169, 1.6732632
      %v2234 = vmul.f32 %v2170, 1.6732632
      %v2235 = vmul.f32 %v2171, 1.6732632
      %v2236 = vmul.f32 %v2172, 1.6732632
      %v2237 = vmul.f32 %v2173, 1.6732632
      %v2238 = vmul.f32 %v2174, 1.6732632
      %v2239 = vmul.f32 %v2175, 1.6732632
      %v2240 = vmul.f32 %v2176, 1.6732632
      %v2241 = vmul.f32 %v2177, 1.6732632
      %v2242 = vmul.f32 %v2178, 1.6732632
      %v2243 = vmul.f32 %v2179, 1.6732632
      %v2244 = vmul.f32 %v2180, 1.6732632
      %v2245 = vmul.f32 %v2181, 1.6732632
      %v2246 = vmul.f32 %v2182, 1.6732632
      %v2247 = vmul.f32 %v2183, 1.6732632
      %v2248 = vmul.f32 %v2184, 1.6732632
      %v2249 = vmul.f32 %v2185, 1.6732632
      %v2250 = vsel %vm1930, %v1673, %v2186
      %v2251 = vsel %vm1931, %v1851, %v2187
      %v2252 = vsel %vm1932, %v1675, %v2188
      %v2253 = vsel %vm1933, %v1853, %v2189
      %v2254 = vsel %vm1934, %v1678, %v2190
      %v2255 = vsel %vm1935, %v1856, %v2191
      %v2256 = vsel %vm1936, %v1680, %v2192
      %v2257 = vsel %vm1937, %v1858, %v2193
      %v2258 = vsel %vm1938, %v1683, %v2194
      %v2259 = vsel %vm1939, %v1861, %v2195
      %v2260 = vsel %vm1940, %v1685, %v2196
      %v2261 = vsel %vm1941, %v1863, %v2197
      %v2262 = vsel %vm1942, %v1688, %v2198
      %v2263 = vsel %vm1943, %v1866, %v2199
      %v2264 = vsel %vm1944, %v1690, %v2200
      %v2265 = vsel %vm1945, %v1868, %v2201
      %v2266 = vsel %vm1946, %v1693, %v2202
      %v2267 = vsel %vm1947, %v1871, %v2203
      %v2268 = vsel %vm1948, %v1695, %v2204
      %v2269 = vsel %vm1949, %v1873, %v2205
      %v2270 = vsel %vm1950, %v1698, %v2206
      %v2271 = vsel %vm1951, %v1876, %v2207
      %v2272 = vsel %vm1952, %v1700, %v2208
      %v2273 = vsel %vm1953, %v1878, %v2209
      %v2274 = vsel %vm1954, %v1703, %v2210
      %v2275 = vsel %vm1955, %v1881, %v2211
      %v2276 = vsel %vm1956, %v1705, %v2212
      %v2277 = vsel %vm1957, %v1883, %v2213
      %v2278 = vsel %vm1958, %v1708, %v2214
      %v2279 = vsel %vm1959, %v1886, %v2215
      %v2280 = vsel %vm1960, %v1710, %v2216
      %v2281 = vsel %vm1961, %v1888, %v2217
      %v2282 = vsel %vm1962, %v1713, %v2218
      %v2283 = vsel %vm1963, %v1891, %v2219
      %v2284 = vsel %vm1964, %v1715, %v2220
      %v2285 = vsel %vm1965, %v1893, %v2221
      %v2286 = vsel %vm1966, %v1718, %v2222
      %v2287 = vsel %vm1967, %v1896, %v2223
      %v2288 = vsel %vm1968, %v1720, %v2224
      %v2289 = vsel %vm1969, %v1898, %v2225
      %v2290 = vsel %vm1970, %v1723, %v2226
      %v2291 = vsel %vm1971, %v1901, %v2227
      %v2292 = vsel %vm1972, %v1725, %v2228
      %v2293 = vsel %vm1973, %v1903, %v2229
      %v2294 = vsel %vm1974, %v1728, %v2230
      %v2295 = vsel %vm1975, %v1906, %v2231
      %v2296 = vsel %vm1976, %v1730, %v2232
      %v2297 = vsel %vm1977, %v1908, %v2233
      %v2298 = vsel %vm1978, %v1733, %v2234
      %v2299 = vsel %vm1979, %v1911, %v2235
      %v2300 = vsel %vm1980, %v1735, %v2236
      %v2301 = vsel %vm1981, %v1913, %v2237
      %v2302 = vsel %vm1982, %v1738, %v2238
      %v2303 = vsel %vm1983, %v1916, %v2239
      %v2304 = vsel %vm1984, %v1740, %v2240
      %v2305 = vsel %vm1985, %v1918, %v2241
      %v2306 = vsel %vm1986, %v1743, %v2242
      %v2307 = vsel %vm1987, %v1921, %v2243
      %v2308 = vsel %vm1988, %v1745, %v2244
      %v2309 = vsel %vm1989, %v1923, %v2245
      %v2310 = vsel %vm1990, %v1748, %v2246
      %v2311 = vsel %vm1991, %v1926, %v2247
      %v2312 = vsel %vm1992, %v1750, %v2248
      %v2313 = vsel %vm1993, %v1928, %v2249
      %v2314 = vmul.f32 %v2250, 1.050701
      %v2315 = vmul.f32 %v2251, 1.050701
      %v2316 = vmul.f32 %v2252, 1.050701
      %v2317 = vmul.f32 %v2253, 1.050701
      %v2318 = vmul.f32 %v2254, 1.050701
      %v2319 = vmul.f32 %v2255, 1.050701
      %v2320 = vmul.f32 %v2256, 1.050701
      %v2321 = vmul.f32 %v2257, 1.050701
      %v2322 = vmul.f32 %v2258, 1.050701
      %v2323 = vmul.f32 %v2259, 1.050701
      %v2324 = vmul.f32 %v2260, 1.050701
      %v2325 = vmul.f32 %v2261, 1.050701
      %v2326 = vmul.f32 %v2262, 1.050701
      %v2327 = vmul.f32 %v2263, 1.050701
      %v2328 = vmul.f32 %v2264, 1.050701
      %v2329 = vmul.f32 %v2265, 1.050701
      %v2330 = vmul.f32 %v2266, 1.050701
      %v2331 = vmul.f32 %v2267, 1.050701
      %v2332 = vmul.f32 %v2268, 1.050701
      %v2333 = vmul.f32 %v2269, 1.050701
      %v2334 = vmul.f32 %v2270, 1.050701
      %v2335 = vmul.f32 %v2271, 1.050701
      %v2336 = vmul.f32 %v2272, 1.050701
      %v2337 = vmul.f32 %v2273, 1.050701
      %v2338 = vmul.f32 %v2274, 1.050701
      %v2339 = vmul.f32 %v2275, 1.050701
      %v2340 = vmul.f32 %v2276, 1.050701
      %v2341 = vmul.f32 %v2277, 1.050701
      %v2342 = vmul.f32 %v2278, 1.050701
      %v2343 = vmul.f32 %v2279, 1.050701
      %v2344 = vmul.f32 %v2280, 1.050701
      %v2345 = vmul.f32 %v2281, 1.050701
      %v2346 = vmul.f32 %v2282, 1.050701
      %v2347 = vmul.f32 %v2283, 1.050701
      %v2348 = vmul.f32 %v2284, 1.050701
      %v2349 = vmul.f32 %v2285, 1.050701
      %v2350 = vmul.f32 %v2286, 1.050701
      %v2351 = vmul.f32 %v2287, 1.050701
      %v2352 = vmul.f32 %v2288, 1.050701
      %v2353 = vmul.f32 %v2289, 1.050701
      %v2354 = vmul.f32 %v2290, 1.050701
      %v2355 = vmul.f32 %v2291, 1.050701
      %v2356 = vmul.f32 %v2292, 1.050701
      %v2357 = vmul.f32 %v2293, 1.050701
      %v2358 = vmul.f32 %v2294, 1.050701
      %v2359 = vmul.f32 %v2295, 1.050701
      %v2360 = vmul.f32 %v2296, 1.050701
      %v2361 = vmul.f32 %v2297, 1.050701
      %v2362 = vmul.f32 %v2298, 1.050701
      %v2363 = vmul.f32 %v2299, 1.050701
      %v2364 = vmul.f32 %v2300, 1.050701
      %v2365 = vmul.f32 %v2301, 1.050701
      %v2366 = vmul.f32 %v2302, 1.050701
      %v2367 = vmul.f32 %v2303, 1.050701
      %v2368 = vmul.f32 %v2304, 1.050701
      %v2369 = vmul.f32 %v2305, 1.050701
      %v2370 = vmul.f32 %v2306, 1.050701
      %v2371 = vmul.f32 %v2307, 1.050701
      %v2372 = vmul.f32 %v2308, 1.050701
      %v2373 = vmul.f32 %v2309, 1.050701
      %v2374 = vmul.f32 %v2310, 1.050701
      %v2375 = vmul.f32 %v2311, 1.050701
      %v2376 = vmul.f32 %v2312, 1.050701
      %v2377 = vmul.f32 %v2313, 1.050701
      %v2378 = vpack.c.bf16 %v2316, %v2314
      %v2379 = vpack.c.bf16 %v2317, %v2315
      %v2380 = vpack.c.bf16 %v2320, %v2318
      %v2381 = vpack.c.bf16 %v2321, %v2319
      %v2382 = vpack.c.bf16 %v2324, %v2322
      %v2383 = vpack.c.bf16 %v2325, %v2323
      %v2384 = vpack.c.bf16 %v2328, %v2326
      %v2385 = vpack.c.bf16 %v2329, %v2327
      %v2386 = vpack.c.bf16 %v2332, %v2330
      %v2387 = vpack.c.bf16 %v2333, %v2331
      %v2388 = vpack.c.bf16 %v2336, %v2334
      %v2389 = vpack.c.bf16 %v2337, %v2335
      %v2390 = vpack.c.bf16 %v2340, %v2338
      %v2391 = vpack.c.bf16 %v2341, %v2339
      %v2392 = vpack.c.bf16 %v2344, %v2342
      %v2393 = vpack.c.bf16 %v2345, %v2343
      %v2394 = vpack.c.bf16 %v2348, %v2346
      %v2395 = vpack.c.bf16 %v2349, %v2347
      %v2396 = vpack.c.bf16 %v2352, %v2350
      %v2397 = vpack.c.bf16 %v2353, %v2351
      %v2398 = vpack.c.bf16 %v2356, %v2354
      %v2399 = vpack.c.bf16 %v2357, %v2355
      %v2400 = vpack.c.bf16 %v2360, %v2358
      %v2401 = vpack.c.bf16 %v2361, %v2359
      %v2402 = vpack.c.bf16 %v2364, %v2362
      %v2403 = vpack.c.bf16 %v2365, %v2363
      %v2404 = vpack.c.bf16 %v2368, %v2366
      %v2405 = vpack.c.bf16 %v2369, %v2367
      %v2406 = vpack.c.bf16 %v2372, %v2370
      %v2407 = vpack.c.bf16 %v2373, %v2371
      %v2408 = vpack.c.bf16 %v2376, %v2374
      %v2409 = vpack.c.bf16 %v2377, %v2375
      %v2410 = vld [vmem:[#allocation9] sm:$0xf]
      %v2411 = vld [vmem:[#allocation9 + $0xc] sm:$0xf]
      %v2412 = vld [vmem:[#allocation9 + $0x18] sm:$0xf]
      %v2413 = vld [vmem:[#allocation9 + $0x24] sm:$0xf]
      %v2414 = vld [vmem:[#allocation9 + $0x30] sm:$0xf]
      %v2415 = vld [vmem:[#allocation9 + $0x3c] sm:$0xf]
      %v2416 = vld [vmem:[#allocation9 + $0x48] sm:$0xf]
      %v2417 = vld [vmem:[#allocation9 + $0x54] sm:$0xf]
      %v2418 = vld [vmem:[#allocation9 + $0x60] sm:$0xf]
      %v2419 = vld [vmem:[#allocation9 + $0x6c] sm:$0xf]
      %v2420 = vld [vmem:[#allocation9 + $0x78] sm:$0xf]
      %v2421 = vld [vmem:[#allocation9 + $0x84] sm:$0xf]
      %v2422 = vld [vmem:[#allocation9 + $0x90] sm:$0xf]
      %v2423 = vld [vmem:[#allocation9 + $0x9c] sm:$0xf]
      %v2424 = vld [vmem:[#allocation9 + $0xa8] sm:$0xf]
      %v2425 = vld [vmem:[#allocation9 + $0xb4] sm:$0xf]
      %v2426 = vld [vmem:[#allocation9 + $0xc0] sm:$0xf]
      %v2427 = vld [vmem:[#allocation9 + $0xcc] sm:$0xf]
      %v2428 = vld [vmem:[#allocation9 + $0xd8] sm:$0xf]
      %v2429 = vld [vmem:[#allocation9 + $0xe4] sm:$0xf]
      %v2430 = vld [vmem:[#allocation9 + $0xf0] sm:$0xf]
      %v2431 = vld [vmem:[#allocation9 + $0xfc] sm:$0xf]
      %v2432 = vld [vmem:[#allocation9 + $0x108] sm:$0xf]
      %v2433 = vld [vmem:[#allocation9 + $0x114] sm:$0xf]
      %v2434 = vld [vmem:[#allocation9 + $0x120] sm:$0xf]
      %v2435 = vld [vmem:[#allocation9 + $0x12c] sm:$0xf]
      %v2436 = vld [vmem:[#allocation9 + $0x138] sm:$0xf]
      %v2437 = vld [vmem:[#allocation9 + $0x144] sm:$0xf]
      %v2438 = vld [vmem:[#allocation9 + $0x150] sm:$0xf]
      %v2439 = vld [vmem:[#allocation9 + $0x15c] sm:$0xf]
      %v2440 = vld [vmem:[#allocation9 + $0x168] sm:$0xf]
      %v2441 = vld [vmem:[#allocation9 + $0x174] sm:$0xf]
      %v2442 = vld [vmem:[#allocation11 + $0x4] sm:$0x1]
      %v2444 = vperm.slane %v2442, 0
      %v2478 = vunpack.c.l.b16 %v2410
      %v2479 = vunpack.c.l.b16 %v2411
      %v2480 = vunpack.c.l.b16 %v2412
      %v2481 = vunpack.c.l.b16 %v2413
      %v2482 = vunpack.c.l.b16 %v2414
      %v2483 = vunpack.c.l.b16 %v2415
      %v2484 = vunpack.c.l.b16 %v2416
      %v2485 = vunpack.c.l.b16 %v2417
      %v2486 = vunpack.c.l.b16 %v2418
      %v2487 = vunpack.c.l.b16 %v2419
      %v2488 = vunpack.c.l.b16 %v2420
      %v2489 = vunpack.c.l.b16 %v2421
      %v2490 = vunpack.c.l.b16 %v2422
      %v2491 = vunpack.c.l.b16 %v2423
      %v2492 = vunpack.c.l.b16 %v2424
      %v2493 = vunpack.c.l.b16 %v2425
      %v2494 = vunpack.c.l.b16 %v2426
      %v2495 = vunpack.c.l.b16 %v2427
      %v2496 = vunpack.c.l.b16 %v2428
      %v2497 = vunpack.c.l.b16 %v2429
      %v2498 = vunpack.c.l.b16 %v2430
      %v2499 = vunpack.c.l.b16 %v2431
      %v2500 = vunpack.c.l.b16 %v2432
      %v2501 = vunpack.c.l.b16 %v2433
      %v2502 = vunpack.c.l.b16 %v2434
      %v2503 = vunpack.c.l.b16 %v2435
      %v2504 = vunpack.c.l.b16 %v2436
      %v2505 = vunpack.c.l.b16 %v2437
      %v2506 = vunpack.c.l.b16 %v2438
      %v2507 = vunpack.c.l.b16 %v2439
      %v2508 = vunpack.c.l.b16 %v2440
      %v2509 = vunpack.c.l.b16 %v2441
      %v2510 = vpack.c.b16 %v2479, %v2478
      %v2511 = vpack.c.b16 %v2481, %v2480
      %v2512 = vpack.c.b16 %v2483, %v2482
      %v2513 = vpack.c.b16 %v2485, %v2484
      %v2514 = vpack.c.b16 %v2487, %v2486
      %v2515 = vpack.c.b16 %v2489, %v2488
      %v2516 = vpack.c.b16 %v2491, %v2490
      %v2517 = vpack.c.b16 %v2493, %v2492
      %v2518 = vpack.c.b16 %v2495, %v2494
      %v2519 = vpack.c.b16 %v2497, %v2496
      %v2520 = vpack.c.b16 %v2499, %v2498
      %v2521 = vpack.c.b16 %v2501, %v2500
      %v2522 = vpack.c.b16 %v2503, %v2502
      %v2523 = vpack.c.b16 %v2505, %v2504
      %v2524 = vpack.c.b16 %v2507, %v2506
      %v2525 = vpack.c.b16 %v2509, %v2508
      %2542 = vmatpush.bf16.msra.mxu0 %v2517
      %2543 = vmatpush.bf16.msra.mxu0 %v2516
      %2544 = vmatpush.bf16.msra.mxu0 %v2515
      %2545 = vmatpush.bf16.msra.mxu0 %v2514
      %2546 = vmatpush.bf16.msra.mxu0 %v2513
      %2547 = vmatpush.bf16.msra.mxu0 %v2512
      %2548 = vmatpush.bf16.msra.mxu0 %v2511
      %2549 = vmatpush.bf16.msra.mxu0 %v2510
      %2550 = vmatmul.bf16.gmra.mxu0 %v2378
      %v2551 = vpop.f32.mrf.mxu0
      %v2552 = vadd.f32 %v2444, %v2551
      %v2553 = vpop.f32.mrf.mxu0
      %v2554 = vadd.f32 %v2444, %v2553
      %2555 = vmatmul.bf16.gmra.mxu0 %v2380
      %v2556 = vpop.f32.mrf.mxu0
      %v2557 = vadd.f32 %v2444, %v2556
      %v2558 = vpop.f32.mrf.mxu0
      %v2559 = vadd.f32 %v2444, %v2558
      %2560 = vmatmul.bf16.gmra.mxu0 %v2382
      %v2561 = vpop.f32.mrf.mxu0
      %v2562 = vadd.f32 %v2444, %v2561
      %v2563 = vpop.f32.mrf.mxu0
      %v2564 = vadd.f32 %v2444, %v2563
      %2565 = vmatmul.bf16.gmra.mxu0 %v2384
      %v2566 = vpop.f32.mrf.mxu0
      %v2567 = vadd.f32 %v2444, %v2566
      %v2568 = vpop.f32.mrf.mxu0
      %v2569 = vadd.f32 %v2444, %v2568
      %2570 = vmatmul.bf16.gmra.mxu0 %v2386
      %v2571 = vpop.f32.mrf.mxu0
      %v2572 = vadd.f32 %v2444, %v2571
      %v2573 = vpop.f32.mrf.mxu0
      %v2574 = vadd.f32 %v2444, %v2573
      %2575 = vmatmul.bf16.gmra.mxu0 %v2388
      %v2576 = vpop.f32.mrf.mxu0
      %v2577 = vadd.f32 %v2444, %v2576
      %v2578 = vpop.f32.mrf.mxu0
      %v2579 = vadd.f32 %v2444, %v2578
      %2580 = vmatmul.bf16.gmra.mxu0 %v2390
      %v2581 = vpop.f32.mrf.mxu0
      %v2582 = vadd.f32 %v2444, %v2581
      %v2583 = vpop.f32.mrf.mxu0
      %v2584 = vadd.f32 %v2444, %v2583
      %2585 = vmatmul.bf16.gmra.mxu0 %v2392
      %v2586 = vpop.f32.mrf.mxu0
      %v2587 = vadd.f32 %v2444, %v2586
      %v2588 = vpop.f32.mrf.mxu0
      %v2589 = vadd.f32 %v2444, %v2588
      %2590 = vmatmul.bf16.gmra.mxu0 %v2394
      %v2591 = vpop.f32.mrf.mxu0
      %v2592 = vadd.f32 %v2444, %v2591
      %v2593 = vpop.f32.mrf.mxu0
      %v2594 = vadd.f32 %v2444, %v2593
      %2595 = vmatmul.bf16.gmra.mxu0 %v2396
      %v2596 = vpop.f32.mrf.mxu0
      %v2597 = vadd.f32 %v2444, %v2596
      %v2598 = vpop.f32.mrf.mxu0
      %v2599 = vadd.f32 %v2444, %v2598
      %2600 = vmatmul.bf16.gmra.mxu0 %v2398
      %v2601 = vpop.f32.mrf.mxu0
      %v2602 = vadd.f32 %v2444, %v2601
      %v2603 = vpop.f32.mrf.mxu0
      %v2604 = vadd.f32 %v2444, %v2603
      %2605 = vmatmul.bf16.gmra.mxu0 %v2400
      %v2606 = vpop.f32.mrf.mxu0
      %v2607 = vadd.f32 %v2444, %v2606
      %v2608 = vpop.f32.mrf.mxu0
      %v2609 = vadd.f32 %v2444, %v2608
      %2610 = vmatmul.bf16.gmra.mxu0 %v2402
      %v2611 = vpop.f32.mrf.mxu0
      %v2612 = vadd.f32 %v2444, %v2611
      %v2613 = vpop.f32.mrf.mxu0
      %v2614 = vadd.f32 %v2444, %v2613
      %2615 = vmatmul.bf16.gmra.mxu0 %v2404
      %v2616 = vpop.f32.mrf.mxu0
      %v2617 = vadd.f32 %v2444, %v2616
      %v2618 = vpop.f32.mrf.mxu0
      %v2619 = vadd.f32 %v2444, %v2618
      %2620 = vmatmul.bf16.gmra.mxu0 %v2406
      %v2621 = vpop.f32.mrf.mxu0
      %v2622 = vadd.f32 %v2444, %v2621
      %v2623 = vpop.f32.mrf.mxu0
      %v2624 = vadd.f32 %v2444, %v2623
      %2625 = vmatmul.bf16.gmra.mxu0 %v2408
      %v2626 = vpop.f32.mrf.mxu0
      %v2627 = vadd.f32 %v2444, %v2626
      %v2628 = vpop.f32.mrf.mxu0
      %v2629 = vadd.f32 %v2444, %v2628
      %2630 = vdwg.mxu0
      %2631 = vmatpush.bf16.msra.mxu0 %v2525
      %2632 = vmatpush.bf16.msra.mxu0 %v2524
      %2633 = vmatpush.bf16.msra.mxu0 %v2523
      %2634 = vmatpush.bf16.msra.mxu0 %v2522
      %2635 = vmatpush.bf16.msra.mxu0 %v2521
      %2636 = vmatpush.bf16.msra.mxu0 %v2520
      %2637 = vmatpush.bf16.msra.mxu0 %v2519
      %2638 = vmatpush.bf16.msra.mxu0 %v2518
      %2639 = vmatmul.bf16.gmra.mxu0 %v2379
      %v2640 = vpop.f32.mrf.mxu0
      %v2641 = vadd.f32 %v2552, %v2640
      %v2642 = vpop.f32.mrf.mxu0
      %v2643 = vadd.f32 %v2554, %v2642
      %2644 = vmatmul.bf16.gmra.mxu0 %v2381
      %v2645 = vpop.f32.mrf.mxu0
      %v2646 = vadd.f32 %v2557, %v2645
      %v2647 = vpop.f32.mrf.mxu0
      %v2648 = vadd.f32 %v2559, %v2647
      %2649 = vmatmul.bf16.gmra.mxu0 %v2383
      %v2650 = vpop.f32.mrf.mxu0
      %v2651 = vadd.f32 %v2562, %v2650
      %v2652 = vpop.f32.mrf.mxu0
      %v2653 = vadd.f32 %v2564, %v2652
      %2654 = vmatmul.bf16.gmra.mxu0 %v2385
      %v2655 = vpop.f32.mrf.mxu0
      %v2656 = vadd.f32 %v2567, %v2655
      %v2657 = vpop.f32.mrf.mxu0
      %v2658 = vadd.f32 %v2569, %v2657
      %2659 = vmatmul.bf16.gmra.mxu0 %v2387
      %v2660 = vpop.f32.mrf.mxu0
      %v2661 = vadd.f32 %v2572, %v2660
      %v2662 = vpop.f32.mrf.mxu0
      %v2663 = vadd.f32 %v2574, %v2662
      %2664 = vmatmul.bf16.gmra.mxu0 %v2389
      %v2665 = vpop.f32.mrf.mxu0
      %v2666 = vadd.f32 %v2577, %v2665
      %v2667 = vpop.f32.mrf.mxu0
      %v2668 = vadd.f32 %v2579, %v2667
      %2669 = vmatmul.bf16.gmra.mxu0 %v2391
      %v2670 = vpop.f32.mrf.mxu0
      %v2671 = vadd.f32 %v2582, %v2670
      %v2672 = vpop.f32.mrf.mxu0
      %v2673 = vadd.f32 %v2584, %v2672
      %2674 = vmatmul.bf16.gmra.mxu0 %v2393
      %v2675 = vpop.f32.mrf.mxu0
      %v2676 = vadd.f32 %v2587, %v2675
      %v2677 = vpop.f32.mrf.mxu0
      %v2678 = vadd.f32 %v2589, %v2677
      %2679 = vmatmul.bf16.gmra.mxu0 %v2395
      %v2680 = vpop.f32.mrf.mxu0
      %v2681 = vadd.f32 %v2592, %v2680
      %v2682 = vpop.f32.mrf.mxu0
      %v2683 = vadd.f32 %v2594, %v2682
      %2684 = vmatmul.bf16.gmra.mxu0 %v2397
      %v2685 = vpop.f32.mrf.mxu0
      %v2686 = vadd.f32 %v2597, %v2685
      %v2687 = vpop.f32.mrf.mxu0
      %v2688 = vadd.f32 %v2599, %v2687
      %2689 = vmatmul.bf16.gmra.mxu0 %v2399
      %v2690 = vpop.f32.mrf.mxu0
      %v2691 = vadd.f32 %v2602, %v2690
      %v2692 = vpop.f32.mrf.mxu0
      %v2693 = vadd.f32 %v2604, %v2692
      %2694 = vmatmul.bf16.gmra.mxu0 %v2401
      %v2695 = vpop.f32.mrf.mxu0
      %v2696 = vadd.f32 %v2607, %v2695
      %v2697 = vpop.f32.mrf.mxu0
      %v2698 = vadd.f32 %v2609, %v2697
      %2699 = vmatmul.bf16.gmra.mxu0 %v2403
      %v2700 = vpop.f32.mrf.mxu0
      %v2701 = vadd.f32 %v2612, %v2700
      %v2702 = vpop.f32.mrf.mxu0
      %v2703 = vadd.f32 %v2614, %v2702
      %2704 = vmatmul.bf16.gmra.mxu0 %v2405
      %v2705 = vpop.f32.mrf.mxu0
      %v2706 = vadd.f32 %v2617, %v2705
      %v2707 = vpop.f32.mrf.mxu0
      %v2708 = vadd.f32 %v2619, %v2707
      %2709 = vmatmul.bf16.gmra.mxu0 %v2407
      %v2710 = vpop.f32.mrf.mxu0
      %v2711 = vadd.f32 %v2622, %v2710
      %v2712 = vpop.f32.mrf.mxu0
      %v2713 = vadd.f32 %v2624, %v2712
      %2714 = vmatmul.bf16.gmra.mxu0 %v2409
      %v2715 = vpop.f32.mrf.mxu0
      %v2716 = vadd.f32 %v2627, %v2715
      %v2717 = vpop.f32.mrf.mxu0
      %v2718 = vadd.f32 %v2629, %v2717
      %2719 = vdwg.mxu0
      %v2720 = vld [vmem:[#allocation9 + $0x180] sm:$0xf]
      %v2721 = vld [vmem:[#allocation9 + $0x18c] sm:$0xf]
      %v2722 = vld [vmem:[#allocation9 + $0x198] sm:$0xf]
      %v2723 = vld [vmem:[#allocation9 + $0x1a4] sm:$0xf]
      %v2724 = vld [vmem:[#allocation9 + $0x1b0] sm:$0xf]
      %v2725 = vld [vmem:[#allocation9 + $0x1bc] sm:$0xf]
      %v2726 = vld [vmem:[#allocation9 + $0x1c8] sm:$0xf]
      %v2727 = vld [vmem:[#allocation9 + $0x1d4] sm:$0xf]
      %v2728 = vld [vmem:[#allocation9 + $0x1e0] sm:$0xf]
      %v2729 = vld [vmem:[#allocation9 + $0x1ec] sm:$0xf]
      %v2730 = vld [vmem:[#allocation9 + $0x1f8] sm:$0xf]
      %v2731 = vld [vmem:[#allocation9 + $0x204] sm:$0xf]
      %v2732 = vld [vmem:[#allocation9 + $0x210] sm:$0xf]
      %v2733 = vld [vmem:[#allocation9 + $0x21c] sm:$0xf]
      %v2734 = vld [vmem:[#allocation9 + $0x228] sm:$0xf]
      %v2735 = vld [vmem:[#allocation9 + $0x234] sm:$0xf]
      %v2736 = vld [vmem:[#allocation9 + $0x240] sm:$0xf]
      %v2737 = vld [vmem:[#allocation9 + $0x24c] sm:$0xf]
      %v2738 = vld [vmem:[#allocation9 + $0x258] sm:$0xf]
      %v2739 = vld [vmem:[#allocation9 + $0x264] sm:$0xf]
      %v2740 = vld [vmem:[#allocation9 + $0x270] sm:$0xf]
      %v2741 = vld [vmem:[#allocation9 + $0x27c] sm:$0xf]
      %v2742 = vld [vmem:[#allocation9 + $0x288] sm:$0xf]
      %v2743 = vld [vmem:[#allocation9 + $0x294] sm:$0xf]
      %v2744 = vld [vmem:[#allocation9 + $0x2a0] sm:$0xf]
      %v2745 = vld [vmem:[#allocation9 + $0x2ac] sm:$0xf]
      %v2746 = vld [vmem:[#allocation9 + $0x2b8] sm:$0xf]
      %v2747 = vld [vmem:[#allocation9 + $0x2c4] sm:$0xf]
      %v2748 = vld [vmem:[#allocation9 + $0x2d0] sm:$0xf]
      %v2749 = vld [vmem:[#allocation9 + $0x2dc] sm:$0xf]
      %v2750 = vld [vmem:[#allocation9 + $0x2e8] sm:$0xf]
      %v2751 = vld [vmem:[#allocation9 + $0x2f4] sm:$0xf]
      %v2752 = vld [vmem:[#allocation9 + $0x300] sm:$0xf]
      %v2753 = vld [vmem:[#allocation9 + $0x30c] sm:$0xf]
      %v2754 = vld [vmem:[#allocation9 + $0x318] sm:$0xf]
      %v2755 = vld [vmem:[#allocation9 + $0x324] sm:$0xf]
      %v2756 = vld [vmem:[#allocation9 + $0x330] sm:$0xf]
      %v2757 = vld [vmem:[#allocation9 + $0x33c] sm:$0xf]
      %v2758 = vld [vmem:[#allocation9 + $0x348] sm:$0xf]
      %v2759 = vld [vmem:[#allocation9 + $0x354] sm:$0xf]
      %v2760 = vld [vmem:[#allocation9 + $0x360] sm:$0xf]
      %v2761 = vld [vmem:[#allocation9 + $0x36c] sm:$0xf]
      %v2762 = vld [vmem:[#allocation9 + $0x378] sm:$0xf]
      %v2763 = vld [vmem:[#allocation9 + $0x384] sm:$0xf]
      %v2764 = vld [vmem:[#allocation9 + $0x390] sm:$0xf]
      %v2765 = vld [vmem:[#allocation9 + $0x39c] sm:$0xf]
      %v2766 = vld [vmem:[#allocation9 + $0x3a8] sm:$0xf]
      %v2767 = vld [vmem:[#allocation9 + $0x3b4] sm:$0xf]
      %v2768 = vld [vmem:[#allocation9 + $0x3c0] sm:$0xf]
      %v2769 = vld [vmem:[#allocation9 + $0x3cc] sm:$0xf]
      %v2770 = vld [vmem:[#allocation9 + $0x3d8] sm:$0xf]
      %v2771 = vld [vmem:[#allocation9 + $0x3e4] sm:$0xf]
      %v2772 = vld [vmem:[#allocation9 + $0x3f0] sm:$0xf]
      %v2773 = vld [vmem:[#allocation9 + $0x3fc] sm:$0xf]
      %v2774 = vld [vmem:[#allocation9 + $0x408] sm:$0xf]
      %v2775 = vld [vmem:[#allocation9 + $0x414] sm:$0xf]
      %v2776 = vld [vmem:[#allocation9 + $0x420] sm:$0xf]
      %v2777 = vld [vmem:[#allocation9 + $0x42c] sm:$0xf]
      %v2778 = vld [vmem:[#allocation9 + $0x438] sm:$0xf]
      %v2779 = vld [vmem:[#allocation9 + $0x444] sm:$0xf]
      %v2780 = vld [vmem:[#allocation9 + $0x450] sm:$0xf]
      %v2781 = vld [vmem:[#allocation9 + $0x45c] sm:$0xf]
      %v2782 = vld [vmem:[#allocation9 + $0x468] sm:$0xf]
      %v2783 = vld [vmem:[#allocation9 + $0x474] sm:$0xf]
      %v2816 = vunpack.c.l.b16 %v2752
      %v2817 = vunpack.c.l.b16 %v2753
      %v2818 = vunpack.c.l.b16 %v2754
      %v2819 = vunpack.c.l.b16 %v2755
      %v2820 = vunpack.c.l.b16 %v2756
      %v2821 = vunpack.c.l.b16 %v2757
      %v2822 = vunpack.c.l.b16 %v2758
      %v2823 = vunpack.c.l.b16 %v2759
      %v2824 = vunpack.c.l.b16 %v2760
      %v2825 = vunpack.c.l.b16 %v2761
      %v2826 = vunpack.c.l.b16 %v2762
      %v2827 = vunpack.c.l.b16 %v2763
      %v2828 = vunpack.c.l.b16 %v2764
      %v2829 = vunpack.c.l.b16 %v2765
      %v2830 = vunpack.c.l.b16 %v2766
      %v2831 = vunpack.c.l.b16 %v2767
      %v2832 = vunpack.c.l.b16 %v2768
      %v2833 = vunpack.c.l.b16 %v2769
      %v2834 = vunpack.c.l.b16 %v2770
      %v2835 = vunpack.c.l.b16 %v2771
      %v2836 = vunpack.c.l.b16 %v2772
      %v2837 = vunpack.c.l.b16 %v2773
      %v2838 = vunpack.c.l.b16 %v2774
      %v2839 = vunpack.c.l.b16 %v2775
      %v2840 = vunpack.c.l.b16 %v2776
      %v2841 = vunpack.c.l.b16 %v2777
      %v2842 = vunpack.c.l.b16 %v2778
      %v2843 = vunpack.c.l.b16 %v2779
      %v2844 = vunpack.c.l.b16 %v2780
      %v2845 = vunpack.c.l.b16 %v2781
      %v2846 = vunpack.c.l.b16 %v2782
      %v2847 = vunpack.c.l.b16 %v2783
      %v2848 = vpack.c.b16 %v2817, %v2816
      %v2849 = vpack.c.b16 %v2819, %v2818
      %v2850 = vpack.c.b16 %v2821, %v2820
      %v2851 = vpack.c.b16 %v2823, %v2822
      %v2852 = vpack.c.b16 %v2825, %v2824
      %v2853 = vpack.c.b16 %v2827, %v2826
      %v2854 = vpack.c.b16 %v2829, %v2828
      %v2855 = vpack.c.b16 %v2831, %v2830
      %v2856 = vpack.c.b16 %v2833, %v2832
      %v2857 = vpack.c.b16 %v2835, %v2834
      %v2858 = vpack.c.b16 %v2837, %v2836
      %v2859 = vpack.c.b16 %v2839, %v2838
      %v2860 = vpack.c.b16 %v2841, %v2840
      %v2861 = vpack.c.b16 %v2843, %v2842
      %v2862 = vpack.c.b16 %v2845, %v2844
      %v2863 = vpack.c.b16 %v2847, %v2846
      %2880 = vmatpush.bf16.msra.mxu0 %v2855
      %2881 = vmatpush.bf16.msra.mxu0 %v2854
      %2882 = vmatpush.bf16.msra.mxu0 %v2853
      %2883 = vmatpush.bf16.msra.mxu0 %v2852
      %2884 = vmatpush.bf16.msra.mxu0 %v2851
      %2885 = vmatpush.bf16.msra.mxu0 %v2850
      %2886 = vmatpush.bf16.msra.mxu0 %v2849
      %2887 = vmatpush.bf16.msra.mxu0 %v2848
      %2888 = vmatmul.bf16.gmra.mxu0 %v2378
      %v2889 = vpop.f32.mrf.mxu0
      %v2890 = vadd.f32 0.0, %v2889
      %v2891 = vpop.f32.mrf.mxu0
      %v2892 = vadd.f32 0.0, %v2891
      %2893 = vmatmul.bf16.gmra.mxu0 %v2380
      %v2894 = vpop.f32.mrf.mxu0
      %v2895 = vadd.f32 0.0, %v2894
      %v2896 = vpop.f32.mrf.mxu0
      %v2897 = vadd.f32 0.0, %v2896
      %2898 = vmatmul.bf16.gmra.mxu0 %v2382
      %v2899 = vpop.f32.mrf.mxu0
      %v2900 = vadd.f32 0.0, %v2899
      %v2901 = vpop.f32.mrf.mxu0
      %v2902 = vadd.f32 0.0, %v2901
      %2903 = vmatmul.bf16.gmra.mxu0 %v2384
      %v2904 = vpop.f32.mrf.mxu0
      %v2905 = vadd.f32 0.0, %v2904
      %v2906 = vpop.f32.mrf.mxu0
      %v2907 = vadd.f32 0.0, %v2906
      %2908 = vmatmul.bf16.gmra.mxu0 %v2386
      %v2909 = vpop.f32.mrf.mxu0
      %v2910 = vadd.f32 0.0, %v2909
      %v2911 = vpop.f32.mrf.mxu0
      %v2912 = vadd.f32 0.0, %v2911
      %2913 = vmatmul.bf16.gmra.mxu0 %v2388
      %v2914 = vpop.f32.mrf.mxu0
      %v2915 = vadd.f32 0.0, %v2914
      %v2916 = vpop.f32.mrf.mxu0
      %v2917 = vadd.f32 0.0, %v2916
      %2918 = vmatmul.bf16.gmra.mxu0 %v2390
      %v2919 = vpop.f32.mrf.mxu0
      %v2920 = vadd.f32 0.0, %v2919
      %v2921 = vpop.f32.mrf.mxu0
      %v2922 = vadd.f32 0.0, %v2921
      %2923 = vmatmul.bf16.gmra.mxu0 %v2392
      %v2924 = vpop.f32.mrf.mxu0
      %v2925 = vadd.f32 0.0, %v2924
      %v2926 = vpop.f32.mrf.mxu0
      %v2927 = vadd.f32 0.0, %v2926
      %2928 = vmatmul.bf16.gmra.mxu0 %v2394
      %v2929 = vpop.f32.mrf.mxu0
      %v2930 = vadd.f32 0.0, %v2929
      %v2931 = vpop.f32.mrf.mxu0
      %v2932 = vadd.f32 0.0, %v2931
      %2933 = vmatmul.bf16.gmra.mxu0 %v2396
      %v2934 = vpop.f32.mrf.mxu0
      %v2935 = vadd.f32 0.0, %v2934
      %v2936 = vpop.f32.mrf.mxu0
      %v2937 = vadd.f32 0.0, %v2936
      %2938 = vmatmul.bf16.gmra.mxu0 %v2398
      %v2939 = vpop.f32.mrf.mxu0
      %v2940 = vadd.f32 0.0, %v2939
      %v2941 = vpop.f32.mrf.mxu0
      %v2942 = vadd.f32 0.0, %v2941
      %2943 = vmatmul.bf16.gmra.mxu0 %v2400
      %v2944 = vpop.f32.mrf.mxu0
      %v2945 = vadd.f32 0.0, %v2944
      %v2946 = vpop.f32.mrf.mxu0
      %v2947 = vadd.f32 0.0, %v2946
      %2948 = vmatmul.bf16.gmra.mxu0 %v2402
      %v2949 = vpop.f32.mrf.mxu0
      %v2950 = vadd.f32 0.0, %v2949
      %v2951 = vpop.f32.mrf.mxu0
      %v2952 = vadd.f32 0.0, %v2951
      %2953 = vmatmul.bf16.gmra.mxu0 %v2404
      %v2954 = vpop.f32.mrf.mxu0
      %v2955 = vadd.f32 0.0, %v2954
      %v2956 = vpop.f32.mrf.mxu0
      %v2957 = vadd.f32 0.0, %v2956
      %2958 = vmatmul.bf16.gmra.mxu0 %v2406
      %v2959 = vpop.f32.mrf.mxu0
      %v2960 = vadd.f32 0.0, %v2959
      %v2961 = vpop.f32.mrf.mxu0
      %v2962 = vadd.f32 0.0, %v2961
      %2963 = vmatmul.bf16.gmra.mxu0 %v2408
      %v2964 = vpop.f32.mrf.mxu0
      %v2965 = vadd.f32 0.0, %v2964
      %v2966 = vpop.f32.mrf.mxu0
      %v2967 = vadd.f32 0.0, %v2966
      %2968 = vdwg.mxu0
      %2969 = vmatpush.bf16.msra.mxu0 %v2863
      %2970 = vmatpush.bf16.msra.mxu0 %v2862
      %2971 = vmatpush.bf16.msra.mxu0 %v2861
      %2972 = vmatpush.bf16.msra.mxu0 %v2860
      %2973 = vmatpush.bf16.msra.mxu0 %v2859
      %2974 = vmatpush.bf16.msra.mxu0 %v2858
      %2975 = vmatpush.bf16.msra.mxu0 %v2857
      %2976 = vmatpush.bf16.msra.mxu0 %v2856
      %2977 = vmatmul.bf16.gmra.mxu0 %v2379
      %v2978 = vpop.f32.mrf.mxu0
      %v2979 = vadd.f32 %v2890, %v2978
      %v2980 = vpop.f32.mrf.mxu0
      %v2981 = vadd.f32 %v2892, %v2980
      %2982 = vmatmul.bf16.gmra.mxu0 %v2381
      %v2983 = vpop.f32.mrf.mxu0
      %v2984 = vadd.f32 %v2895, %v2983
      %v2985 = vpop.f32.mrf.mxu0
      %v2986 = vadd.f32 %v2897, %v2985
      %2987 = vmatmul.bf16.gmra.mxu0 %v2383
      %v2988 = vpop.f32.mrf.mxu0
      %v2989 = vadd.f32 %v2900, %v2988
      %v2990 = vpop.f32.mrf.mxu0
      %v2991 = vadd.f32 %v2902, %v2990
      %2992 = vmatmul.bf16.gmra.mxu0 %v2385
      %v2993 = vpop.f32.mrf.mxu0
      %v2994 = vadd.f32 %v2905, %v2993
      %v2995 = vpop.f32.mrf.mxu0
      %v2996 = vadd.f32 %v2907, %v2995
      %2997 = vmatmul.bf16.gmra.mxu0 %v2387
      %v2998 = vpop.f32.mrf.mxu0
      %v2999 = vadd.f32 %v2910, %v2998
      %v3000 = vpop.f32.mrf.mxu0
      %v3001 = vadd.f32 %v2912, %v3000
      %3002 = vmatmul.bf16.gmra.mxu0 %v2389
      %v3003 = vpop.f32.mrf.mxu0
      %v3004 = vadd.f32 %v2915, %v3003
      %v3005 = vpop.f32.mrf.mxu0
      %v3006 = vadd.f32 %v2917, %v3005
      %3007 = vmatmul.bf16.gmra.mxu0 %v2391
      %v3008 = vpop.f32.mrf.mxu0
      %v3009 = vadd.f32 %v2920, %v3008
      %v3010 = vpop.f32.mrf.mxu0
      %v3011 = vadd.f32 %v2922, %v3010
      %3012 = vmatmul.bf16.gmra.mxu0 %v2393
      %v3013 = vpop.f32.mrf.mxu0
      %v3014 = vadd.f32 %v2925, %v3013
      %v3015 = vpop.f32.mrf.mxu0
      %v3016 = vadd.f32 %v2927, %v3015
      %3017 = vmatmul.bf16.gmra.mxu0 %v2395
      %v3018 = vpop.f32.mrf.mxu0
      %v3019 = vadd.f32 %v2930, %v3018
      %v3020 = vpop.f32.mrf.mxu0
      %v3021 = vadd.f32 %v2932, %v3020
      %3022 = vmatmul.bf16.gmra.mxu0 %v2397
      %v3023 = vpop.f32.mrf.mxu0
      %v3024 = vadd.f32 %v2935, %v3023
      %v3025 = vpop.f32.mrf.mxu0
      %v3026 = vadd.f32 %v2937, %v3025
      %3027 = vmatmul.bf16.gmra.mxu0 %v2399
      %v3028 = vpop.f32.mrf.mxu0
      %v3029 = vadd.f32 %v2940, %v3028
      %v3030 = vpop.f32.mrf.mxu0
      %v3031 = vadd.f32 %v2942, %v3030
      %3032 = vmatmul.bf16.gmra.mxu0 %v2401
      %v3033 = vpop.f32.mrf.mxu0
      %v3034 = vadd.f32 %v2945, %v3033
      %v3035 = vpop.f32.mrf.mxu0
      %v3036 = vadd.f32 %v2947, %v3035
      %3037 = vmatmul.bf16.gmra.mxu0 %v2403
      %v3038 = vpop.f32.mrf.mxu0
      %v3039 = vadd.f32 %v2950, %v3038
      %v3040 = vpop.f32.mrf.mxu0
      %v3041 = vadd.f32 %v2952, %v3040
      %3042 = vmatmul.bf16.gmra.mxu0 %v2405
      %v3043 = vpop.f32.mrf.mxu0
      %v3044 = vadd.f32 %v2955, %v3043
      %v3045 = vpop.f32.mrf.mxu0
      %v3046 = vadd.f32 %v2957, %v3045
      %3047 = vmatmul.bf16.gmra.mxu0 %v2407
      %v3048 = vpop.f32.mrf.mxu0
      %v3049 = vadd.f32 %v2960, %v3048
      %v3050 = vpop.f32.mrf.mxu0
      %v3051 = vadd.f32 %v2962, %v3050
      %3052 = vmatmul.bf16.gmra.mxu0 %v2409
      %v3053 = vpop.f32.mrf.mxu0
      %v3054 = vadd.f32 %v2965, %v3053
      %v3055 = vpop.f32.mrf.mxu0
      %v3056 = vadd.f32 %v2967, %v3055
      %3057 = vdwg.mxu0
      %v3090 = vunpack.c.l.b16 %v2720
      %v3091 = vunpack.c.l.b16 %v2721
      %v3092 = vunpack.c.l.b16 %v2722
      %v3093 = vunpack.c.l.b16 %v2723
      %v3094 = vunpack.c.l.b16 %v2724
      %v3095 = vunpack.c.l.b16 %v2725
      %v3096 = vunpack.c.l.b16 %v2726
      %v3097 = vunpack.c.l.b16 %v2727
      %v3098 = vunpack.c.l.b16 %v2728
      %v3099 = vunpack.c.l.b16 %v2729
      %v3100 = vunpack.c.l.b16 %v2730
      %v3101 = vunpack.c.l.b16 %v2731
      %v3102 = vunpack.c.l.b16 %v2732
      %v3103 = vunpack.c.l.b16 %v2733
      %v3104 = vunpack.c.l.b16 %v2734
      %v3105 = vunpack.c.l.b16 %v2735
      %v3106 = vunpack.c.l.b16 %v2736
      %v3107 = vunpack.c.l.b16 %v2737
      %v3108 = vunpack.c.l.b16 %v2738
      %v3109 = vunpack.c.l.b16 %v2739
      %v3110 = vunpack.c.l.b16 %v2740
      %v3111 = vunpack.c.l.b16 %v2741
      %v3112 = vunpack.c.l.b16 %v2742
      %v3113 = vunpack.c.l.b16 %v2743
      %v3114 = vunpack.c.l.b16 %v2744
      %v3115 = vunpack.c.l.b16 %v2745
      %v3116 = vunpack.c.l.b16 %v2746
      %v3117 = vunpack.c.l.b16 %v2747
      %v3118 = vunpack.c.l.b16 %v2748
      %v3119 = vunpack.c.l.b16 %v2749
      %v3120 = vunpack.c.l.b16 %v2750
      %v3121 = vunpack.c.l.b16 %v2751
      %v3122 = vpack.c.b16 %v3091, %v3090
      %v3123 = vpack.c.b16 %v3093, %v3092
      %v3124 = vpack.c.b16 %v3095, %v3094
      %v3125 = vpack.c.b16 %v3097, %v3096
      %v3126 = vpack.c.b16 %v3099, %v3098
      %v3127 = vpack.c.b16 %v3101, %v3100
      %v3128 = vpack.c.b16 %v3103, %v3102
      %v3129 = vpack.c.b16 %v3105, %v3104
      %v3130 = vpack.c.b16 %v3107, %v3106
      %v3131 = vpack.c.b16 %v3109, %v3108
      %v3132 = vpack.c.b16 %v3111, %v3110
      %v3133 = vpack.c.b16 %v3113, %v3112
      %v3134 = vpack.c.b16 %v3115, %v3114
      %v3135 = vpack.c.b16 %v3117, %v3116
      %v3136 = vpack.c.b16 %v3119, %v3118
      %v3137 = vpack.c.b16 %v3121, %v3120
      %3154 = vmatpush.bf16.msra.mxu0 %v3129
      %3155 = vmatpush.bf16.msra.mxu0 %v3128
      %3156 = vmatpush.bf16.msra.mxu0 %v3127
      %3157 = vmatpush.bf16.msra.mxu0 %v3126
      %3158 = vmatpush.bf16.msra.mxu0 %v3125
      %3159 = vmatpush.bf16.msra.mxu0 %v3124
      %3160 = vmatpush.bf16.msra.mxu0 %v3123
      %3161 = vmatpush.bf16.msra.mxu0 %v3122
      %3162 = vmatmul.bf16.gmra.mxu0 %v1344
      %v3163 = vpop.f32.mrf.mxu0
      %v3164 = vadd.f32 %v2979, %v3163
      %v3165 = vpop.f32.mrf.mxu0
      %v3166 = vadd.f32 %v2981, %v3165
      %3167 = vmatmul.bf16.gmra.mxu0 %v1346
      %v3168 = vpop.f32.mrf.mxu0
      %v3169 = vadd.f32 %v2984, %v3168
      %v3170 = vpop.f32.mrf.mxu0
      %v3171 = vadd.f32 %v2986, %v3170
      %3172 = vmatmul.bf16.gmra.mxu0 %v1348
      %v3173 = vpop.f32.mrf.mxu0
      %v3174 = vadd.f32 %v2989, %v3173
      %v3175 = vpop.f32.mrf.mxu0
      %v3176 = vadd.f32 %v2991, %v3175
      %3177 = vmatmul.bf16.gmra.mxu0 %v1350
      %v3178 = vpop.f32.mrf.mxu0
      %v3179 = vadd.f32 %v2994, %v3178
      %v3180 = vpop.f32.mrf.mxu0
      %v3181 = vadd.f32 %v2996, %v3180
      %3182 = vmatmul.bf16.gmra.mxu0 %v1352
      %v3183 = vpop.f32.mrf.mxu0
      %v3184 = vadd.f32 %v2999, %v3183
      %v3185 = vpop.f32.mrf.mxu0
      %v3186 = vadd.f32 %v3001, %v3185
      %3187 = vmatmul.bf16.gmra.mxu0 %v1354
      %v3188 = vpop.f32.mrf.mxu0
      %v3189 = vadd.f32 %v3004, %v3188
      %v3190 = vpop.f32.mrf.mxu0
      %v3191 = vadd.f32 %v3006, %v3190
      %3192 = vmatmul.bf16.gmra.mxu0 %v1356
      %v3193 = vpop.f32.mrf.mxu0
      %v3194 = vadd.f32 %v3009, %v3193
      %v3195 = vpop.f32.mrf.mxu0
      %v3196 = vadd.f32 %v3011, %v3195
      %3197 = vmatmul.bf16.gmra.mxu0 %v1358
      %v3198 = vpop.f32.mrf.mxu0
      %v3199 = vadd.f32 %v3014, %v3198
      %v3200 = vpop.f32.mrf.mxu0
      %v3201 = vadd.f32 %v3016, %v3200
      %3202 = vmatmul.bf16.gmra.mxu0 %v1360
      %v3203 = vpop.f32.mrf.mxu0
      %v3204 = vadd.f32 %v3019, %v3203
      %v3205 = vpop.f32.mrf.mxu0
      %v3206 = vadd.f32 %v3021, %v3205
      %3207 = vmatmul.bf16.gmra.mxu0 %v1362
      %v3208 = vpop.f32.mrf.mxu0
      %v3209 = vadd.f32 %v3024, %v3208
      %v3210 = vpop.f32.mrf.mxu0
      %v3211 = vadd.f32 %v3026, %v3210
      %3212 = vmatmul.bf16.gmra.mxu0 %v1364
      %v3213 = vpop.f32.mrf.mxu0
      %v3214 = vadd.f32 %v3029, %v3213
      %v3215 = vpop.f32.mrf.mxu0
      %v3216 = vadd.f32 %v3031, %v3215
      %3217 = vmatmul.bf16.gmra.mxu0 %v1366
      %v3218 = vpop.f32.mrf.mxu0
      %v3219 = vadd.f32 %v3034, %v3218
      %v3220 = vpop.f32.mrf.mxu0
      %v3221 = vadd.f32 %v3036, %v3220
      %3222 = vmatmul.bf16.gmra.mxu0 %v1368
      %v3223 = vpop.f32.mrf.mxu0
      %v3224 = vadd.f32 %v3039, %v3223
      %v3225 = vpop.f32.mrf.mxu0
      %v3226 = vadd.f32 %v3041, %v3225
      %3227 = vmatmul.bf16.gmra.mxu0 %v1370
      %v3228 = vpop.f32.mrf.mxu0
      %v3229 = vadd.f32 %v3044, %v3228
      %v3230 = vpop.f32.mrf.mxu0
      %v3231 = vadd.f32 %v3046, %v3230
      %3232 = vmatmul.bf16.gmra.mxu0 %v1372
      %v3233 = vpop.f32.mrf.mxu0
      %v3234 = vadd.f32 %v3049, %v3233
      %v3235 = vpop.f32.mrf.mxu0
      %v3236 = vadd.f32 %v3051, %v3235
      %3237 = vmatmul.bf16.gmra.mxu0 %v1374
      %v3238 = vpop.f32.mrf.mxu0
      %v3239 = vadd.f32 %v3054, %v3238
      %v3240 = vpop.f32.mrf.mxu0
      %v3241 = vadd.f32 %v3056, %v3240
      %3242 = vdwg.mxu0
      %3243 = vmatpush.bf16.msra.mxu0 %v3137
      %3244 = vmatpush.bf16.msra.mxu0 %v3136
      %3245 = vmatpush.bf16.msra.mxu0 %v3135
      %3246 = vmatpush.bf16.msra.mxu0 %v3134
      %3247 = vmatpush.bf16.msra.mxu0 %v3133
      %3248 = vmatpush.bf16.msra.mxu0 %v3132
      %3249 = vmatpush.bf16.msra.mxu0 %v3131
      %3250 = vmatpush.bf16.msra.mxu0 %v3130
      %3251 = vmatmul.bf16.gmra.mxu0 %v1345
      %v3252 = vpop.f32.mrf.mxu0
      %v3253 = vadd.f32 %v3164, %v3252
      %v3254 = vpop.f32.mrf.mxu0
      %v3255 = vadd.f32 %v3166, %v3254
      %3256 = vmatmul.bf16.gmra.mxu0 %v1347
      %v3257 = vpop.f32.mrf.mxu0
      %v3258 = vadd.f32 %v3169, %v3257
      %v3259 = vpop.f32.mrf.mxu0
      %v3260 = vadd.f32 %v3171, %v3259
      %3261 = vmatmul.bf16.gmra.mxu0 %v1349
      %v3262 = vpop.f32.mrf.mxu0
      %v3263 = vadd.f32 %v3174, %v3262
      %v3264 = vpop.f32.mrf.mxu0
      %v3265 = vadd.f32 %v3176, %v3264
      %3266 = vmatmul.bf16.gmra.mxu0 %v1351
      %v3267 = vpop.f32.mrf.mxu0
      %v3268 = vadd.f32 %v3179, %v3267
      %v3269 = vpop.f32.mrf.mxu0
      %v3270 = vadd.f32 %v3181, %v3269
      %3271 = vmatmul.bf16.gmra.mxu0 %v1353
      %v3272 = vpop.f32.mrf.mxu0
      %v3273 = vadd.f32 %v3184, %v3272
      %v3274 = vpop.f32.mrf.mxu0
      %v3275 = vadd.f32 %v3186, %v3274
      %3276 = vmatmul.bf16.gmra.mxu0 %v1355
      %v3277 = vpop.f32.mrf.mxu0
      %v3278 = vadd.f32 %v3189, %v3277
      %v3279 = vpop.f32.mrf.mxu0
      %v3280 = vadd.f32 %v3191, %v3279
      %3281 = vmatmul.bf16.gmra.mxu0 %v1357
      %v3282 = vpop.f32.mrf.mxu0
      %v3283 = vadd.f32 %v3194, %v3282
      %v3284 = vpop.f32.mrf.mxu0
      %v3285 = vadd.f32 %v3196, %v3284
      %3286 = vmatmul.bf16.gmra.mxu0 %v1359
      %v3287 = vpop.f32.mrf.mxu0
      %v3288 = vadd.f32 %v3199, %v3287
      %v3289 = vpop.f32.mrf.mxu0
      %v3290 = vadd.f32 %v3201, %v3289
      %3291 = vmatmul.bf16.gmra.mxu0 %v1361
      %v3292 = vpop.f32.mrf.mxu0
      %v3293 = vadd.f32 %v3204, %v3292
      %v3294 = vpop.f32.mrf.mxu0
      %v3295 = vadd.f32 %v3206, %v3294
      %3296 = vmatmul.bf16.gmra.mxu0 %v1363
      %v3297 = vpop.f32.mrf.mxu0
      %v3298 = vadd.f32 %v3209, %v3297
      %v3299 = vpop.f32.mrf.mxu0
      %v3300 = vadd.f32 %v3211, %v3299
      %3301 = vmatmul.bf16.gmra.mxu0 %v1365
      %v3302 = vpop.f32.mrf.mxu0
      %v3303 = vadd.f32 %v3214, %v3302
      %v3304 = vpop.f32.mrf.mxu0
      %v3305 = vadd.f32 %v3216, %v3304
      %3306 = vmatmul.bf16.gmra.mxu0 %v1367
      %v3307 = vpop.f32.mrf.mxu0
      %v3308 = vadd.f32 %v3219, %v3307
      %v3309 = vpop.f32.mrf.mxu0
      %v3310 = vadd.f32 %v3221, %v3309
      %3311 = vmatmul.bf16.gmra.mxu0 %v1369
      %v3312 = vpop.f32.mrf.mxu0
      %v3313 = vadd.f32 %v3224, %v3312
      %v3314 = vpop.f32.mrf.mxu0
      %v3315 = vadd.f32 %v3226, %v3314
      %3316 = vmatmul.bf16.gmra.mxu0 %v1371
      %v3317 = vpop.f32.mrf.mxu0
      %v3318 = vadd.f32 %v3229, %v3317
      %v3319 = vpop.f32.mrf.mxu0
      %v3320 = vadd.f32 %v3231, %v3319
      %3321 = vmatmul.bf16.gmra.mxu0 %v1373
      %v3322 = vpop.f32.mrf.mxu0
      %v3323 = vadd.f32 %v3234, %v3322
      %v3324 = vpop.f32.mrf.mxu0
      %v3325 = vadd.f32 %v3236, %v3324
      %3326 = vmatmul.bf16.gmra.mxu0 %v1375
      %v3327 = vpop.f32.mrf.mxu0
      %v3328 = vadd.f32 %v3239, %v3327
      %v3329 = vpop.f32.mrf.mxu0
      %v3330 = vadd.f32 %v3241, %v3329
      %3331 = vdwg.mxu0
      %v3332 = vld [vmem:[#allocation11 + $0x5] sm:$0x1]
      %v3334 = vperm.slane %v3332, 0
      %v3336 = vadd.f32 %v3253, %v3334
      %v3337 = vadd.f32 %v3255, %v3334
      %v3338 = vadd.f32 %v3258, %v3334
      %v3339 = vadd.f32 %v3260, %v3334
      %v3340 = vadd.f32 %v3263, %v3334
      %v3341 = vadd.f32 %v3265, %v3334
      %v3342 = vadd.f32 %v3268, %v3334
      %v3343 = vadd.f32 %v3270, %v3334
      %v3344 = vadd.f32 %v3273, %v3334
      %v3345 = vadd.f32 %v3275, %v3334
      %v3346 = vadd.f32 %v3278, %v3334
      %v3347 = vadd.f32 %v3280, %v3334
      %v3348 = vadd.f32 %v3283, %v3334
      %v3349 = vadd.f32 %v3285, %v3334
      %v3350 = vadd.f32 %v3288, %v3334
      %v3351 = vadd.f32 %v3290, %v3334
      %v3352 = vadd.f32 %v3293, %v3334
      %v3353 = vadd.f32 %v3295, %v3334
      %v3354 = vadd.f32 %v3298, %v3334
      %v3355 = vadd.f32 %v3300, %v3334
      %v3356 = vadd.f32 %v3303, %v3334
      %v3357 = vadd.f32 %v3305, %v3334
      %v3358 = vadd.f32 %v3308, %v3334
      %v3359 = vadd.f32 %v3310, %v3334
      %v3360 = vadd.f32 %v3313, %v3334
      %v3361 = vadd.f32 %v3315, %v3334
      %v3362 = vadd.f32 %v3318, %v3334
      %v3363 = vadd.f32 %v3320, %v3334
      %v3364 = vadd.f32 %v3323, %v3334
      %v3365 = vadd.f32 %v3325, %v3334
      %v3366 = vadd.f32 %v3328, %v3334
      %v3367 = vadd.f32 %v3330, %v3334
      %v3368 = vmax.f32 %v3336, 0.0
      %v3369 = vmax.f32 %v3337, 0.0
      %v3370 = vmax.f32 %v3338, 0.0
      %v3371 = vmax.f32 %v3339, 0.0
      %v3372 = vmax.f32 %v3340, 0.0
      %v3373 = vmax.f32 %v3341, 0.0
      %v3374 = vmax.f32 %v3342, 0.0
      %v3375 = vmax.f32 %v3343, 0.0
      %v3376 = vmax.f32 %v3344, 0.0
      %v3377 = vmax.f32 %v3345, 0.0
      %v3378 = vmax.f32 %v3346, 0.0
      %v3379 = vmax.f32 %v3347, 0.0
      %v3380 = vmax.f32 %v3348, 0.0
      %v3381 = vmax.f32 %v3349, 0.0
      %v3382 = vmax.f32 %v3350, 0.0
      %v3383 = vmax.f32 %v3351, 0.0
      %v3384 = vmax.f32 %v3352, 0.0
      %v3385 = vmax.f32 %v3353, 0.0
      %v3386 = vmax.f32 %v3354, 0.0
      %v3387 = vmax.f32 %v3355, 0.0
      %v3388 = vmax.f32 %v3356, 0.0
      %v3389 = vmax.f32 %v3357, 0.0
      %v3390 = vmax.f32 %v3358, 0.0
      %v3391 = vmax.f32 %v3359, 0.0
      %v3392 = vmax.f32 %v3360, 0.0
      %v3393 = vmax.f32 %v3361, 0.0
      %v3394 = vmax.f32 %v3362, 0.0
      %v3395 = vmax.f32 %v3363, 0.0
      %v3396 = vmax.f32 %v3364, 0.0
      %v3397 = vmax.f32 %v3365, 0.0
      %v3398 = vmax.f32 %v3366, 0.0
      %v3399 = vmax.f32 %v3367, 0.0
      %v3400 = vpack.c.bf16 %v3369, %v3368
      %v3401 = vpack.c.bf16 %v3371, %v3370
      %v3402 = vpack.c.bf16 %v3373, %v3372
      %v3403 = vpack.c.bf16 %v3375, %v3374
      %v3404 = vpack.c.bf16 %v3377, %v3376
      %v3405 = vpack.c.bf16 %v3379, %v3378
      %v3406 = vpack.c.bf16 %v3381, %v3380
      %v3407 = vpack.c.bf16 %v3383, %v3382
      %v3408 = vpack.c.bf16 %v3385, %v3384
      %v3409 = vpack.c.bf16 %v3387, %v3386
      %v3410 = vpack.c.bf16 %v3389, %v3388
      %v3411 = vpack.c.bf16 %v3391, %v3390
      %v3412 = vpack.c.bf16 %v3393, %v3392
      %v3413 = vpack.c.bf16 %v3395, %v3394
      %v3414 = vpack.c.bf16 %v3397, %v3396
      %v3415 = vpack.c.bf16 %v3399, %v3398
      %v3416 = vld [vmem:[#allocation9 + $0x480] sm:$0xf]
      %v3417 = vld [vmem:[#allocation9 + $0x48c] sm:$0xf]
      %v3418 = vld [vmem:[#allocation9 + $0x498] sm:$0xf]
      %v3419 = vld [vmem:[#allocation9 + $0x4a4] sm:$0xf]
      %v3420 = vld [vmem:[#allocation9 + $0x4b0] sm:$0xf]
      %v3421 = vld [vmem:[#allocation9 + $0x4bc] sm:$0xf]
      %v3422 = vld [vmem:[#allocation9 + $0x4c8] sm:$0xf]
      %v3423 = vld [vmem:[#allocation9 + $0x4d4] sm:$0xf]
      %v3424 = vld [vmem:[#allocation9 + $0x4e0] sm:$0xf]
      %v3425 = vld [vmem:[#allocation9 + $0x4ec] sm:$0xf]
      %v3426 = vld [vmem:[#allocation9 + $0x4f8] sm:$0xf]
      %v3427 = vld [vmem:[#allocation9 + $0x504] sm:$0xf]
      %v3428 = vld [vmem:[#allocation9 + $0x510] sm:$0xf]
      %v3429 = vld [vmem:[#allocation9 + $0x51c] sm:$0xf]
      %v3430 = vld [vmem:[#allocation9 + $0x528] sm:$0xf]
      %v3431 = vld [vmem:[#allocation9 + $0x534] sm:$0xf]
      %v3432 = vld [vmem:[#allocation11 + $0x6] sm:$0x1]
      %v3434 = vperm.slane %v3432, 0
      %v3452 = vunpack.c.l.b16 %v3416
      %v3453 = vunpack.c.l.b16 %v3417
      %v3454 = vunpack.c.l.b16 %v3418
      %v3455 = vunpack.c.l.b16 %v3419
      %v3456 = vunpack.c.l.b16 %v3420
      %v3457 = vunpack.c.l.b16 %v3421
      %v3458 = vunpack.c.l.b16 %v3422
      %v3459 = vunpack.c.l.b16 %v3423
      %v3460 = vunpack.c.l.b16 %v3424
      %v3461 = vunpack.c.l.b16 %v3425
      %v3462 = vunpack.c.l.b16 %v3426
      %v3463 = vunpack.c.l.b16 %v3427
      %v3464 = vunpack.c.l.b16 %v3428
      %v3465 = vunpack.c.l.b16 %v3429
      %v3466 = vunpack.c.l.b16 %v3430
      %v3467 = vunpack.c.l.b16 %v3431
      %v3468 = vpack.c.b16 %v3453, %v3452
      %v3469 = vpack.c.b16 %v3455, %v3454
      %v3470 = vpack.c.b16 %v3457, %v3456
      %v3471 = vpack.c.b16 %v3459, %v3458
      %v3472 = vpack.c.b16 %v3461, %v3460
      %v3473 = vpack.c.b16 %v3463, %v3462
      %v3474 = vpack.c.b16 %v3465, %v3464
      %v3475 = vpack.c.b16 %v3467, %v3466
      %3484 = vmatpush.bf16.msra.mxu0 %v3475
      %3485 = vmatpush.bf16.msra.mxu0 %v3474
      %3486 = vmatpush.bf16.msra.mxu0 %v3473
      %3487 = vmatpush.bf16.msra.mxu0 %v3472
      %3488 = vmatpush.bf16.msra.mxu0 %v3471
      %3489 = vmatpush.bf16.msra.mxu0 %v3470
      %3490 = vmatpush.bf16.msra.mxu0 %v3469
      %3491 = vmatpush.bf16.msra.mxu0 %v3468
      %3492 = vmatmul.bf16.gmra.mxu0 %v3400
      %v3493 = vpop.f32.mrf.mxu0
      %v3494 = vadd.f32 %v3434, %v3493
      %v3495 = vpop.f32.mrf.mxu0
      %v3496 = vadd.f32 %v3434, %v3495
      %3497 = vmatmul.bf16.gmra.mxu0 %v3401
      %v3498 = vpop.f32.mrf.mxu0
      %v3499 = vadd.f32 %v3434, %v3498
      %v3500 = vpop.f32.mrf.mxu0
      %v3501 = vadd.f32 %v3434, %v3500
      %3502 = vmatmul.bf16.gmra.mxu0 %v3402
      %v3503 = vpop.f32.mrf.mxu0
      %v3504 = vadd.f32 %v3434, %v3503
      %v3505 = vpop.f32.mrf.mxu0
      %v3506 = vadd.f32 %v3434, %v3505
      %3507 = vmatmul.bf16.gmra.mxu0 %v3403
      %v3508 = vpop.f32.mrf.mxu0
      %v3509 = vadd.f32 %v3434, %v3508
      %v3510 = vpop.f32.mrf.mxu0
      %v3511 = vadd.f32 %v3434, %v3510
      %3512 = vmatmul.bf16.gmra.mxu0 %v3404
      %v3513 = vpop.f32.mrf.mxu0
      %v3514 = vadd.f32 %v3434, %v3513
      %v3515 = vpop.f32.mrf.mxu0
      %v3516 = vadd.f32 %v3434, %v3515
      %3517 = vmatmul.bf16.gmra.mxu0 %v3405
      %v3518 = vpop.f32.mrf.mxu0
      %v3519 = vadd.f32 %v3434, %v3518
      %v3520 = vpop.f32.mrf.mxu0
      %v3521 = vadd.f32 %v3434, %v3520
      %3522 = vmatmul.bf16.gmra.mxu0 %v3406
      %v3523 = vpop.f32.mrf.mxu0
      %v3524 = vadd.f32 %v3434, %v3523
      %v3525 = vpop.f32.mrf.mxu0
      %v3526 = vadd.f32 %v3434, %v3525
      %3527 = vmatmul.bf16.gmra.mxu0 %v3407
      %v3528 = vpop.f32.mrf.mxu0
      %v3529 = vadd.f32 %v3434, %v3528
      %v3530 = vpop.f32.mrf.mxu0
      %v3531 = vadd.f32 %v3434, %v3530
      %3532 = vmatmul.bf16.gmra.mxu0 %v3408
      %v3533 = vpop.f32.mrf.mxu0
      %v3534 = vadd.f32 %v3434, %v3533
      %v3535 = vpop.f32.mrf.mxu0
      %v3536 = vadd.f32 %v3434, %v3535
      %3537 = vmatmul.bf16.gmra.mxu0 %v3409
      %v3538 = vpop.f32.mrf.mxu0
      %v3539 = vadd.f32 %v3434, %v3538
      %v3540 = vpop.f32.mrf.mxu0
      %v3541 = vadd.f32 %v3434, %v3540
      %3542 = vmatmul.bf16.gmra.mxu0 %v3410
      %v3543 = vpop.f32.mrf.mxu0
      %v3544 = vadd.f32 %v3434, %v3543
      %v3545 = vpop.f32.mrf.mxu0
      %v3546 = vadd.f32 %v3434, %v3545
      %3547 = vmatmul.bf16.gmra.mxu0 %v3411
      %v3548 = vpop.f32.mrf.mxu0
      %v3549 = vadd.f32 %v3434, %v3548
      %v3550 = vpop.f32.mrf.mxu0
      %v3551 = vadd.f32 %v3434, %v3550
      %3552 = vmatmul.bf16.gmra.mxu0 %v3412
      %v3553 = vpop.f32.mrf.mxu0
      %v3554 = vadd.f32 %v3434, %v3553
      %v3555 = vpop.f32.mrf.mxu0
      %v3556 = vadd.f32 %v3434, %v3555
      %3557 = vmatmul.bf16.gmra.mxu0 %v3413
      %v3558 = vpop.f32.mrf.mxu0
      %v3559 = vadd.f32 %v3434, %v3558
      %v3560 = vpop.f32.mrf.mxu0
      %v3561 = vadd.f32 %v3434, %v3560
      %3562 = vmatmul.bf16.gmra.mxu0 %v3414
      %v3563 = vpop.f32.mrf.mxu0
      %v3564 = vadd.f32 %v3434, %v3563
      %v3565 = vpop.f32.mrf.mxu0
      %v3566 = vadd.f32 %v3434, %v3565
      %3567 = vmatmul.bf16.gmra.mxu0 %v3415
      %v3568 = vpop.f32.mrf.mxu0
      %v3569 = vadd.f32 %v3434, %v3568
      %v3570 = vpop.f32.mrf.mxu0
      %v3571 = vadd.f32 %v3434, %v3570
      %3572 = vdwg.mxu0
      %v3573 = vmax.f32 %v3494, 0.0
      %v3574 = vmax.f32 %v3496, 0.0
      %v3575 = vmax.f32 %v3499, 0.0
      %v3576 = vmax.f32 %v3501, 0.0
      %v3577 = vmax.f32 %v3504, 0.0
      %v3578 = vmax.f32 %v3506, 0.0
      %v3579 = vmax.f32 %v3509, 0.0
      %v3580 = vmax.f32 %v3511, 0.0
      %v3581 = vmax.f32 %v3514, 0.0
      %v3582 = vmax.f32 %v3516, 0.0
      %v3583 = vmax.f32 %v3519, 0.0
      %v3584 = vmax.f32 %v3521, 0.0
      %v3585 = vmax.f32 %v3524, 0.0
      %v3586 = vmax.f32 %v3526, 0.0
      %v3587 = vmax.f32 %v3529, 0.0
      %v3588 = vmax.f32 %v3531, 0.0
      %v3589 = vmax.f32 %v3534, 0.0
      %v3590 = vmax.f32 %v3536, 0.0
      %v3591 = vmax.f32 %v3539, 0.0
      %v3592 = vmax.f32 %v3541, 0.0
      %v3593 = vmax.f32 %v3544, 0.0
      %v3594 = vmax.f32 %v3546, 0.0
      %v3595 = vmax.f32 %v3549, 0.0
      %v3596 = vmax.f32 %v3551, 0.0
      %v3597 = vmax.f32 %v3554, 0.0
      %v3598 = vmax.f32 %v3556, 0.0
      %v3599 = vmax.f32 %v3559, 0.0
      %v3600 = vmax.f32 %v3561, 0.0
      %v3601 = vmax.f32 %v3564, 0.0
      %v3602 = vmax.f32 %v3566, 0.0
      %v3603 = vmax.f32 %v3569, 0.0
      %v3604 = vmax.f32 %v3571, 0.0
      %v3605 = vpack.c.bf16 %v3574, %v3573
      %v3606 = vpack.c.bf16 %v3576, %v3575
      %v3607 = vpack.c.bf16 %v3578, %v3577
      %v3608 = vpack.c.bf16 %v3580, %v3579
      %v3609 = vpack.c.bf16 %v3582, %v3581
      %v3610 = vpack.c.bf16 %v3584, %v3583
      %v3611 = vpack.c.bf16 %v3586, %v3585
      %v3612 = vpack.c.bf16 %v3588, %v3587
      %v3613 = vpack.c.bf16 %v3590, %v3589
      %v3614 = vpack.c.bf16 %v3592, %v3591
      %v3615 = vpack.c.bf16 %v3594, %v3593
      %v3616 = vpack.c.bf16 %v3596, %v3595
      %v3617 = vpack.c.bf16 %v3598, %v3597
      %v3618 = vpack.c.bf16 %v3600, %v3599
      %v3619 = vpack.c.bf16 %v3602, %v3601
      %v3620 = vpack.c.bf16 %v3604, %v3603
      %v3621 = vld [vmem:[#allocation9 + $0x540] sm:$0xff]
      %v3622 = vld [vmem:[#allocation9 + $0x548] sm:$0xf]
      %v3623 = vld [vmem:[#allocation9 + $0x54c] sm:$0xff]
      %v3624 = vld [vmem:[#allocation9 + $0x554] sm:$0xf]
      %v3625 = vld [vmem:[#allocation9 + $0x558] sm:$0xff]
      %v3626 = vld [vmem:[#allocation9 + $0x560] sm:$0xf]
      %v3627 = vld [vmem:[#allocation9 + $0x564] sm:$0xff]
      %v3628 = vld [vmem:[#allocation9 + $0x56c] sm:$0xf]
      %v3629 = vld [vmem:[#allocation9 + $0x570] sm:$0xff]
      %v3630 = vld [vmem:[#allocation9 + $0x578] sm:$0xf]
      %v3631 = vld [vmem:[#allocation9 + $0x57c] sm:$0xff]
      %v3632 = vld [vmem:[#allocation9 + $0x584] sm:$0xf]
      %v3633 = vld [vmem:[#allocation9 + $0x588] sm:$0xff]
      %v3634 = vld [vmem:[#allocation9 + $0x590] sm:$0xf]
      %v3635 = vld [vmem:[#allocation9 + $0x594] sm:$0xff]
      %v3636 = vld [vmem:[#allocation9 + $0x59c] sm:$0xf]
      %v3637 = vld [vmem:[#allocation9 + $0x5a0] sm:$0xff]
      %v3638 = vld [vmem:[#allocation9 + $0x5a8] sm:$0xf]
      %v3639 = vld [vmem:[#allocation9 + $0x5ac] sm:$0xff]
      %v3640 = vld [vmem:[#allocation9 + $0x5b4] sm:$0xf]
      %v3641 = vld [vmem:[#allocation9 + $0x5b8] sm:$0xff]
      %v3642 = vld [vmem:[#allocation9 + $0x5c0] sm:$0xf]
      %v3643 = vld [vmem:[#allocation9 + $0x5c4] sm:$0xff]
      %v3644 = vld [vmem:[#allocation9 + $0x5cc] sm:$0xf]
      %v3645 = vld [vmem:[#allocation9 + $0x5d0] sm:$0xff]
      %v3646 = vld [vmem:[#allocation9 + $0x5d8] sm:$0xf]
      %v3647 = vld [vmem:[#allocation9 + $0x5dc] sm:$0xff]
      %v3648 = vld [vmem:[#allocation9 + $0x5e4] sm:$0xf]
      %v3649 = vld [vmem:[#allocation9 + $0x5e8] sm:$0xff]
      %v3650 = vld [vmem:[#allocation9 + $0x5f0] sm:$0xf]
      %v3651 = vld [vmem:[#allocation9 + $0x5f4] sm:$0xff]
      %v3652 = vld [vmem:[#allocation9 + $0x5fc] sm:$0xf]
      %v3653 = vld [vmem:[#allocation11 + $0x7] sm:$0x7]
      %v3655 = vperm.slane %v3653, 0
      %v3656 = vperm.slane %v3653, 1
      %v3657 = vperm.slane %v3653, 2
      %v3693 = vunpack.c.l.b16 %v3621
      %v3694 = vunpack.c.h.b16 %v3621
      %v3695 = vunpack.c.l.b16 %v3622
      %v3696 = vunpack.c.l.b16 %v3623
      %v3697 = vunpack.c.h.b16 %v3623
      %v3698 = vunpack.c.l.b16 %v3624
      %v3699 = vunpack.c.l.b16 %v3625
      %v3700 = vunpack.c.h.b16 %v3625
      %v3701 = vunpack.c.l.b16 %v3626
      %v3702 = vunpack.c.l.b16 %v3627
      %v3703 = vunpack.c.h.b16 %v3627
      %v3704 = vunpack.c.l.b16 %v3628
      %v3705 = vunpack.c.l.b16 %v3629
      %v3706 = vunpack.c.h.b16 %v3629
      %v3707 = vunpack.c.l.b16 %v3630
      %v3708 = vunpack.c.l.b16 %v3631
      %v3709 = vunpack.c.h.b16 %v3631
      %v3710 = vunpack.c.l.b16 %v3632
      %v3711 = vunpack.c.l.b16 %v3633
      %v3712 = vunpack.c.h.b16 %v3633
      %v3713 = vunpack.c.l.b16 %v3634
      %v3714 = vunpack.c.l.b16 %v3635
      %v3715 = vunpack.c.h.b16 %v3635
      %v3716 = vunpack.c.l.b16 %v3636
      %v3717 = vunpack.c.l.b16 %v3637
      %v3718 = vunpack.c.h.b16 %v3637
      %v3719 = vunpack.c.l.b16 %v3638
      %v3720 = vunpack.c.l.b16 %v3639
      %v3721 = vunpack.c.h.b16 %v3639
      %v3722 = vunpack.c.l.b16 %v3640
      %v3723 = vunpack.c.l.b16 %v3641
      %v3724 = vunpack.c.h.b16 %v3641
      %v3725 = vunpack.c.l.b16 %v3642
      %v3726 = vunpack.c.l.b16 %v3643
      %v3727 = vunpack.c.h.b16 %v3643
      %v3728 = vunpack.c.l.b16 %v3644
      %v3729 = vunpack.c.l.b16 %v3645
      %v3730 = vunpack.c.h.b16 %v3645
      %v3731 = vunpack.c.l.b16 %v3646
      %v3732 = vunpack.c.l.b16 %v3647
      %v3733 = vunpack.c.h.b16 %v3647
      %v3734 = vunpack.c.l.b16 %v3648
      %v3735 = vunpack.c.l.b16 %v3649
      %v3736 = vunpack.c.h.b16 %v3649
      %v3737 = vunpack.c.l.b16 %v3650
      %v3738 = vunpack.c.l.b16 %v3651
      %v3739 = vunpack.c.h.b16 %v3651
      %v3740 = vunpack.c.l.b16 %v3652
      %v3741 = vpack.c.b16 %v3696, %v3693
      %v3742 = vpack.c.b16 %v3697, %v3694
      %v3743 = vpack.c.b16 %v3698, %v3695
      %v3744 = vpack.c.b16 %v3702, %v3699
      %v3745 = vpack.c.b16 %v3703, %v3700
      %v3746 = vpack.c.b16 %v3704, %v3701
      %v3747 = vpack.c.b16 %v3708, %v3705
      %v3748 = vpack.c.b16 %v3709, %v3706
      %v3749 = vpack.c.b16 %v3710, %v3707
      %v3750 = vpack.c.b16 %v3714, %v3711
      %v3751 = vpack.c.b16 %v3715, %v3712
      %v3752 = vpack.c.b16 %v3716, %v3713
      %v3753 = vpack.c.b16 %v3720, %v3717
      %v3754 = vpack.c.b16 %v3721, %v3718
      %v3755 = vpack.c.b16 %v3722, %v3719
      %v3756 = vpack.c.b16 %v3726, %v3723
      %v3757 = vpack.c.b16 %v3727, %v3724
      %v3758 = vpack.c.b16 %v3728, %v3725
      %v3759 = vpack.c.b16 %v3732, %v3729
      %v3760 = vpack.c.b16 %v3733, %v3730
      %v3761 = vpack.c.b16 %v3734, %v3731
      %v3762 = vpack.c.b16 %v3738, %v3735
      %v3763 = vpack.c.b16 %v3739, %v3736
      %v3764 = vpack.c.b16 %v3740, %v3737
      %3789 = vmatpush.bf16.msra.mxu0 %v3762
      %3790 = vmatpush.bf16.msra.mxu0 %v3759
      %3791 = vmatpush.bf16.msra.mxu0 %v3756
      %3792 = vmatpush.bf16.msra.mxu0 %v3753
      %3793 = vmatpush.bf16.msra.mxu0 %v3750
      %3794 = vmatpush.bf16.msra.mxu0 %v3747
      %3795 = vmatpush.bf16.msra.mxu0 %v3744
      %3796 = vmatpush.bf16.msra.mxu0 %v3741
      %3797 = vmatmul.bf16.gmra.mxu0 %v3605
      %v3798 = vpop.f32.mrf.mxu0
      %v3799 = vadd.f32 %v3655, %v3798
      %v3800 = vpop.f32.mrf.mxu0
      %v3801 = vadd.f32 %v3655, %v3800
      %3802 = vmatmul.bf16.gmra.mxu0 %v3606
      %v3803 = vpop.f32.mrf.mxu0
      %v3804 = vadd.f32 %v3655, %v3803
      %v3805 = vpop.f32.mrf.mxu0
      %v3806 = vadd.f32 %v3655, %v3805
      %3807 = vmatmul.bf16.gmra.mxu0 %v3607
      %v3808 = vpop.f32.mrf.mxu0
      %v3809 = vadd.f32 %v3655, %v3808
      %v3810 = vpop.f32.mrf.mxu0
      %v3811 = vadd.f32 %v3655, %v3810
      %3812 = vmatmul.bf16.gmra.mxu0 %v3608
      %v3813 = vpop.f32.mrf.mxu0
      %v3814 = vadd.f32 %v3655, %v3813
      %v3815 = vpop.f32.mrf.mxu0
      %v3816 = vadd.f32 %v3655, %v3815
      %3817 = vmatmul.bf16.gmra.mxu0 %v3609
      %v3818 = vpop.f32.mrf.mxu0
      %v3819 = vadd.f32 %v3655, %v3818
      %v3820 = vpop.f32.mrf.mxu0
      %v3821 = vadd.f32 %v3655, %v3820
      %3822 = vmatmul.bf16.gmra.mxu0 %v3610
      %v3823 = vpop.f32.mrf.mxu0
      %v3824 = vadd.f32 %v3655, %v3823
      %v3825 = vpop.f32.mrf.mxu0
      %v3826 = vadd.f32 %v3655, %v3825
      %3827 = vmatmul.bf16.gmra.mxu0 %v3611
      %v3828 = vpop.f32.mrf.mxu0
      %v3829 = vadd.f32 %v3655, %v3828
      %v3830 = vpop.f32.mrf.mxu0
      %v3831 = vadd.f32 %v3655, %v3830
      %3832 = vmatmul.bf16.gmra.mxu0 %v3612
      %v3833 = vpop.f32.mrf.mxu0
      %v3834 = vadd.f32 %v3655, %v3833
      %v3835 = vpop.f32.mrf.mxu0
      %v3836 = vadd.f32 %v3655, %v3835
      %3837 = vmatmul.bf16.gmra.mxu0 %v3613
      %v3838 = vpop.f32.mrf.mxu0
      %v3839 = vadd.f32 %v3655, %v3838
      %v3840 = vpop.f32.mrf.mxu0
      %v3841 = vadd.f32 %v3655, %v3840
      %3842 = vmatmul.bf16.gmra.mxu0 %v3614
      %v3843 = vpop.f32.mrf.mxu0
      %v3844 = vadd.f32 %v3655, %v3843
      %v3845 = vpop.f32.mrf.mxu0
      %v3846 = vadd.f32 %v3655, %v3845
      %3847 = vmatmul.bf16.gmra.mxu0 %v3615
      %v3848 = vpop.f32.mrf.mxu0
      %v3849 = vadd.f32 %v3655, %v3848
      %v3850 = vpop.f32.mrf.mxu0
      %v3851 = vadd.f32 %v3655, %v3850
      %3852 = vmatmul.bf16.gmra.mxu0 %v3616
      %v3853 = vpop.f32.mrf.mxu0
      %v3854 = vadd.f32 %v3655, %v3853
      %v3855 = vpop.f32.mrf.mxu0
      %v3856 = vadd.f32 %v3655, %v3855
      %3857 = vmatmul.bf16.gmra.mxu0 %v3617
      %v3858 = vpop.f32.mrf.mxu0
      %v3859 = vadd.f32 %v3655, %v3858
      %v3860 = vpop.f32.mrf.mxu0
      %v3861 = vadd.f32 %v3655, %v3860
      %3862 = vmatmul.bf16.gmra.mxu0 %v3618
      %v3863 = vpop.f32.mrf.mxu0
      %v3864 = vadd.f32 %v3655, %v3863
      %v3865 = vpop.f32.mrf.mxu0
      %v3866 = vadd.f32 %v3655, %v3865
      %3867 = vmatmul.bf16.gmra.mxu0 %v3619
      %v3868 = vpop.f32.mrf.mxu0
      %v3869 = vadd.f32 %v3655, %v3868
      %v3870 = vpop.f32.mrf.mxu0
      %v3871 = vadd.f32 %v3655, %v3870
      %3872 = vmatmul.bf16.gmra.mxu0 %v3620
      %v3873 = vpop.f32.mrf.mxu0
      %v3874 = vadd.f32 %v3655, %v3873
      %v3875 = vpop.f32.mrf.mxu0
      %v3876 = vadd.f32 %v3655, %v3875
      %3877 = vdwg.mxu0
      %3878 = vmatpush.bf16.msra.mxu0 %v3763
      %3879 = vmatpush.bf16.msra.mxu0 %v3760
      %3880 = vmatpush.bf16.msra.mxu0 %v3757
      %3881 = vmatpush.bf16.msra.mxu0 %v3754
      %3882 = vmatpush.bf16.msra.mxu0 %v3751
      %3883 = vmatpush.bf16.msra.mxu0 %v3748
      %3884 = vmatpush.bf16.msra.mxu0 %v3745
      %3885 = vmatpush.bf16.msra.mxu0 %v3742
      %3886 = vmatmul.bf16.gmra.mxu0 %v3605
      %v3887 = vpop.f32.mrf.mxu0
      %v3888 = vadd.f32 %v3656, %v3887
      %v3889 = vpop.f32.mrf.mxu0
      %v3890 = vadd.f32 %v3656, %v3889
      %3891 = vmatmul.bf16.gmra.mxu0 %v3606
      %v3892 = vpop.f32.mrf.mxu0
      %v3893 = vadd.f32 %v3656, %v3892
      %v3894 = vpop.f32.mrf.mxu0
      %v3895 = vadd.f32 %v3656, %v3894
      %3896 = vmatmul.bf16.gmra.mxu0 %v3607
      %v3897 = vpop.f32.mrf.mxu0
      %v3898 = vadd.f32 %v3656, %v3897
      %v3899 = vpop.f32.mrf.mxu0
      %v3900 = vadd.f32 %v3656, %v3899
      %3901 = vmatmul.bf16.gmra.mxu0 %v3608
      %v3902 = vpop.f32.mrf.mxu0
      %v3903 = vadd.f32 %v3656, %v3902
      %v3904 = vpop.f32.mrf.mxu0
      %v3905 = vadd.f32 %v3656, %v3904
      %3906 = vmatmul.bf16.gmra.mxu0 %v3609
      %v3907 = vpop.f32.mrf.mxu0
      %v3908 = vadd.f32 %v3656, %v3907
      %v3909 = vpop.f32.mrf.mxu0
      %v3910 = vadd.f32 %v3656, %v3909
      %3911 = vmatmul.bf16.gmra.mxu0 %v3610
      %v3912 = vpop.f32.mrf.mxu0
      %v3913 = vadd.f32 %v3656, %v3912
      %v3914 = vpop.f32.mrf.mxu0
      %v3915 = vadd.f32 %v3656, %v3914
      %3916 = vmatmul.bf16.gmra.mxu0 %v3611
      %v3917 = vpop.f32.mrf.mxu0
      %v3918 = vadd.f32 %v3656, %v3917
      %v3919 = vpop.f32.mrf.mxu0
      %v3920 = vadd.f32 %v3656, %v3919
      %3921 = vmatmul.bf16.gmra.mxu0 %v3612
      %v3922 = vpop.f32.mrf.mxu0
      %v3923 = vadd.f32 %v3656, %v3922
      %v3924 = vpop.f32.mrf.mxu0
      %v3925 = vadd.f32 %v3656, %v3924
      %3926 = vmatmul.bf16.gmra.mxu0 %v3613
      %v3927 = vpop.f32.mrf.mxu0
      %v3928 = vadd.f32 %v3656, %v3927
      %v3929 = vpop.f32.mrf.mxu0
      %v3930 = vadd.f32 %v3656, %v3929
      %3931 = vmatmul.bf16.gmra.mxu0 %v3614
      %v3932 = vpop.f32.mrf.mxu0
      %v3933 = vadd.f32 %v3656, %v3932
      %v3934 = vpop.f32.mrf.mxu0
      %v3935 = vadd.f32 %v3656, %v3934
      %3936 = vmatmul.bf16.gmra.mxu0 %v3615
      %v3937 = vpop.f32.mrf.mxu0
      %v3938 = vadd.f32 %v3656, %v3937
      %v3939 = vpop.f32.mrf.mxu0
      %v3940 = vadd.f32 %v3656, %v3939
      %3941 = vmatmul.bf16.gmra.mxu0 %v3616
      %v3942 = vpop.f32.mrf.mxu0
      %v3943 = vadd.f32 %v3656, %v3942
      %v3944 = vpop.f32.mrf.mxu0
      %v3945 = vadd.f32 %v3656, %v3944
      %3946 = vmatmul.bf16.gmra.mxu0 %v3617
      %v3947 = vpop.f32.mrf.mxu0
      %v3948 = vadd.f32 %v3656, %v3947
      %v3949 = vpop.f32.mrf.mxu0
      %v3950 = vadd.f32 %v3656, %v3949
      %3951 = vmatmul.bf16.gmra.mxu0 %v3618
      %v3952 = vpop.f32.mrf.mxu0
      %v3953 = vadd.f32 %v3656, %v3952
      %v3954 = vpop.f32.mrf.mxu0
      %v3955 = vadd.f32 %v3656, %v3954
      %3956 = vmatmul.bf16.gmra.mxu0 %v3619
      %v3957 = vpop.f32.mrf.mxu0
      %v3958 = vadd.f32 %v3656, %v3957
      %v3959 = vpop.f32.mrf.mxu0
      %v3960 = vadd.f32 %v3656, %v3959
      %3961 = vmatmul.bf16.gmra.mxu0 %v3620
      %v3962 = vpop.f32.mrf.mxu0
      %v3963 = vadd.f32 %v3656, %v3962
      %v3964 = vpop.f32.mrf.mxu0
      %v3965 = vadd.f32 %v3656, %v3964
      %3966 = vdwg.mxu0
      %3967 = vmatpush.bf16.msra.mxu0 %v3764
      %3968 = vmatpush.bf16.msra.mxu0 %v3761
      %3969 = vmatpush.bf16.msra.mxu0 %v3758
      %3970 = vmatpush.bf16.msra.mxu0 %v3755
      %3971 = vmatpush.bf16.msra.mxu0 %v3752
      %3972 = vmatpush.bf16.msra.mxu0 %v3749
      %3973 = vmatpush.bf16.msra.mxu0 %v3746
      %3974 = vmatpush.bf16.msra.mxu0 %v3743
      %3975 = vmatmul.bf16.gmra.mxu0 %v3605
      %v3976 = vpop.f32.mrf.mxu0
      %v3977 = vadd.f32 %v3657, %v3976
      %v3978 = vpop.f32.mrf.mxu0
      %v3979 = vadd.f32 %v3657, %v3978
      %3980 = vmatmul.bf16.gmra.mxu0 %v3606
      %v3981 = vpop.f32.mrf.mxu0
      %v3982 = vadd.f32 %v3657, %v3981
      %v3983 = vpop.f32.mrf.mxu0
      %v3984 = vadd.f32 %v3657, %v3983
      %3985 = vmatmul.bf16.gmra.mxu0 %v3607
      %v3986 = vpop.f32.mrf.mxu0
      %v3987 = vadd.f32 %v3657, %v3986
      %v3988 = vpop.f32.mrf.mxu0
      %v3989 = vadd.f32 %v3657, %v3988
      %3990 = vmatmul.bf16.gmra.mxu0 %v3608
      %v3991 = vpop.f32.mrf.mxu0
      %v3992 = vadd.f32 %v3657, %v3991
      %v3993 = vpop.f32.mrf.mxu0
      %v3994 = vadd.f32 %v3657, %v3993
      %3995 = vmatmul.bf16.gmra.mxu0 %v3609
      %v3996 = vpop.f32.mrf.mxu0
      %v3997 = vadd.f32 %v3657, %v3996
      %v3998 = vpop.f32.mrf.mxu0
      %v3999 = vadd.f32 %v3657, %v3998
      %4000 = vmatmul.bf16.gmra.mxu0 %v3610
      %v4001 = vpop.f32.mrf.mxu0
      %v4002 = vadd.f32 %v3657, %v4001
      %v4003 = vpop.f32.mrf.mxu0
      %v4004 = vadd.f32 %v3657, %v4003
      %4005 = vmatmul.bf16.gmra.mxu0 %v3611
      %v4006 = vpop.f32.mrf.mxu0
      %v4007 = vadd.f32 %v3657, %v4006
      %v4008 = vpop.f32.mrf.mxu0
      %v4009 = vadd.f32 %v3657, %v4008
      %4010 = vmatmul.bf16.gmra.mxu0 %v3612
      %v4011 = vpop.f32.mrf.mxu0
      %v4012 = vadd.f32 %v3657, %v4011
      %v4013 = vpop.f32.mrf.mxu0
      %v4014 = vadd.f32 %v3657, %v4013
      %4015 = vmatmul.bf16.gmra.mxu0 %v3613
      %v4016 = vpop.f32.mrf.mxu0
      %v4017 = vadd.f32 %v3657, %v4016
      %v4018 = vpop.f32.mrf.mxu0
      %v4019 = vadd.f32 %v3657, %v4018
      %4020 = vmatmul.bf16.gmra.mxu0 %v3614
      %v4021 = vpop.f32.mrf.mxu0
      %v4022 = vadd.f32 %v3657, %v4021
      %v4023 = vpop.f32.mrf.mxu0
      %v4024 = vadd.f32 %v3657, %v4023
      %4025 = vmatmul.bf16.gmra.mxu0 %v3615
      %v4026 = vpop.f32.mrf.mxu0
      %v4027 = vadd.f32 %v3657, %v4026
      %v4028 = vpop.f32.mrf.mxu0
      %v4029 = vadd.f32 %v3657, %v4028
      %4030 = vmatmul.bf16.gmra.mxu0 %v3616
      %v4031 = vpop.f32.mrf.mxu0
      %v4032 = vadd.f32 %v3657, %v4031
      %v4033 = vpop.f32.mrf.mxu0
      %v4034 = vadd.f32 %v3657, %v4033
      %4035 = vmatmul.bf16.gmra.mxu0 %v3617
      %v4036 = vpop.f32.mrf.mxu0
      %v4037 = vadd.f32 %v3657, %v4036
      %v4038 = vpop.f32.mrf.mxu0
      %v4039 = vadd.f32 %v3657, %v4038
      %4040 = vmatmul.bf16.gmra.mxu0 %v3618
      %v4041 = vpop.f32.mrf.mxu0
      %v4042 = vadd.f32 %v3657, %v4041
      %v4043 = vpop.f32.mrf.mxu0
      %v4044 = vadd.f32 %v3657, %v4043
      %4045 = vmatmul.bf16.gmra.mxu0 %v3619
      %v4046 = vpop.f32.mrf.mxu0
      %v4047 = vadd.f32 %v3657, %v4046
      %v4048 = vpop.f32.mrf.mxu0
      %v4049 = vadd.f32 %v3657, %v4048
      %4050 = vmatmul.bf16.gmra.mxu0 %v3620
      %v4051 = vpop.f32.mrf.mxu0
      %v4052 = vadd.f32 %v3657, %v4051
      %v4053 = vpop.f32.mrf.mxu0
      %v4054 = vadd.f32 %v3657, %v4053
      %4055 = vdwg.mxu0
      %v4056 = vmax.f32 %v3799, 0.0
      %v4057 = vmax.f32 %v3888, 0.0
      %v4058 = vmax.f32 %v3977, 0.0
      %v4059 = vmax.f32 %v3801, 0.0
      %v4060 = vmax.f32 %v3890, 0.0
      %v4061 = vmax.f32 %v3979, 0.0
      %v4062 = vmax.f32 %v3804, 0.0
      %v4063 = vmax.f32 %v3893, 0.0
      %v4064 = vmax.f32 %v3982, 0.0
      %v4065 = vmax.f32 %v3806, 0.0
      %v4066 = vmax.f32 %v3895, 0.0
      %v4067 = vmax.f32 %v3984, 0.0
      %v4068 = vmax.f32 %v3809, 0.0
      %v4069 = vmax.f32 %v3898, 0.0
      %v4070 = vmax.f32 %v3987, 0.0
      %v4071 = vmax.f32 %v3811, 0.0
      %v4072 = vmax.f32 %v3900, 0.0
      %v4073 = vmax.f32 %v3989, 0.0
      %v4074 = vmax.f32 %v3814, 0.0
      %v4075 = vmax.f32 %v3903, 0.0
      %v4076 = vmax.f32 %v3992, 0.0
      %v4077 = vmax.f32 %v3816, 0.0
      %v4078 = vmax.f32 %v3905, 0.0
      %v4079 = vmax.f32 %v3994, 0.0
      %v4080 = vmax.f32 %v3819, 0.0
      %v4081 = vmax.f32 %v3908, 0.0
      %v4082 = vmax.f32 %v3997, 0.0
      %v4083 = vmax.f32 %v3821, 0.0
      %v4084 = vmax.f32 %v3910, 0.0
      %v4085 = vmax.f32 %v3999, 0.0
      %v4086 = vmax.f32 %v3824, 0.0
      %v4087 = vmax.f32 %v3913, 0.0
      %v4088 = vmax.f32 %v4002, 0.0
      %v4089 = vmax.f32 %v3826, 0.0
      %v4090 = vmax.f32 %v3915, 0.0
      %v4091 = vmax.f32 %v4004, 0.0
      %v4092 = vmax.f32 %v3829, 0.0
      %v4093 = vmax.f32 %v3918, 0.0
      %v4094 = vmax.f32 %v4007, 0.0
      %v4095 = vmax.f32 %v3831, 0.0
      %v4096 = vmax.f32 %v3920, 0.0
      %v4097 = vmax.f32 %v4009, 0.0
      %v4098 = vmax.f32 %v3834, 0.0
      %v4099 = vmax.f32 %v3923, 0.0
      %v4100 = vmax.f32 %v4012, 0.0
      %v4101 = vmax.f32 %v3836, 0.0
      %v4102 = vmax.f32 %v3925, 0.0
      %v4103 = vmax.f32 %v4014, 0.0
      %v4104 = vmax.f32 %v3839, 0.0
      %v4105 = vmax.f32 %v3928, 0.0
      %v4106 = vmax.f32 %v4017, 0.0
      %v4107 = vmax.f32 %v3841, 0.0
      %v4108 = vmax.f32 %v3930, 0.0
      %v4109 = vmax.f32 %v4019, 0.0
      %v4110 = vmax.f32 %v3844, 0.0
      %v4111 = vmax.f32 %v3933, 0.0
      %v4112 = vmax.f32 %v4022, 0.0
      %v4113 = vmax.f32 %v3846, 0.0
      %v4114 = vmax.f32 %v3935, 0.0
      %v4115 = vmax.f32 %v4024, 0.0
      %v4116 = vmax.f32 %v3849, 0.0
      %v4117 = vmax.f32 %v3938, 0.0
      %v4118 = vmax.f32 %v4027, 0.0
      %v4119 = vmax.f32 %v3851, 0.0
      %v4120 = vmax.f32 %v3940, 0.0
      %v4121 = vmax.f32 %v4029, 0.0
      %v4122 = vmax.f32 %v3854, 0.0
      %v4123 = vmax.f32 %v3943, 0.0
      %v4124 = vmax.f32 %v4032, 0.0
      %v4125 = vmax.f32 %v3856, 0.0
      %v4126 = vmax.f32 %v3945, 0.0
      %v4127 = vmax.f32 %v4034, 0.0
      %v4128 = vmax.f32 %v3859, 0.0
      %v4129 = vmax.f32 %v3948, 0.0
      %v4130 = vmax.f32 %v4037, 0.0
      %v4131 = vmax.f32 %v3861, 0.0
      %v4132 = vmax.f32 %v3950, 0.0
      %v4133 = vmax.f32 %v4039, 0.0
      %v4134 = vmax.f32 %v3864, 0.0
      %v4135 = vmax.f32 %v3953, 0.0
      %v4136 = vmax.f32 %v4042, 0.0
      %v4137 = vmax.f32 %v3866, 0.0
      %v4138 = vmax.f32 %v3955, 0.0
      %v4139 = vmax.f32 %v4044, 0.0
      %v4140 = vmax.f32 %v3869, 0.0
      %v4141 = vmax.f32 %v3958, 0.0
      %v4142 = vmax.f32 %v4047, 0.0
      %v4143 = vmax.f32 %v3871, 0.0
      %v4144 = vmax.f32 %v3960, 0.0
      %v4145 = vmax.f32 %v4049, 0.0
      %v4146 = vmax.f32 %v3874, 0.0
      %v4147 = vmax.f32 %v3963, 0.0
      %v4148 = vmax.f32 %v4052, 0.0
      %v4149 = vmax.f32 %v3876, 0.0
      %v4150 = vmax.f32 %v3965, 0.0
      %v4151 = vmax.f32 %v4054, 0.0
      %v4152 = vpack.c.bf16 %v4059, %v4056
      %v4153 = vpack.c.bf16 %v4060, %v4057
      %v4154 = vpack.c.bf16 %v4061, %v4058
      %v4155 = vpack.c.bf16 %v4065, %v4062
      %v4156 = vpack.c.bf16 %v4066, %v4063
      %v4157 = vpack.c.bf16 %v4067, %v4064
      %v4158 = vpack.c.bf16 %v4071, %v4068
      %v4159 = vpack.c.bf16 %v4072, %v4069
      %v4160 = vpack.c.bf16 %v4073, %v4070
      %v4161 = vpack.c.bf16 %v4077, %v4074
      %v4162 = vpack.c.bf16 %v4078, %v4075
      %v4163 = vpack.c.bf16 %v4079, %v4076
      %v4164 = vpack.c.bf16 %v4083, %v4080
      %v4165 = vpack.c.bf16 %v4084, %v4081
      %v4166 = vpack.c.bf16 %v4085, %v4082
      %v4167 = vpack.c.bf16 %v4089, %v4086
      %v4168 = vpack.c.bf16 %v4090, %v4087
      %v4169 = vpack.c.bf16 %v4091, %v4088
      %v4170 = vpack.c.bf16 %v4095, %v4092
      %v4171 = vpack.c.bf16 %v4096, %v4093
      %v4172 = vpack.c.bf16 %v4097, %v4094
      %v4173 = vpack.c.bf16 %v4101, %v4098
      %v4174 = vpack.c.bf16 %v4102, %v4099
      %v4175 = vpack.c.bf16 %v4103, %v4100
      %v4176 = vpack.c.bf16 %v4107, %v4104
      %v4177 = vpack.c.bf16 %v4108, %v4105
      %v4178 = vpack.c.bf16 %v4109, %v4106
      %v4179 = vpack.c.bf16 %v4113, %v4110
      %v4180 = vpack.c.bf16 %v4114, %v4111
      %v4181 = vpack.c.bf16 %v4115, %v4112
      %v4182 = vpack.c.bf16 %v4119, %v4116
      %v4183 = vpack.c.bf16 %v4120, %v4117
      %v4184 = vpack.c.bf16 %v4121, %v4118
      %v4185 = vpack.c.bf16 %v4125, %v4122
      %v4186 = vpack.c.bf16 %v4126, %v4123
      %v4187 = vpack.c.bf16 %v4127, %v4124
      %v4188 = vpack.c.bf16 %v4131, %v4128
      %v4189 = vpack.c.bf16 %v4132, %v4129
      %v4190 = vpack.c.bf16 %v4133, %v4130
      %v4191 = vpack.c.bf16 %v4137, %v4134
      %v4192 = vpack.c.bf16 %v4138, %v4135
      %v4193 = vpack.c.bf16 %v4139, %v4136
      %v4194 = vpack.c.bf16 %v4143, %v4140
      %v4195 = vpack.c.bf16 %v4144, %v4141
      %v4196 = vpack.c.bf16 %v4145, %v4142
      %v4197 = vpack.c.bf16 %v4149, %v4146
      %v4198 = vpack.c.bf16 %v4150, %v4147
      %v4199 = vpack.c.bf16 %v4151, %v4148
      %v4200 = vld [vmem:[#allocation9 + $0x600] sm:$0xff]
      %v4201 = vld [vmem:[#allocation9 + $0x60c] sm:$0xff]
      %v4202 = vld [vmem:[#allocation9 + $0x618] sm:$0xff]
      %v4203 = vld [vmem:[#allocation9 + $0x624] sm:$0xff]
      %v4204 = vld [vmem:[#allocation9 + $0x630] sm:$0xff]
      %v4205 = vld [vmem:[#allocation9 + $0x63c] sm:$0xff]
      %v4206 = vld [vmem:[#allocation9 + $0x648] sm:$0xff]
      %v4207 = vld [vmem:[#allocation9 + $0x654] sm:$0xff]
      %v4208 = vld [vmem:[#allocation9 + $0x660] sm:$0xff]
      %v4209 = vld [vmem:[#allocation9 + $0x66c] sm:$0xff]
      %v4210 = vld [vmem:[#allocation9 + $0x678] sm:$0xff]
      %v4211 = vld [vmem:[#allocation9 + $0x684] sm:$0xff]
      %v4212 = vld [vmem:[#allocation9 + $0x690] sm:$0xff]
      %v4213 = vld [vmem:[#allocation9 + $0x69c] sm:$0xff]
      %v4214 = vld [vmem:[#allocation9 + $0x6a8] sm:$0xff]
      %v4215 = vld [vmem:[#allocation9 + $0x6b4] sm:$0xff]
      %v4216 = vld [vmem:[#allocation9 + $0x6c0] sm:$0xff]
      %v4217 = vld [vmem:[#allocation9 + $0x6cc] sm:$0xff]
      %v4218 = vld [vmem:[#allocation9 + $0x6d8] sm:$0xff]
      %v4219 = vld [vmem:[#allocation9 + $0x6e4] sm:$0xff]
      %v4220 = vld [vmem:[#allocation9 + $0x6f0] sm:$0xff]
      %v4221 = vld [vmem:[#allocation9 + $0x6fc] sm:$0xff]
      %v4222 = vld [vmem:[#allocation9 + $0x708] sm:$0xff]
      %v4223 = vld [vmem:[#allocation9 + $0x714] sm:$0xff]
      %v4224 = vld [vmem:[#allocation9 + $0x720] sm:$0xff]
      %v4225 = vld [vmem:[#allocation9 + $0x72c] sm:$0xff]
      %v4226 = vld [vmem:[#allocation9 + $0x738] sm:$0xff]
      %v4227 = vld [vmem:[#allocation9 + $0x744] sm:$0xff]
      %v4228 = vld [vmem:[#allocation9 + $0x750] sm:$0xff]
      %v4229 = vld [vmem:[#allocation9 + $0x75c] sm:$0xff]
      %v4230 = vld [vmem:[#allocation9 + $0x768] sm:$0xff]
      %v4231 = vld [vmem:[#allocation9 + $0x774] sm:$0xff]
      %v4232 = vld [vmem:[#allocation9 + $0x780] sm:$0xff]
      %v4233 = vld [vmem:[#allocation9 + $0x78c] sm:$0xff]
      %v4234 = vld [vmem:[#allocation9 + $0x798] sm:$0xff]
      %v4235 = vld [vmem:[#allocation9 + $0x7a4] sm:$0xff]
      %v4236 = vld [vmem:[#allocation9 + $0x7b0] sm:$0xff]
      %v4237 = vld [vmem:[#allocation9 + $0x7bc] sm:$0xff]
      %v4238 = vld [vmem:[#allocation9 + $0x7c8] sm:$0xff]
      %v4239 = vld [vmem:[#allocation9 + $0x7d4] sm:$0xff]
      %v4240 = vld [vmem:[#allocation9 + $0x7e0] sm:$0xff]
      %v4241 = vld [vmem:[#allocation9 + $0x7ec] sm:$0xff]
      %v4242 = vld [vmem:[#allocation9 + $0x7f8] sm:$0xff]
      %v4243 = vld [vmem:[#allocation9 + $0x804] sm:$0xff]
      %v4244 = vld [vmem:[#allocation9 + $0x810] sm:$0xff]
      %v4245 = vld [vmem:[#allocation9 + $0x81c] sm:$0xff]
      %v4246 = vld [vmem:[#allocation9 + $0x828] sm:$0xff]
      %v4247 = vld [vmem:[#allocation9 + $0x834] sm:$0xff]
      %v4248 = vld [vmem:[#allocation11 + $0xa] sm:$0x3]
      %v4250 = vperm.slane %v4248, 0
      %v4251 = vperm.slane %v4248, 1
      %v4302 = vunpack.c.l.b16 %v4200
      %v4303 = vunpack.c.h.b16 %v4200
      %v4304 = vunpack.c.l.b16 %v4201
      %v4305 = vunpack.c.h.b16 %v4201
      %v4306 = vunpack.c.l.b16 %v4202
      %v4307 = vunpack.c.h.b16 %v4202
      %v4308 = vunpack.c.l.b16 %v4203
      %v4309 = vunpack.c.h.b16 %v4203
      %v4310 = vunpack.c.l.b16 %v4204
      %v4311 = vunpack.c.h.b16 %v4204
      %v4312 = vunpack.c.l.b16 %v4205
      %v4313 = vunpack.c.h.b16 %v4205
      %v4314 = vunpack.c.l.b16 %v4206
      %v4315 = vunpack.c.h.b16 %v4206
      %v4316 = vunpack.c.l.b16 %v4207
      %v4317 = vunpack.c.h.b16 %v4207
      %v4318 = vunpack.c.l.b16 %v4208
      %v4319 = vunpack.c.h.b16 %v4208
      %v4320 = vunpack.c.l.b16 %v4209
      %v4321 = vunpack.c.h.b16 %v4209
      %v4322 = vunpack.c.l.b16 %v4210
      %v4323 = vunpack.c.h.b16 %v4210
      %v4324 = vunpack.c.l.b16 %v4211
      %v4325 = vunpack.c.h.b16 %v4211
      %v4326 = vunpack.c.l.b16 %v4212
      %v4327 = vunpack.c.h.b16 %v4212
      %v4328 = vunpack.c.l.b16 %v4213
      %v4329 = vunpack.c.h.b16 %v4213
      %v4330 = vunpack.c.l.b16 %v4214
      %v4331 = vunpack.c.h.b16 %v4214
      %v4332 = vunpack.c.l.b16 %v4215
      %v4333 = vunpack.c.h.b16 %v4215
      %v4334 = vunpack.c.l.b16 %v4216
      %v4335 = vunpack.c.h.b16 %v4216
      %v4336 = vunpack.c.l.b16 %v4217
      %v4337 = vunpack.c.h.b16 %v4217
      %v4338 = vunpack.c.l.b16 %v4218
      %v4339 = vunpack.c.h.b16 %v4218
      %v4340 = vunpack.c.l.b16 %v4219
      %v4341 = vunpack.c.h.b16 %v4219
      %v4342 = vunpack.c.l.b16 %v4220
      %v4343 = vunpack.c.h.b16 %v4220
      %v4344 = vunpack.c.l.b16 %v4221
      %v4345 = vunpack.c.h.b16 %v4221
      %v4346 = vunpack.c.l.b16 %v4222
      %v4347 = vunpack.c.h.b16 %v4222
      %v4348 = vunpack.c.l.b16 %v4223
      %v4349 = vunpack.c.h.b16 %v4223
      %v4350 = vunpack.c.l.b16 %v4224
      %v4351 = vunpack.c.h.b16 %v4224
      %v4352 = vunpack.c.l.b16 %v4225
      %v4353 = vunpack.c.h.b16 %v4225
      %v4354 = vunpack.c.l.b16 %v4226
      %v4355 = vunpack.c.h.b16 %v4226
      %v4356 = vunpack.c.l.b16 %v4227
      %v4357 = vunpack.c.h.b16 %v4227
      %v4358 = vunpack.c.l.b16 %v4228
      %v4359 = vunpack.c.h.b16 %v4228
      %v4360 = vunpack.c.l.b16 %v4229
      %v4361 = vunpack.c.h.b16 %v4229
      %v4362 = vunpack.c.l.b16 %v4230
      %v4363 = vunpack.c.h.b16 %v4230
      %v4364 = vunpack.c.l.b16 %v4231
      %v4365 = vunpack.c.h.b16 %v4231
      %v4366 = vunpack.c.l.b16 %v4232
      %v4367 = vunpack.c.h.b16 %v4232
      %v4368 = vunpack.c.l.b16 %v4233
      %v4369 = vunpack.c.h.b16 %v4233
      %v4370 = vunpack.c.l.b16 %v4234
      %v4371 = vunpack.c.h.b16 %v4234
      %v4372 = vunpack.c.l.b16 %v4235
      %v4373 = vunpack.c.h.b16 %v4235
      %v4374 = vunpack.c.l.b16 %v4236
      %v4375 = vunpack.c.h.b16 %v4236
      %v4376 = vunpack.c.l.b16 %v4237
      %v4377 = vunpack.c.h.b16 %v4237
      %v4378 = vunpack.c.l.b16 %v4238
      %v4379 = vunpack.c.h.b16 %v4238
      %v4380 = vunpack.c.l.b16 %v4239
      %v4381 = vunpack.c.h.b16 %v4239
      %v4382 = vunpack.c.l.b16 %v4240
      %v4383 = vunpack.c.h.b16 %v4240
      %v4384 = vunpack.c.l.b16 %v4241
      %v4385 = vunpack.c.h.b16 %v4241
      %v4386 = vunpack.c.l.b16 %v4242
      %v4387 = vunpack.c.h.b16 %v4242
      %v4388 = vunpack.c.l.b16 %v4243
      %v4389 = vunpack.c.h.b16 %v4243
      %v4390 = vunpack.c.l.b16 %v4244
      %v4391 = vunpack.c.h.b16 %v4244
      %v4392 = vunpack.c.l.b16 %v4245
      %v4393 = vunpack.c.h.b16 %v4245
      %v4394 = vunpack.c.l.b16 %v4246
      %v4395 = vunpack.c.h.b16 %v4246
      %v4396 = vunpack.c.l.b16 %v4247
      %v4397 = vunpack.c.h.b16 %v4247
      %v4398 = vpack.c.b16 %v4304, %v4302
      %v4399 = vpack.c.b16 %v4305, %v4303
      %v4400 = vpack.c.b16 %v4308, %v4306
      %v4401 = vpack.c.b16 %v4309, %v4307
      %v4402 = vpack.c.b16 %v4312, %v4310
      %v4403 = vpack.c.b16 %v4313, %v4311
      %v4404 = vpack.c.b16 %v4316, %v4314
      %v4405 = vpack.c.b16 %v4317, %v4315
      %v4406 = vpack.c.b16 %v4320, %v4318
      %v4407 = vpack.c.b16 %v4321, %v4319
      %v4408 = vpack.c.b16 %v4324, %v4322
      %v4409 = vpack.c.b16 %v4325, %v4323
      %v4410 = vpack.c.b16 %v4328, %v4326
      %v4411 = vpack.c.b16 %v4329, %v4327
      %v4412 = vpack.c.b16 %v4332, %v4330
      %v4413 = vpack.c.b16 %v4333, %v4331
      %v4414 = vpack.c.b16 %v4336, %v4334
      %v4415 = vpack.c.b16 %v4337, %v4335
      %v4416 = vpack.c.b16 %v4340, %v4338
      %v4417 = vpack.c.b16 %v4341, %v4339
      %v4418 = vpack.c.b16 %v4344, %v4342
      %v4419 = vpack.c.b16 %v4345, %v4343
      %v4420 = vpack.c.b16 %v4348, %v4346
      %v4421 = vpack.c.b16 %v4349, %v4347
      %v4422 = vpack.c.b16 %v4352, %v4350
      %v4423 = vpack.c.b16 %v4353, %v4351
      %v4424 = vpack.c.b16 %v4356, %v4354
      %v4425 = vpack.c.b16 %v4357, %v4355
      %v4426 = vpack.c.b16 %v4360, %v4358
      %v4427 = vpack.c.b16 %v4361, %v4359
      %v4428 = vpack.c.b16 %v4364, %v4362
      %v4429 = vpack.c.b16 %v4365, %v4363
      %v4430 = vpack.c.b16 %v4368, %v4366
      %v4431 = vpack.c.b16 %v4369, %v4367
      %v4432 = vpack.c.b16 %v4372, %v4370
      %v4433 = vpack.c.b16 %v4373, %v4371
      %v4434 = vpack.c.b16 %v4376, %v4374
      %v4435 = vpack.c.b16 %v4377, %v4375
      %v4436 = vpack.c.b16 %v4380, %v4378
      %v4437 = vpack.c.b16 %v4381, %v4379
      %v4438 = vpack.c.b16 %v4384, %v4382
      %v4439 = vpack.c.b16 %v4385, %v4383
      %v4440 = vpack.c.b16 %v4388, %v4386
      %v4441 = vpack.c.b16 %v4389, %v4387
      %v4442 = vpack.c.b16 %v4392, %v4390
      %v4443 = vpack.c.b16 %v4393, %v4391
      %v4444 = vpack.c.b16 %v4396, %v4394
      %v4445 = vpack.c.b16 %v4397, %v4395
      %4494 = vmatpush.bf16.msra.mxu0 %v4412
      %4495 = vmatpush.bf16.msra.mxu0 %v4410
      %4496 = vmatpush.bf16.msra.mxu0 %v4408
      %4497 = vmatpush.bf16.msra.mxu0 %v4406
      %4498 = vmatpush.bf16.msra.mxu0 %v4404
      %4499 = vmatpush.bf16.msra.mxu0 %v4402
      %4500 = vmatpush.bf16.msra.mxu0 %v4400
      %4501 = vmatpush.bf16.msra.mxu0 %v4398
      %4502 = vmatmul.bf16.gmra.mxu0 %v4152
      %v4503 = vpop.f32.mrf.mxu0
      %v4504 = vadd.f32 %v4250, %v4503
      %v4505 = vpop.f32.mrf.mxu0
      %v4506 = vadd.f32 %v4250, %v4505
      %4507 = vmatmul.bf16.gmra.mxu0 %v4155
      %v4508 = vpop.f32.mrf.mxu0
      %v4509 = vadd.f32 %v4250, %v4508
      %v4510 = vpop.f32.mrf.mxu0
      %v4511 = vadd.f32 %v4250, %v4510
      %4512 = vmatmul.bf16.gmra.mxu0 %v4158
      %v4513 = vpop.f32.mrf.mxu0
      %v4514 = vadd.f32 %v4250, %v4513
      %v4515 = vpop.f32.mrf.mxu0
      %v4516 = vadd.f32 %v4250, %v4515
      %4517 = vmatmul.bf16.gmra.mxu0 %v4161
      %v4518 = vpop.f32.mrf.mxu0
      %v4519 = vadd.f32 %v4250, %v4518
      %v4520 = vpop.f32.mrf.mxu0
      %v4521 = vadd.f32 %v4250, %v4520
      %4522 = vmatmul.bf16.gmra.mxu0 %v4164
      %v4523 = vpop.f32.mrf.mxu0
      %v4524 = vadd.f32 %v4250, %v4523
      %v4525 = vpop.f32.mrf.mxu0
      %v4526 = vadd.f32 %v4250, %v4525
      %4527 = vmatmul.bf16.gmra.mxu0 %v4167
      %v4528 = vpop.f32.mrf.mxu0
      %v4529 = vadd.f32 %v4250, %v4528
      %v4530 = vpop.f32.mrf.mxu0
      %v4531 = vadd.f32 %v4250, %v4530
      %4532 = vmatmul.bf16.gmra.mxu0 %v4170
      %v4533 = vpop.f32.mrf.mxu0
      %v4534 = vadd.f32 %v4250, %v4533
      %v4535 = vpop.f32.mrf.mxu0
      %v4536 = vadd.f32 %v4250, %v4535
      %4537 = vmatmul.bf16.gmra.mxu0 %v4173
      %v4538 = vpop.f32.mrf.mxu0
      %v4539 = vadd.f32 %v4250, %v4538
      %v4540 = vpop.f32.mrf.mxu0
      %v4541 = vadd.f32 %v4250, %v4540
      %4542 = vmatmul.bf16.gmra.mxu0 %v4176
      %v4543 = vpop.f32.mrf.mxu0
      %v4544 = vadd.f32 %v4250, %v4543
      %v4545 = vpop.f32.mrf.mxu0
      %v4546 = vadd.f32 %v4250, %v4545
      %4547 = vmatmul.bf16.gmra.mxu0 %v4179
      %v4548 = vpop.f32.mrf.mxu0
      %v4549 = vadd.f32 %v4250, %v4548
      %v4550 = vpop.f32.mrf.mxu0
      %v4551 = vadd.f32 %v4250, %v4550
      %4552 = vmatmul.bf16.gmra.mxu0 %v4182
      %v4553 = vpop.f32.mrf.mxu0
      %v4554 = vadd.f32 %v4250, %v4553
      %v4555 = vpop.f32.mrf.mxu0
      %v4556 = vadd.f32 %v4250, %v4555
      %4557 = vmatmul.bf16.gmra.mxu0 %v4185
      %v4558 = vpop.f32.mrf.mxu0
      %v4559 = vadd.f32 %v4250, %v4558
      %v4560 = vpop.f32.mrf.mxu0
      %v4561 = vadd.f32 %v4250, %v4560
      %4562 = vmatmul.bf16.gmra.mxu0 %v4188
      %v4563 = vpop.f32.mrf.mxu0
      %v4564 = vadd.f32 %v4250, %v4563
      %v4565 = vpop.f32.mrf.mxu0
      %v4566 = vadd.f32 %v4250, %v4565
      %4567 = vmatmul.bf16.gmra.mxu0 %v4191
      %v4568 = vpop.f32.mrf.mxu0
      %v4569 = vadd.f32 %v4250, %v4568
      %v4570 = vpop.f32.mrf.mxu0
      %v4571 = vadd.f32 %v4250, %v4570
      %4572 = vmatmul.bf16.gmra.mxu0 %v4194
      %v4573 = vpop.f32.mrf.mxu0
      %v4574 = vadd.f32 %v4250, %v4573
      %v4575 = vpop.f32.mrf.mxu0
      %v4576 = vadd.f32 %v4250, %v4575
      %4577 = vmatmul.bf16.gmra.mxu0 %v4197
      %v4578 = vpop.f32.mrf.mxu0
      %v4579 = vadd.f32 %v4250, %v4578
      %v4580 = vpop.f32.mrf.mxu0
      %v4581 = vadd.f32 %v4250, %v4580
      %4582 = vdwg.mxu0
      %4583 = vmatpush.bf16.msra.mxu0 %v4428
      %4584 = vmatpush.bf16.msra.mxu0 %v4426
      %4585 = vmatpush.bf16.msra.mxu0 %v4424
      %4586 = vmatpush.bf16.msra.mxu0 %v4422
      %4587 = vmatpush.bf16.msra.mxu0 %v4420
      %4588 = vmatpush.bf16.msra.mxu0 %v4418
      %4589 = vmatpush.bf16.msra.mxu0 %v4416
      %4590 = vmatpush.bf16.msra.mxu0 %v4414
      %4591 = vmatmul.bf16.gmra.mxu0 %v4153
      %v4592 = vpop.f32.mrf.mxu0
      %v4593 = vadd.f32 %v4504, %v4592
      %v4594 = vpop.f32.mrf.mxu0
      %v4595 = vadd.f32 %v4506, %v4594
      %4596 = vmatmul.bf16.gmra.mxu0 %v4156
      %v4597 = vpop.f32.mrf.mxu0
      %v4598 = vadd.f32 %v4509, %v4597
      %v4599 = vpop.f32.mrf.mxu0
      %v4600 = vadd.f32 %v4511, %v4599
      %4601 = vmatmul.bf16.gmra.mxu0 %v4159
      %v4602 = vpop.f32.mrf.mxu0
      %v4603 = vadd.f32 %v4514, %v4602
      %v4604 = vpop.f32.mrf.mxu0
      %v4605 = vadd.f32 %v4516, %v4604
      %4606 = vmatmul.bf16.gmra.mxu0 %v4162
      %v4607 = vpop.f32.mrf.mxu0
      %v4608 = vadd.f32 %v4519, %v4607
      %v4609 = vpop.f32.mrf.mxu0
      %v4610 = vadd.f32 %v4521, %v4609
      %4611 = vmatmul.bf16.gmra.mxu0 %v4165
      %v4612 = vpop.f32.mrf.mxu0
      %v4613 = vadd.f32 %v4524, %v4612
      %v4614 = vpop.f32.mrf.mxu0
      %v4615 = vadd.f32 %v4526, %v4614
      %4616 = vmatmul.bf16.gmra.mxu0 %v4168
      %v4617 = vpop.f32.mrf.mxu0
      %v4618 = vadd.f32 %v4529, %v4617
      %v4619 = vpop.f32.mrf.mxu0
      %v4620 = vadd.f32 %v4531, %v4619
      %4621 = vmatmul.bf16.gmra.mxu0 %v4171
      %v4622 = vpop.f32.mrf.mxu0
      %v4623 = vadd.f32 %v4534, %v4622
      %v4624 = vpop.f32.mrf.mxu0
      %v4625 = vadd.f32 %v4536, %v4624
      %4626 = vmatmul.bf16.gmra.mxu0 %v4174
      %v4627 = vpop.f32.mrf.mxu0
      %v4628 = vadd.f32 %v4539, %v4627
      %v4629 = vpop.f32.mrf.mxu0
      %v4630 = vadd.f32 %v4541, %v4629
      %4631 = vmatmul.bf16.gmra.mxu0 %v4177
      %v4632 = vpop.f32.mrf.mxu0
      %v4633 = vadd.f32 %v4544, %v4632
      %v4634 = vpop.f32.mrf.mxu0
      %v4635 = vadd.f32 %v4546, %v4634
      %4636 = vmatmul.bf16.gmra.mxu0 %v4180
      %v4637 = vpop.f32.mrf.mxu0
      %v4638 = vadd.f32 %v4549, %v4637
      %v4639 = vpop.f32.mrf.mxu0
      %v4640 = vadd.f32 %v4551, %v4639
      %4641 = vmatmul.bf16.gmra.mxu0 %v4183
      %v4642 = vpop.f32.mrf.mxu0
      %v4643 = vadd.f32 %v4554, %v4642
      %v4644 = vpop.f32.mrf.mxu0
      %v4645 = vadd.f32 %v4556, %v4644
      %4646 = vmatmul.bf16.gmra.mxu0 %v4186
      %v4647 = vpop.f32.mrf.mxu0
      %v4648 = vadd.f32 %v4559, %v4647
      %v4649 = vpop.f32.mrf.mxu0
      %v4650 = vadd.f32 %v4561, %v4649
      %4651 = vmatmul.bf16.gmra.mxu0 %v4189
      %v4652 = vpop.f32.mrf.mxu0
      %v4653 = vadd.f32 %v4564, %v4652
      %v4654 = vpop.f32.mrf.mxu0
      %v4655 = vadd.f32 %v4566, %v4654
      %4656 = vmatmul.bf16.gmra.mxu0 %v4192
      %v4657 = vpop.f32.mrf.mxu0
      %v4658 = vadd.f32 %v4569, %v4657
      %v4659 = vpop.f32.mrf.mxu0
      %v4660 = vadd.f32 %v4571, %v4659
      %4661 = vmatmul.bf16.gmra.mxu0 %v4195
      %v4662 = vpop.f32.mrf.mxu0
      %v4663 = vadd.f32 %v4574, %v4662
      %v4664 = vpop.f32.mrf.mxu0
      %v4665 = vadd.f32 %v4576, %v4664
      %4666 = vmatmul.bf16.gmra.mxu0 %v4198
      %v4667 = vpop.f32.mrf.mxu0
      %v4668 = vadd.f32 %v4579, %v4667
      %v4669 = vpop.f32.mrf.mxu0
      %v4670 = vadd.f32 %v4581, %v4669
      %4671 = vdwg.mxu0
      %4672 = vmatpush.bf16.msra.mxu0 %v4444
      %4673 = vmatpush.bf16.msra.mxu0 %v4442
      %4674 = vmatpush.bf16.msra.mxu0 %v4440
      %4675 = vmatpush.bf16.msra.mxu0 %v4438
      %4676 = vmatpush.bf16.msra.mxu0 %v4436
      %4677 = vmatpush.bf16.msra.mxu0 %v4434
      %4678 = vmatpush.bf16.msra.mxu0 %v4432
      %4679 = vmatpush.bf16.msra.mxu0 %v4430
      %4680 = vmatmul.bf16.gmra.mxu0 %v4154
      %v4681 = vpop.f32.mrf.mxu0
      %v4682 = vadd.f32 %v4593, %v4681
      %v4683 = vpop.f32.mrf.mxu0
      %v4684 = vadd.f32 %v4595, %v4683
      %4685 = vmatmul.bf16.gmra.mxu0 %v4157
      %v4686 = vpop.f32.mrf.mxu0
      %v4687 = vadd.f32 %v4598, %v4686
      %v4688 = vpop.f32.mrf.mxu0
      %v4689 = vadd.f32 %v4600, %v4688
      %4690 = vmatmul.bf16.gmra.mxu0 %v4160
      %v4691 = vpop.f32.mrf.mxu0
      %v4692 = vadd.f32 %v4603, %v4691
      %v4693 = vpop.f32.mrf.mxu0
      %v4694 = vadd.f32 %v4605, %v4693
      %4695 = vmatmul.bf16.gmra.mxu0 %v4163
      %v4696 = vpop.f32.mrf.mxu0
      %v4697 = vadd.f32 %v4608, %v4696
      %v4698 = vpop.f32.mrf.mxu0
      %v4699 = vadd.f32 %v4610, %v4698
      %4700 = vmatmul.bf16.gmra.mxu0 %v4166
      %v4701 = vpop.f32.mrf.mxu0
      %v4702 = vadd.f32 %v4613, %v4701
      %v4703 = vpop.f32.mrf.mxu0
      %v4704 = vadd.f32 %v4615, %v4703
      %4705 = vmatmul.bf16.gmra.mxu0 %v4169
      %v4706 = vpop.f32.mrf.mxu0
      %v4707 = vadd.f32 %v4618, %v4706
      %v4708 = vpop.f32.mrf.mxu0
      %v4709 = vadd.f32 %v4620, %v4708
      %4710 = vmatmul.bf16.gmra.mxu0 %v4172
      %v4711 = vpop.f32.mrf.mxu0
      %v4712 = vadd.f32 %v4623, %v4711
      %v4713 = vpop.f32.mrf.mxu0
      %v4714 = vadd.f32 %v4625, %v4713
      %4715 = vmatmul.bf16.gmra.mxu0 %v4175
      %v4716 = vpop.f32.mrf.mxu0
      %v4717 = vadd.f32 %v4628, %v4716
      %v4718 = vpop.f32.mrf.mxu0
      %v4719 = vadd.f32 %v4630, %v4718
      %4720 = vmatmul.bf16.gmra.mxu0 %v4178
      %v4721 = vpop.f32.mrf.mxu0
      %v4722 = vadd.f32 %v4633, %v4721
      %v4723 = vpop.f32.mrf.mxu0
      %v4724 = vadd.f32 %v4635, %v4723
      %4725 = vmatmul.bf16.gmra.mxu0 %v4181
      %v4726 = vpop.f32.mrf.mxu0
      %v4727 = vadd.f32 %v4638, %v4726
      %v4728 = vpop.f32.mrf.mxu0
      %v4729 = vadd.f32 %v4640, %v4728
      %4730 = vmatmul.bf16.gmra.mxu0 %v4184
      %v4731 = vpop.f32.mrf.mxu0
      %v4732 = vadd.f32 %v4643, %v4731
      %v4733 = vpop.f32.mrf.mxu0
      %v4734 = vadd.f32 %v4645, %v4733
      %4735 = vmatmul.bf16.gmra.mxu0 %v4187
      %v4736 = vpop.f32.mrf.mxu0
      %v4737 = vadd.f32 %v4648, %v4736
      %v4738 = vpop.f32.mrf.mxu0
      %v4739 = vadd.f32 %v4650, %v4738
      %4740 = vmatmul.bf16.gmra.mxu0 %v4190
      %v4741 = vpop.f32.mrf.mxu0
      %v4742 = vadd.f32 %v4653, %v4741
      %v4743 = vpop.f32.mrf.mxu0
      %v4744 = vadd.f32 %v4655, %v4743
      %4745 = vmatmul.bf16.gmra.mxu0 %v4193
      %v4746 = vpop.f32.mrf.mxu0
      %v4747 = vadd.f32 %v4658, %v4746
      %v4748 = vpop.f32.mrf.mxu0
      %v4749 = vadd.f32 %v4660, %v4748
      %4750 = vmatmul.bf16.gmra.mxu0 %v4196
      %v4751 = vpop.f32.mrf.mxu0
      %v4752 = vadd.f32 %v4663, %v4751
      %v4753 = vpop.f32.mrf.mxu0
      %v4754 = vadd.f32 %v4665, %v4753
      %4755 = vmatmul.bf16.gmra.mxu0 %v4199
      %v4756 = vpop.f32.mrf.mxu0
      %v4757 = vadd.f32 %v4668, %v4756
      %v4758 = vpop.f32.mrf.mxu0
      %v4759 = vadd.f32 %v4670, %v4758
      %4760 = vdwg.mxu0
      %4761 = vmatpush.bf16.msra.mxu0 %v4413
      %4762 = vmatpush.bf16.msra.mxu0 %v4411
      %4763 = vmatpush.bf16.msra.mxu0 %v4409
      %4764 = vmatpush.bf16.msra.mxu0 %v4407
      %4765 = vmatpush.bf16.msra.mxu0 %v4405
      %4766 = vmatpush.bf16.msra.mxu0 %v4403
      %4767 = vmatpush.bf16.msra.mxu0 %v4401
      %4768 = vmatpush.bf16.msra.mxu0 %v4399
      %4769 = vmatmul.bf16.gmra.mxu0 %v4152
      %v4770 = vpop.f32.mrf.mxu0
      %v4771 = vadd.f32 %v4251, %v4770
      %v4772 = vpop.f32.mrf.mxu0
      %v4773 = vadd.f32 %v4251, %v4772
      %4774 = vmatmul.bf16.gmra.mxu0 %v4155
      %v4775 = vpop.f32.mrf.mxu0
      %v4776 = vadd.f32 %v4251, %v4775
      %v4777 = vpop.f32.mrf.mxu0
      %v4778 = vadd.f32 %v4251, %v4777
      %4779 = vmatmul.bf16.gmra.mxu0 %v4158
      %v4780 = vpop.f32.mrf.mxu0
      %v4781 = vadd.f32 %v4251, %v4780
      %v4782 = vpop.f32.mrf.mxu0
      %v4783 = vadd.f32 %v4251, %v4782
      %4784 = vmatmul.bf16.gmra.mxu0 %v4161
      %v4785 = vpop.f32.mrf.mxu0
      %v4786 = vadd.f32 %v4251, %v4785
      %v4787 = vpop.f32.mrf.mxu0
      %v4788 = vadd.f32 %v4251, %v4787
      %4789 = vmatmul.bf16.gmra.mxu0 %v4164
      %v4790 = vpop.f32.mrf.mxu0
      %v4791 = vadd.f32 %v4251, %v4790
      %v4792 = vpop.f32.mrf.mxu0
      %v4793 = vadd.f32 %v4251, %v4792
      %4794 = vmatmul.bf16.gmra.mxu0 %v4167
      %v4795 = vpop.f32.mrf.mxu0
      %v4796 = vadd.f32 %v4251, %v4795
      %v4797 = vpop.f32.mrf.mxu0
      %v4798 = vadd.f32 %v4251, %v4797
      %4799 = vmatmul.bf16.gmra.mxu0 %v4170
      %v4800 = vpop.f32.mrf.mxu0
      %v4801 = vadd.f32 %v4251, %v4800
      %v4802 = vpop.f32.mrf.mxu0
      %v4803 = vadd.f32 %v4251, %v4802
      %4804 = vmatmul.bf16.gmra.mxu0 %v4173
      %v4805 = vpop.f32.mrf.mxu0
      %v4806 = vadd.f32 %v4251, %v4805
      %v4807 = vpop.f32.mrf.mxu0
      %v4808 = vadd.f32 %v4251, %v4807
      %4809 = vmatmul.bf16.gmra.mxu0 %v4176
      %v4810 = vpop.f32.mrf.mxu0
      %v4811 = vadd.f32 %v4251, %v4810
      %v4812 = vpop.f32.mrf.mxu0
      %v4813 = vadd.f32 %v4251, %v4812
      %4814 = vmatmul.bf16.gmra.mxu0 %v4179
      %v4815 = vpop.f32.mrf.mxu0
      %v4816 = vadd.f32 %v4251, %v4815
      %v4817 = vpop.f32.mrf.mxu0
      %v4818 = vadd.f32 %v4251, %v4817
      %4819 = vmatmul.bf16.gmra.mxu0 %v4182
      %v4820 = vpop.f32.mrf.mxu0
      %v4821 = vadd.f32 %v4251, %v4820
      %v4822 = vpop.f32.mrf.mxu0
      %v4823 = vadd.f32 %v4251, %v4822
      %4824 = vmatmul.bf16.gmra.mxu0 %v4185
      %v4825 = vpop.f32.mrf.mxu0
      %v4826 = vadd.f32 %v4251, %v4825
      %v4827 = vpop.f32.mrf.mxu0
      %v4828 = vadd.f32 %v4251, %v4827
      %4829 = vmatmul.bf16.gmra.mxu0 %v4188
      %v4830 = vpop.f32.mrf.mxu0
      %v4831 = vadd.f32 %v4251, %v4830
      %v4832 = vpop.f32.mrf.mxu0
      %v4833 = vadd.f32 %v4251, %v4832
      %4834 = vmatmul.bf16.gmra.mxu0 %v4191
      %v4835 = vpop.f32.mrf.mxu0
      %v4836 = vadd.f32 %v4251, %v4835
      %v4837 = vpop.f32.mrf.mxu0
      %v4838 = vadd.f32 %v4251, %v4837
      %4839 = vmatmul.bf16.gmra.mxu0 %v4194
      %v4840 = vpop.f32.mrf.mxu0
      %v4841 = vadd.f32 %v4251, %v4840
      %v4842 = vpop.f32.mrf.mxu0
      %v4843 = vadd.f32 %v4251, %v4842
      %4844 = vmatmul.bf16.gmra.mxu0 %v4197
      %v4845 = vpop.f32.mrf.mxu0
      %v4846 = vadd.f32 %v4251, %v4845
      %v4847 = vpop.f32.mrf.mxu0
      %v4848 = vadd.f32 %v4251, %v4847
      %4849 = vdwg.mxu0
      %4850 = vmatpush.bf16.msra.mxu0 %v4429
      %4851 = vmatpush.bf16.msra.mxu0 %v4427
      %4852 = vmatpush.bf16.msra.mxu0 %v4425
      %4853 = vmatpush.bf16.msra.mxu0 %v4423
      %4854 = vmatpush.bf16.msra.mxu0 %v4421
      %4855 = vmatpush.bf16.msra.mxu0 %v4419
      %4856 = vmatpush.bf16.msra.mxu0 %v4417
      %4857 = vmatpush.bf16.msra.mxu0 %v4415
      %4858 = vmatmul.bf16.gmra.mxu0 %v4153
      %v4859 = vpop.f32.mrf.mxu0
      %v4860 = vadd.f32 %v4771, %v4859
      %v4861 = vpop.f32.mrf.mxu0
      %v4862 = vadd.f32 %v4773, %v4861
      %4863 = vmatmul.bf16.gmra.mxu0 %v4156
      %v4864 = vpop.f32.mrf.mxu0
      %v4865 = vadd.f32 %v4776, %v4864
      %v4866 = vpop.f32.mrf.mxu0
      %v4867 = vadd.f32 %v4778, %v4866
      %4868 = vmatmul.bf16.gmra.mxu0 %v4159
      %v4869 = vpop.f32.mrf.mxu0
      %v4870 = vadd.f32 %v4781, %v4869
      %v4871 = vpop.f32.mrf.mxu0
      %v4872 = vadd.f32 %v4783, %v4871
      %4873 = vmatmul.bf16.gmra.mxu0 %v4162
      %v4874 = vpop.f32.mrf.mxu0
      %v4875 = vadd.f32 %v4786, %v4874
      %v4876 = vpop.f32.mrf.mxu0
      %v4877 = vadd.f32 %v4788, %v4876
      %4878 = vmatmul.bf16.gmra.mxu0 %v4165
      %v4879 = vpop.f32.mrf.mxu0
      %v4880 = vadd.f32 %v4791, %v4879
      %v4881 = vpop.f32.mrf.mxu0
      %v4882 = vadd.f32 %v4793, %v4881
      %4883 = vmatmul.bf16.gmra.mxu0 %v4168
      %v4884 = vpop.f32.mrf.mxu0
      %v4885 = vadd.f32 %v4796, %v4884
      %v4886 = vpop.f32.mrf.mxu0
      %v4887 = vadd.f32 %v4798, %v4886
      %4888 = vmatmul.bf16.gmra.mxu0 %v4171
      %v4889 = vpop.f32.mrf.mxu0
      %v4890 = vadd.f32 %v4801, %v4889
      %v4891 = vpop.f32.mrf.mxu0
      %v4892 = vadd.f32 %v4803, %v4891
      %4893 = vmatmul.bf16.gmra.mxu0 %v4174
      %v4894 = vpop.f32.mrf.mxu0
      %v4895 = vadd.f32 %v4806, %v4894
      %v4896 = vpop.f32.mrf.mxu0
      %v4897 = vadd.f32 %v4808, %v4896
      %4898 = vmatmul.bf16.gmra.mxu0 %v4177
      %v4899 = vpop.f32.mrf.mxu0
      %v4900 = vadd.f32 %v4811, %v4899
      %v4901 = vpop.f32.mrf.mxu0
      %v4902 = vadd.f32 %v4813, %v4901
      %4903 = vmatmul.bf16.gmra.mxu0 %v4180
      %v4904 = vpop.f32.mrf.mxu0
      %v4905 = vadd.f32 %v4816, %v4904
      %v4906 = vpop.f32.mrf.mxu0
      %v4907 = vadd.f32 %v4818, %v4906
      %4908 = vmatmul.bf16.gmra.mxu0 %v4183
      %v4909 = vpop.f32.mrf.mxu0
      %v4910 = vadd.f32 %v4821, %v4909
      %v4911 = vpop.f32.mrf.mxu0
      %v4912 = vadd.f32 %v4823, %v4911
      %4913 = vmatmul.bf16.gmra.mxu0 %v4186
      %v4914 = vpop.f32.mrf.mxu0
      %v4915 = vadd.f32 %v4826, %v4914
      %v4916 = vpop.f32.mrf.mxu0
      %v4917 = vadd.f32 %v4828, %v4916
      %4918 = vmatmul.bf16.gmra.mxu0 %v4189
      %v4919 = vpop.f32.mrf.mxu0
      %v4920 = vadd.f32 %v4831, %v4919
      %v4921 = vpop.f32.mrf.mxu0
      %v4922 = vadd.f32 %v4833, %v4921
      %4923 = vmatmul.bf16.gmra.mxu0 %v4192
      %v4924 = vpop.f32.mrf.mxu0
      %v4925 = vadd.f32 %v4836, %v4924
      %v4926 = vpop.f32.mrf.mxu0
      %v4927 = vadd.f32 %v4838, %v4926
      %4928 = vmatmul.bf16.gmra.mxu0 %v4195
      %v4929 = vpop.f32.mrf.mxu0
      %v4930 = vadd.f32 %v4841, %v4929
      %v4931 = vpop.f32.mrf.mxu0
      %v4932 = vadd.f32 %v4843, %v4931
      %4933 = vmatmul.bf16.gmra.mxu0 %v4198
      %v4934 = vpop.f32.mrf.mxu0
      %v4935 = vadd.f32 %v4846, %v4934
      %v4936 = vpop.f32.mrf.mxu0
      %v4937 = vadd.f32 %v4848, %v4936
      %4938 = vdwg.mxu0
      %4939 = vmatpush.bf16.msra.mxu0 %v4445
      %4940 = vmatpush.bf16.msra.mxu0 %v4443
      %4941 = vmatpush.bf16.msra.mxu0 %v4441
      %4942 = vmatpush.bf16.msra.mxu0 %v4439
      %4943 = vmatpush.bf16.msra.mxu0 %v4437
      %4944 = vmatpush.bf16.msra.mxu0 %v4435
      %4945 = vmatpush.bf16.msra.mxu0 %v4433
      %4946 = vmatpush.bf16.msra.mxu0 %v4431
      %4947 = vmatmul.bf16.gmra.mxu0 %v4154
      %v4948 = vpop.f32.mrf.mxu0
      %v4949 = vadd.f32 %v4860, %v4948
      %v4950 = vpop.f32.mrf.mxu0
      %v4951 = vadd.f32 %v4862, %v4950
      %4952 = vmatmul.bf16.gmra.mxu0 %v4157
      %v4953 = vpop.f32.mrf.mxu0
      %v4954 = vadd.f32 %v4865, %v4953
      %v4955 = vpop.f32.mrf.mxu0
      %v4956 = vadd.f32 %v4867, %v4955
      %4957 = vmatmul.bf16.gmra.mxu0 %v4160
      %v4958 = vpop.f32.mrf.mxu0
      %v4959 = vadd.f32 %v4870, %v4958
      %v4960 = vpop.f32.mrf.mxu0
      %v4961 = vadd.f32 %v4872, %v4960
      %4962 = vmatmul.bf16.gmra.mxu0 %v4163
      %v4963 = vpop.f32.mrf.mxu0
      %v4964 = vadd.f32 %v4875, %v4963
      %v4965 = vpop.f32.mrf.mxu0
      %v4966 = vadd.f32 %v4877, %v4965
      %4967 = vmatmul.bf16.gmra.mxu0 %v4166
      %v4968 = vpop.f32.mrf.mxu0
      %v4969 = vadd.f32 %v4880, %v4968
      %v4970 = vpop.f32.mrf.mxu0
      %v4971 = vadd.f32 %v4882, %v4970
      %4972 = vmatmul.bf16.gmra.mxu0 %v4169
      %v4973 = vpop.f32.mrf.mxu0
      %v4974 = vadd.f32 %v4885, %v4973
      %v4975 = vpop.f32.mrf.mxu0
      %v4976 = vadd.f32 %v4887, %v4975
      %4977 = vmatmul.bf16.gmra.mxu0 %v4172
      %v4978 = vpop.f32.mrf.mxu0
      %v4979 = vadd.f32 %v4890, %v4978
      %v4980 = vpop.f32.mrf.mxu0
      %v4981 = vadd.f32 %v4892, %v4980
      %4982 = vmatmul.bf16.gmra.mxu0 %v4175
      %v4983 = vpop.f32.mrf.mxu0
      %v4984 = vadd.f32 %v4895, %v4983
      %v4985 = vpop.f32.mrf.mxu0
      %v4986 = vadd.f32 %v4897, %v4985
      %4987 = vmatmul.bf16.gmra.mxu0 %v4178
      %v4988 = vpop.f32.mrf.mxu0
      %v4989 = vadd.f32 %v4900, %v4988
      %v4990 = vpop.f32.mrf.mxu0
      %v4991 = vadd.f32 %v4902, %v4990
      %4992 = vmatmul.bf16.gmra.mxu0 %v4181
      %v4993 = vpop.f32.mrf.mxu0
      %v4994 = vadd.f32 %v4905, %v4993
      %v4995 = vpop.f32.mrf.mxu0
      %v4996 = vadd.f32 %v4907, %v4995
      %4997 = vmatmul.bf16.gmra.mxu0 %v4184
      %v4998 = vpop.f32.mrf.mxu0
      %v4999 = vadd.f32 %v4910, %v4998
      %v5000 = vpop.f32.mrf.mxu0
      %v5001 = vadd.f32 %v4912, %v5000
      %5002 = vmatmul.bf16.gmra.mxu0 %v4187
      %v5003 = vpop.f32.mrf.mxu0
      %v5004 = vadd.f32 %v4915, %v5003
      %v5005 = vpop.f32.mrf.mxu0
      %v5006 = vadd.f32 %v4917, %v5005
      %5007 = vmatmul.bf16.gmra.mxu0 %v4190
      %v5008 = vpop.f32.mrf.mxu0
      %v5009 = vadd.f32 %v4920, %v5008
      %v5010 = vpop.f32.mrf.mxu0
      %v5011 = vadd.f32 %v4922, %v5010
      %5012 = vmatmul.bf16.gmra.mxu0 %v4193
      %v5013 = vpop.f32.mrf.mxu0
      %v5014 = vadd.f32 %v4925, %v5013
      %v5015 = vpop.f32.mrf.mxu0
      %v5016 = vadd.f32 %v4927, %v5015
      %5017 = vmatmul.bf16.gmra.mxu0 %v4196
      %v5018 = vpop.f32.mrf.mxu0
      %v5019 = vadd.f32 %v4930, %v5018
      %v5020 = vpop.f32.mrf.mxu0
      %v5021 = vadd.f32 %v4932, %v5020
      %5022 = vmatmul.bf16.gmra.mxu0 %v4199
      %v5023 = vpop.f32.mrf.mxu0
      %v5024 = vadd.f32 %v4935, %v5023
      %v5025 = vpop.f32.mrf.mxu0
      %v5026 = vadd.f32 %v4937, %v5025
      %5027 = vdwg.mxu0
      %v5028 = vmax.f32 %v4682, 0.0
      %v5029 = vmax.f32 %v4949, 0.0
      %v5030 = vmax.f32 %v4684, 0.0
      %v5031 = vmax.f32 %v4951, 0.0
      %v5032 = vmax.f32 %v4687, 0.0
      %v5033 = vmax.f32 %v4954, 0.0
      %v5034 = vmax.f32 %v4689, 0.0
      %v5035 = vmax.f32 %v4956, 0.0
      %v5036 = vmax.f32 %v4692, 0.0
      %v5037 = vmax.f32 %v4959, 0.0
      %v5038 = vmax.f32 %v4694, 0.0
      %v5039 = vmax.f32 %v4961, 0.0
      %v5040 = vmax.f32 %v4697, 0.0
      %v5041 = vmax.f32 %v4964, 0.0
      %v5042 = vmax.f32 %v4699, 0.0
      %v5043 = vmax.f32 %v4966, 0.0
      %v5044 = vmax.f32 %v4702, 0.0
      %v5045 = vmax.f32 %v4969, 0.0
      %v5046 = vmax.f32 %v4704, 0.0
      %v5047 = vmax.f32 %v4971, 0.0
      %v5048 = vmax.f32 %v4707, 0.0
      %v5049 = vmax.f32 %v4974, 0.0
      %v5050 = vmax.f32 %v4709, 0.0
      %v5051 = vmax.f32 %v4976, 0.0
      %v5052 = vmax.f32 %v4712, 0.0
      %v5053 = vmax.f32 %v4979, 0.0
      %v5054 = vmax.f32 %v4714, 0.0
      %v5055 = vmax.f32 %v4981, 0.0
      %v5056 = vmax.f32 %v4717, 0.0
      %v5057 = vmax.f32 %v4984, 0.0
      %v5058 = vmax.f32 %v4719, 0.0
      %v5059 = vmax.f32 %v4986, 0.0
      %v5060 = vmax.f32 %v4722, 0.0
      %v5061 = vmax.f32 %v4989, 0.0
      %v5062 = vmax.f32 %v4724, 0.0
      %v5063 = vmax.f32 %v4991, 0.0
      %v5064 = vmax.f32 %v4727, 0.0
      %v5065 = vmax.f32 %v4994, 0.0
      %v5066 = vmax.f32 %v4729, 0.0
      %v5067 = vmax.f32 %v4996, 0.0
      %v5068 = vmax.f32 %v4732, 0.0
      %v5069 = vmax.f32 %v4999, 0.0
      %v5070 = vmax.f32 %v4734, 0.0
      %v5071 = vmax.f32 %v5001, 0.0
      %v5072 = vmax.f32 %v4737, 0.0
      %v5073 = vmax.f32 %v5004, 0.0
      %v5074 = vmax.f32 %v4739, 0.0
      %v5075 = vmax.f32 %v5006, 0.0
      %v5076 = vmax.f32 %v4742, 0.0
      %v5077 = vmax.f32 %v5009, 0.0
      %v5078 = vmax.f32 %v4744, 0.0
      %v5079 = vmax.f32 %v5011, 0.0
      %v5080 = vmax.f32 %v4747, 0.0
      %v5081 = vmax.f32 %v5014, 0.0
      %v5082 = vmax.f32 %v4749, 0.0
      %v5083 = vmax.f32 %v5016, 0.0
      %v5084 = vmax.f32 %v4752, 0.0
      %v5085 = vmax.f32 %v5019, 0.0
      %v5086 = vmax.f32 %v4754, 0.0
      %v5087 = vmax.f32 %v5021, 0.0
      %v5088 = vmax.f32 %v4757, 0.0
      %v5089 = vmax.f32 %v5024, 0.0
      %v5090 = vmax.f32 %v4759, 0.0
      %v5091 = vmax.f32 %v5026, 0.0
      %v5092 = vpack.c.bf16 %v5030, %v5028
      %v5093 = vpack.c.bf16 %v5031, %v5029
      %v5094 = vpack.c.bf16 %v5034, %v5032
      %v5095 = vpack.c.bf16 %v5035, %v5033
      %v5096 = vpack.c.bf16 %v5038, %v5036
      %v5097 = vpack.c.bf16 %v5039, %v5037
      %v5098 = vpack.c.bf16 %v5042, %v5040
      %v5099 = vpack.c.bf16 %v5043, %v5041
      %v5100 = vpack.c.bf16 %v5046, %v5044
      %v5101 = vpack.c.bf16 %v5047, %v5045
      %v5102 = vpack.c.bf16 %v5050, %v5048
      %v5103 = vpack.c.bf16 %v5051, %v5049
      %v5104 = vpack.c.bf16 %v5054, %v5052
      %v5105 = vpack.c.bf16 %v5055, %v5053
      %v5106 = vpack.c.bf16 %v5058, %v5056
      %v5107 = vpack.c.bf16 %v5059, %v5057
      %v5108 = vpack.c.bf16 %v5062, %v5060
      %v5109 = vpack.c.bf16 %v5063, %v5061
      %v5110 = vpack.c.bf16 %v5066, %v5064
      %v5111 = vpack.c.bf16 %v5067, %v5065
      %v5112 = vpack.c.bf16 %v5070, %v5068
      %v5113 = vpack.c.bf16 %v5071, %v5069
      %v5114 = vpack.c.bf16 %v5074, %v5072
      %v5115 = vpack.c.bf16 %v5075, %v5073
      %v5116 = vpack.c.bf16 %v5078, %v5076
      %v5117 = vpack.c.bf16 %v5079, %v5077
      %v5118 = vpack.c.bf16 %v5082, %v5080
      %v5119 = vpack.c.bf16 %v5083, %v5081
      %v5120 = vpack.c.bf16 %v5086, %v5084
      %v5121 = vpack.c.bf16 %v5087, %v5085
      %v5122 = vpack.c.bf16 %v5090, %v5088
      %v5123 = vpack.c.bf16 %v5091, %v5089
      %v5124 = vld [vmem:[#allocation9 + $0x840] sm:$0xf]
      %v5125 = vld [vmem:[#allocation9 + $0x84c] sm:$0xf]
      %v5126 = vld [vmem:[#allocation9 + $0x858] sm:$0xf]
      %v5127 = vld [vmem:[#allocation9 + $0x864] sm:$0xf]
      %v5128 = vld [vmem:[#allocation9 + $0x870] sm:$0xf]
      %v5129 = vld [vmem:[#allocation9 + $0x87c] sm:$0xf]
      %v5130 = vld [vmem:[#allocation9 + $0x888] sm:$0xf]
      %v5131 = vld [vmem:[#allocation9 + $0x894] sm:$0xf]
      %v5132 = vld [vmem:[#allocation9 + $0x8a0] sm:$0xf]
      %v5133 = vld [vmem:[#allocation9 + $0x8ac] sm:$0xf]
      %v5134 = vld [vmem:[#allocation9 + $0x8b8] sm:$0xf]
      %v5135 = vld [vmem:[#allocation9 + $0x8c4] sm:$0xf]
      %v5136 = vld [vmem:[#allocation9 + $0x8d0] sm:$0xf]
      %v5137 = vld [vmem:[#allocation9 + $0x8dc] sm:$0xf]
      %v5138 = vld [vmem:[#allocation9 + $0x8e8] sm:$0xf]
      %v5139 = vld [vmem:[#allocation9 + $0x8f4] sm:$0xf]
      %v5140 = vld [vmem:[#allocation9 + $0x900] sm:$0xf]
      %v5141 = vld [vmem:[#allocation9 + $0x90c] sm:$0xf]
      %v5142 = vld [vmem:[#allocation9 + $0x918] sm:$0xf]
      %v5143 = vld [vmem:[#allocation9 + $0x924] sm:$0xf]
      %v5144 = vld [vmem:[#allocation9 + $0x930] sm:$0xf]
      %v5145 = vld [vmem:[#allocation9 + $0x93c] sm:$0xf]
      %v5146 = vld [vmem:[#allocation9 + $0x948] sm:$0xf]
      %v5147 = vld [vmem:[#allocation9 + $0x954] sm:$0xf]
      %v5148 = vld [vmem:[#allocation9 + $0x960] sm:$0xf]
      %v5149 = vld [vmem:[#allocation9 + $0x96c] sm:$0xf]
      %v5150 = vld [vmem:[#allocation9 + $0x978] sm:$0xf]
      %v5151 = vld [vmem:[#allocation9 + $0x984] sm:$0xf]
      %v5152 = vld [vmem:[#allocation9 + $0x990] sm:$0xf]
      %v5153 = vld [vmem:[#allocation9 + $0x99c] sm:$0xf]
      %v5154 = vld [vmem:[#allocation9 + $0x9a8] sm:$0xf]
      %v5155 = vld [vmem:[#allocation9 + $0x9b4] sm:$0xf]
      %v5156 = vld [vmem:[#allocation11 + $0xc] sm:$0x1]
      %v5158 = vperm.slane %v5156, 0
      %v5192 = vunpack.c.l.b16 %v5124
      %v5193 = vunpack.c.l.b16 %v5125
      %v5194 = vunpack.c.l.b16 %v5126
      %v5195 = vunpack.c.l.b16 %v5127
      %v5196 = vunpack.c.l.b16 %v5128
      %v5197 = vunpack.c.l.b16 %v5129
      %v5198 = vunpack.c.l.b16 %v5130
      %v5199 = vunpack.c.l.b16 %v5131
      %v5200 = vunpack.c.l.b16 %v5132
      %v5201 = vunpack.c.l.b16 %v5133
      %v5202 = vunpack.c.l.b16 %v5134
      %v5203 = vunpack.c.l.b16 %v5135
      %v5204 = vunpack.c.l.b16 %v5136
      %v5205 = vunpack.c.l.b16 %v5137
      %v5206 = vunpack.c.l.b16 %v5138
      %v5207 = vunpack.c.l.b16 %v5139
      %v5208 = vunpack.c.l.b16 %v5140
      %v5209 = vunpack.c.l.b16 %v5141
      %v5210 = vunpack.c.l.b16 %v5142
      %v5211 = vunpack.c.l.b16 %v5143
      %v5212 = vunpack.c.l.b16 %v5144
      %v5213 = vunpack.c.l.b16 %v5145
      %v5214 = vunpack.c.l.b16 %v5146
      %v5215 = vunpack.c.l.b16 %v5147
      %v5216 = vunpack.c.l.b16 %v5148
      %v5217 = vunpack.c.l.b16 %v5149
      %v5218 = vunpack.c.l.b16 %v5150
      %v5219 = vunpack.c.l.b16 %v5151
      %v5220 = vunpack.c.l.b16 %v5152
      %v5221 = vunpack.c.l.b16 %v5153
      %v5222 = vunpack.c.l.b16 %v5154
      %v5223 = vunpack.c.l.b16 %v5155
      %v5224 = vpack.c.b16 %v5193, %v5192
      %v5225 = vpack.c.b16 %v5195, %v5194
      %v5226 = vpack.c.b16 %v5197, %v5196
      %v5227 = vpack.c.b16 %v5199, %v5198
      %v5228 = vpack.c.b16 %v5201, %v5200
      %v5229 = vpack.c.b16 %v5203, %v5202
      %v5230 = vpack.c.b16 %v5205, %v5204
      %v5231 = vpack.c.b16 %v5207, %v5206
      %v5232 = vpack.c.b16 %v5209, %v5208
      %v5233 = vpack.c.b16 %v5211, %v5210
      %v5234 = vpack.c.b16 %v5213, %v5212
      %v5235 = vpack.c.b16 %v5215, %v5214
      %v5236 = vpack.c.b16 %v5217, %v5216
      %v5237 = vpack.c.b16 %v5219, %v5218
      %v5238 = vpack.c.b16 %v5221, %v5220
      %v5239 = vpack.c.b16 %v5223, %v5222
      %5256 = vmatpush.bf16.msra.mxu0 %v5231
      %5257 = vmatpush.bf16.msra.mxu0 %v5230
      %5258 = vmatpush.bf16.msra.mxu0 %v5229
      %5259 = vmatpush.bf16.msra.mxu0 %v5228
      %5260 = vmatpush.bf16.msra.mxu0 %v5227
      %5261 = vmatpush.bf16.msra.mxu0 %v5226
      %5262 = vmatpush.bf16.msra.mxu0 %v5225
      %5263 = vmatpush.bf16.msra.mxu0 %v5224
      %5264 = vmatmul.bf16.gmra.mxu0 %v5092
      %v5265 = vpop.f32.mrf.mxu0
      %v5266 = vadd.f32 %v5158, %v5265
      %v5267 = vpop.f32.mrf.mxu0
      %v5268 = vadd.f32 %v5158, %v5267
      %5269 = vmatmul.bf16.gmra.mxu0 %v5094
      %v5270 = vpop.f32.mrf.mxu0
      %v5271 = vadd.f32 %v5158, %v5270
      %v5272 = vpop.f32.mrf.mxu0
      %v5273 = vadd.f32 %v5158, %v5272
      %5274 = vmatmul.bf16.gmra.mxu0 %v5096
      %v5275 = vpop.f32.mrf.mxu0
      %v5276 = vadd.f32 %v5158, %v5275
      %v5277 = vpop.f32.mrf.mxu0
      %v5278 = vadd.f32 %v5158, %v5277
      %5279 = vmatmul.bf16.gmra.mxu0 %v5098
      %v5280 = vpop.f32.mrf.mxu0
      %v5281 = vadd.f32 %v5158, %v5280
      %v5282 = vpop.f32.mrf.mxu0
      %v5283 = vadd.f32 %v5158, %v5282
      %5284 = vmatmul.bf16.gmra.mxu0 %v5100
      %v5285 = vpop.f32.mrf.mxu0
      %v5286 = vadd.f32 %v5158, %v5285
      %v5287 = vpop.f32.mrf.mxu0
      %v5288 = vadd.f32 %v5158, %v5287
      %5289 = vmatmul.bf16.gmra.mxu0 %v5102
      %v5290 = vpop.f32.mrf.mxu0
      %v5291 = vadd.f32 %v5158, %v5290
      %v5292 = vpop.f32.mrf.mxu0
      %v5293 = vadd.f32 %v5158, %v5292
      %5294 = vmatmul.bf16.gmra.mxu0 %v5104
      %v5295 = vpop.f32.mrf.mxu0
      %v5296 = vadd.f32 %v5158, %v5295
      %v5297 = vpop.f32.mrf.mxu0
      %v5298 = vadd.f32 %v5158, %v5297
      %5299 = vmatmul.bf16.gmra.mxu0 %v5106
      %v5300 = vpop.f32.mrf.mxu0
      %v5301 = vadd.f32 %v5158, %v5300
      %v5302 = vpop.f32.mrf.mxu0
      %v5303 = vadd.f32 %v5158, %v5302
      %5304 = vmatmul.bf16.gmra.mxu0 %v5108
      %v5305 = vpop.f32.mrf.mxu0
      %v5306 = vadd.f32 %v5158, %v5305
      %v5307 = vpop.f32.mrf.mxu0
      %v5308 = vadd.f32 %v5158, %v5307
      %5309 = vmatmul.bf16.gmra.mxu0 %v5110
      %v5310 = vpop.f32.mrf.mxu0
      %v5311 = vadd.f32 %v5158, %v5310
      %v5312 = vpop.f32.mrf.mxu0
      %v5313 = vadd.f32 %v5158, %v5312
      %5314 = vmatmul.bf16.gmra.mxu0 %v5112
      %v5315 = vpop.f32.mrf.mxu0
      %v5316 = vadd.f32 %v5158, %v5315
      %v5317 = vpop.f32.mrf.mxu0
      %v5318 = vadd.f32 %v5158, %v5317
      %5319 = vmatmul.bf16.gmra.mxu0 %v5114
      %v5320 = vpop.f32.mrf.mxu0
      %v5321 = vadd.f32 %v5158, %v5320
      %v5322 = vpop.f32.mrf.mxu0
      %v5323 = vadd.f32 %v5158, %v5322
      %5324 = vmatmul.bf16.gmra.mxu0 %v5116
      %v5325 = vpop.f32.mrf.mxu0
      %v5326 = vadd.f32 %v5158, %v5325
      %v5327 = vpop.f32.mrf.mxu0
      %v5328 = vadd.f32 %v5158, %v5327
      %5329 = vmatmul.bf16.gmra.mxu0 %v5118
      %v5330 = vpop.f32.mrf.mxu0
      %v5331 = vadd.f32 %v5158, %v5330
      %v5332 = vpop.f32.mrf.mxu0
      %v5333 = vadd.f32 %v5158, %v5332
      %5334 = vmatmul.bf16.gmra.mxu0 %v5120
      %v5335 = vpop.f32.mrf.mxu0
      %v5336 = vadd.f32 %v5158, %v5335
      %v5337 = vpop.f32.mrf.mxu0
      %v5338 = vadd.f32 %v5158, %v5337
      %5339 = vmatmul.bf16.gmra.mxu0 %v5122
      %v5340 = vpop.f32.mrf.mxu0
      %v5341 = vadd.f32 %v5158, %v5340
      %v5342 = vpop.f32.mrf.mxu0
      %v5343 = vadd.f32 %v5158, %v5342
      %5344 = vdwg.mxu0
      %5345 = vmatpush.bf16.msra.mxu0 %v5239
      %5346 = vmatpush.bf16.msra.mxu0 %v5238
      %5347 = vmatpush.bf16.msra.mxu0 %v5237
      %5348 = vmatpush.bf16.msra.mxu0 %v5236
      %5349 = vmatpush.bf16.msra.mxu0 %v5235
      %5350 = vmatpush.bf16.msra.mxu0 %v5234
      %5351 = vmatpush.bf16.msra.mxu0 %v5233
      %5352 = vmatpush.bf16.msra.mxu0 %v5232
      %5353 = vmatmul.bf16.gmra.mxu0 %v5093
      %v5354 = vpop.f32.mrf.mxu0
      %v5355 = vadd.f32 %v5266, %v5354
      %v5356 = vpop.f32.mrf.mxu0
      %v5357 = vadd.f32 %v5268, %v5356
      %5358 = vmatmul.bf16.gmra.mxu0 %v5095
      %v5359 = vpop.f32.mrf.mxu0
      %v5360 = vadd.f32 %v5271, %v5359
      %v5361 = vpop.f32.mrf.mxu0
      %v5362 = vadd.f32 %v5273, %v5361
      %5363 = vmatmul.bf16.gmra.mxu0 %v5097
      %v5364 = vpop.f32.mrf.mxu0
      %v5365 = vadd.f32 %v5276, %v5364
      %v5366 = vpop.f32.mrf.mxu0
      %v5367 = vadd.f32 %v5278, %v5366
      %5368 = vmatmul.bf16.gmra.mxu0 %v5099
      %v5369 = vpop.f32.mrf.mxu0
      %v5370 = vadd.f32 %v5281, %v5369
      %v5371 = vpop.f32.mrf.mxu0
      %v5372 = vadd.f32 %v5283, %v5371
      %5373 = vmatmul.bf16.gmra.mxu0 %v5101
      %v5374 = vpop.f32.mrf.mxu0
      %v5375 = vadd.f32 %v5286, %v5374
      %v5376 = vpop.f32.mrf.mxu0
      %v5377 = vadd.f32 %v5288, %v5376
      %5378 = vmatmul.bf16.gmra.mxu0 %v5103
      %v5379 = vpop.f32.mrf.mxu0
      %v5380 = vadd.f32 %v5291, %v5379
      %v5381 = vpop.f32.mrf.mxu0
      %v5382 = vadd.f32 %v5293, %v5381
      %5383 = vmatmul.bf16.gmra.mxu0 %v5105
      %v5384 = vpop.f32.mrf.mxu0
      %v5385 = vadd.f32 %v5296, %v5384
      %v5386 = vpop.f32.mrf.mxu0
      %v5387 = vadd.f32 %v5298, %v5386
      %5388 = vmatmul.bf16.gmra.mxu0 %v5107
      %v5389 = vpop.f32.mrf.mxu0
      %v5390 = vadd.f32 %v5301, %v5389
      %v5391 = vpop.f32.mrf.mxu0
      %v5392 = vadd.f32 %v5303, %v5391
      %5393 = vmatmul.bf16.gmra.mxu0 %v5109
      %v5394 = vpop.f32.mrf.mxu0
      %v5395 = vadd.f32 %v5306, %v5394
      %v5396 = vpop.f32.mrf.mxu0
      %v5397 = vadd.f32 %v5308, %v5396
      %5398 = vmatmul.bf16.gmra.mxu0 %v5111
      %v5399 = vpop.f32.mrf.mxu0
      %v5400 = vadd.f32 %v5311, %v5399
      %v5401 = vpop.f32.mrf.mxu0
      %v5402 = vadd.f32 %v5313, %v5401
      %5403 = vmatmul.bf16.gmra.mxu0 %v5113
      %v5404 = vpop.f32.mrf.mxu0
      %v5405 = vadd.f32 %v5316, %v5404
      %v5406 = vpop.f32.mrf.mxu0
      %v5407 = vadd.f32 %v5318, %v5406
      %5408 = vmatmul.bf16.gmra.mxu0 %v5115
      %v5409 = vpop.f32.mrf.mxu0
      %v5410 = vadd.f32 %v5321, %v5409
      %v5411 = vpop.f32.mrf.mxu0
      %v5412 = vadd.f32 %v5323, %v5411
      %5413 = vmatmul.bf16.gmra.mxu0 %v5117
      %v5414 = vpop.f32.mrf.mxu0
      %v5415 = vadd.f32 %v5326, %v5414
      %v5416 = vpop.f32.mrf.mxu0
      %v5417 = vadd.f32 %v5328, %v5416
      %5418 = vmatmul.bf16.gmra.mxu0 %v5119
      %v5419 = vpop.f32.mrf.mxu0
      %v5420 = vadd.f32 %v5331, %v5419
      %v5421 = vpop.f32.mrf.mxu0
      %v5422 = vadd.f32 %v5333, %v5421
      %5423 = vmatmul.bf16.gmra.mxu0 %v5121
      %v5424 = vpop.f32.mrf.mxu0
      %v5425 = vadd.f32 %v5336, %v5424
      %v5426 = vpop.f32.mrf.mxu0
      %v5427 = vadd.f32 %v5338, %v5426
      %5428 = vmatmul.bf16.gmra.mxu0 %v5123
      %v5429 = vpop.f32.mrf.mxu0
      %v5430 = vadd.f32 %v5341, %v5429
      %v5431 = vpop.f32.mrf.mxu0
      %v5432 = vadd.f32 %v5343, %v5431
      %5433 = vdwg.mxu0
      %v5434 = vmax.f32 %v5355, 0.0
      %v5435 = vmax.f32 %v5357, 0.0
      %v5436 = vmax.f32 %v5360, 0.0
      %v5437 = vmax.f32 %v5362, 0.0
      %v5438 = vmax.f32 %v5365, 0.0
      %v5439 = vmax.f32 %v5367, 0.0
      %v5440 = vmax.f32 %v5370, 0.0
      %v5441 = vmax.f32 %v5372, 0.0
      %v5442 = vmax.f32 %v5375, 0.0
      %v5443 = vmax.f32 %v5377, 0.0
      %v5444 = vmax.f32 %v5380, 0.0
      %v5445 = vmax.f32 %v5382, 0.0
      %v5446 = vmax.f32 %v5385, 0.0
      %v5447 = vmax.f32 %v5387, 0.0
      %v5448 = vmax.f32 %v5390, 0.0
      %v5449 = vmax.f32 %v5392, 0.0
      %v5450 = vmax.f32 %v5395, 0.0
      %v5451 = vmax.f32 %v5397, 0.0
      %v5452 = vmax.f32 %v5400, 0.0
      %v5453 = vmax.f32 %v5402, 0.0
      %v5454 = vmax.f32 %v5405, 0.0
      %v5455 = vmax.f32 %v5407, 0.0
      %v5456 = vmax.f32 %v5410, 0.0
      %v5457 = vmax.f32 %v5412, 0.0
      %v5458 = vmax.f32 %v5415, 0.0
      %v5459 = vmax.f32 %v5417, 0.0
      %v5460 = vmax.f32 %v5420, 0.0
      %v5461 = vmax.f32 %v5422, 0.0
      %v5462 = vmax.f32 %v5425, 0.0
      %v5463 = vmax.f32 %v5427, 0.0
      %v5464 = vmax.f32 %v5430, 0.0
      %v5465 = vmax.f32 %v5432, 0.0
      %v5466 = vpack.c.bf16 %v5435, %v5434
      %v5467 = vpack.c.bf16 %v5437, %v5436
      %v5468 = vpack.c.bf16 %v5439, %v5438
      %v5469 = vpack.c.bf16 %v5441, %v5440
      %v5470 = vpack.c.bf16 %v5443, %v5442
      %v5471 = vpack.c.bf16 %v5445, %v5444
      %v5472 = vpack.c.bf16 %v5447, %v5446
      %v5473 = vpack.c.bf16 %v5449, %v5448
      %v5474 = vpack.c.bf16 %v5451, %v5450
      %v5475 = vpack.c.bf16 %v5453, %v5452
      %v5476 = vpack.c.bf16 %v5455, %v5454
      %v5477 = vpack.c.bf16 %v5457, %v5456
      %v5478 = vpack.c.bf16 %v5459, %v5458
      %v5479 = vpack.c.bf16 %v5461, %v5460
      %v5480 = vpack.c.bf16 %v5463, %v5462
      %v5481 = vpack.c.bf16 %v5465, %v5464
      %v5482 = vld [vmem:[#allocation9 + $0x9c0] sm:$0xf]
      %v5483 = vld [vmem:[#allocation9 + $0x9cc] sm:$0xf]
      %v5484 = vld [vmem:[#allocation9 + $0x9d8] sm:$0xf]
      %v5485 = vld [vmem:[#allocation9 + $0x9e4] sm:$0xf]
      %v5486 = vld [vmem:[#allocation9 + $0x9f0] sm:$0xf]
      %v5487 = vld [vmem:[#allocation9 + $0x9fc] sm:$0xf]
      %v5488 = vld [vmem:[#allocation9 + $0xa08] sm:$0xf]
      %v5489 = vld [vmem:[#allocation9 + $0xa14] sm:$0xf]
      %v5490 = vld [vmem:[#allocation9 + $0xa20] sm:$0xf]
      %v5491 = vld [vmem:[#allocation9 + $0xa2c] sm:$0xf]
      %v5492 = vld [vmem:[#allocation9 + $0xa38] sm:$0xf]
      %v5493 = vld [vmem:[#allocation9 + $0xa44] sm:$0xf]
      %v5494 = vld [vmem:[#allocation9 + $0xa50] sm:$0xf]
      %v5495 = vld [vmem:[#allocation9 + $0xa5c] sm:$0xf]
      %v5496 = vld [vmem:[#allocation9 + $0xa68] sm:$0xf]
      %v5497 = vld [vmem:[#allocation9 + $0xa74] sm:$0xf]
      %v5498 = vld [vmem:[#allocation11 + $0xd] sm:$0x1]
      %v5500 = vperm.slane %v5498, 0
      %v5518 = vunpack.c.l.b16 %v5482
      %v5519 = vunpack.c.l.b16 %v5483
      %v5520 = vunpack.c.l.b16 %v5484
      %v5521 = vunpack.c.l.b16 %v5485
      %v5522 = vunpack.c.l.b16 %v5486
      %v5523 = vunpack.c.l.b16 %v5487
      %v5524 = vunpack.c.l.b16 %v5488
      %v5525 = vunpack.c.l.b16 %v5489
      %v5526 = vunpack.c.l.b16 %v5490
      %v5527 = vunpack.c.l.b16 %v5491
      %v5528 = vunpack.c.l.b16 %v5492
      %v5529 = vunpack.c.l.b16 %v5493
      %v5530 = vunpack.c.l.b16 %v5494
      %v5531 = vunpack.c.l.b16 %v5495
      %v5532 = vunpack.c.l.b16 %v5496
      %v5533 = vunpack.c.l.b16 %v5497
      %v5534 = vpack.c.b16 %v5519, %v5518
      %v5535 = vpack.c.b16 %v5521, %v5520
      %v5536 = vpack.c.b16 %v5523, %v5522
      %v5537 = vpack.c.b16 %v5525, %v5524
      %v5538 = vpack.c.b16 %v5527, %v5526
      %v5539 = vpack.c.b16 %v5529, %v5528
      %v5540 = vpack.c.b16 %v5531, %v5530
      %v5541 = vpack.c.b16 %v5533, %v5532
      %5550 = vmatpush.bf16.msra.mxu0 %v5541
      %5551 = vmatpush.bf16.msra.mxu0 %v5540
      %5552 = vmatpush.bf16.msra.mxu0 %v5539
      %5553 = vmatpush.bf16.msra.mxu0 %v5538
      %5554 = vmatpush.bf16.msra.mxu0 %v5537
      %5555 = vmatpush.bf16.msra.mxu0 %v5536
      %5556 = vmatpush.bf16.msra.mxu0 %v5535
      %5557 = vmatpush.bf16.msra.mxu0 %v5534
      %5558 = vmatmul.bf16.gmra.mxu0 %v5466
      %v5559 = vpop.f32.mrf.mxu0
      %v5560 = vadd.f32 %v5500, %v5559
      %v5561 = vpop.f32.mrf.mxu0
      %v5562 = vadd.f32 %v5500, %v5561
      %5563 = vmatmul.bf16.gmra.mxu0 %v5467
      %v5564 = vpop.f32.mrf.mxu0
      %v5565 = vadd.f32 %v5500, %v5564
      %v5566 = vpop.f32.mrf.mxu0
      %v5567 = vadd.f32 %v5500, %v5566
      %5568 = vmatmul.bf16.gmra.mxu0 %v5468
      %v5569 = vpop.f32.mrf.mxu0
      %v5570 = vadd.f32 %v5500, %v5569
      %v5571 = vpop.f32.mrf.mxu0
      %v5572 = vadd.f32 %v5500, %v5571
      %5573 = vmatmul.bf16.gmra.mxu0 %v5469
      %v5574 = vpop.f32.mrf.mxu0
      %v5575 = vadd.f32 %v5500, %v5574
      %v5576 = vpop.f32.mrf.mxu0
      %v5577 = vadd.f32 %v5500, %v5576
      %5578 = vmatmul.bf16.gmra.mxu0 %v5470
      %v5579 = vpop.f32.mrf.mxu0
      %v5580 = vadd.f32 %v5500, %v5579
      %v5581 = vpop.f32.mrf.mxu0
      %v5582 = vadd.f32 %v5500, %v5581
      %5583 = vmatmul.bf16.gmra.mxu0 %v5471
      %v5584 = vpop.f32.mrf.mxu0
      %v5585 = vadd.f32 %v5500, %v5584
      %v5586 = vpop.f32.mrf.mxu0
      %v5587 = vadd.f32 %v5500, %v5586
      %5588 = vmatmul.bf16.gmra.mxu0 %v5472
      %v5589 = vpop.f32.mrf.mxu0
      %v5590 = vadd.f32 %v5500, %v5589
      %v5591 = vpop.f32.mrf.mxu0
      %v5592 = vadd.f32 %v5500, %v5591
      %5593 = vmatmul.bf16.gmra.mxu0 %v5473
      %v5594 = vpop.f32.mrf.mxu0
      %v5595 = vadd.f32 %v5500, %v5594
      %v5596 = vpop.f32.mrf.mxu0
      %v5597 = vadd.f32 %v5500, %v5596
      %5598 = vmatmul.bf16.gmra.mxu0 %v5474
      %v5599 = vpop.f32.mrf.mxu0
      %v5600 = vadd.f32 %v5500, %v5599
      %v5601 = vpop.f32.mrf.mxu0
      %v5602 = vadd.f32 %v5500, %v5601
      %5603 = vmatmul.bf16.gmra.mxu0 %v5475
      %v5604 = vpop.f32.mrf.mxu0
      %v5605 = vadd.f32 %v5500, %v5604
      %v5606 = vpop.f32.mrf.mxu0
      %v5607 = vadd.f32 %v5500, %v5606
      %5608 = vmatmul.bf16.gmra.mxu0 %v5476
      %v5609 = vpop.f32.mrf.mxu0
      %v5610 = vadd.f32 %v5500, %v5609
      %v5611 = vpop.f32.mrf.mxu0
      %v5612 = vadd.f32 %v5500, %v5611
      %5613 = vmatmul.bf16.gmra.mxu0 %v5477
      %v5614 = vpop.f32.mrf.mxu0
      %v5615 = vadd.f32 %v5500, %v5614
      %v5616 = vpop.f32.mrf.mxu0
      %v5617 = vadd.f32 %v5500, %v5616
      %5618 = vmatmul.bf16.gmra.mxu0 %v5478
      %v5619 = vpop.f32.mrf.mxu0
      %v5620 = vadd.f32 %v5500, %v5619
      %v5621 = vpop.f32.mrf.mxu0
      %v5622 = vadd.f32 %v5500, %v5621
      %5623 = vmatmul.bf16.gmra.mxu0 %v5479
      %v5624 = vpop.f32.mrf.mxu0
      %v5625 = vadd.f32 %v5500, %v5624
      %v5626 = vpop.f32.mrf.mxu0
      %v5627 = vadd.f32 %v5500, %v5626
      %5628 = vmatmul.bf16.gmra.mxu0 %v5480
      %v5629 = vpop.f32.mrf.mxu0
      %v5630 = vadd.f32 %v5500, %v5629
      %v5631 = vpop.f32.mrf.mxu0
      %v5632 = vadd.f32 %v5500, %v5631
      %5633 = vmatmul.bf16.gmra.mxu0 %v5481
      %v5634 = vpop.f32.mrf.mxu0
      %v5635 = vadd.f32 %v5500, %v5634
      %v5636 = vpop.f32.mrf.mxu0
      %v5637 = vadd.f32 %v5500, %v5636
      %5638 = vdwg.mxu0
      %v5639 = vadd.f32 %v2641, %v5560
      %v5640 = vadd.f32 %v2643, %v5562
      %v5641 = vadd.f32 %v2646, %v5565
      %v5642 = vadd.f32 %v2648, %v5567
      %v5643 = vadd.f32 %v2651, %v5570
      %v5644 = vadd.f32 %v2653, %v5572
      %v5645 = vadd.f32 %v2656, %v5575
      %v5646 = vadd.f32 %v2658, %v5577
      %v5647 = vadd.f32 %v2661, %v5580
      %v5648 = vadd.f32 %v2663, %v5582
      %v5649 = vadd.f32 %v2666, %v5585
      %v5650 = vadd.f32 %v2668, %v5587
      %v5651 = vadd.f32 %v2671, %v5590
      %v5652 = vadd.f32 %v2673, %v5592
      %v5653 = vadd.f32 %v2676, %v5595
      %v5654 = vadd.f32 %v2678, %v5597
      %v5655 = vadd.f32 %v2681, %v5600
      %v5656 = vadd.f32 %v2683, %v5602
      %v5657 = vadd.f32 %v2686, %v5605
      %v5658 = vadd.f32 %v2688, %v5607
      %v5659 = vadd.f32 %v2691, %v5610
      %v5660 = vadd.f32 %v2693, %v5612
      %v5661 = vadd.f32 %v2696, %v5615
      %v5662 = vadd.f32 %v2698, %v5617
      %v5663 = vadd.f32 %v2701, %v5620
      %v5664 = vadd.f32 %v2703, %v5622
      %v5665 = vadd.f32 %v2706, %v5625
      %v5666 = vadd.f32 %v2708, %v5627
      %v5667 = vadd.f32 %v2711, %v5630
      %v5668 = vadd.f32 %v2713, %v5632
      %v5669 = vadd.f32 %v2716, %v5635
      %v5670 = vadd.f32 %v2718, %v5637
      %5671 = vst [vmem:[#allocation12] sm:$0xff] %v5639
      %5672 = vst [vmem:[#allocation12 + $0x8] sm:$0xff] %v5640
      %5673 = vst [vmem:[#allocation12 + $0x10] sm:$0xff] %v5641
      %5674 = vst [vmem:[#allocation12 + $0x18] sm:$0xff] %v5642
      %5675 = vst [vmem:[#allocation12 + $0x20] sm:$0xff] %v5643
      %5676 = vst [vmem:[#allocation12 + $0x28] sm:$0xff] %v5644
      %5677 = vst [vmem:[#allocation12 + $0x30] sm:$0xff] %v5645
      %5678 = vst [vmem:[#allocation12 + $0x38] sm:$0xff] %v5646
      %5679 = vst [vmem:[#allocation12 + $0x40] sm:$0xff] %v5647
      %5680 = vst [vmem:[#allocation12 + $0x48] sm:$0xff] %v5648
      %5681 = vst [vmem:[#allocation12 + $0x50] sm:$0xff] %v5649
      %5682 = vst [vmem:[#allocation12 + $0x58] sm:$0xff] %v5650
      %5683 = vst [vmem:[#allocation12 + $0x60] sm:$0xff] %v5651
      %5684 = vst [vmem:[#allocation12 + $0x68] sm:$0xff] %v5652
      %5685 = vst [vmem:[#allocation12 + $0x70] sm:$0xff] %v5653
      %5686 = vst [vmem:[#allocation12 + $0x78] sm:$0xff] %v5654
      %5687 = vst [vmem:[#allocation12 + $0x80] sm:$0xff] %v5655
      %5688 = vst [vmem:[#allocation12 + $0x88] sm:$0xff] %v5656
      %5689 = vst [vmem:[#allocation12 + $0x90] sm:$0xff] %v5657
      %5690 = vst [vmem:[#allocation12 + $0x98] sm:$0xff] %v5658
      %5691 = vst [vmem:[#allocation12 + $0xa0] sm:$0xff] %v5659
      %5692 = vst [vmem:[#allocation12 + $0xa8] sm:$0xff] %v5660
      %5693 = vst [vmem:[#allocation12 + $0xb0] sm:$0xff] %v5661
      %5694 = vst [vmem:[#allocation12 + $0xb8] sm:$0xff] %v5662
      %5695 = vst [vmem:[#allocation12 + $0xc0] sm:$0xff] %v5663
      %5696 = vst [vmem:[#allocation12 + $0xc8] sm:$0xff] %v5664
      %5697 = vst [vmem:[#allocation12 + $0xd0] sm:$0xff] %v5665
      %5698 = vst [vmem:[#allocation12 + $0xd8] sm:$0xff] %v5666
      %5699 = vst [vmem:[#allocation12 + $0xe0] sm:$0xff] %v5667
      %5700 = vst [vmem:[#allocation12 + $0xe8] sm:$0xff] %v5668
      %5701 = vst [vmem:[#allocation12 + $0xf0] sm:$0xff] %v5669
      %5702 = vst [vmem:[#allocation12 + $0xf8] sm:$0xff] %v5670
    $region49: #{tpu_custom_call.1} parent=1 // pred_fallthru
      _
    // Predicated region
    $region50: #{tpu_custom_call.1} parent=1 // pred_check
      _
    $region51: #{tpu_custom_call.1} parent=1 // pred_check_branch
      %5704 = sbr.rel (0) target = $region53
    $region52: #{tpu_custom_call.1} parent=1 // pred_region
      %5706 = vsyncadd [#allocation5], 0
      %s5707 = sshll.u32 [#allocation12], 4
      %s5708 = int_to_ptr.vmem [resolvable:$true] %s5707
      %s5709 = sshll.u32 %s5, 4
      %s5710 = int_to_ptr.hbm [resolvable:$true] %s5709
      %5715 = dma.vmem_to_hbm [thread:$0]  %s5708, 4096, %s5710, [#allocation5], 128, 128, 8
    $region53: #{tpu_custom_call.1} parent=1 // pred_fallthru
      _
    // Predicated region
    $region54: #{tpu_custom_call.1} parent=1 // pred_check
      _
    $region55: #{tpu_custom_call.1} parent=1 // pred_check_branch
      %5717 = sbr.rel (0) target = $region57
    $region56: #{tpu_custom_call.1} parent=1 // pred_region
      %5719 = dma.done [#allocation5], 4096
    $region57: #{tpu_custom_call.1} parent=1 // pred_fallthru
      _
    %5720 = vsyncpa [#allocation4], 1
    %5721 = vsyncpa [#allocation7], 1
    %5722 = vsyncpa [#allocation10], 1
    %5723 = vsyncpa [#allocation5], 1

</llo_original>
